<compile_context>
chip_gen: v7x
topology: tpu7x:2x2x1
jax: 0.10.0
libtpu: 0.0.40
codegen_flags: <defaults>
</compile_context>

<pallas_src>
import jax
import jax.numpy as jnp
from jax.experimental import pallas as pl
from jax.experimental.pallas import tpu as pltpu

HALO = 128  # lane-aligned halo so the scratch center store is a clean full-tile store


def _make_resblock_kernel(dilations):
    def resblock1d_kernel(x_ref, w_ref, b_ref, ada_ref, o_ref, pad_ref):
        # x_ref  : (1, C, T)        input for this batch element (channels-on-sublanes)
        # w_ref  : (6, 3, C, C)     conv weights [convs1_0..2, convs2_0..2], per-tap (Cout,Cin)
        # b_ref  : (C, 6)           conv biases, one column per conv
        # ada_ref: (1, C, 12)       per-iteration [1+g1, b1, 1+g2, b2] columns (from AdaIN fc)
        # o_ref  : (1, C, T)        output
        # pad_ref: (C, T + 2*HALO)  VMEM scratch with zero halos for dilated-conv time shifts
        C = x_ref.shape[1]
        T = x_ref.shape[2]

        # Zero the halo margins once per batch element (the center is overwritten before use).
        pad_ref[:, :HALO] = jnp.zeros((C, HALO), jnp.float32)
        pad_ref[:, HALO + T:HALO + T + HALO] = jnp.zeros((C, HALO), jnp.float32)

        ada = ada_ref[0]  # (C, 12)
        x = x_ref[0]      # (C, T)

        def norm_affine_lrelu(v, col):
            # InstanceNorm1d(affine=False) + AdaIN affine fused into one FMA, then leaky_relu.
            one_plus_gamma = ada[:, col:col + 1]      # (C, 1)
            beta = ada[:, col + 1:col + 2]            # (C, 1)
            mean = jnp.mean(v, axis=1, keepdims=True)                       # (C, 1)
            var = jnp.maximum(
                jnp.mean(v * v, axis=1, keepdims=True) - mean * mean, 0.0)  # (C, 1)
            scale = one_plus_gamma * jax.lax.rsqrt(var + 1e-5)
            shift = beta - mean * scale
            y = v * scale + shift
            return jnp.where(y >= 0.0, y, 0.01 * y)  # F.leaky_relu default slope

        def conv3(v, ci, d):
            # 'same' k=3 dilated conv: y[:, t] = b + sum_k W_k @ v[:, t + (k-1)*d]
            pad_ref[:, HALO:HALO + T] = v
            acc = jnp.dot(w_ref[ci, 0], pad_ref[:, HALO - d:HALO - d + T],
                          preferred_element_type=jnp.float32)
            acc = acc + jnp.dot(w_ref[ci, 1], pad_ref[:, HALO:HALO + T],
                                preferred_element_type=jnp.float32)
            acc = acc + jnp.dot(w_ref[ci, 2], pad_ref[:, HALO + d:HALO + d + T],
                                preferred_element_type=jnp.float32)
            return acc + b_ref[:, ci:ci + 1]

        for i, d in enumerate(dilations):
            xt = norm_affine_lrelu(x, 4 * i)          # adain1[i] + leaky_relu
            xt = conv3(xt, i, d)                      # convs1[i] (dilation d)
            xt = norm_affine_lrelu(xt, 4 * i + 2)     # adain2[i] + leaky_relu
            xt = conv3(xt, 3 + i, 1)                  # convs2[i] (dilation 1)
            x = x + xt                                # residual

        o_ref[0] = x

    return resblock1d_kernel


def resblock1d_forward(x, s, params, dilations=(1, 3, 5)):
    """x: (B, C, T) f32, s: (B, S) f32.  Returns (B, C, T) f32 matching the PyTorch forward."""
    w1, b1, w2, b2, fcw1, fcb1, fcw2, fcb2 = params
    B, C, T = x.shape

    # --- glue (plain XLA): pack conv weights/biases and precompute AdaIN affine params ---
    w_all = jnp.concatenate([w1, w2], axis=0)            # (6, C, C, 3)
    w_all = jnp.transpose(w_all, (0, 3, 1, 2))           # (6, 3, Cout, Cin)
    b_all = jnp.concatenate([b1, b2], axis=0).T          # (C, 6)

    fcw = jnp.concatenate([fcw1, fcw2], axis=0)          # (6, 2C, S)  [adain1_0..2, adain2_0..2]
    fcb = jnp.concatenate([fcb1, fcb2], axis=0)          # (6, 2C)
    h = jnp.einsum('bs,jcs->bjc', s, fcw) + fcb[None]    # one GEMM for all 6 AdaIN fc layers
    gamma, beta = h[..., :C], h[..., C:]                 # (B, 6, C) each
    cols = []
    for i in range(len(dilations)):
        cols += [1.0 + gamma[:, i], beta[:, i], 1.0 + gamma[:, 3 + i], beta[:, 3 + i]]
    ada = jnp.stack(cols, axis=-1)                       # (B, C, 12) channel-on-sublane

    n_norm = 2 * len(dilations)
    cost = pl.CostEstimate(
        flops=int(2 * B * 6 * 3 * C * C * T),
        transcendentals=int(B * n_norm * C),
        bytes_accessed=int(4 * (2 * B * C * T + w_all.size + b_all.size + ada.size)),
    )

    out = pl.pallas_call(
        _make_resblock_kernel(dilations),
        out_shape=jax.ShapeDtypeStruct((B, C, T), jnp.float32),
        grid_spec=pltpu.PrefetchScalarGridSpec(
            num_scalar_prefetch=0,
            grid=(B,),
            in_specs=[
                pl.BlockSpec((1, C, T), lambda b: (b, 0, 0)),
                pl.BlockSpec((6, 3, C, C), lambda b: (0, 0, 0, 0)),
                pl.BlockSpec((C, 6), lambda b: (0, 0)),
                pl.BlockSpec((1, C, 12), lambda b: (b, 0, 0)),
            ],
            out_specs=pl.BlockSpec((1, C, T), lambda b: (b, 0, 0)),
            scratch_shapes=[pltpu.VMEM((C, T + 2 * HALO), jnp.float32)],
        ),
        compiler_params=pltpu.CompilerParams(dimension_semantics=("parallel",)),
        cost_estimate=cost,
    )(x, w_all, b_all, ada)
    return out


def reference_forward(x, s, params, dilations=(1, 3, 5)):
    """Pure-JAX reference mirroring the PyTorch ResBlock1D forward (NCL layout)."""
    w1, b1, w2, b2, fcw1, fcb1, fcw2, fcb2 = params
    C = x.shape[1]

    def conv1d(v, w, b, d):
        pad = d * (w.shape[-1] - 1) // 2
        y = jax.lax.conv_general_dilated(
            v, w, window_strides=(1,), padding=[(pad, pad)],
            rhs_dilation=(d,), dimension_numbers=("NCH", "OIH", "NCH"))
        return y + b[None, :, None]

    def adain(v, fcw, fcb):
        mean = v.mean(axis=2, keepdims=True)
        var = ((v - mean) ** 2).mean(axis=2, keepdims=True)
        vhat = (v - mean) / jnp.sqrt(var + 1e-5)
        h = s @ fcw.T + fcb
        g, bt = h[:, :C, None], h[:, C:, None]
        return (1.0 + g) * vhat + bt

    lrelu = lambda v: jnp.where(v >= 0.0, v, 0.01 * v)

    for i, d in enumerate(dilations):
        xt = lrelu(adain(x, fcw1[i], fcb1[i]))
        xt = conv1d(xt, w1[i], b1[i], d)
        xt = lrelu(adain(xt, fcw2[i], fcb2[i]))
        xt = conv1d(xt, w2[i], b2[i], 1)
        x = x + xt
    return x


if __name__ == "__main__":
    key = jax.random.PRNGKey(0)
    B, C, T, S = 2, 64, 256, 128          # batch, channels, sequence length, style_dim
    kernel_size, dilations = 3, (1, 3, 5)

    keys = iter(jax.random.split(key, 32))

    def make_wn_conv(k_v, k_g, k_b):
        # weight_norm(Conv1d) with default dim=0: w = g * v / ||v||_{dims 1,2}
        v = jax.random.normal(k_v, (C, C, kernel_size), jnp.float32) * 0.01   # init_weights std
        g = jax.random.uniform(k_g, (C, 1, 1), jnp.float32, 0.5, 1.5)
        w = g * v / jnp.sqrt(jnp.sum(v * v, axis=(1, 2), keepdims=True))
        b = jax.random.uniform(k_b, (C,), jnp.float32, -0.1, 0.1)
        return w, b

    w1l, b1l, w2l, b2l = [], [], [], []
    for _ in range(3):
        w, b = make_wn_conv(next(keys), next(keys), next(keys)); w1l.append(w); b1l.append(b)
    for _ in range(3):
        w, b = make_wn_conv(next(keys), next(keys), next(keys)); w2l.append(w); b2l.append(b)
    w1, b1 = jnp.stack(w1l), jnp.stack(b1l)
    w2, b2 = jnp.stack(w2l), jnp.stack(b2l)

    fcw1 = jax.random.normal(next(keys), (3, 2 * C, S), jnp.float32) * 0.05
    fcb1 = jax.random.normal(next(keys), (3, 2 * C), jnp.float32) * 0.05
    fcw2 = jax.random.normal(next(keys), (3, 2 * C, S), jnp.float32) * 0.05
    fcb2 = jax.random.normal(next(keys), (3, 2 * C), jnp.float32) * 0.05

    params = (w1, b1, w2, b2, fcw1, fcb1, fcw2, fcb2)

    x = jax.random.normal(next(keys), (B, C, T), jnp.float32)
    s = jax.random.normal(next(keys), (B, S), jnp.float32)

    out = jax.block_until_ready(resblock1d_forward(x, s, params, dilations))
    ref = jax.block_until_ready(reference_forward(x, s, params, dilations))

    assert out.shape == ref.shape == (B, C, T), (out.shape, ref.shape)
    max_err = float(jnp.max(jnp.abs(out - ref)))
    assert jnp.allclose(out, ref, atol=1e-3, rtol=1e-3), f"max abs err {max_err}"
    print("KERNEL_OK")
</pallas_src>

<mosaic_0001>
module attributes {stable_mosaic.version = 11 : i64} {
  func.func @resblock1d_kernel(%arg0: i32, %arg1: memref<1x64x256xf32, #tpu.memory_space<vmem>>, %arg2: memref<6x3x64x64xf32, #tpu.memory_space<vmem>>, %arg3: memref<64x6xf32, #tpu.memory_space<vmem>>, %arg4: memref<1x64x12xf32, #tpu.memory_space<vmem>>, %arg5: memref<1x64x256xf32, #tpu.memory_space<vmem>>, %arg6: memref<64x512xf32, #tpu.memory_space<vmem>>) attributes {dimension_semantics = [#tpu.dimension_semantics<parallel>], iteration_bounds = array<i64: 2>, scalar_prefetch = 0 : i64, scratch_operands = 1 : i64, tpu.core_type = #tpu.core_type<tc>, window_params = [{transform_indices = @transform_0, window_bounds = array<i64: 1, 64, 256>}, {pipeline_mode = #tpu.pipeline_mode<synchronous>, transform_indices = @transform_1, window_bounds = array<i64: 6, 3, 64, 64>}, {pipeline_mode = #tpu.pipeline_mode<synchronous>, transform_indices = @transform_2, window_bounds = array<i64: 64, 6>}, {transform_indices = @transform_3, window_bounds = array<i64: 1, 64, 12>}, {transform_indices = @transform_4, window_bounds = array<i64: 1, 64, 256>}]} {
    %cst = arith.constant 0.000000e+00 : f32
    %0 = vector.broadcast %cst : f32 to vector<64x128xf32>
    %c0 = arith.constant 0 : index
    %c0_0 = arith.constant 0 : index
    %1 = vector.load %arg6[%c0, %c0_0] : memref<64x512xf32, #tpu.memory_space<vmem>>, vector<64x128xf32>
    tpu.vector_store %arg6[%c0, %c0_0], %0 {strides = array<i32>} : memref<64x512xf32, #tpu.memory_space<vmem>>, vector<64x128xf32>,
    %cst_1 = arith.constant 0.000000e+00 : f32
    %2 = vector.broadcast %cst_1 : f32 to vector<64x128xf32>
    %c0_2 = arith.constant 0 : index
    %c384 = arith.constant 384 : index
    %3 = vector.load %arg6[%c0_2, %c384] : memref<64x512xf32, #tpu.memory_space<vmem>>, vector<64x128xf32>
    tpu.vector_store %arg6[%c0_2, %c384], %2 {strides = array<i32>} : memref<64x512xf32, #tpu.memory_space<vmem>>, vector<64x128xf32>,
    %c0_3 = arith.constant 0 : index
    %c0_4 = arith.constant 0 : index
    %c0_5 = arith.constant 0 : index
    %4 = vector.load %arg4[%c0_3, %c0_4, %c0_5] : memref<1x64x12xf32, #tpu.memory_space<vmem>>, vector<1x64x12xf32>
    %5 = vector.shape_cast %4 : vector<1x64x12xf32> to vector<64x12xf32>
    %c0_6 = arith.constant 0 : index
    %c0_7 = arith.constant 0 : index
    %c0_8 = arith.constant 0 : index
    %6 = vector.load %arg1[%c0_6, %c0_7, %c0_8] : memref<1x64x256xf32, #tpu.memory_space<vmem>>, vector<1x64x256xf32>
    %7 = vector.shape_cast %6 : vector<1x64x256xf32> to vector<64x256xf32>
    %8 = vector.extract_strided_slice %5 {offsets = [0, 0], sizes = [64, 1], strides = [1, 1]} : vector<64x12xf32> to vector<64x1xf32>
    %9 = vector.extract_strided_slice %5 {offsets = [0, 1], sizes = [64, 1], strides = [1, 1]} : vector<64x12xf32> to vector<64x1xf32>
    %cst_9 = arith.constant dense<0.000000e+00> : vector<64xf32>
    %10 = vector.multi_reduction <add>, %7, %cst_9 [1] : vector<64x256xf32> to vector<64xf32>
    %11 = vector.shape_cast %10 : vector<64xf32> to vector<64x1xf32>
    %cst_10 = arith.constant 2.560000e+02 : f32
    %12 = vector.broadcast %cst_10 : f32 to vector<64x1xf32>
    %13 = arith.divf %11, %12 : vector<64x1xf32>
    %14 = arith.mulf %7, %7 : vector<64x256xf32>
    %cst_11 = arith.constant dense<0.000000e+00> : vector<64xf32>
    %15 = vector.multi_reduction <add>, %14, %cst_11 [1] : vector<64x256xf32> to vector<64xf32>
    %16 = vector.shape_cast %15 : vector<64xf32> to vector<64x1xf32>
    %cst_12 = arith.constant 2.560000e+02 : f32
    %17 = vector.broadcast %cst_12 : f32 to vector<64x1xf32>
    %18 = arith.divf %16, %17 : vector<64x1xf32>
    %19 = arith.mulf %13, %13 : vector<64x1xf32>
    %20 = arith.subf %18, %19 : vector<64x1xf32>
    %cst_13 = arith.constant 0.000000e+00 : f32
    %21 = vector.broadcast %cst_13 : f32 to vector<64x1xf32>
    %22 = arith.maximumf %20, %21 : vector<64x1xf32>
    %cst_14 = arith.constant 9.99999974E-6 : f32
    %23 = vector.broadcast %cst_14 : f32 to vector<64x1xf32>
    %24 = arith.addf %22, %23 : vector<64x1xf32>
    %25 = math.rsqrt %24 : vector<64x1xf32>
    %26 = arith.mulf %8, %25 : vector<64x1xf32>
    %27 = arith.mulf %13, %26 : vector<64x1xf32>
    %28 = arith.subf %9, %27 : vector<64x1xf32>
    %29 = vector.broadcast %26 : vector<64x1xf32> to vector<64x256xf32>
    %30 = arith.mulf %7, %29 : vector<64x256xf32>
    %31 = vector.broadcast %28 : vector<64x1xf32> to vector<64x256xf32>
    %32 = arith.addf %30, %31 : vector<64x256xf32>
    %cst_15 = arith.constant 0.000000e+00 : f32
    %33 = vector.broadcast %cst_15 : f32 to vector<64x256xf32>
    %34 = arith.cmpf oge, %32, %33 : vector<64x256xf32>
    %cst_16 = arith.constant 0.00999999977 : f32
    %35 = vector.broadcast %cst_16 : f32 to vector<64x256xf32>
    %36 = arith.mulf %35, %32 : vector<64x256xf32>
    %37 = arith.select %34, %32, %36 : vector<64x256xi1>, vector<64x256xf32>
    %c0_17 = arith.constant 0 : index
    %c128 = arith.constant 128 : index
    %38 = vector.load %arg6[%c0_17, %c128] : memref<64x512xf32, #tpu.memory_space<vmem>>, vector<64x256xf32>
    tpu.vector_store %arg6[%c0_17, %c128], %37 {strides = array<i32>} : memref<64x512xf32, #tpu.memory_space<vmem>>, vector<64x256xf32>,
    %c0_18 = arith.constant 0 : index
    %c0_19 = arith.constant 0 : index
    %c0_20 = arith.constant 0 : index
    %c0_21 = arith.constant 0 : index
    %39 = vector.load %arg2[%c0_18, %c0_19, %c0_20, %c0_21] : memref<6x3x64x64xf32, #tpu.memory_space<vmem>>, vector<1x1x64x64xf32>
    %40 = vector.shape_cast %39 : vector<1x1x64x64xf32> to vector<64x64xf32>
    %c0_22 = arith.constant 0 : index
    %c127 = arith.constant 127 : index
    %41 = vector.load %arg6[%c0_22, %c127] : memref<64x512xf32, #tpu.memory_space<vmem>>, vector<64x256xf32>
    %cst_23 = arith.constant dense<0.000000e+00> : vector<64x256xf32>
    %42 = tpu.matmul %40, %41, %cst_23 {dimension_numbers = #tpu.dot_dimension_numbers<[1], [0], [0], [1], [0, 0, 1, 1], [], []>} : vector<64x64xf32>, vector<64x256xf32>, vector<64x256xf32> -> vector<64x256xf32>
    %c0_24 = arith.constant 0 : index
    %c1 = arith.constant 1 : index
    %c0_25 = arith.constant 0 : index
    %c0_26 = arith.constant 0 : index
    %43 = vector.load %arg2[%c0_24, %c1, %c0_25, %c0_26] : memref<6x3x64x64xf32, #tpu.memory_space<vmem>>, vector<1x1x64x64xf32>
    %44 = vector.shape_cast %43 : vector<1x1x64x64xf32> to vector<64x64xf32>
    %c0_27 = arith.constant 0 : index
    %c128_28 = arith.constant 128 : index
    %45 = vector.load %arg6[%c0_27, %c128_28] : memref<64x512xf32, #tpu.memory_space<vmem>>, vector<64x256xf32>
    %cst_29 = arith.constant dense<0.000000e+00> : vector<64x256xf32>
    %46 = tpu.matmul %44, %45, %cst_29 {dimension_numbers = #tpu.dot_dimension_numbers<[1], [0], [0], [1], [0, 0, 1, 1], [], []>} : vector<64x64xf32>, vector<64x256xf32>, vector<64x256xf32> -> vector<64x256xf32>
    %47 = arith.addf %42, %46 : vector<64x256xf32>
    %c0_30 = arith.constant 0 : index
    %c2 = arith.constant 2 : index
    %c0_31 = arith.constant 0 : index
    %c0_32 = arith.constant 0 : index
    %48 = vector.load %arg2[%c0_30, %c2, %c0_31, %c0_32] : memref<6x3x64x64xf32, #tpu.memory_space<vmem>>, vector<1x1x64x64xf32>
    %49 = vector.shape_cast %48 : vector<1x1x64x64xf32> to vector<64x64xf32>
    %c0_33 = arith.constant 0 : index
    %c129 = arith.constant 129 : index
    %50 = vector.load %arg6[%c0_33, %c129] : memref<64x512xf32, #tpu.memory_space<vmem>>, vector<64x256xf32>
    %cst_34 = arith.constant dense<0.000000e+00> : vector<64x256xf32>
    %51 = tpu.matmul %49, %50, %cst_34 {dimension_numbers = #tpu.dot_dimension_numbers<[1], [0], [0], [1], [0, 0, 1, 1], [], []>} : vector<64x64xf32>, vector<64x256xf32>, vector<64x256xf32> -> vector<64x256xf32>
    %52 = arith.addf %47, %51 : vector<64x256xf32>
    %c0_35 = arith.constant 0 : index
    %c0_36 = arith.constant 0 : index
    %53 = vector.load %arg3[%c0_35, %c0_36] : memref<64x6xf32, #tpu.memory_space<vmem>>, vector<64x1xf32>
    %54 = vector.broadcast %53 : vector<64x1xf32> to vector<64x256xf32>
    %55 = arith.addf %52, %54 : vector<64x256xf32>
    %56 = vector.extract_strided_slice %5 {offsets = [0, 2], sizes = [64, 1], strides = [1, 1]} : vector<64x12xf32> to vector<64x1xf32>
    %57 = vector.extract_strided_slice %5 {offsets = [0, 3], sizes = [64, 1], strides = [1, 1]} : vector<64x12xf32> to vector<64x1xf32>
    %cst_37 = arith.constant dense<0.000000e+00> : vector<64xf32>
    %58 = vector.multi_reduction <add>, %55, %cst_37 [1] : vector<64x256xf32> to vector<64xf32>
    %59 = vector.shape_cast %58 : vector<64xf32> to vector<64x1xf32>
    %cst_38 = arith.constant 2.560000e+02 : f32
    %60 = vector.broadcast %cst_38 : f32 to vector<64x1xf32>
    %61 = arith.divf %59, %60 : vector<64x1xf32>
    %62 = arith.mulf %55, %55 : vector<64x256xf32>
    %cst_39 = arith.constant dense<0.000000e+00> : vector<64xf32>
    %63 = vector.multi_reduction <add>, %62, %cst_39 [1] : vector<64x256xf32> to vector<64xf32>
    %64 = vector.shape_cast %63 : vector<64xf32> to vector<64x1xf32>
    %cst_40 = arith.constant 2.560000e+02 : f32
    %65 = vector.broadcast %cst_40 : f32 to vector<64x1xf32>
    %66 = arith.divf %64, %65 : vector<64x1xf32>
    %67 = arith.mulf %61, %61 : vector<64x1xf32>
    %68 = arith.subf %66, %67 : vector<64x1xf32>
    %cst_41 = arith.constant 0.000000e+00 : f32
    %69 = vector.broadcast %cst_41 : f32 to vector<64x1xf32>
    %70 = arith.maximumf %68, %69 : vector<64x1xf32>
    %cst_42 = arith.constant 9.99999974E-6 : f32
    %71 = vector.broadcast %cst_42 : f32 to vector<64x1xf32>
    %72 = arith.addf %70, %71 : vector<64x1xf32>
    %73 = math.rsqrt %72 : vector<64x1xf32>
    %74 = arith.mulf %56, %73 : vector<64x1xf32>
    %75 = arith.mulf %61, %74 : vector<64x1xf32>
    %76 = arith.subf %57, %75 : vector<64x1xf32>
    %77 = vector.broadcast %74 : vector<64x1xf32> to vector<64x256xf32>
    %78 = arith.mulf %55, %77 : vector<64x256xf32>
    %79 = vector.broadcast %76 : vector<64x1xf32> to vector<64x256xf32>
    %80 = arith.addf %78, %79 : vector<64x256xf32>
    %cst_43 = arith.constant 0.000000e+00 : f32
    %81 = vector.broadcast %cst_43 : f32 to vector<64x256xf32>
    %82 = arith.cmpf oge, %80, %81 : vector<64x256xf32>
    %cst_44 = arith.constant 0.00999999977 : f32
    %83 = vector.broadcast %cst_44 : f32 to vector<64x256xf32>
    %84 = arith.mulf %83, %80 : vector<64x256xf32>
    %85 = arith.select %82, %80, %84 : vector<64x256xi1>, vector<64x256xf32>
    %c0_45 = arith.constant 0 : index
    %c128_46 = arith.constant 128 : index
    %86 = vector.load %arg6[%c0_45, %c128_46] : memref<64x512xf32, #tpu.memory_space<vmem>>, vector<64x256xf32>
    tpu.vector_store %arg6[%c0_45, %c128_46], %85 {strides = array<i32>} : memref<64x512xf32, #tpu.memory_space<vmem>>, vector<64x256xf32>,
    %c3 = arith.constant 3 : index
    %c0_47 = arith.constant 0 : index
    %c0_48 = arith.constant 0 : index
    %c0_49 = arith.constant 0 : index
    %87 = vector.load %arg2[%c3, %c0_47, %c0_48, %c0_49] : memref<6x3x64x64xf32, #tpu.memory_space<vmem>>, vector<1x1x64x64xf32>
    %88 = vector.shape_cast %87 : vector<1x1x64x64xf32> to vector<64x64xf32>
    %c0_50 = arith.constant 0 : index
    %c127_51 = arith.constant 127 : index
    %89 = vector.load %arg6[%c0_50, %c127_51] : memref<64x512xf32, #tpu.memory_space<vmem>>, vector<64x256xf32>
    %cst_52 = arith.constant dense<0.000000e+00> : vector<64x256xf32>
    %90 = tpu.matmul %88, %89, %cst_52 {dimension_numbers = #tpu.dot_dimension_numbers<[1], [0], [0], [1], [0, 0, 1, 1], [], []>} : vector<64x64xf32>, vector<64x256xf32>, vector<64x256xf32> -> vector<64x256xf32>
    %c3_53 = arith.constant 3 : index
    %c1_54 = arith.constant 1 : index
    %c0_55 = arith.constant 0 : index
    %c0_56 = arith.constant 0 : index
    %91 = vector.load %arg2[%c3_53, %c1_54, %c0_55, %c0_56] : memref<6x3x64x64xf32, #tpu.memory_space<vmem>>, vector<1x1x64x64xf32>
    %92 = vector.shape_cast %91 : vector<1x1x64x64xf32> to vector<64x64xf32>
    %c0_57 = arith.constant 0 : index
    %c128_58 = arith.constant 128 : index
    %93 = vector.load %arg6[%c0_57, %c128_58] : memref<64x512xf32, #tpu.memory_space<vmem>>, vector<64x256xf32>
    %cst_59 = arith.constant dense<0.000000e+00> : vector<64x256xf32>
    %94 = tpu.matmul %92, %93, %cst_59 {dimension_numbers = #tpu.dot_dimension_numbers<[1], [0], [0], [1], [0, 0, 1, 1], [], []>} : vector<64x64xf32>, vector<64x256xf32>, vector<64x256xf32> -> vector<64x256xf32>
    %95 = arith.addf %90, %94 : vector<64x256xf32>
    %c3_60 = arith.constant 3 : index
    %c2_61 = arith.constant 2 : index
    %c0_62 = arith.constant 0 : index
    %c0_63 = arith.constant 0 : index
    %96 = vector.load %arg2[%c3_60, %c2_61, %c0_62, %c0_63] : memref<6x3x64x64xf32, #tpu.memory_space<vmem>>, vector<1x1x64x64xf32>
    %97 = vector.shape_cast %96 : vector<1x1x64x64xf32> to vector<64x64xf32>
    %c0_64 = arith.constant 0 : index
    %c129_65 = arith.constant 129 : index
    %98 = vector.load %arg6[%c0_64, %c129_65] : memref<64x512xf32, #tpu.memory_space<vmem>>, vector<64x256xf32>
    %cst_66 = arith.constant dense<0.000000e+00> : vector<64x256xf32>
    %99 = tpu.matmul %97, %98, %cst_66 {dimension_numbers = #tpu.dot_dimension_numbers<[1], [0], [0], [1], [0, 0, 1, 1], [], []>} : vector<64x64xf32>, vector<64x256xf32>, vector<64x256xf32> -> vector<64x256xf32>
    %100 = arith.addf %95, %99 : vector<64x256xf32>
    %c0_67 = arith.constant 0 : index
    %c3_68 = arith.constant 3 : index
    %101 = vector.load %arg3[%c0_67, %c3_68] : memref<64x6xf32, #tpu.memory_space<vmem>>, vector<64x1xf32>
    %102 = vector.broadcast %101 : vector<64x1xf32> to vector<64x256xf32>
    %103 = arith.addf %100, %102 : vector<64x256xf32>
    %104 = arith.addf %7, %103 : vector<64x256xf32>
    %105 = vector.extract_strided_slice %5 {offsets = [0, 4], sizes = [64, 1], strides = [1, 1]} : vector<64x12xf32> to vector<64x1xf32>
    %106 = vector.extract_strided_slice %5 {offsets = [0, 5], sizes = [64, 1], strides = [1, 1]} : vector<64x12xf32> to vector<64x1xf32>
    %cst_69 = arith.constant dense<0.000000e+00> : vector<64xf32>
    %107 = vector.multi_reduction <add>, %104, %cst_69 [1] : vector<64x256xf32> to vector<64xf32>
    %108 = vector.shape_cast %107 : vector<64xf32> to vector<64x1xf32>
    %cst_70 = arith.constant 2.560000e+02 : f32
    %109 = vector.broadcast %cst_70 : f32 to vector<64x1xf32>
    %110 = arith.divf %108, %109 : vector<64x1xf32>
    %111 = arith.mulf %104, %104 : vector<64x256xf32>
    %cst_71 = arith.constant dense<0.000000e+00> : vector<64xf32>
    %112 = vector.multi_reduction <add>, %111, %cst_71 [1] : vector<64x256xf32> to vector<64xf32>
    %113 = vector.shape_cast %112 : vector<64xf32> to vector<64x1xf32>
    %cst_72 = arith.constant 2.560000e+02 : f32
    %114 = vector.broadcast %cst_72 : f32 to vector<64x1xf32>
    %115 = arith.divf %113, %114 : vector<64x1xf32>
    %116 = arith.mulf %110, %110 : vector<64x1xf32>
    %117 = arith.subf %115, %116 : vector<64x1xf32>
    %cst_73 = arith.constant 0.000000e+00 : f32
    %118 = vector.broadcast %cst_73 : f32 to vector<64x1xf32>
    %119 = arith.maximumf %117, %118 : vector<64x1xf32>
    %cst_74 = arith.constant 9.99999974E-6 : f32
    %120 = vector.broadcast %cst_74 : f32 to vector<64x1xf32>
    %121 = arith.addf %119, %120 : vector<64x1xf32>
    %122 = math.rsqrt %121 : vector<64x1xf32>
    %123 = arith.mulf %105, %122 : vector<64x1xf32>
    %124 = arith.mulf %110, %123 : vector<64x1xf32>
    %125 = arith.subf %106, %124 : vector<64x1xf32>
    %126 = vector.broadcast %123 : vector<64x1xf32> to vector<64x256xf32>
    %127 = arith.mulf %104, %126 : vector<64x256xf32>
    %128 = vector.broadcast %125 : vector<64x1xf32> to vector<64x256xf32>
    %129 = arith.addf %127, %128 : vector<64x256xf32>
    %cst_75 = arith.constant 0.000000e+00 : f32
    %130 = vector.broadcast %cst_75 : f32 to vector<64x256xf32>
    %131 = arith.cmpf oge, %129, %130 : vector<64x256xf32>
    %cst_76 = arith.constant 0.00999999977 : f32
    %132 = vector.broadcast %cst_76 : f32 to vector<64x256xf32>
    %133 = arith.mulf %132, %129 : vector<64x256xf32>
    %134 = arith.select %131, %129, %133 : vector<64x256xi1>, vector<64x256xf32>
    %c0_77 = arith.constant 0 : index
    %c128_78 = arith.constant 128 : index
    %135 = vector.load %arg6[%c0_77, %c128_78] : memref<64x512xf32, #tpu.memory_space<vmem>>, vector<64x256xf32>
    tpu.vector_store %arg6[%c0_77, %c128_78], %134 {strides = array<i32>} : memref<64x512xf32, #tpu.memory_space<vmem>>, vector<64x256xf32>,
    %c1_79 = arith.constant 1 : index
    %c0_80 = arith.constant 0 : index
    %c0_81 = arith.constant 0 : index
    %c0_82 = arith.constant 0 : index
    %136 = vector.load %arg2[%c1_79, %c0_80, %c0_81, %c0_82] : memref<6x3x64x64xf32, #tpu.memory_space<vmem>>, vector<1x1x64x64xf32>
    %137 = vector.shape_cast %136 : vector<1x1x64x64xf32> to vector<64x64xf32>
    %c0_83 = arith.constant 0 : index
    %c125 = arith.constant 125 : index
    %138 = vector.load %arg6[%c0_83, %c125] : memref<64x512xf32, #tpu.memory_space<vmem>>, vector<64x256xf32>
    %cst_84 = arith.constant dense<0.000000e+00> : vector<64x256xf32>
    %139 = tpu.matmul %137, %138, %cst_84 {dimension_numbers = #tpu.dot_dimension_numbers<[1], [0], [0], [1], [0, 0, 1, 1], [], []>} : vector<64x64xf32>, vector<64x256xf32>, vector<64x256xf32> -> vector<64x256xf32>
    %c1_85 = arith.constant 1 : index
    %c1_86 = arith.constant 1 : index
    %c0_87 = arith.constant 0 : index
    %c0_88 = arith.constant 0 : index
    %140 = vector.load %arg2[%c1_85, %c1_86, %c0_87, %c0_88] : memref<6x3x64x64xf32, #tpu.memory_space<vmem>>, vector<1x1x64x64xf32>
    %141 = vector.shape_cast %140 : vector<1x1x64x64xf32> to vector<64x64xf32>
    %c0_89 = arith.constant 0 : index
    %c128_90 = arith.constant 128 : index
    %142 = vector.load %arg6[%c0_89, %c128_90] : memref<64x512xf32, #tpu.memory_space<vmem>>, vector<64x256xf32>
    %cst_91 = arith.constant dense<0.000000e+00> : vector<64x256xf32>
    %143 = tpu.matmul %141, %142, %cst_91 {dimension_numbers = #tpu.dot_dimension_numbers<[1], [0], [0], [1], [0, 0, 1, 1], [], []>} : vector<64x64xf32>, vector<64x256xf32>, vector<64x256xf32> -> vector<64x256xf32>
    %144 = arith.addf %139, %143 : vector<64x256xf32>
    %c1_92 = arith.constant 1 : index
    %c2_93 = arith.constant 2 : index
    %c0_94 = arith.constant 0 : index
    %c0_95 = arith.constant 0 : index
    %145 = vector.load %arg2[%c1_92, %c2_93, %c0_94, %c0_95] : memref<6x3x64x64xf32, #tpu.memory_space<vmem>>, vector<1x1x64x64xf32>
    %146 = vector.shape_cast %145 : vector<1x1x64x64xf32> to vector<64x64xf32>
    %c0_96 = arith.constant 0 : index
    %c131 = arith.constant 131 : index
    %147 = vector.load %arg6[%c0_96, %c131] : memref<64x512xf32, #tpu.memory_space<vmem>>, vector<64x256xf32>
    %cst_97 = arith.constant dense<0.000000e+00> : vector<64x256xf32>
    %148 = tpu.matmul %146, %147, %cst_97 {dimension_numbers = #tpu.dot_dimension_numbers<[1], [0], [0], [1], [0, 0, 1, 1], [], []>} : vector<64x64xf32>, vector<64x256xf32>, vector<64x256xf32> -> vector<64x256xf32>
    %149 = arith.addf %144, %148 : vector<64x256xf32>
    %c0_98 = arith.constant 0 : index
    %c1_99 = arith.constant 1 : index
    %150 = vector.load %arg3[%c0_98, %c1_99] : memref<64x6xf32, #tpu.memory_space<vmem>>, vector<64x1xf32>
    %151 = vector.broadcast %150 : vector<64x1xf32> to vector<64x256xf32>
    %152 = arith.addf %149, %151 : vector<64x256xf32>
    %153 = vector.extract_strided_slice %5 {offsets = [0, 6], sizes = [64, 1], strides = [1, 1]} : vector<64x12xf32> to vector<64x1xf32>
    %154 = vector.extract_strided_slice %5 {offsets = [0, 7], sizes = [64, 1], strides = [1, 1]} : vector<64x12xf32> to vector<64x1xf32>
    %cst_100 = arith.constant dense<0.000000e+00> : vector<64xf32>
    %155 = vector.multi_reduction <add>, %152, %cst_100 [1] : vector<64x256xf32> to vector<64xf32>
    %156 = vector.shape_cast %155 : vector<64xf32> to vector<64x1xf32>
    %cst_101 = arith.constant 2.560000e+02 : f32
    %157 = vector.broadcast %cst_101 : f32 to vector<64x1xf32>
    %158 = arith.divf %156, %157 : vector<64x1xf32>
    %159 = arith.mulf %152, %152 : vector<64x256xf32>
    %cst_102 = arith.constant dense<0.000000e+00> : vector<64xf32>
    %160 = vector.multi_reduction <add>, %159, %cst_102 [1] : vector<64x256xf32> to vector<64xf32>
    %161 = vector.shape_cast %160 : vector<64xf32> to vector<64x1xf32>
    %cst_103 = arith.constant 2.560000e+02 : f32
    %162 = vector.broadcast %cst_103 : f32 to vector<64x1xf32>
    %163 = arith.divf %161, %162 : vector<64x1xf32>
    %164 = arith.mulf %158, %158 : vector<64x1xf32>
    %165 = arith.subf %163, %164 : vector<64x1xf32>
    %cst_104 = arith.constant 0.000000e+00 : f32
    %166 = vector.broadcast %cst_104 : f32 to vector<64x1xf32>
    %167 = arith.maximumf %165, %166 : vector<64x1xf32>
    %cst_105 = arith.constant 9.99999974E-6 : f32
    %168 = vector.broadcast %cst_105 : f32 to vector<64x1xf32>
    %169 = arith.addf %167, %168 : vector<64x1xf32>
    %170 = math.rsqrt %169 : vector<64x1xf32>
    %171 = arith.mulf %153, %170 : vector<64x1xf32>
    %172 = arith.mulf %158, %171 : vector<64x1xf32>
    %173 = arith.subf %154, %172 : vector<64x1xf32>
    %174 = vector.broadcast %171 : vector<64x1xf32> to vector<64x256xf32>
    %175 = arith.mulf %152, %174 : vector<64x256xf32>
    %176 = vector.broadcast %173 : vector<64x1xf32> to vector<64x256xf32>
    %177 = arith.addf %175, %176 : vector<64x256xf32>
    %cst_106 = arith.constant 0.000000e+00 : f32
    %178 = vector.broadcast %cst_106 : f32 to vector<64x256xf32>
    %179 = arith.cmpf oge, %177, %178 : vector<64x256xf32>
    %cst_107 = arith.constant 0.00999999977 : f32
    %180 = vector.broadcast %cst_107 : f32 to vector<64x256xf32>
    %181 = arith.mulf %180, %177 : vector<64x256xf32>
    %182 = arith.select %179, %177, %181 : vector<64x256xi1>, vector<64x256xf32>
    %c0_108 = arith.constant 0 : index
    %c128_109 = arith.constant 128 : index
    %183 = vector.load %arg6[%c0_108, %c128_109] : memref<64x512xf32, #tpu.memory_space<vmem>>, vector<64x256xf32>
    tpu.vector_store %arg6[%c0_108, %c128_109], %182 {strides = array<i32>} : memref<64x512xf32, #tpu.memory_space<vmem>>, vector<64x256xf32>,
    %c4 = arith.constant 4 : index
    %c0_110 = arith.constant 0 : index
    %c0_111 = arith.constant 0 : index
    %c0_112 = arith.constant 0 : index
    %184 = vector.load %arg2[%c4, %c0_110, %c0_111, %c0_112] : memref<6x3x64x64xf32, #tpu.memory_space<vmem>>, vector<1x1x64x64xf32>
    %185 = vector.shape_cast %184 : vector<1x1x64x64xf32> to vector<64x64xf32>
    %c0_113 = arith.constant 0 : index
    %c127_114 = arith.constant 127 : index
    %186 = vector.load %arg6[%c0_113, %c127_114] : memref<64x512xf32, #tpu.memory_space<vmem>>, vector<64x256xf32>
    %cst_115 = arith.constant dense<0.000000e+00> : vector<64x256xf32>
    %187 = tpu.matmul %185, %186, %cst_115 {dimension_numbers = #tpu.dot_dimension_numbers<[1], [0], [0], [1], [0, 0, 1, 1], [], []>} : vector<64x64xf32>, vector<64x256xf32>, vector<64x256xf32> -> vector<64x256xf32>
    %c4_116 = arith.constant 4 : index
    %c1_117 = arith.constant 1 : index
    %c0_118 = arith.constant 0 : index
    %c0_119 = arith.constant 0 : index
    %188 = vector.load %arg2[%c4_116, %c1_117, %c0_118, %c0_119] : memref<6x3x64x64xf32, #tpu.memory_space<vmem>>, vector<1x1x64x64xf32>
    %189 = vector.shape_cast %188 : vector<1x1x64x64xf32> to vector<64x64xf32>
    %c0_120 = arith.constant 0 : index
    %c128_121 = arith.constant 128 : index
    %190 = vector.load %arg6[%c0_120, %c128_121] : memref<64x512xf32, #tpu.memory_space<vmem>>, vector<64x256xf32>
    %cst_122 = arith.constant dense<0.000000e+00> : vector<64x256xf32>
    %191 = tpu.matmul %189, %190, %cst_122 {dimension_numbers = #tpu.dot_dimension_numbers<[1], [0], [0], [1], [0, 0, 1, 1], [], []>} : vector<64x64xf32>, vector<64x256xf32>, vector<64x256xf32> -> vector<64x256xf32>
    %192 = arith.addf %187, %191 : vector<64x256xf32>
    %c4_123 = arith.constant 4 : index
    %c2_124 = arith.constant 2 : index
    %c0_125 = arith.constant 0 : index
    %c0_126 = arith.constant 0 : index
    %193 = vector.load %arg2[%c4_123, %c2_124, %c0_125, %c0_126] : memref<6x3x64x64xf32, #tpu.memory_space<vmem>>, vector<1x1x64x64xf32>
    %194 = vector.shape_cast %193 : vector<1x1x64x64xf32> to vector<64x64xf32>
    %c0_127 = arith.constant 0 : index
    %c129_128 = arith.constant 129 : index
    %195 = vector.load %arg6[%c0_127, %c129_128] : memref<64x512xf32, #tpu.memory_space<vmem>>, vector<64x256xf32>
    %cst_129 = arith.constant dense<0.000000e+00> : vector<64x256xf32>
    %196 = tpu.matmul %194, %195, %cst_129 {dimension_numbers = #tpu.dot_dimension_numbers<[1], [0], [0], [1], [0, 0, 1, 1], [], []>} : vector<64x64xf32>, vector<64x256xf32>, vector<64x256xf32> -> vector<64x256xf32>
    %197 = arith.addf %192, %196 : vector<64x256xf32>
    %c0_130 = arith.constant 0 : index
    %c4_131 = arith.constant 4 : index
    %198 = vector.load %arg3[%c0_130, %c4_131] : memref<64x6xf32, #tpu.memory_space<vmem>>, vector<64x1xf32>
    %199 = vector.broadcast %198 : vector<64x1xf32> to vector<64x256xf32>
    %200 = arith.addf %197, %199 : vector<64x256xf32>
    %201 = arith.addf %104, %200 : vector<64x256xf32>
    %202 = vector.extract_strided_slice %5 {offsets = [0, 8], sizes = [64, 1], strides = [1, 1]} : vector<64x12xf32> to vector<64x1xf32>
    %203 = vector.extract_strided_slice %5 {offsets = [0, 9], sizes = [64, 1], strides = [1, 1]} : vector<64x12xf32> to vector<64x1xf32>
    %cst_132 = arith.constant dense<0.000000e+00> : vector<64xf32>
    %204 = vector.multi_reduction <add>, %201, %cst_132 [1] : vector<64x256xf32> to vector<64xf32>
    %205 = vector.shape_cast %204 : vector<64xf32> to vector<64x1xf32>
    %cst_133 = arith.constant 2.560000e+02 : f32
    %206 = vector.broadcast %cst_133 : f32 to vector<64x1xf32>
    %207 = arith.divf %205, %206 : vector<64x1xf32>
    %208 = arith.mulf %201, %201 : vector<64x256xf32>
    %cst_134 = arith.constant dense<0.000000e+00> : vector<64xf32>
    %209 = vector.multi_reduction <add>, %208, %cst_134 [1] : vector<64x256xf32> to vector<64xf32>
    %210 = vector.shape_cast %209 : vector<64xf32> to vector<64x1xf32>
    %cst_135 = arith.constant 2.560000e+02 : f32
    %211 = vector.broadcast %cst_135 : f32 to vector<64x1xf32>
    %212 = arith.divf %210, %211 : vector<64x1xf32>
    %213 = arith.mulf %207, %207 : vector<64x1xf32>
    %214 = arith.subf %212, %213 : vector<64x1xf32>
    %cst_136 = arith.constant 0.000000e+00 : f32
    %215 = vector.broadcast %cst_136 : f32 to vector<64x1xf32>
    %216 = arith.maximumf %214, %215 : vector<64x1xf32>
    %cst_137 = arith.constant 9.99999974E-6 : f32
    %217 = vector.broadcast %cst_137 : f32 to vector<64x1xf32>
    %218 = arith.addf %216, %217 : vector<64x1xf32>
    %219 = math.rsqrt %218 : vector<64x1xf32>
    %220 = arith.mulf %202, %219 : vector<64x1xf32>
    %221 = arith.mulf %207, %220 : vector<64x1xf32>
    %222 = arith.subf %203, %221 : vector<64x1xf32>
    %223 = vector.broadcast %220 : vector<64x1xf32> to vector<64x256xf32>
    %224 = arith.mulf %201, %223 : vector<64x256xf32>
    %225 = vector.broadcast %222 : vector<64x1xf32> to vector<64x256xf32>
    %226 = arith.addf %224, %225 : vector<64x256xf32>
    %cst_138 = arith.constant 0.000000e+00 : f32
    %227 = vector.broadcast %cst_138 : f32 to vector<64x256xf32>
    %228 = arith.cmpf oge, %226, %227 : vector<64x256xf32>
    %cst_139 = arith.constant 0.00999999977 : f32
    %229 = vector.broadcast %cst_139 : f32 to vector<64x256xf32>
    %230 = arith.mulf %229, %226 : vector<64x256xf32>
    %231 = arith.select %228, %226, %230 : vector<64x256xi1>, vector<64x256xf32>
    %c0_140 = arith.constant 0 : index
    %c128_141 = arith.constant 128 : index
    %232 = vector.load %arg6[%c0_140, %c128_141] : memref<64x512xf32, #tpu.memory_space<vmem>>, vector<64x256xf32>
    tpu.vector_store %arg6[%c0_140, %c128_141], %231 {strides = array<i32>} : memref<64x512xf32, #tpu.memory_space<vmem>>, vector<64x256xf32>,
    %c2_142 = arith.constant 2 : index
    %c0_143 = arith.constant 0 : index
    %c0_144 = arith.constant 0 : index
    %c0_145 = arith.constant 0 : index
    %233 = vector.load %arg2[%c2_142, %c0_143, %c0_144, %c0_145] : memref<6x3x64x64xf32, #tpu.memory_space<vmem>>, vector<1x1x64x64xf32>
    %234 = vector.shape_cast %233 : vector<1x1x64x64xf32> to vector<64x64xf32>
    %c0_146 = arith.constant 0 : index
    %c123 = arith.constant 123 : index
    %235 = vector.load %arg6[%c0_146, %c123] : memref<64x512xf32, #tpu.memory_space<vmem>>, vector<64x256xf32>
    %cst_147 = arith.constant dense<0.000000e+00> : vector<64x256xf32>
    %236 = tpu.matmul %234, %235, %cst_147 {dimension_numbers = #tpu.dot_dimension_numbers<[1], [0], [0], [1], [0, 0, 1, 1], [], []>} : vector<64x64xf32>, vector<64x256xf32>, vector<64x256xf32> -> vector<64x256xf32>
    %c2_148 = arith.constant 2 : index
    %c1_149 = arith.constant 1 : index
    %c0_150 = arith.constant 0 : index
    %c0_151 = arith.constant 0 : index
    %237 = vector.load %arg2[%c2_148, %c1_149, %c0_150, %c0_151] : memref<6x3x64x64xf32, #tpu.memory_space<vmem>>, vector<1x1x64x64xf32>
    %238 = vector.shape_cast %237 : vector<1x1x64x64xf32> to vector<64x64xf32>
    %c0_152 = arith.constant 0 : index
    %c128_153 = arith.constant 128 : index
    %239 = vector.load %arg6[%c0_152, %c128_153] : memref<64x512xf32, #tpu.memory_space<vmem>>, vector<64x256xf32>
    %cst_154 = arith.constant dense<0.000000e+00> : vector<64x256xf32>
    %240 = tpu.matmul %238, %239, %cst_154 {dimension_numbers = #tpu.dot_dimension_numbers<[1], [0], [0], [1], [0, 0, 1, 1], [], []>} : vector<64x64xf32>, vector<64x256xf32>, vector<64x256xf32> -> vector<64x256xf32>
    %241 = arith.addf %236, %240 : vector<64x256xf32>
    %c2_155 = arith.constant 2 : index
    %c2_156 = arith.constant 2 : index
    %c0_157 = arith.constant 0 : index
    %c0_158 = arith.constant 0 : index
    %242 = vector.load %arg2[%c2_155, %c2_156, %c0_157, %c0_158] : memref<6x3x64x64xf32, #tpu.memory_space<vmem>>, vector<1x1x64x64xf32>
    %243 = vector.shape_cast %242 : vector<1x1x64x64xf32> to vector<64x64xf32>
    %c0_159 = arith.constant 0 : index
    %c133 = arith.constant 133 : index
    %244 = vector.load %arg6[%c0_159, %c133] : memref<64x512xf32, #tpu.memory_space<vmem>>, vector<64x256xf32>
    %cst_160 = arith.constant dense<0.000000e+00> : vector<64x256xf32>
    %245 = tpu.matmul %243, %244, %cst_160 {dimension_numbers = #tpu.dot_dimension_numbers<[1], [0], [0], [1], [0, 0, 1, 1], [], []>} : vector<64x64xf32>, vector<64x256xf32>, vector<64x256xf32> -> vector<64x256xf32>
    %246 = arith.addf %241, %245 : vector<64x256xf32>
    %c0_161 = arith.constant 0 : index
    %c2_162 = arith.constant 2 : index
    %247 = vector.load %arg3[%c0_161, %c2_162] : memref<64x6xf32, #tpu.memory_space<vmem>>, vector<64x1xf32>
    %248 = vector.broadcast %247 : vector<64x1xf32> to vector<64x256xf32>
    %249 = arith.addf %246, %248 : vector<64x256xf32>
    %250 = vector.extract_strided_slice %5 {offsets = [0, 10], sizes = [64, 1], strides = [1, 1]} : vector<64x12xf32> to vector<64x1xf32>
    %251 = vector.extract_strided_slice %5 {offsets = [0, 11], sizes = [64, 1], strides = [1, 1]} : vector<64x12xf32> to vector<64x1xf32>
    %cst_163 = arith.constant dense<0.000000e+00> : vector<64xf32>
    %252 = vector.multi_reduction <add>, %249, %cst_163 [1] : vector<64x256xf32> to vector<64xf32>
    %253 = vector.shape_cast %252 : vector<64xf32> to vector<64x1xf32>
    %cst_164 = arith.constant 2.560000e+02 : f32
    %254 = vector.broadcast %cst_164 : f32 to vector<64x1xf32>
    %255 = arith.divf %253, %254 : vector<64x1xf32>
    %256 = arith.mulf %249, %249 : vector<64x256xf32>
    %cst_165 = arith.constant dense<0.000000e+00> : vector<64xf32>
    %257 = vector.multi_reduction <add>, %256, %cst_165 [1] : vector<64x256xf32> to vector<64xf32>
    %258 = vector.shape_cast %257 : vector<64xf32> to vector<64x1xf32>
    %cst_166 = arith.constant 2.560000e+02 : f32
    %259 = vector.broadcast %cst_166 : f32 to vector<64x1xf32>
    %260 = arith.divf %258, %259 : vector<64x1xf32>
    %261 = arith.mulf %255, %255 : vector<64x1xf32>
    %262 = arith.subf %260, %261 : vector<64x1xf32>
    %cst_167 = arith.constant 0.000000e+00 : f32
    %263 = vector.broadcast %cst_167 : f32 to vector<64x1xf32>
    %264 = arith.maximumf %262, %263 : vector<64x1xf32>
    %cst_168 = arith.constant 9.99999974E-6 : f32
    %265 = vector.broadcast %cst_168 : f32 to vector<64x1xf32>
    %266 = arith.addf %264, %265 : vector<64x1xf32>
    %267 = math.rsqrt %266 : vector<64x1xf32>
    %268 = arith.mulf %250, %267 : vector<64x1xf32>
    %269 = arith.mulf %255, %268 : vector<64x1xf32>
    %270 = arith.subf %251, %269 : vector<64x1xf32>
    %271 = vector.broadcast %268 : vector<64x1xf32> to vector<64x256xf32>
    %272 = arith.mulf %249, %271 : vector<64x256xf32>
    %273 = vector.broadcast %270 : vector<64x1xf32> to vector<64x256xf32>
    %274 = arith.addf %272, %273 : vector<64x256xf32>
    %cst_169 = arith.constant 0.000000e+00 : f32
    %275 = vector.broadcast %cst_169 : f32 to vector<64x256xf32>
    %276 = arith.cmpf oge, %274, %275 : vector<64x256xf32>
    %cst_170 = arith.constant 0.00999999977 : f32
    %277 = vector.broadcast %cst_170 : f32 to vector<64x256xf32>
    %278 = arith.mulf %277, %274 : vector<64x256xf32>
    %279 = arith.select %276, %274, %278 : vector<64x256xi1>, vector<64x256xf32>
    %c0_171 = arith.constant 0 : index
    %c128_172 = arith.constant 128 : index
    %280 = vector.load %arg6[%c0_171, %c128_172] : memref<64x512xf32, #tpu.memory_space<vmem>>, vector<64x256xf32>
    tpu.vector_store %arg6[%c0_171, %c128_172], %279 {strides = array<i32>} : memref<64x512xf32, #tpu.memory_space<vmem>>, vector<64x256xf32>,
    %c5 = arith.constant 5 : index
    %c0_173 = arith.constant 0 : index
    %c0_174 = arith.constant 0 : index
    %c0_175 = arith.constant 0 : index
    %281 = vector.load %arg2[%c5, %c0_173, %c0_174, %c0_175] : memref<6x3x64x64xf32, #tpu.memory_space<vmem>>, vector<1x1x64x64xf32>
    %282 = vector.shape_cast %281 : vector<1x1x64x64xf32> to vector<64x64xf32>
    %c0_176 = arith.constant 0 : index
    %c127_177 = arith.constant 127 : index
    %283 = vector.load %arg6[%c0_176, %c127_177] : memref<64x512xf32, #tpu.memory_space<vmem>>, vector<64x256xf32>
    %cst_178 = arith.constant dense<0.000000e+00> : vector<64x256xf32>
    %284 = tpu.matmul %282, %283, %cst_178 {dimension_numbers = #tpu.dot_dimension_numbers<[1], [0], [0], [1], [0, 0, 1, 1], [], []>} : vector<64x64xf32>, vector<64x256xf32>, vector<64x256xf32> -> vector<64x256xf32>
    %c5_179 = arith.constant 5 : index
    %c1_180 = arith.constant 1 : index
    %c0_181 = arith.constant 0 : index
    %c0_182 = arith.constant 0 : index
    %285 = vector.load %arg2[%c5_179, %c1_180, %c0_181, %c0_182] : memref<6x3x64x64xf32, #tpu.memory_space<vmem>>, vector<1x1x64x64xf32>
    %286 = vector.shape_cast %285 : vector<1x1x64x64xf32> to vector<64x64xf32>
    %c0_183 = arith.constant 0 : index
    %c128_184 = arith.constant 128 : index
    %287 = vector.load %arg6[%c0_183, %c128_184] : memref<64x512xf32, #tpu.memory_space<vmem>>, vector<64x256xf32>
    %cst_185 = arith.constant dense<0.000000e+00> : vector<64x256xf32>
    %288 = tpu.matmul %286, %287, %cst_185 {dimension_numbers = #tpu.dot_dimension_numbers<[1], [0], [0], [1], [0, 0, 1, 1], [], []>} : vector<64x64xf32>, vector<64x256xf32>, vector<64x256xf32> -> vector<64x256xf32>
    %289 = arith.addf %284, %288 : vector<64x256xf32>
    %c5_186 = arith.constant 5 : index
    %c2_187 = arith.constant 2 : index
    %c0_188 = arith.constant 0 : index
    %c0_189 = arith.constant 0 : index
    %290 = vector.load %arg2[%c5_186, %c2_187, %c0_188, %c0_189] : memref<6x3x64x64xf32, #tpu.memory_space<vmem>>, vector<1x1x64x64xf32>
    %291 = vector.shape_cast %290 : vector<1x1x64x64xf32> to vector<64x64xf32>
    %c0_190 = arith.constant 0 : index
    %c129_191 = arith.constant 129 : index
    %292 = vector.load %arg6[%c0_190, %c129_191] : memref<64x512xf32, #tpu.memory_space<vmem>>, vector<64x256xf32>
    %cst_192 = arith.constant dense<0.000000e+00> : vector<64x256xf32>
    %293 = tpu.matmul %291, %292, %cst_192 {dimension_numbers = #tpu.dot_dimension_numbers<[1], [0], [0], [1], [0, 0, 1, 1], [], []>} : vector<64x64xf32>, vector<64x256xf32>, vector<64x256xf32> -> vector<64x256xf32>
    %294 = arith.addf %289, %293 : vector<64x256xf32>
    %c0_193 = arith.constant 0 : index
    %c5_194 = arith.constant 5 : index
    %295 = vector.load %arg3[%c0_193, %c5_194] : memref<64x6xf32, #tpu.memory_space<vmem>>, vector<64x1xf32>
    %296 = vector.broadcast %295 : vector<64x1xf32> to vector<64x256xf32>
    %297 = arith.addf %294, %296 : vector<64x256xf32>
    %298 = arith.addf %201, %297 : vector<64x256xf32>
    %c0_195 = arith.constant 0 : index
    %c0_196 = arith.constant 0 : index
    %c0_197 = arith.constant 0 : index
    %299 = vector.load %arg5[%c0_195, %c0_196, %c0_197] : memref<1x64x256xf32, #tpu.memory_space<vmem>>, vector<1x64x256xf32>
    %300 = vector.shape_cast %299 : vector<1x64x256xf32> to vector<64x256xf32>
    %301 = vector.shape_cast %298 : vector<64x256xf32> to vector<1x64x256xf32>
    tpu.vector_store %arg5[%c0_195, %c0_196, %c0_197], %301 {strides = array<i32>} : memref<1x64x256xf32, #tpu.memory_space<vmem>>, vector<1x64x256xf32>,
    return
  }
  func.func @transform_0(%arg0: i32) -> (i32, i32, i32) {
    %c0_i32 = arith.constant 0 : i32
    %c0_i32_0 = arith.constant 0 : i32
    %c0_i32_1 = arith.constant 0 : i32
    return %arg0, %c0_i32, %c0_i32_0 : i32, i32, i32
  }
  func.func @transform_1(%arg0: i32) -> (i32, i32, i32, i32) {
    %c0_i32 = arith.constant 0 : i32
    %c0_i32_0 = arith.constant 0 : i32
    %c0_i32_1 = arith.constant 0 : i32
    %c0_i32_2 = arith.constant 0 : i32
    %c0_i32_3 = arith.constant 0 : i32
    return %c0_i32, %c0_i32_0, %c0_i32_1, %c0_i32_2 : i32, i32, i32, i32
  }
  func.func @transform_2(%arg0: i32) -> (i32, i32) {
    %c0_i32 = arith.constant 0 : i32
    %c0_i32_0 = arith.constant 0 : i32
    %c0_i32_1 = arith.constant 0 : i32
    return %c0_i32, %c0_i32_0 : i32, i32
  }
  func.func @transform_3(%arg0: i32) -> (i32, i32, i32) {
    %c0_i32 = arith.constant 0 : i32
    %c0_i32_0 = arith.constant 0 : i32
    %c0_i32_1 = arith.constant 0 : i32
    return %arg0, %c0_i32, %c0_i32_0 : i32, i32, i32
  }
  func.func @transform_4(%arg0: i32) -> (i32, i32, i32) {
    %c0_i32 = arith.constant 0 : i32
    %c0_i32_0 = arith.constant 0 : i32
    %c0_i32_1 = arith.constant 0 : i32
    return %arg0, %c0_i32, %c0_i32_0 : i32, i32, i32
  }
}

</mosaic_0001>

<llo_original>
// kernel: tpu_custom_call.1
$region0: #{tpu_custom_call.1}
  #allocation0 [shape = 'u32[]', space=smem, size = 0x4, offset = 0x4, fixed_abs, tag = 'smem constant byte address 0x4 - core index']
  #allocation1 [shape = 'u32[144,128]{1,0:T(1,128)}', space=vmem, size = 0x12000, scoped, tag = 'internal scratch']
  #allocation2 [shape = 'f32[64,512]{1,0:T(8,128)}', space=vmem, size = 0x20000, scoped, tag = 'scratch operand']
  %s0 = inlined_call_operand.hbm [shape: f32[2,64,256], index: 0, kind: input, shape index: {}]
  %s1 = inlined_call_operand.hbm [shape: f32[6,3,64,64], index: 1, kind: input, shape index: {}]
  %s2 = inlined_call_operand.vmem [shape: f32[64,6], index: 2, kind: input, shape index: {}]
  %s3 = inlined_call_operand.vmem [shape: f32[2,64,12], index: 3, kind: input, shape index: {}]
  %s4 = inlined_call_operand.hbm [shape: f32[2,64,256], index: 4, kind: output, shape index: {}]
  %s5 = sld [smem:[#allocation0]]
  $region57: #{tpu_custom_call.1} parent=0
    _
  %s7 = ssub.s32 1, %s5
  %s8 = scalar_select 0, %s7, %s5
  $region1: #{tpu_custom_call.1} parent=0
    #allocation3 [shape = 'u8[131072]{0}', space=vmem, size = 0x20000, scoped, tag = 'input window, operand 0']
    #allocation4 [shape = 's32[2]{0}', space=sflag, size = 0x8, scoped, tag = 'scoped memory for tpu_custom_call.1']
    #allocation5 [shape = 's32[2]{0}', space=sflag, size = 0x8, scoped, tag = 'scoped memory for tpu_custom_call.1']
    #allocation6 [shape = 'u8[589824]{0}', space=vmem, size = 0x90000, scoped, tag = 'input window, operand 1, single buffered']
    #allocation7 [shape = 's32[1]{0}', space=sflag, size = 0x4, scoped, tag = 'scoped memory for tpu_custom_call.1']
    #allocation8 [shape = 'u8[131072]{0}', space=vmem, size = 0x20000, scoped, tag = 'output window, operand 0']
    %9 = vsyncpa [#allocation4], 0
    %s10 = scalar_lea.sflag [#allocation4], 1
    %11 = vsyncpa %s10, 0
    %12 = vsyncpa [#allocation7], 0
    %13 = vsyncpa [#allocation5], 0
    %s14 = scalar_lea.sflag [#allocation5], 1
    %15 = vsyncpa %s14, 0
    loop: start=0, step=1, limit=4
    $region2: #{tpu_custom_call.1} parent=1 // loop_pre_header
      _
    $region3: #{tpu_custom_call.1} parent=1 // loop_header
      %s17 = sphi 0, %s21
      %p18 = scmp.ge.s32.totalorder %s17, 4
      %s27 = sphi 0, %s29
      %s30 = sphi 0, %s27
      %s31 = sphi 0, %s30
      %s47 = sphi 0, %s31
      %s51 = sphi 0, %s51
      %s53 = sphi 0, %s51
      %s54 = sphi 0, %s53
      %s68 = sphi 0, %s54
      %s72 = sphi 0, %s72
      %s74 = sphi 0, %s72
      %s75 = sphi 0, %s74
      %s89 = sphi 0, %s75
      %s95 = sphi 0, %s97
      %s98 = sphi 0, %s95
      %s99 = sphi 0, %s98
      %s115 = sphi 0, %s99
      %s121 = sphi 0, %s123
      %s124 = sphi 0, %s121
      %s125 = sphi 0, %s124
      %s141 = sphi 0, %s125
    $region4: #{tpu_custom_call.1} parent=1 // loop_header_branch
      %20 = sbr.rel (%p18) target = $region8
    $region5: #{tpu_custom_call.1} parent=1 // loop_body
      %s22 = ssub.s32 %s17, 1
      %s23 = ssub.s32 %s17, 2
      %s24 = sadd.s32 %s17, 1
      %s25 = ssub.s32 %s17, %s24
      %p26 = scmp.eq.s32.totalorder %s25, 0
      %s28 = sadd.s32 %s27, 1
      %s29 = scalar_select %p26, %s27, %s28
      %p32 = pneg %p26
      %p33 = scmp.eq.s32.totalorder %s17, 1
      %p34 = por %p32, %p33
      %p35 = scmp.ne.s32.totalorder %s27, %s30
      %p36 = scmp.eq.s32.totalorder %s17, 0
      %p37 = por %p35, %p36
      %p38 = scmp.ne.s32.totalorder %s27, %s30
      %p39 = scmp.eq.s32.totalorder %s22, 1
      %p40 = por %p38, %p39
      %p41 = scmp.ne.s32.totalorder %s30, %s31
      %p42 = scmp.eq.s32.totalorder %s22, 0
      %p43 = por %p41, %p42
      %p44 = scmp.ne.s32.totalorder %s30, %s31
      %p45 = scmp.eq.s32.totalorder %s23, 1
      %p46 = por %p44, %p45
      %p48 = scmp.ne.s32.totalorder %s31, %s47
      %p49 = scmp.eq.s32.totalorder %s23, 0
      %p50 = por %p48, %p49
      %s52 = sadd.s32 %s51, 1
      %p55 = scmp.eq.s32.totalorder %s17, 1
      %p56 = scmp.ne.s32.totalorder %s51, %s53
      %p57 = scmp.eq.s32.totalorder %s17, 0
      %p58 = por %p56, %p57
      %p59 = scmp.ne.s32.totalorder %s51, %s53
      %p60 = scmp.eq.s32.totalorder %s22, 1
      %p61 = por %p59, %p60
      %p62 = scmp.ne.s32.totalorder %s53, %s54
      %p63 = scmp.eq.s32.totalorder %s22, 0
      %p64 = por %p62, %p63
      %p65 = scmp.ne.s32.totalorder %s53, %s54
      %p66 = scmp.eq.s32.totalorder %s23, 1
      %p67 = por %p65, %p66
      %p69 = scmp.ne.s32.totalorder %s54, %s68
      %p70 = scmp.eq.s32.totalorder %s23, 0
      %p71 = por %p69, %p70
      %s73 = sadd.s32 %s72, 1
      %p76 = scmp.eq.s32.totalorder %s17, 1
      %p77 = scmp.ne.s32.totalorder %s72, %s74
      %p78 = scmp.eq.s32.totalorder %s17, 0
      %p79 = por %p77, %p78
      %p80 = scmp.ne.s32.totalorder %s72, %s74
      %p81 = scmp.eq.s32.totalorder %s22, 1
      %p82 = por %p80, %p81
      %p83 = scmp.ne.s32.totalorder %s74, %s75
      %p84 = scmp.eq.s32.totalorder %s22, 0
      %p85 = por %p83, %p84
      %p86 = scmp.ne.s32.totalorder %s74, %s75
      %p87 = scmp.eq.s32.totalorder %s23, 1
      %p88 = por %p86, %p87
      %p90 = scmp.ne.s32.totalorder %s75, %s89
      %p91 = scmp.eq.s32.totalorder %s23, 0
      %p92 = por %p90, %p91
      %s93 = ssub.s32 %s17, %s24
      %p94 = scmp.eq.s32.totalorder %s93, 0
      %s96 = sadd.s32 %s95, 1
      %s97 = scalar_select %p94, %s95, %s96
      %p100 = pneg %p94
      %p101 = scmp.eq.s32.totalorder %s17, 1
      %p102 = por %p100, %p101
      %p103 = scmp.ne.s32.totalorder %s95, %s98
      %p104 = scmp.eq.s32.totalorder %s17, 0
      %p105 = por %p103, %p104
      %p106 = scmp.ne.s32.totalorder %s95, %s98
      %p107 = scmp.eq.s32.totalorder %s22, 1
      %p108 = por %p106, %p107
      %p109 = scmp.ne.s32.totalorder %s98, %s99
      %p110 = scmp.eq.s32.totalorder %s22, 0
      %p111 = por %p109, %p110
      %p112 = scmp.ne.s32.totalorder %s98, %s99
      %p113 = scmp.eq.s32.totalorder %s23, 1
      %p114 = por %p112, %p113
      %p116 = scmp.ne.s32.totalorder %s99, %s115
      %p117 = scmp.eq.s32.totalorder %s23, 0
      %p118 = por %p116, %p117
      %s119 = ssub.s32 %s17, %s24
      %p120 = scmp.eq.s32.totalorder %s119, 0
      %s122 = sadd.s32 %s121, 1
      %s123 = scalar_select %p120, %s121, %s122
      %p126 = pneg %p120
      %p127 = scmp.eq.s32.totalorder %s17, 1
      %p128 = por %p126, %p127
      %p129 = scmp.ne.s32.totalorder %s121, %s124
      %p130 = scmp.eq.s32.totalorder %s17, 0
      %p131 = por %p129, %p130
      %p132 = scmp.ne.s32.totalorder %s121, %s124
      %p133 = scmp.eq.s32.totalorder %s22, 1
      %p134 = por %p132, %p133
      %p135 = scmp.ne.s32.totalorder %s124, %s125
      %p136 = scmp.eq.s32.totalorder %s22, 0
      %p137 = por %p135, %p136
      %p138 = scmp.ne.s32.totalorder %s124, %s125
      %p139 = scmp.eq.s32.totalorder %s23, 1
      %p140 = por %p138, %p139
      %p142 = scmp.ne.s32.totalorder %s125, %s141
      %p143 = scmp.eq.s32.totalorder %s23, 0
      %p144 = por %p142, %p143
      %p145 = scmp.le.s32.totalorder 1, %s17
      %p146 = scmp.lt.s32.totalorder %s17, 3
      %p147 = pnand %p145, %p146
      %p148 = pneg %p147
      // Predicated region
      $region9: #{tpu_custom_call.1} parent=5 // pred_check
        _
      $region10: #{tpu_custom_call.1} parent=5 // pred_check_branch
        %150 = sbr.rel (%p147) target = $region12
      $region11: #{tpu_custom_call.1} parent=5 // pred_region
        %s151 = ssub.s32 %s17, 1
        // Predicated region
        $region13: #{tpu_custom_call.1} parent=11 // pred_check
          %p152 = pneg %p64
        $region14: #{tpu_custom_call.1} parent=11 // pred_check_branch
          %154 = sbr.rel (%p152) target = $region16
        $region15: #{tpu_custom_call.1} parent=11 // pred_region
          %s156 = ssub.s32 18432, 18432
          %157 = vsyncadd [#allocation7], %s156
          %s158 = sshll.u32 [#allocation6], 4
          %s159 = int_to_ptr.vmem [resolvable:$true] %s158
          %164 = dma.hbm_to_vmem [thread:$0]  %s1, 18432, %s159, [#allocation7], 128, 128, 8
        $region16: #{tpu_custom_call.1} parent=11 // pred_fallthru
          _
        // Predicated region
        $region17: #{tpu_custom_call.1} parent=11 // pred_check
          %p165 = pneg %p85
        $region18: #{tpu_custom_call.1} parent=11 // pred_check_branch
          %167 = sbr.rel (%p165) target = $region20
        $region19: #{tpu_custom_call.1} parent=11 // pred_region
          _
        $region20: #{tpu_custom_call.1} parent=11 // pred_fallthru
          _
      $region12: #{tpu_custom_call.1} parent=5 // pred_fallthru
        _
      %p168 = scmp.lt.s32.totalorder %s17, 2
      // Predicated region
      $region21: #{tpu_custom_call.1} parent=5 // pred_check
        %p169 = pneg %p168
      $region22: #{tpu_custom_call.1} parent=5 // pred_check_branch
        %171 = sbr.rel (%p169) target = $region24
      $region23: #{tpu_custom_call.1} parent=5 // pred_region
        // Predicated region
        $region25: #{tpu_custom_call.1} parent=23 // pred_check
          %p172 = pneg %p37
        $region26: #{tpu_custom_call.1} parent=23 // pred_check_branch
          %174 = sbr.rel (%p172) target = $region28
        $region27: #{tpu_custom_call.1} parent=23 // pred_region
          %s175 = sand.u32 %s27, 1
          %s176 = scalar_lea.sflag [#allocation4], %s175
          %s177 = sand.u32 %s27, 1
          %s178 = smul.addr %s177, 128
          %s179 = scalar_lea.vmem [#allocation3], %s178
          %s181 = ssub.s32 2048, 2048
          %182 = vsyncadd %s176, %s181
          %s183 = smul.addr %s17, 16
          %s184 = smul.addr %s183, 128
          %s185 = scalar_lea.hbm %s0, %s184
          %s186 = sshll.u32 %s179, 4
          %s187 = int_to_ptr.vmem [resolvable:$true] %s186
          %192 = dma.hbm_to_vmem [thread:$0]  %s185, 2048, %s187, %s176, 256, 256, 16
        $region28: #{tpu_custom_call.1} parent=23 // pred_fallthru
          _
        // Predicated region
        $region29: #{tpu_custom_call.1} parent=23 // pred_check
          %p193 = pneg %p105
        $region30: #{tpu_custom_call.1} parent=23 // pred_check_branch
          %195 = sbr.rel (%p193) target = $region32
        $region31: #{tpu_custom_call.1} parent=23 // pred_region
          %p196 = scmp.lt.s32.totalorder %s17, 1
          %s197 = scalar_select %p196, %s17, 1
          %s198 = smul.addr %s197, 8
          %s199 = smul.addr %s198, 8
          %s200 = scalar_lea.vmem %s3, %s199
        $region32: #{tpu_custom_call.1} parent=23 // pred_fallthru
          _
      $region24: #{tpu_custom_call.1} parent=5 // pred_fallthru
        _
      %p201 = scmp.le.s32.totalorder 1, %s17
      %p202 = scmp.lt.s32.totalorder %s17, 3
      %p203 = pnand %p201, %p202
      %p204 = pneg %p203
      // Predicated region
      $region33: #{tpu_custom_call.1} parent=5 // pred_check
        _
      $region34: #{tpu_custom_call.1} parent=5 // pred_check_branch
        %206 = sbr.rel (%p203) target = $region36
      $region35: #{tpu_custom_call.1} parent=5 // pred_region
        %s207 = ssub.s32 %s17, 1
        %s208 = sand.u32 %s30, 1
        %s209 = scalar_lea.sflag [#allocation4], %s208
        %s210 = sand.u32 %s30, 1
        %s211 = smul.addr %s210, 128
        %s212 = scalar_lea.vmem [#allocation3], %s211
        // Predicated region
        $region37: #{tpu_custom_call.1} parent=35 // pred_check
          %p213 = pneg %p43
        $region38: #{tpu_custom_call.1} parent=35 // pred_check_branch
          %215 = sbr.rel (%p213) target = $region40
        $region39: #{tpu_custom_call.1} parent=35 // pred_region
          %216 = dma.done %s209, 2048
        $region40: #{tpu_custom_call.1} parent=35 // pred_fallthru
          _
        // Predicated region
        $region41: #{tpu_custom_call.1} parent=35 // pred_check
          %p217 = pneg %p64
        $region42: #{tpu_custom_call.1} parent=35 // pred_check_branch
          %219 = sbr.rel (%p217) target = $region44
        $region43: #{tpu_custom_call.1} parent=35 // pred_region
          %220 = dma.done [#allocation7], 18432
        $region44: #{tpu_custom_call.1} parent=35 // pred_fallthru
          _
        %s221 = sand.u32 %s30, 1
        %s222 = scalar_lea.sflag [#allocation4], %s221
        %s223 = sand.u32 %s30, 1
        %s224 = smul.addr %s223, 128
        %s225 = scalar_lea.vmem [#allocation3], %s224
        %p226 = pneg %p43
        %p227 = pneg %p40
        %p228 = pneg %p64
        %p229 = pneg %p61
        %p230 = pneg %p85
        %p231 = pneg %p82
        %p232 = scmp.lt.s32.totalorder %s22, 1
        %s233 = scalar_select %p232, %s22, 1
        %s234 = smul.addr %s233, 8
        %s235 = smul.addr %s234, 8
        %s236 = scalar_lea.vmem %s3, %s235
        %p237 = pneg %p111
        %p238 = pneg %p108
        %p239 = pneg %p137
        %p240 = pneg %p134
        %s241 = sand.u32 %s124, 1
        %s242 = scalar_lea.sflag [#allocation5], %s241
        %s243 = sand.u32 %s124, 1
        %s244 = smul.addr %s243, 128
        %s245 = scalar_lea.vmem [#allocation8], %s244
        %p246 = scmp.lt.s32.totalorder %s22, 1
        %s247 = scalar_select %p246, %s22, 1
        %s248 = smul.addr %s247, 8
        %s249 = smul.addr %s248, 8
        %s250 = scalar_lea.vmem %s3, %s249
        %251 = vst [vmem:[#allocation2] sm:$0xff] 0.0
        %252 = vst [vmem:[#allocation2 + $0x20] sm:$0xff] 0.0
        %253 = vst [vmem:[#allocation2 + $0x40] sm:$0xff] 0.0
        %254 = vst [vmem:[#allocation2 + $0x60] sm:$0xff] 0.0
        %255 = vst [vmem:[#allocation2 + $0x80] sm:$0xff] 0.0
        %256 = vst [vmem:[#allocation2 + $0xa0] sm:$0xff] 0.0
        %257 = vst [vmem:[#allocation2 + $0xc0] sm:$0xff] 0.0
        %258 = vst [vmem:[#allocation2 + $0xe0] sm:$0xff] 0.0
        %259 = vst [vmem:[#allocation2 + $0x18] sm:$0xff] 0.0
        %260 = vst [vmem:[#allocation2 + $0x38] sm:$0xff] 0.0
        %261 = vst [vmem:[#allocation2 + $0x58] sm:$0xff] 0.0
        %262 = vst [vmem:[#allocation2 + $0x78] sm:$0xff] 0.0
        %263 = vst [vmem:[#allocation2 + $0x98] sm:$0xff] 0.0
        %264 = vst [vmem:[#allocation2 + $0xb8] sm:$0xff] 0.0
        %265 = vst [vmem:[#allocation2 + $0xd8] sm:$0xff] 0.0
        %266 = vst [vmem:[#allocation2 + $0xf8] sm:$0xff] 0.0
        %v267 = vld [vmem:[%s250] sm:$0xff]
        %v268 = vld [vmem:[%s250 + $0x8] sm:$0xff]
        %v269 = vld [vmem:[%s250 + $0x10] sm:$0xff]
        %v270 = vld [vmem:[%s250 + $0x18] sm:$0xff]
        %v271 = vld [vmem:[%s250 + $0x20] sm:$0xff]
        %v272 = vld [vmem:[%s250 + $0x28] sm:$0xff]
        %v273 = vld [vmem:[%s250 + $0x30] sm:$0xff]
        %v274 = vld [vmem:[%s250 + $0x38] sm:$0xff]
        %v275 = vld [vmem:[%s212] sm:$0xff]
        %v276 = vld [vmem:[%s212 + $0x8] sm:$0xff]
        %v277 = vld [vmem:[%s212 + $0x10] sm:$0xff]
        %v278 = vld [vmem:[%s212 + $0x18] sm:$0xff]
        %v279 = vld [vmem:[%s212 + $0x20] sm:$0xff]
        %v280 = vld [vmem:[%s212 + $0x28] sm:$0xff]
        %v281 = vld [vmem:[%s212 + $0x30] sm:$0xff]
        %v282 = vld [vmem:[%s212 + $0x38] sm:$0xff]
        %v283 = vld [vmem:[%s212 + $0x40] sm:$0xff]
        %v284 = vld [vmem:[%s212 + $0x48] sm:$0xff]
        %v285 = vld [vmem:[%s212 + $0x50] sm:$0xff]
        %v286 = vld [vmem:[%s212 + $0x58] sm:$0xff]
        %v287 = vld [vmem:[%s212 + $0x60] sm:$0xff]
        %v288 = vld [vmem:[%s212 + $0x68] sm:$0xff]
        %v289 = vld [vmem:[%s212 + $0x70] sm:$0xff]
        %v290 = vld [vmem:[%s212 + $0x78] sm:$0xff]
        %v291 = vadd.f32 %v275, %v276
        %292 = vadd.xlane.f32.xlu0 %v291
        %v293 = vpop.xlane.xlu0 %292
        %v294 = vadd.f32 %v277, %v278
        %295 = vadd.xlane.f32.xlu0 %v294
        %v296 = vpop.xlane.xlu0 %295
        %v297 = vadd.f32 %v279, %v280
        %298 = vadd.xlane.f32.xlu0 %v297
        %v299 = vpop.xlane.xlu0 %298
        %v300 = vadd.f32 %v281, %v282
        %301 = vadd.xlane.f32.xlu0 %v300
        %v302 = vpop.xlane.xlu0 %301
        %v303 = vadd.f32 %v283, %v284
        %304 = vadd.xlane.f32.xlu0 %v303
        %v305 = vpop.xlane.xlu0 %304
        %v306 = vadd.f32 %v285, %v286
        %307 = vadd.xlane.f32.xlu0 %v306
        %v308 = vpop.xlane.xlu0 %307
        %v309 = vadd.f32 %v287, %v288
        %310 = vadd.xlane.f32.xlu0 %v309
        %v311 = vpop.xlane.xlu0 %310
        %v312 = vadd.f32 %v289, %v290
        %313 = vadd.xlane.f32.xlu0 %v312
        %v314 = vpop.xlane.xlu0 %313
        %v315 = vrcp.pop 256.0
        %v316 = vmul.f32 %v293, %v315
        %v317 = vmul.f32 %v296, %v315
        %v318 = vmul.f32 %v299, %v315
        %v319 = vmul.f32 %v302, %v315
        %v320 = vmul.f32 %v305, %v315
        %v321 = vmul.f32 %v308, %v315
        %v322 = vmul.f32 %v311, %v315
        %v323 = vmul.f32 %v314, %v315
        %v324 = vmul.f32 %v275, %v275
        %v325 = vmul.f32 %v276, %v276
        %v326 = vmul.f32 %v277, %v277
        %v327 = vmul.f32 %v278, %v278
        %v328 = vmul.f32 %v279, %v279
        %v329 = vmul.f32 %v280, %v280
        %v330 = vmul.f32 %v281, %v281
        %v331 = vmul.f32 %v282, %v282
        %v332 = vmul.f32 %v283, %v283
        %v333 = vmul.f32 %v284, %v284
        %v334 = vmul.f32 %v285, %v285
        %v335 = vmul.f32 %v286, %v286
        %v336 = vmul.f32 %v287, %v287
        %v337 = vmul.f32 %v288, %v288
        %v338 = vmul.f32 %v289, %v289
        %v339 = vmul.f32 %v290, %v290
        %v340 = vadd.f32 %v324, %v325
        %341 = vadd.xlane.f32.xlu0 %v340
        %v342 = vpop.xlane.xlu0 %341
        %v343 = vadd.f32 %v326, %v327
        %344 = vadd.xlane.f32.xlu0 %v343
        %v345 = vpop.xlane.xlu0 %344
        %v346 = vadd.f32 %v328, %v329
        %347 = vadd.xlane.f32.xlu0 %v346
        %v348 = vpop.xlane.xlu0 %347
        %v349 = vadd.f32 %v330, %v331
        %350 = vadd.xlane.f32.xlu0 %v349
        %v351 = vpop.xlane.xlu0 %350
        %v352 = vadd.f32 %v332, %v333
        %353 = vadd.xlane.f32.xlu0 %v352
        %v354 = vpop.xlane.xlu0 %353
        %v355 = vadd.f32 %v334, %v335
        %356 = vadd.xlane.f32.xlu0 %v355
        %v357 = vpop.xlane.xlu0 %356
        %v358 = vadd.f32 %v336, %v337
        %359 = vadd.xlane.f32.xlu0 %v358
        %v360 = vpop.xlane.xlu0 %359
        %v361 = vadd.f32 %v338, %v339
        %362 = vadd.xlane.f32.xlu0 %v361
        %v363 = vpop.xlane.xlu0 %362
        %v364 = vmul.f32 %v342, %v315
        %v365 = vmul.f32 %v345, %v315
        %v366 = vmul.f32 %v348, %v315
        %v367 = vmul.f32 %v351, %v315
        %v368 = vmul.f32 %v354, %v315
        %v369 = vmul.f32 %v357, %v315
        %v370 = vmul.f32 %v360, %v315
        %v371 = vmul.f32 %v363, %v315
        %v372 = vmul.f32 %v316, %v316
        %v373 = vmul.f32 %v317, %v317
        %v374 = vmul.f32 %v318, %v318
        %v375 = vmul.f32 %v319, %v319
        %v376 = vmul.f32 %v320, %v320
        %v377 = vmul.f32 %v321, %v321
        %v378 = vmul.f32 %v322, %v322
        %v379 = vmul.f32 %v323, %v323
        %v380 = vsub.f32 %v364, %v372
        %v381 = vsub.f32 %v365, %v373
        %v382 = vsub.f32 %v366, %v374
        %v383 = vsub.f32 %v367, %v375
        %v384 = vsub.f32 %v368, %v376
        %v385 = vsub.f32 %v369, %v377
        %v386 = vsub.f32 %v370, %v378
        %v387 = vsub.f32 %v371, %v379
        %v388 = vmax.f32 %v380, 0.0
        %v389 = vmax.f32 %v381, 0.0
        %v390 = vmax.f32 %v382, 0.0
        %v391 = vmax.f32 %v383, 0.0
        %v392 = vmax.f32 %v384, 0.0
        %v393 = vmax.f32 %v385, 0.0
        %v394 = vmax.f32 %v386, 0.0
        %v395 = vmax.f32 %v387, 0.0
        %v396 = vadd.f32 %v388, 1e-05
        %v397 = vadd.f32 %v389, 1e-05
        %v398 = vadd.f32 %v390, 1e-05
        %v399 = vadd.f32 %v391, 1e-05
        %v400 = vadd.f32 %v392, 1e-05
        %v401 = vadd.f32 %v393, 1e-05
        %v402 = vadd.f32 %v394, 1e-05
        %v403 = vadd.f32 %v395, 1e-05
        %v404 = vrsqrt.pop %v396
        %v405 = vrsqrt.pop %v397
        %v406 = vrsqrt.pop %v398
        %v407 = vrsqrt.pop %v399
        %v408 = vrsqrt.pop %v400
        %v409 = vrsqrt.pop %v401
        %v410 = vrsqrt.pop %v402
        %v411 = vrsqrt.pop %v403
        %v412 = vmul.f32 %v267, %v404
        %v413 = vmul.f32 %v268, %v405
        %v414 = vmul.f32 %v269, %v406
        %v415 = vmul.f32 %v270, %v407
        %v416 = vmul.f32 %v271, %v408
        %v417 = vmul.f32 %v272, %v409
        %v418 = vmul.f32 %v273, %v410
        %v419 = vmul.f32 %v274, %v411
        %v420 = vmul.f32 %v316, %v412
        %v421 = vmul.f32 %v317, %v413
        %v422 = vmul.f32 %v318, %v414
        %v423 = vmul.f32 %v319, %v415
        %v424 = vmul.f32 %v320, %v416
        %v425 = vmul.f32 %v321, %v417
        %v426 = vmul.f32 %v322, %v418
        %v427 = vmul.f32 %v323, %v419
        %436 = vrot.lane.b32.xlu0 %v420, 1
        %v437 = vpop.permute.xlu0 %436
        %438 = vrot.lane.b32.xlu0 %v421, 1
        %v439 = vpop.permute.xlu0 %438
        %440 = vrot.lane.b32.xlu0 %v422, 1
        %v441 = vpop.permute.xlu0 %440
        %442 = vrot.lane.b32.xlu0 %v423, 1
        %v443 = vpop.permute.xlu0 %442
        %444 = vrot.lane.b32.xlu0 %v424, 1
        %v445 = vpop.permute.xlu0 %444
        %446 = vrot.lane.b32.xlu0 %v425, 1
        %v447 = vpop.permute.xlu0 %446
        %448 = vrot.lane.b32.xlu0 %v426, 1
        %v449 = vpop.permute.xlu0 %448
        %450 = vrot.lane.b32.xlu0 %v427, 1
        %v451 = vpop.permute.xlu0 %450
        %v460 = vsub.f32 %v267, %v437
        %v461 = vsub.f32 %v268, %v439
        %v462 = vsub.f32 %v269, %v441
        %v463 = vsub.f32 %v270, %v443
        %v464 = vsub.f32 %v271, %v445
        %v465 = vsub.f32 %v272, %v447
        %v466 = vsub.f32 %v273, %v449
        %v467 = vsub.f32 %v274, %v451
        %469 = vset.pattern.permute.xlu0 0
        %470 = vperm.xlu0 %469, %v412
        %v471 = vpop.permute.xlu0 %470
        %474 = vset.pattern.permute.xlu0 0
        %475 = vperm.xlu0 %474, %v413
        %v476 = vpop.permute.xlu0 %475
        %479 = vset.pattern.permute.xlu0 0
        %480 = vperm.xlu0 %479, %v414
        %v481 = vpop.permute.xlu0 %480
        %484 = vset.pattern.permute.xlu0 0
        %485 = vperm.xlu0 %484, %v415
        %v486 = vpop.permute.xlu0 %485
        %489 = vset.pattern.permute.xlu0 0
        %490 = vperm.xlu0 %489, %v416
        %v491 = vpop.permute.xlu0 %490
        %494 = vset.pattern.permute.xlu0 0
        %495 = vperm.xlu0 %494, %v417
        %v496 = vpop.permute.xlu0 %495
        %499 = vset.pattern.permute.xlu0 0
        %500 = vperm.xlu0 %499, %v418
        %v501 = vpop.permute.xlu0 %500
        %504 = vset.pattern.permute.xlu0 0
        %505 = vperm.xlu0 %504, %v419
        %v506 = vpop.permute.xlu0 %505
        %v508 = vmul.f32 %v275, %v471
        %v509 = vmul.f32 %v276, %v471
        %v510 = vmul.f32 %v277, %v476
        %v511 = vmul.f32 %v278, %v476
        %v512 = vmul.f32 %v279, %v481
        %v513 = vmul.f32 %v280, %v481
        %v514 = vmul.f32 %v281, %v486
        %v515 = vmul.f32 %v282, %v486
        %v516 = vmul.f32 %v283, %v491
        %v517 = vmul.f32 %v284, %v491
        %v518 = vmul.f32 %v285, %v496
        %v519 = vmul.f32 %v286, %v496
        %v520 = vmul.f32 %v287, %v501
        %v521 = vmul.f32 %v288, %v501
        %v522 = vmul.f32 %v289, %v506
        %v523 = vmul.f32 %v290, %v506
        %525 = vset.pattern.permute.xlu0 1
        %526 = vperm.xlu0 %525, %v460
        %v527 = vpop.permute.xlu0 %526
        %530 = vset.pattern.permute.xlu0 1
        %531 = vperm.xlu0 %530, %v461
        %v532 = vpop.permute.xlu0 %531
        %535 = vset.pattern.permute.xlu0 1
        %536 = vperm.xlu0 %535, %v462
        %v537 = vpop.permute.xlu0 %536
        %540 = vset.pattern.permute.xlu0 1
        %541 = vperm.xlu0 %540, %v463
        %v542 = vpop.permute.xlu0 %541
        %545 = vset.pattern.permute.xlu0 1
        %546 = vperm.xlu0 %545, %v464
        %v547 = vpop.permute.xlu0 %546
        %550 = vset.pattern.permute.xlu0 1
        %551 = vperm.xlu0 %550, %v465
        %v552 = vpop.permute.xlu0 %551
        %555 = vset.pattern.permute.xlu0 1
        %556 = vperm.xlu0 %555, %v466
        %v557 = vpop.permute.xlu0 %556
        %560 = vset.pattern.permute.xlu0 1
        %561 = vperm.xlu0 %560, %v467
        %v562 = vpop.permute.xlu0 %561
        %v564 = vadd.f32 %v508, %v527
        %v565 = vadd.f32 %v509, %v527
        %v566 = vadd.f32 %v510, %v532
        %v567 = vadd.f32 %v511, %v532
        %v568 = vadd.f32 %v512, %v537
        %v569 = vadd.f32 %v513, %v537
        %v570 = vadd.f32 %v514, %v542
        %v571 = vadd.f32 %v515, %v542
        %v572 = vadd.f32 %v516, %v547
        %v573 = vadd.f32 %v517, %v547
        %v574 = vadd.f32 %v518, %v552
        %v575 = vadd.f32 %v519, %v552
        %v576 = vadd.f32 %v520, %v557
        %v577 = vadd.f32 %v521, %v557
        %v578 = vadd.f32 %v522, %v562
        %v579 = vadd.f32 %v523, %v562
        %vm580 = vcmp.ge.f32.partialorder %v564, 0.0
        %vm581 = vcmp.ge.f32.partialorder %v565, 0.0
        %vm582 = vcmp.ge.f32.partialorder %v566, 0.0
        %vm583 = vcmp.ge.f32.partialorder %v567, 0.0
        %vm584 = vcmp.ge.f32.partialorder %v568, 0.0
        %vm585 = vcmp.ge.f32.partialorder %v569, 0.0
        %vm586 = vcmp.ge.f32.partialorder %v570, 0.0
        %vm587 = vcmp.ge.f32.partialorder %v571, 0.0
        %vm588 = vcmp.ge.f32.partialorder %v572, 0.0
        %vm589 = vcmp.ge.f32.partialorder %v573, 0.0
        %vm590 = vcmp.ge.f32.partialorder %v574, 0.0
        %vm591 = vcmp.ge.f32.partialorder %v575, 0.0
        %vm592 = vcmp.ge.f32.partialorder %v576, 0.0
        %vm593 = vcmp.ge.f32.partialorder %v577, 0.0
        %vm594 = vcmp.ge.f32.partialorder %v578, 0.0
        %vm595 = vcmp.ge.f32.partialorder %v579, 0.0
        %v596 = vmul.f32 %v564, 0.01
        %v597 = vmul.f32 %v565, 0.01
        %v598 = vmul.f32 %v566, 0.01
        %v599 = vmul.f32 %v567, 0.01
        %v600 = vmul.f32 %v568, 0.01
        %v601 = vmul.f32 %v569, 0.01
        %v602 = vmul.f32 %v570, 0.01
        %v603 = vmul.f32 %v571, 0.01
        %v604 = vmul.f32 %v572, 0.01
        %v605 = vmul.f32 %v573, 0.01
        %v606 = vmul.f32 %v574, 0.01
        %v607 = vmul.f32 %v575, 0.01
        %v608 = vmul.f32 %v576, 0.01
        %v609 = vmul.f32 %v577, 0.01
        %v610 = vmul.f32 %v578, 0.01
        %v611 = vmul.f32 %v579, 0.01
        %v612 = vsel %vm580, %v564, %v596
        %v613 = vsel %vm581, %v565, %v597
        %v614 = vsel %vm582, %v566, %v598
        %v615 = vsel %vm583, %v567, %v599
        %v616 = vsel %vm584, %v568, %v600
        %v617 = vsel %vm585, %v569, %v601
        %v618 = vsel %vm586, %v570, %v602
        %v619 = vsel %vm587, %v571, %v603
        %v620 = vsel %vm588, %v572, %v604
        %v621 = vsel %vm589, %v573, %v605
        %v622 = vsel %vm590, %v574, %v606
        %v623 = vsel %vm591, %v575, %v607
        %v624 = vsel %vm592, %v576, %v608
        %v625 = vsel %vm593, %v577, %v609
        %v626 = vsel %vm594, %v578, %v610
        %v627 = vsel %vm595, %v579, %v611
        %628 = vst [vmem:[#allocation2 + $0x8] sm:$0xff] %v612
        %629 = vst [vmem:[#allocation2 + $0x10] sm:$0xff] %v613
        %630 = vst [vmem:[#allocation2 + $0x28] sm:$0xff] %v614
        %631 = vst [vmem:[#allocation2 + $0x30] sm:$0xff] %v615
        %632 = vst [vmem:[#allocation2 + $0x48] sm:$0xff] %v616
        %633 = vst [vmem:[#allocation2 + $0x50] sm:$0xff] %v617
        %634 = vst [vmem:[#allocation2 + $0x68] sm:$0xff] %v618
        %635 = vst [vmem:[#allocation2 + $0x70] sm:$0xff] %v619
        %636 = vst [vmem:[#allocation2 + $0x88] sm:$0xff] %v620
        %637 = vst [vmem:[#allocation2 + $0x90] sm:$0xff] %v621
        %638 = vst [vmem:[#allocation2 + $0xa8] sm:$0xff] %v622
        %639 = vst [vmem:[#allocation2 + $0xb0] sm:$0xff] %v623
        %640 = vst [vmem:[#allocation2 + $0xc8] sm:$0xff] %v624
        %641 = vst [vmem:[#allocation2 + $0xd0] sm:$0xff] %v625
        %642 = vst [vmem:[#allocation2 + $0xe8] sm:$0xff] %v626
        %643 = vst [vmem:[#allocation2 + $0xf0] sm:$0xff] %v627
        %v644 = vld [vmem:[#allocation6] sm:$0xff]
        %v645 = vld [vmem:[#allocation6 + $0x8] sm:$0xff]
        %v646 = vld [vmem:[#allocation6 + $0x10] sm:$0xff]
        %v647 = vld [vmem:[#allocation6 + $0x18] sm:$0xff]
        %v648 = vld [vmem:[#allocation6 + $0x20] sm:$0xff]
        %v649 = vld [vmem:[#allocation6 + $0x28] sm:$0xff]
        %v650 = vld [vmem:[#allocation6 + $0x30] sm:$0xff]
        %v651 = vld [vmem:[#allocation6 + $0x38] sm:$0xff]
        %v652 = vld [vmem:[#allocation2] sm:$0xff]
        %v653 = vld [vmem:[#allocation2 + $0x8] sm:$0xff]
        %v654 = vld [vmem:[#allocation2 + $0x10] sm:$0xff]
        %v655 = vld [vmem:[#allocation2 + $0x20] sm:$0xff]
        %v656 = vld [vmem:[#allocation2 + $0x28] sm:$0xff]
        %v657 = vld [vmem:[#allocation2 + $0x30] sm:$0xff]
        %v658 = vld [vmem:[#allocation2 + $0x40] sm:$0xff]
        %v659 = vld [vmem:[#allocation2 + $0x48] sm:$0xff]
        %v660 = vld [vmem:[#allocation2 + $0x50] sm:$0xff]
        %v661 = vld [vmem:[#allocation2 + $0x60] sm:$0xff]
        %v662 = vld [vmem:[#allocation2 + $0x68] sm:$0xff]
        %v663 = vld [vmem:[#allocation2 + $0x70] sm:$0xff]
        %v664 = vld [vmem:[#allocation2 + $0x80] sm:$0xff]
        %v665 = vld [vmem:[#allocation2 + $0x88] sm:$0xff]
        %v666 = vld [vmem:[#allocation2 + $0x90] sm:$0xff]
        %v667 = vld [vmem:[#allocation2 + $0xa0] sm:$0xff]
        %v668 = vld [vmem:[#allocation2 + $0xa8] sm:$0xff]
        %v669 = vld [vmem:[#allocation2 + $0xb0] sm:$0xff]
        %v670 = vld [vmem:[#allocation2 + $0xc0] sm:$0xff]
        %v671 = vld [vmem:[#allocation2 + $0xc8] sm:$0xff]
        %v672 = vld [vmem:[#allocation2 + $0xd0] sm:$0xff]
        %v673 = vld [vmem:[#allocation2 + $0xe0] sm:$0xff]
        %v674 = vld [vmem:[#allocation2 + $0xe8] sm:$0xff]
        %v675 = vld [vmem:[#allocation2 + $0xf0] sm:$0xff]
        %s676 = scalar_lea.vmem [#allocation6], 64
        %v677 = vld [vmem:[%s676] sm:$0xff]
        %v678 = vld [vmem:[%s676 + $0x8] sm:$0xff]
        %v679 = vld [vmem:[%s676 + $0x10] sm:$0xff]
        %v680 = vld [vmem:[%s676 + $0x18] sm:$0xff]
        %v681 = vld [vmem:[%s676 + $0x20] sm:$0xff]
        %v682 = vld [vmem:[%s676 + $0x28] sm:$0xff]
        %v683 = vld [vmem:[%s676 + $0x30] sm:$0xff]
        %v684 = vld [vmem:[%s676 + $0x38] sm:$0xff]
        %vm685 = vcmask 523264
        %v687 = vsel %vm685, %v677, 0
        %v690 = vsel %vm685, %v678, 0
        %v693 = vsel %vm685, %v679, 0
        %v696 = vsel %vm685, %v680, 0
        %v699 = vsel %vm685, %v681, 0
        %v702 = vsel %vm685, %v682, 0
        %v705 = vsel %vm685, %v683, 0
        %v708 = vsel %vm685, %v684, 0
        %710 = vmatprep.subr.mxu0 %v654
        %711 = vmatpush1.msra.mxu0 %v653
        %712 = vmatprep.subr.mxu0 %v657
        %713 = vmatpush1.msra.mxu0 %v656
        %714 = vmatprep.subr.mxu0 %v660
        %715 = vmatpush1.msra.mxu0 %v659
        %716 = vmatprep.subr.mxu0 %v663
        %717 = vmatpush1.msra.mxu0 %v662
        %718 = vmatprep.subr.mxu0 %v666
        %719 = vmatpush1.msra.mxu0 %v665
        %720 = vmatprep.subr.mxu0 %v669
        %721 = vmatpush1.msra.mxu0 %v668
        %722 = vmatprep.subr.mxu0 %v672
        %723 = vmatpush1.msra.mxu0 %v671
        %724 = vmatprep.subr.mxu0 %v675
        %725 = vmatpush1.msra.mxu0 %v674
        %726 = vmatprep.subr.mxu0 0.0
        %727 = vmatpush1.msra.mxu0 0.0
        %728 = vmatprep.subr.mxu0 0.0
        %729 = vmatpush1.msra.mxu0 0.0
        %730 = vmatprep.subr.mxu0 0.0
        %731 = vmatpush1.msra.mxu0 0.0
        %732 = vmatprep.subr.mxu0 0.0
        %733 = vmatpush1.msra.mxu0 0.0
        %734 = vmatprep.subr.mxu0 0.0
        %735 = vmatpush1.msra.mxu0 0.0
        %736 = vmatprep.subr.mxu0 0.0
        %737 = vmatpush1.msra.mxu0 0.0
        %738 = vmatprep.subr.mxu0 0.0
        %739 = vmatpush1.msra.mxu0 0.0
        %740 = vmatprep.subr.mxu0 0.0
        %741 = vmatpush1.msra.mxu0 0.0
        %742 = vmatprep.subr.mxu0 0.0
        %743 = vmatpush1.msra.mxu0 0.0
        %744 = vmatprep.subr.mxu0 0.0
        %745 = vmatpush1.msra.mxu0 0.0
        %746 = vmatprep.subr.mxu0 0.0
        %747 = vmatpush1.msra.mxu0 0.0
        %748 = vmatprep.subr.mxu0 0.0
        %749 = vmatpush1.msra.mxu0 0.0
        %750 = vmatprep.subr.mxu0 0.0
        %751 = vmatpush1.msra.mxu0 0.0
        %752 = vmatprep.subr.mxu0 0.0
        %753 = vmatpush1.msra.mxu0 0.0
        %754 = vmatprep.subr.mxu0 0.0
        %755 = vmatpush1.msra.mxu0 0.0
        %756 = vmatprep.subr.mxu0 0.0
        %757 = vmatpush1.msra.mxu0 0.0
        %758 = vmatprep.subr.mxu0 0.0
        %759 = vmatpush1.msra.mxu0 0.0
        %760 = vmatprep.subr.mxu0 0.0
        %761 = vmatpush1.msra.mxu0 0.0
        %762 = vmatprep.subr.mxu0 0.0
        %763 = vmatpush1.msra.mxu0 0.0
        %764 = vmatprep.subr.mxu0 0.0
        %765 = vmatpush1.msra.mxu0 0.0
        %766 = vmatprep.subr.mxu0 0.0
        %767 = vmatpush1.msra.mxu0 0.0
        %768 = vmatprep.subr.mxu0 0.0
        %769 = vmatpush1.msra.mxu0 0.0
        %770 = vmatprep.subr.mxu0 0.0
        %771 = vmatpush1.msra.mxu0 0.0
        %772 = vmatprep.subr.mxu0 0.0
        %773 = vmatpush1.msra.mxu0 0.0
        %774 = vmatprep.mubr.f32.mxu0 0.0
        %775 = vmatmul.mubr.f32.gmra.mrb[0].mxu0 %v687
        %v776 = vpop.f32.mrb[0].mxu0
        %v777 = vadd.f32 0.0, %v776
        %v778 = vpop.f32.mrb[0].mxu0
        %v779 = vadd.f32 0.0, %v778
        %780 = vmatprep.mubr.f32.mxu0 0.0
        %781 = vmatmul.mubr.f32.gmra.mrb[0].mxu0 %v690
        %v782 = vpop.f32.mrb[0].mxu0
        %v783 = vadd.f32 0.0, %v782
        %v784 = vpop.f32.mrb[0].mxu0
        %v785 = vadd.f32 0.0, %v784
        %786 = vmatprep.mubr.f32.mxu0 0.0
        %787 = vmatmul.mubr.f32.gmra.mrb[0].mxu0 %v693
        %v788 = vpop.f32.mrb[0].mxu0
        %v789 = vadd.f32 0.0, %v788
        %v790 = vpop.f32.mrb[0].mxu0
        %v791 = vadd.f32 0.0, %v790
        %792 = vmatprep.mubr.f32.mxu0 0.0
        %793 = vmatmul.mubr.f32.gmra.mrb[0].mxu0 %v696
        %v794 = vpop.f32.mrb[0].mxu0
        %v795 = vadd.f32 0.0, %v794
        %v796 = vpop.f32.mrb[0].mxu0
        %v797 = vadd.f32 0.0, %v796
        %798 = vmatprep.mubr.f32.mxu0 0.0
        %799 = vmatmul.mubr.f32.gmra.mrb[0].mxu0 %v699
        %v800 = vpop.f32.mrb[0].mxu0
        %v801 = vadd.f32 0.0, %v800
        %v802 = vpop.f32.mrb[0].mxu0
        %v803 = vadd.f32 0.0, %v802
        %804 = vmatprep.mubr.f32.mxu0 0.0
        %805 = vmatmul.mubr.f32.gmra.mrb[0].mxu0 %v702
        %v806 = vpop.f32.mrb[0].mxu0
        %v807 = vadd.f32 0.0, %v806
        %v808 = vpop.f32.mrb[0].mxu0
        %v809 = vadd.f32 0.0, %v808
        %810 = vmatprep.mubr.f32.mxu0 0.0
        %811 = vmatmul.mubr.f32.gmra.mrb[0].mxu0 %v705
        %v812 = vpop.f32.mrb[0].mxu0
        %v813 = vadd.f32 0.0, %v812
        %v814 = vpop.f32.mrb[0].mxu0
        %v815 = vadd.f32 0.0, %v814
        %816 = vmatprep.mubr.f32.mxu0 0.0
        %817 = vmatmul.mubr.f32.gmra.mrb[0].mxu0 %v708
        %v818 = vpop.f32.mrb[0].mxu0
        %v819 = vadd.f32 0.0, %v818
        %v820 = vpop.f32.mrb[0].mxu0
        %v821 = vadd.f32 0.0, %v820
        %822 = vdwg.mxu0
        %847 = vrot.lane.b32.xlu0 %v652, 1
        %v848 = vpop.permute.xlu0 %847
        %849 = vrot.lane.b32.xlu0 %v653, 1
        %v850 = vpop.permute.xlu0 %849
        %851 = vrot.lane.b32.xlu0 %v654, 1
        %v852 = vpop.permute.xlu0 %851
        %853 = vrot.lane.b32.xlu0 %v655, 1
        %v854 = vpop.permute.xlu0 %853
        %855 = vrot.lane.b32.xlu0 %v656, 1
        %v856 = vpop.permute.xlu0 %855
        %857 = vrot.lane.b32.xlu0 %v657, 1
        %v858 = vpop.permute.xlu0 %857
        %859 = vrot.lane.b32.xlu0 %v658, 1
        %v860 = vpop.permute.xlu0 %859
        %861 = vrot.lane.b32.xlu0 %v659, 1
        %v862 = vpop.permute.xlu0 %861
        %863 = vrot.lane.b32.xlu0 %v660, 1
        %v864 = vpop.permute.xlu0 %863
        %865 = vrot.lane.b32.xlu0 %v661, 1
        %v866 = vpop.permute.xlu0 %865
        %867 = vrot.lane.b32.xlu0 %v662, 1
        %v868 = vpop.permute.xlu0 %867
        %869 = vrot.lane.b32.xlu0 %v663, 1
        %v870 = vpop.permute.xlu0 %869
        %871 = vrot.lane.b32.xlu0 %v664, 1
        %v872 = vpop.permute.xlu0 %871
        %873 = vrot.lane.b32.xlu0 %v665, 1
        %v874 = vpop.permute.xlu0 %873
        %875 = vrot.lane.b32.xlu0 %v666, 1
        %v876 = vpop.permute.xlu0 %875
        %877 = vrot.lane.b32.xlu0 %v667, 1
        %v878 = vpop.permute.xlu0 %877
        %879 = vrot.lane.b32.xlu0 %v668, 1
        %v880 = vpop.permute.xlu0 %879
        %881 = vrot.lane.b32.xlu0 %v669, 1
        %v882 = vpop.permute.xlu0 %881
        %883 = vrot.lane.b32.xlu0 %v670, 1
        %v884 = vpop.permute.xlu0 %883
        %885 = vrot.lane.b32.xlu0 %v671, 1
        %v886 = vpop.permute.xlu0 %885
        %887 = vrot.lane.b32.xlu0 %v672, 1
        %v888 = vpop.permute.xlu0 %887
        %889 = vrot.lane.b32.xlu0 %v673, 1
        %v890 = vpop.permute.xlu0 %889
        %891 = vrot.lane.b32.xlu0 %v674, 1
        %v892 = vpop.permute.xlu0 %891
        %893 = vrot.lane.b32.xlu0 %v675, 1
        %v894 = vpop.permute.xlu0 %893
        %vm895 = vcmask 7168
        %v896 = vsel %vm895, %v848, %v850
        %v897 = vsel %vm895, %v850, %v852
        %v898 = vsel %vm895, %v854, %v856
        %v899 = vsel %vm895, %v856, %v858
        %v900 = vsel %vm895, %v860, %v862
        %v901 = vsel %vm895, %v862, %v864
        %v902 = vsel %vm895, %v866, %v868
        %v903 = vsel %vm895, %v868, %v870
        %v904 = vsel %vm895, %v872, %v874
        %v905 = vsel %vm895, %v874, %v876
        %v906 = vsel %vm895, %v878, %v880
        %v907 = vsel %vm895, %v880, %v882
        %v908 = vsel %vm895, %v884, %v886
        %v909 = vsel %vm895, %v886, %v888
        %v910 = vsel %vm895, %v890, %v892
        %v911 = vsel %vm895, %v892, %v894
        %v929 = vsel %vm685, %v644, 0
        %v932 = vsel %vm685, %v645, 0
        %v935 = vsel %vm685, %v646, 0
        %v938 = vsel %vm685, %v647, 0
        %v941 = vsel %vm685, %v648, 0
        %v944 = vsel %vm685, %v649, 0
        %v947 = vsel %vm685, %v650, 0
        %v950 = vsel %vm685, %v651, 0
        %952 = vmatprep.subr.mxu0 %v897
        %953 = vmatpush1.msra.mxu0 %v896
        %954 = vmatprep.subr.mxu0 %v899
        %955 = vmatpush1.msra.mxu0 %v898
        %956 = vmatprep.subr.mxu0 %v901
        %957 = vmatpush1.msra.mxu0 %v900
        %958 = vmatprep.subr.mxu0 %v903
        %959 = vmatpush1.msra.mxu0 %v902
        %960 = vmatprep.subr.mxu0 %v905
        %961 = vmatpush1.msra.mxu0 %v904
        %962 = vmatprep.subr.mxu0 %v907
        %963 = vmatpush1.msra.mxu0 %v906
        %964 = vmatprep.subr.mxu0 %v909
        %965 = vmatpush1.msra.mxu0 %v908
        %966 = vmatprep.subr.mxu0 %v911
        %967 = vmatpush1.msra.mxu0 %v910
        %968 = vmatprep.subr.mxu0 0.0
        %969 = vmatpush1.msra.mxu0 0.0
        %970 = vmatprep.subr.mxu0 0.0
        %971 = vmatpush1.msra.mxu0 0.0
        %972 = vmatprep.subr.mxu0 0.0
        %973 = vmatpush1.msra.mxu0 0.0
        %974 = vmatprep.subr.mxu0 0.0
        %975 = vmatpush1.msra.mxu0 0.0
        %976 = vmatprep.subr.mxu0 0.0
        %977 = vmatpush1.msra.mxu0 0.0
        %978 = vmatprep.subr.mxu0 0.0
        %979 = vmatpush1.msra.mxu0 0.0
        %980 = vmatprep.subr.mxu0 0.0
        %981 = vmatpush1.msra.mxu0 0.0
        %982 = vmatprep.subr.mxu0 0.0
        %983 = vmatpush1.msra.mxu0 0.0
        %984 = vmatprep.subr.mxu0 0.0
        %985 = vmatpush1.msra.mxu0 0.0
        %986 = vmatprep.subr.mxu0 0.0
        %987 = vmatpush1.msra.mxu0 0.0
        %988 = vmatprep.subr.mxu0 0.0
        %989 = vmatpush1.msra.mxu0 0.0
        %990 = vmatprep.subr.mxu0 0.0
        %991 = vmatpush1.msra.mxu0 0.0
        %992 = vmatprep.subr.mxu0 0.0
        %993 = vmatpush1.msra.mxu0 0.0
        %994 = vmatprep.subr.mxu0 0.0
        %995 = vmatpush1.msra.mxu0 0.0
        %996 = vmatprep.subr.mxu0 0.0
        %997 = vmatpush1.msra.mxu0 0.0
        %998 = vmatprep.subr.mxu0 0.0
        %999 = vmatpush1.msra.mxu0 0.0
        %1000 = vmatprep.subr.mxu0 0.0
        %1001 = vmatpush1.msra.mxu0 0.0
        %1002 = vmatprep.subr.mxu0 0.0
        %1003 = vmatpush1.msra.mxu0 0.0
        %1004 = vmatprep.subr.mxu0 0.0
        %1005 = vmatpush1.msra.mxu0 0.0
        %1006 = vmatprep.subr.mxu0 0.0
        %1007 = vmatpush1.msra.mxu0 0.0
        %1008 = vmatprep.subr.mxu0 0.0
        %1009 = vmatpush1.msra.mxu0 0.0
        %1010 = vmatprep.subr.mxu0 0.0
        %1011 = vmatpush1.msra.mxu0 0.0
        %1012 = vmatprep.subr.mxu0 0.0
        %1013 = vmatpush1.msra.mxu0 0.0
        %1014 = vmatprep.subr.mxu0 0.0
        %1015 = vmatpush1.msra.mxu0 0.0
        %1016 = vmatprep.mubr.f32.mxu0 0.0
        %1017 = vmatmul.mubr.f32.gmra.mrb[0].mxu0 %v929
        %v1018 = vpop.f32.mrb[0].mxu0
        %v1019 = vadd.f32 %v777, %v1018
        %v1020 = vpop.f32.mrb[0].mxu0
        %v1021 = vadd.f32 %v779, %v1020
        %1022 = vmatprep.mubr.f32.mxu0 0.0
        %1023 = vmatmul.mubr.f32.gmra.mrb[0].mxu0 %v932
        %v1024 = vpop.f32.mrb[0].mxu0
        %v1025 = vadd.f32 %v783, %v1024
        %v1026 = vpop.f32.mrb[0].mxu0
        %v1027 = vadd.f32 %v785, %v1026
        %1028 = vmatprep.mubr.f32.mxu0 0.0
        %1029 = vmatmul.mubr.f32.gmra.mrb[0].mxu0 %v935
        %v1030 = vpop.f32.mrb[0].mxu0
        %v1031 = vadd.f32 %v789, %v1030
        %v1032 = vpop.f32.mrb[0].mxu0
        %v1033 = vadd.f32 %v791, %v1032
        %1034 = vmatprep.mubr.f32.mxu0 0.0
        %1035 = vmatmul.mubr.f32.gmra.mrb[0].mxu0 %v938
        %v1036 = vpop.f32.mrb[0].mxu0
        %v1037 = vadd.f32 %v795, %v1036
        %v1038 = vpop.f32.mrb[0].mxu0
        %v1039 = vadd.f32 %v797, %v1038
        %1040 = vmatprep.mubr.f32.mxu0 0.0
        %1041 = vmatmul.mubr.f32.gmra.mrb[0].mxu0 %v941
        %v1042 = vpop.f32.mrb[0].mxu0
        %v1043 = vadd.f32 %v801, %v1042
        %v1044 = vpop.f32.mrb[0].mxu0
        %v1045 = vadd.f32 %v803, %v1044
        %1046 = vmatprep.mubr.f32.mxu0 0.0
        %1047 = vmatmul.mubr.f32.gmra.mrb[0].mxu0 %v944
        %v1048 = vpop.f32.mrb[0].mxu0
        %v1049 = vadd.f32 %v807, %v1048
        %v1050 = vpop.f32.mrb[0].mxu0
        %v1051 = vadd.f32 %v809, %v1050
        %1052 = vmatprep.mubr.f32.mxu0 0.0
        %1053 = vmatmul.mubr.f32.gmra.mrb[0].mxu0 %v947
        %v1054 = vpop.f32.mrb[0].mxu0
        %v1055 = vadd.f32 %v813, %v1054
        %v1056 = vpop.f32.mrb[0].mxu0
        %v1057 = vadd.f32 %v815, %v1056
        %1058 = vmatprep.mubr.f32.mxu0 0.0
        %1059 = vmatmul.mubr.f32.gmra.mrb[0].mxu0 %v950
        %v1060 = vpop.f32.mrb[0].mxu0
        %v1061 = vadd.f32 %v819, %v1060
        %v1062 = vpop.f32.mrb[0].mxu0
        %v1063 = vadd.f32 %v821, %v1062
        %1064 = vdwg.mxu0
        %s1065 = scalar_lea.vmem [#allocation6], 128
        %v1066 = vld [vmem:[%s1065] sm:$0xff]
        %v1067 = vld [vmem:[%s1065 + $0x8] sm:$0xff]
        %v1068 = vld [vmem:[%s1065 + $0x10] sm:$0xff]
        %v1069 = vld [vmem:[%s1065 + $0x18] sm:$0xff]
        %v1070 = vld [vmem:[%s1065 + $0x20] sm:$0xff]
        %v1071 = vld [vmem:[%s1065 + $0x28] sm:$0xff]
        %v1072 = vld [vmem:[%s1065 + $0x30] sm:$0xff]
        %v1073 = vld [vmem:[%s1065 + $0x38] sm:$0xff]
        %v1074 = vld [vmem:[#allocation2 + $0x8] sm:$0xff]
        %v1075 = vld [vmem:[#allocation2 + $0x10] sm:$0xff]
        %v1076 = vld [vmem:[#allocation2 + $0x18] sm:$0xff]
        %v1077 = vld [vmem:[#allocation2 + $0x28] sm:$0xff]
        %v1078 = vld [vmem:[#allocation2 + $0x30] sm:$0xff]
        %v1079 = vld [vmem:[#allocation2 + $0x38] sm:$0xff]
        %v1080 = vld [vmem:[#allocation2 + $0x48] sm:$0xff]
        %v1081 = vld [vmem:[#allocation2 + $0x50] sm:$0xff]
        %v1082 = vld [vmem:[#allocation2 + $0x58] sm:$0xff]
        %v1083 = vld [vmem:[#allocation2 + $0x68] sm:$0xff]
        %v1084 = vld [vmem:[#allocation2 + $0x70] sm:$0xff]
        %v1085 = vld [vmem:[#allocation2 + $0x78] sm:$0xff]
        %v1086 = vld [vmem:[#allocation2 + $0x88] sm:$0xff]
        %v1087 = vld [vmem:[#allocation2 + $0x90] sm:$0xff]
        %v1088 = vld [vmem:[#allocation2 + $0x98] sm:$0xff]
        %v1089 = vld [vmem:[#allocation2 + $0xa8] sm:$0xff]
        %v1090 = vld [vmem:[#allocation2 + $0xb0] sm:$0xff]
        %v1091 = vld [vmem:[#allocation2 + $0xb8] sm:$0xff]
        %v1092 = vld [vmem:[#allocation2 + $0xc8] sm:$0xff]
        %v1093 = vld [vmem:[#allocation2 + $0xd0] sm:$0xff]
        %v1094 = vld [vmem:[#allocation2 + $0xd8] sm:$0xff]
        %v1095 = vld [vmem:[#allocation2 + $0xe8] sm:$0xff]
        %v1096 = vld [vmem:[#allocation2 + $0xf0] sm:$0xff]
        %v1097 = vld [vmem:[#allocation2 + $0xf8] sm:$0xff]
        %1122 = vrot.lane.b32.xlu0 %v1074, 127
        %v1123 = vpop.permute.xlu0 %1122
        %1124 = vrot.lane.b32.xlu0 %v1075, 127
        %v1125 = vpop.permute.xlu0 %1124
        %1126 = vrot.lane.b32.xlu0 %v1076, 127
        %v1127 = vpop.permute.xlu0 %1126
        %1128 = vrot.lane.b32.xlu0 %v1077, 127
        %v1129 = vpop.permute.xlu0 %1128
        %1130 = vrot.lane.b32.xlu0 %v1078, 127
        %v1131 = vpop.permute.xlu0 %1130
        %1132 = vrot.lane.b32.xlu0 %v1079, 127
        %v1133 = vpop.permute.xlu0 %1132
        %1134 = vrot.lane.b32.xlu0 %v1080, 127
        %v1135 = vpop.permute.xlu0 %1134
        %1136 = vrot.lane.b32.xlu0 %v1081, 127
        %v1137 = vpop.permute.xlu0 %1136
        %1138 = vrot.lane.b32.xlu0 %v1082, 127
        %v1139 = vpop.permute.xlu0 %1138
        %1140 = vrot.lane.b32.xlu0 %v1083, 127
        %v1141 = vpop.permute.xlu0 %1140
        %1142 = vrot.lane.b32.xlu0 %v1084, 127
        %v1143 = vpop.permute.xlu0 %1142
        %1144 = vrot.lane.b32.xlu0 %v1085, 127
        %v1145 = vpop.permute.xlu0 %1144
        %1146 = vrot.lane.b32.xlu0 %v1086, 127
        %v1147 = vpop.permute.xlu0 %1146
        %1148 = vrot.lane.b32.xlu0 %v1087, 127
        %v1149 = vpop.permute.xlu0 %1148
        %1150 = vrot.lane.b32.xlu0 %v1088, 127
        %v1151 = vpop.permute.xlu0 %1150
        %1152 = vrot.lane.b32.xlu0 %v1089, 127
        %v1153 = vpop.permute.xlu0 %1152
        %1154 = vrot.lane.b32.xlu0 %v1090, 127
        %v1155 = vpop.permute.xlu0 %1154
        %1156 = vrot.lane.b32.xlu0 %v1091, 127
        %v1157 = vpop.permute.xlu0 %1156
        %1158 = vrot.lane.b32.xlu0 %v1092, 127
        %v1159 = vpop.permute.xlu0 %1158
        %1160 = vrot.lane.b32.xlu0 %v1093, 127
        %v1161 = vpop.permute.xlu0 %1160
        %1162 = vrot.lane.b32.xlu0 %v1094, 127
        %v1163 = vpop.permute.xlu0 %1162
        %1164 = vrot.lane.b32.xlu0 %v1095, 127
        %v1165 = vpop.permute.xlu0 %1164
        %1166 = vrot.lane.b32.xlu0 %v1096, 127
        %v1167 = vpop.permute.xlu0 %1166
        %1168 = vrot.lane.b32.xlu0 %v1097, 127
        %v1169 = vpop.permute.xlu0 %1168
        %vm1170 = vcmask 1039360
        %v1171 = vsel %vm1170, %v1123, %v1125
        %v1172 = vsel %vm1170, %v1125, %v1127
        %v1173 = vsel %vm1170, %v1129, %v1131
        %v1174 = vsel %vm1170, %v1131, %v1133
        %v1175 = vsel %vm1170, %v1135, %v1137
        %v1176 = vsel %vm1170, %v1137, %v1139
        %v1177 = vsel %vm1170, %v1141, %v1143
        %v1178 = vsel %vm1170, %v1143, %v1145
        %v1179 = vsel %vm1170, %v1147, %v1149
        %v1180 = vsel %vm1170, %v1149, %v1151
        %v1181 = vsel %vm1170, %v1153, %v1155
        %v1182 = vsel %vm1170, %v1155, %v1157
        %v1183 = vsel %vm1170, %v1159, %v1161
        %v1184 = vsel %vm1170, %v1161, %v1163
        %v1185 = vsel %vm1170, %v1165, %v1167
        %v1186 = vsel %vm1170, %v1167, %v1169
        %v1204 = vsel %vm685, %v1066, 0
        %v1207 = vsel %vm685, %v1067, 0
        %v1210 = vsel %vm685, %v1068, 0
        %v1213 = vsel %vm685, %v1069, 0
        %v1216 = vsel %vm685, %v1070, 0
        %v1219 = vsel %vm685, %v1071, 0
        %v1222 = vsel %vm685, %v1072, 0
        %v1225 = vsel %vm685, %v1073, 0
        %1227 = vmatprep.subr.mxu0 %v1172
        %1228 = vmatpush1.msra.mxu0 %v1171
        %1229 = vmatprep.subr.mxu0 %v1174
        %1230 = vmatpush1.msra.mxu0 %v1173
        %1231 = vmatprep.subr.mxu0 %v1176
        %1232 = vmatpush1.msra.mxu0 %v1175
        %1233 = vmatprep.subr.mxu0 %v1178
        %1234 = vmatpush1.msra.mxu0 %v1177
        %1235 = vmatprep.subr.mxu0 %v1180
        %1236 = vmatpush1.msra.mxu0 %v1179
        %1237 = vmatprep.subr.mxu0 %v1182
        %1238 = vmatpush1.msra.mxu0 %v1181
        %1239 = vmatprep.subr.mxu0 %v1184
        %1240 = vmatpush1.msra.mxu0 %v1183
        %1241 = vmatprep.subr.mxu0 %v1186
        %1242 = vmatpush1.msra.mxu0 %v1185
        %1243 = vmatprep.subr.mxu0 0.0
        %1244 = vmatpush1.msra.mxu0 0.0
        %1245 = vmatprep.subr.mxu0 0.0
        %1246 = vmatpush1.msra.mxu0 0.0
        %1247 = vmatprep.subr.mxu0 0.0
        %1248 = vmatpush1.msra.mxu0 0.0
        %1249 = vmatprep.subr.mxu0 0.0
        %1250 = vmatpush1.msra.mxu0 0.0
        %1251 = vmatprep.subr.mxu0 0.0
        %1252 = vmatpush1.msra.mxu0 0.0
        %1253 = vmatprep.subr.mxu0 0.0
        %1254 = vmatpush1.msra.mxu0 0.0
        %1255 = vmatprep.subr.mxu0 0.0
        %1256 = vmatpush1.msra.mxu0 0.0
        %1257 = vmatprep.subr.mxu0 0.0
        %1258 = vmatpush1.msra.mxu0 0.0
        %1259 = vmatprep.subr.mxu0 0.0
        %1260 = vmatpush1.msra.mxu0 0.0
        %1261 = vmatprep.subr.mxu0 0.0
        %1262 = vmatpush1.msra.mxu0 0.0
        %1263 = vmatprep.subr.mxu0 0.0
        %1264 = vmatpush1.msra.mxu0 0.0
        %1265 = vmatprep.subr.mxu0 0.0
        %1266 = vmatpush1.msra.mxu0 0.0
        %1267 = vmatprep.subr.mxu0 0.0
        %1268 = vmatpush1.msra.mxu0 0.0
        %1269 = vmatprep.subr.mxu0 0.0
        %1270 = vmatpush1.msra.mxu0 0.0
        %1271 = vmatprep.subr.mxu0 0.0
        %1272 = vmatpush1.msra.mxu0 0.0
        %1273 = vmatprep.subr.mxu0 0.0
        %1274 = vmatpush1.msra.mxu0 0.0
        %1275 = vmatprep.subr.mxu0 0.0
        %1276 = vmatpush1.msra.mxu0 0.0
        %1277 = vmatprep.subr.mxu0 0.0
        %1278 = vmatpush1.msra.mxu0 0.0
        %1279 = vmatprep.subr.mxu0 0.0
        %1280 = vmatpush1.msra.mxu0 0.0
        %1281 = vmatprep.subr.mxu0 0.0
        %1282 = vmatpush1.msra.mxu0 0.0
        %1283 = vmatprep.subr.mxu0 0.0
        %1284 = vmatpush1.msra.mxu0 0.0
        %1285 = vmatprep.subr.mxu0 0.0
        %1286 = vmatpush1.msra.mxu0 0.0
        %1287 = vmatprep.subr.mxu0 0.0
        %1288 = vmatpush1.msra.mxu0 0.0
        %1289 = vmatprep.subr.mxu0 0.0
        %1290 = vmatpush1.msra.mxu0 0.0
        %1291 = vmatprep.mubr.f32.mxu0 0.0
        %1292 = vmatmul.mubr.f32.gmra.mrb[0].mxu0 %v1204
        %v1293 = vpop.f32.mrb[0].mxu0
        %v1294 = vadd.f32 0.0, %v1293
        %v1295 = vpop.f32.mrb[0].mxu0
        %v1296 = vadd.f32 0.0, %v1295
        %1297 = vmatprep.mubr.f32.mxu0 0.0
        %1298 = vmatmul.mubr.f32.gmra.mrb[0].mxu0 %v1207
        %v1299 = vpop.f32.mrb[0].mxu0
        %v1300 = vadd.f32 0.0, %v1299
        %v1301 = vpop.f32.mrb[0].mxu0
        %v1302 = vadd.f32 0.0, %v1301
        %1303 = vmatprep.mubr.f32.mxu0 0.0
        %1304 = vmatmul.mubr.f32.gmra.mrb[0].mxu0 %v1210
        %v1305 = vpop.f32.mrb[0].mxu0
        %v1306 = vadd.f32 0.0, %v1305
        %v1307 = vpop.f32.mrb[0].mxu0
        %v1308 = vadd.f32 0.0, %v1307
        %1309 = vmatprep.mubr.f32.mxu0 0.0
        %1310 = vmatmul.mubr.f32.gmra.mrb[0].mxu0 %v1213
        %v1311 = vpop.f32.mrb[0].mxu0
        %v1312 = vadd.f32 0.0, %v1311
        %v1313 = vpop.f32.mrb[0].mxu0
        %v1314 = vadd.f32 0.0, %v1313
        %1315 = vmatprep.mubr.f32.mxu0 0.0
        %1316 = vmatmul.mubr.f32.gmra.mrb[0].mxu0 %v1216
        %v1317 = vpop.f32.mrb[0].mxu0
        %v1318 = vadd.f32 0.0, %v1317
        %v1319 = vpop.f32.mrb[0].mxu0
        %v1320 = vadd.f32 0.0, %v1319
        %1321 = vmatprep.mubr.f32.mxu0 0.0
        %1322 = vmatmul.mubr.f32.gmra.mrb[0].mxu0 %v1219
        %v1323 = vpop.f32.mrb[0].mxu0
        %v1324 = vadd.f32 0.0, %v1323
        %v1325 = vpop.f32.mrb[0].mxu0
        %v1326 = vadd.f32 0.0, %v1325
        %1327 = vmatprep.mubr.f32.mxu0 0.0
        %1328 = vmatmul.mubr.f32.gmra.mrb[0].mxu0 %v1222
        %v1329 = vpop.f32.mrb[0].mxu0
        %v1330 = vadd.f32 0.0, %v1329
        %v1331 = vpop.f32.mrb[0].mxu0
        %v1332 = vadd.f32 0.0, %v1331
        %1333 = vmatprep.mubr.f32.mxu0 0.0
        %1334 = vmatmul.mubr.f32.gmra.mrb[0].mxu0 %v1225
        %v1335 = vpop.f32.mrb[0].mxu0
        %v1336 = vadd.f32 0.0, %v1335
        %v1337 = vpop.f32.mrb[0].mxu0
        %v1338 = vadd.f32 0.0, %v1337
        %1339 = vdwg.mxu0
        %v1340 = vadd.f32 %v1019, %v1294
        %v1341 = vadd.f32 %v1021, %v1296
        %v1342 = vadd.f32 %v1025, %v1300
        %v1343 = vadd.f32 %v1027, %v1302
        %v1344 = vadd.f32 %v1031, %v1306
        %v1345 = vadd.f32 %v1033, %v1308
        %v1346 = vadd.f32 %v1037, %v1312
        %v1347 = vadd.f32 %v1039, %v1314
        %v1348 = vadd.f32 %v1043, %v1318
        %v1349 = vadd.f32 %v1045, %v1320
        %v1350 = vadd.f32 %v1049, %v1324
        %v1351 = vadd.f32 %v1051, %v1326
        %v1352 = vadd.f32 %v1055, %v1330
        %v1353 = vadd.f32 %v1057, %v1332
        %v1354 = vadd.f32 %v1061, %v1336
        %v1355 = vadd.f32 %v1063, %v1338
        %v1356 = vld [vmem:[%s2] sm:$0xff]
        %v1357 = vld [vmem:[%s2 + $0x8] sm:$0xff]
        %v1358 = vld [vmem:[%s2 + $0x10] sm:$0xff]
        %v1359 = vld [vmem:[%s2 + $0x18] sm:$0xff]
        %v1360 = vld [vmem:[%s2 + $0x20] sm:$0xff]
        %v1361 = vld [vmem:[%s2 + $0x28] sm:$0xff]
        %v1362 = vld [vmem:[%s2 + $0x30] sm:$0xff]
        %v1363 = vld [vmem:[%s2 + $0x38] sm:$0xff]
        %1365 = vset.pattern.permute.xlu0 0
        %1366 = vperm.xlu0 %1365, %v1356
        %v1367 = vpop.permute.xlu0 %1366
        %1370 = vset.pattern.permute.xlu0 0
        %1371 = vperm.xlu0 %1370, %v1357
        %v1372 = vpop.permute.xlu0 %1371
        %1375 = vset.pattern.permute.xlu0 0
        %1376 = vperm.xlu0 %1375, %v1358
        %v1377 = vpop.permute.xlu0 %1376
        %1380 = vset.pattern.permute.xlu0 0
        %1381 = vperm.xlu0 %1380, %v1359
        %v1382 = vpop.permute.xlu0 %1381
        %1385 = vset.pattern.permute.xlu0 0
        %1386 = vperm.xlu0 %1385, %v1360
        %v1387 = vpop.permute.xlu0 %1386
        %1390 = vset.pattern.permute.xlu0 0
        %1391 = vperm.xlu0 %1390, %v1361
        %v1392 = vpop.permute.xlu0 %1391
        %1395 = vset.pattern.permute.xlu0 0
        %1396 = vperm.xlu0 %1395, %v1362
        %v1397 = vpop.permute.xlu0 %1396
        %1400 = vset.pattern.permute.xlu0 0
        %1401 = vperm.xlu0 %1400, %v1363
        %v1402 = vpop.permute.xlu0 %1401
        %v1404 = vadd.f32 %v1340, %v1367
        %v1405 = vadd.f32 %v1341, %v1367
        %v1406 = vadd.f32 %v1342, %v1372
        %v1407 = vadd.f32 %v1343, %v1372
        %v1408 = vadd.f32 %v1344, %v1377
        %v1409 = vadd.f32 %v1345, %v1377
        %v1410 = vadd.f32 %v1346, %v1382
        %v1411 = vadd.f32 %v1347, %v1382
        %v1412 = vadd.f32 %v1348, %v1387
        %v1413 = vadd.f32 %v1349, %v1387
        %v1414 = vadd.f32 %v1350, %v1392
        %v1415 = vadd.f32 %v1351, %v1392
        %v1416 = vadd.f32 %v1352, %v1397
        %v1417 = vadd.f32 %v1353, %v1397
        %v1418 = vadd.f32 %v1354, %v1402
        %v1419 = vadd.f32 %v1355, %v1402
        %v1420 = vadd.f32 %v1404, %v1405
        %1421 = vadd.xlane.f32.xlu0 %v1420
        %v1422 = vpop.xlane.xlu0 %1421
        %v1423 = vadd.f32 %v1406, %v1407
        %1424 = vadd.xlane.f32.xlu0 %v1423
        %v1425 = vpop.xlane.xlu0 %1424
        %v1426 = vadd.f32 %v1408, %v1409
        %1427 = vadd.xlane.f32.xlu0 %v1426
        %v1428 = vpop.xlane.xlu0 %1427
        %v1429 = vadd.f32 %v1410, %v1411
        %1430 = vadd.xlane.f32.xlu0 %v1429
        %v1431 = vpop.xlane.xlu0 %1430
        %v1432 = vadd.f32 %v1412, %v1413
        %1433 = vadd.xlane.f32.xlu0 %v1432
        %v1434 = vpop.xlane.xlu0 %1433
        %v1435 = vadd.f32 %v1414, %v1415
        %1436 = vadd.xlane.f32.xlu0 %v1435
        %v1437 = vpop.xlane.xlu0 %1436
        %v1438 = vadd.f32 %v1416, %v1417
        %1439 = vadd.xlane.f32.xlu0 %v1438
        %v1440 = vpop.xlane.xlu0 %1439
        %v1441 = vadd.f32 %v1418, %v1419
        %1442 = vadd.xlane.f32.xlu0 %v1441
        %v1443 = vpop.xlane.xlu0 %1442
        %v1444 = vmul.f32 %v1422, %v315
        %v1445 = vmul.f32 %v1425, %v315
        %v1446 = vmul.f32 %v1428, %v315
        %v1447 = vmul.f32 %v1431, %v315
        %v1448 = vmul.f32 %v1434, %v315
        %v1449 = vmul.f32 %v1437, %v315
        %v1450 = vmul.f32 %v1440, %v315
        %v1451 = vmul.f32 %v1443, %v315
        %v1452 = vmul.f32 %v1404, %v1404
        %v1453 = vmul.f32 %v1405, %v1405
        %v1454 = vmul.f32 %v1406, %v1406
        %v1455 = vmul.f32 %v1407, %v1407
        %v1456 = vmul.f32 %v1408, %v1408
        %v1457 = vmul.f32 %v1409, %v1409
        %v1458 = vmul.f32 %v1410, %v1410
        %v1459 = vmul.f32 %v1411, %v1411
        %v1460 = vmul.f32 %v1412, %v1412
        %v1461 = vmul.f32 %v1413, %v1413
        %v1462 = vmul.f32 %v1414, %v1414
        %v1463 = vmul.f32 %v1415, %v1415
        %v1464 = vmul.f32 %v1416, %v1416
        %v1465 = vmul.f32 %v1417, %v1417
        %v1466 = vmul.f32 %v1418, %v1418
        %v1467 = vmul.f32 %v1419, %v1419
        %v1468 = vadd.f32 %v1452, %v1453
        %1469 = vadd.xlane.f32.xlu0 %v1468
        %v1470 = vpop.xlane.xlu0 %1469
        %v1471 = vadd.f32 %v1454, %v1455
        %1472 = vadd.xlane.f32.xlu0 %v1471
        %v1473 = vpop.xlane.xlu0 %1472
        %v1474 = vadd.f32 %v1456, %v1457
        %1475 = vadd.xlane.f32.xlu0 %v1474
        %v1476 = vpop.xlane.xlu0 %1475
        %v1477 = vadd.f32 %v1458, %v1459
        %1478 = vadd.xlane.f32.xlu0 %v1477
        %v1479 = vpop.xlane.xlu0 %1478
        %v1480 = vadd.f32 %v1460, %v1461
        %1481 = vadd.xlane.f32.xlu0 %v1480
        %v1482 = vpop.xlane.xlu0 %1481
        %v1483 = vadd.f32 %v1462, %v1463
        %1484 = vadd.xlane.f32.xlu0 %v1483
        %v1485 = vpop.xlane.xlu0 %1484
        %v1486 = vadd.f32 %v1464, %v1465
        %1487 = vadd.xlane.f32.xlu0 %v1486
        %v1488 = vpop.xlane.xlu0 %1487
        %v1489 = vadd.f32 %v1466, %v1467
        %1490 = vadd.xlane.f32.xlu0 %v1489
        %v1491 = vpop.xlane.xlu0 %1490
        %v1492 = vmul.f32 %v1470, %v315
        %v1493 = vmul.f32 %v1473, %v315
        %v1494 = vmul.f32 %v1476, %v315
        %v1495 = vmul.f32 %v1479, %v315
        %v1496 = vmul.f32 %v1482, %v315
        %v1497 = vmul.f32 %v1485, %v315
        %v1498 = vmul.f32 %v1488, %v315
        %v1499 = vmul.f32 %v1491, %v315
        %v1500 = vmul.f32 %v1444, %v1444
        %v1501 = vmul.f32 %v1445, %v1445
        %v1502 = vmul.f32 %v1446, %v1446
        %v1503 = vmul.f32 %v1447, %v1447
        %v1504 = vmul.f32 %v1448, %v1448
        %v1505 = vmul.f32 %v1449, %v1449
        %v1506 = vmul.f32 %v1450, %v1450
        %v1507 = vmul.f32 %v1451, %v1451
        %v1508 = vsub.f32 %v1492, %v1500
        %v1509 = vsub.f32 %v1493, %v1501
        %v1510 = vsub.f32 %v1494, %v1502
        %v1511 = vsub.f32 %v1495, %v1503
        %v1512 = vsub.f32 %v1496, %v1504
        %v1513 = vsub.f32 %v1497, %v1505
        %v1514 = vsub.f32 %v1498, %v1506
        %v1515 = vsub.f32 %v1499, %v1507
        %v1516 = vmax.f32 %v1508, 0.0
        %v1517 = vmax.f32 %v1509, 0.0
        %v1518 = vmax.f32 %v1510, 0.0
        %v1519 = vmax.f32 %v1511, 0.0
        %v1520 = vmax.f32 %v1512, 0.0
        %v1521 = vmax.f32 %v1513, 0.0
        %v1522 = vmax.f32 %v1514, 0.0
        %v1523 = vmax.f32 %v1515, 0.0
        %v1524 = vadd.f32 %v1516, 1e-05
        %v1525 = vadd.f32 %v1517, 1e-05
        %v1526 = vadd.f32 %v1518, 1e-05
        %v1527 = vadd.f32 %v1519, 1e-05
        %v1528 = vadd.f32 %v1520, 1e-05
        %v1529 = vadd.f32 %v1521, 1e-05
        %v1530 = vadd.f32 %v1522, 1e-05
        %v1531 = vadd.f32 %v1523, 1e-05
        %v1532 = vrsqrt.pop %v1524
        %v1533 = vrsqrt.pop %v1525
        %v1534 = vrsqrt.pop %v1526
        %v1535 = vrsqrt.pop %v1527
        %v1536 = vrsqrt.pop %v1528
        %v1537 = vrsqrt.pop %v1529
        %v1538 = vrsqrt.pop %v1530
        %v1539 = vrsqrt.pop %v1531
        %v1540 = vmul.f32 %v267, %v1532
        %v1541 = vmul.f32 %v268, %v1533
        %v1542 = vmul.f32 %v269, %v1534
        %v1543 = vmul.f32 %v270, %v1535
        %v1544 = vmul.f32 %v271, %v1536
        %v1545 = vmul.f32 %v272, %v1537
        %v1546 = vmul.f32 %v273, %v1538
        %v1547 = vmul.f32 %v274, %v1539
        %v1548 = vmul.f32 %v1444, %v1540
        %v1549 = vmul.f32 %v1445, %v1541
        %v1550 = vmul.f32 %v1446, %v1542
        %v1551 = vmul.f32 %v1447, %v1543
        %v1552 = vmul.f32 %v1448, %v1544
        %v1553 = vmul.f32 %v1449, %v1545
        %v1554 = vmul.f32 %v1450, %v1546
        %v1555 = vmul.f32 %v1451, %v1547
        %1564 = vrot.lane.b32.xlu0 %v1548, 1
        %v1565 = vpop.permute.xlu0 %1564
        %1566 = vrot.lane.b32.xlu0 %v1549, 1
        %v1567 = vpop.permute.xlu0 %1566
        %1568 = vrot.lane.b32.xlu0 %v1550, 1
        %v1569 = vpop.permute.xlu0 %1568
        %1570 = vrot.lane.b32.xlu0 %v1551, 1
        %v1571 = vpop.permute.xlu0 %1570
        %1572 = vrot.lane.b32.xlu0 %v1552, 1
        %v1573 = vpop.permute.xlu0 %1572
        %1574 = vrot.lane.b32.xlu0 %v1553, 1
        %v1575 = vpop.permute.xlu0 %1574
        %1576 = vrot.lane.b32.xlu0 %v1554, 1
        %v1577 = vpop.permute.xlu0 %1576
        %1578 = vrot.lane.b32.xlu0 %v1555, 1
        %v1579 = vpop.permute.xlu0 %1578
        %v1588 = vsub.f32 %v267, %v1565
        %v1589 = vsub.f32 %v268, %v1567
        %v1590 = vsub.f32 %v269, %v1569
        %v1591 = vsub.f32 %v270, %v1571
        %v1592 = vsub.f32 %v271, %v1573
        %v1593 = vsub.f32 %v272, %v1575
        %v1594 = vsub.f32 %v273, %v1577
        %v1595 = vsub.f32 %v274, %v1579
        %1597 = vset.pattern.permute.xlu0 2
        %1598 = vperm.xlu0 %1597, %v1540
        %v1599 = vpop.permute.xlu0 %1598
        %1602 = vset.pattern.permute.xlu0 2
        %1603 = vperm.xlu0 %1602, %v1541
        %v1604 = vpop.permute.xlu0 %1603
        %1607 = vset.pattern.permute.xlu0 2
        %1608 = vperm.xlu0 %1607, %v1542
        %v1609 = vpop.permute.xlu0 %1608
        %1612 = vset.pattern.permute.xlu0 2
        %1613 = vperm.xlu0 %1612, %v1543
        %v1614 = vpop.permute.xlu0 %1613
        %1617 = vset.pattern.permute.xlu0 2
        %1618 = vperm.xlu0 %1617, %v1544
        %v1619 = vpop.permute.xlu0 %1618
        %1622 = vset.pattern.permute.xlu0 2
        %1623 = vperm.xlu0 %1622, %v1545
        %v1624 = vpop.permute.xlu0 %1623
        %1627 = vset.pattern.permute.xlu0 2
        %1628 = vperm.xlu0 %1627, %v1546
        %v1629 = vpop.permute.xlu0 %1628
        %1632 = vset.pattern.permute.xlu0 2
        %1633 = vperm.xlu0 %1632, %v1547
        %v1634 = vpop.permute.xlu0 %1633
        %v1636 = vmul.f32 %v1404, %v1599
        %v1637 = vmul.f32 %v1405, %v1599
        %v1638 = vmul.f32 %v1406, %v1604
        %v1639 = vmul.f32 %v1407, %v1604
        %v1640 = vmul.f32 %v1408, %v1609
        %v1641 = vmul.f32 %v1409, %v1609
        %v1642 = vmul.f32 %v1410, %v1614
        %v1643 = vmul.f32 %v1411, %v1614
        %v1644 = vmul.f32 %v1412, %v1619
        %v1645 = vmul.f32 %v1413, %v1619
        %v1646 = vmul.f32 %v1414, %v1624
        %v1647 = vmul.f32 %v1415, %v1624
        %v1648 = vmul.f32 %v1416, %v1629
        %v1649 = vmul.f32 %v1417, %v1629
        %v1650 = vmul.f32 %v1418, %v1634
        %v1651 = vmul.f32 %v1419, %v1634
        %1653 = vset.pattern.permute.xlu0 3
        %1654 = vperm.xlu0 %1653, %v1588
        %v1655 = vpop.permute.xlu0 %1654
        %1658 = vset.pattern.permute.xlu0 3
        %1659 = vperm.xlu0 %1658, %v1589
        %v1660 = vpop.permute.xlu0 %1659
        %1663 = vset.pattern.permute.xlu0 3
        %1664 = vperm.xlu0 %1663, %v1590
        %v1665 = vpop.permute.xlu0 %1664
        %1668 = vset.pattern.permute.xlu0 3
        %1669 = vperm.xlu0 %1668, %v1591
        %v1670 = vpop.permute.xlu0 %1669
        %1673 = vset.pattern.permute.xlu0 3
        %1674 = vperm.xlu0 %1673, %v1592
        %v1675 = vpop.permute.xlu0 %1674
        %1678 = vset.pattern.permute.xlu0 3
        %1679 = vperm.xlu0 %1678, %v1593
        %v1680 = vpop.permute.xlu0 %1679
        %1683 = vset.pattern.permute.xlu0 3
        %1684 = vperm.xlu0 %1683, %v1594
        %v1685 = vpop.permute.xlu0 %1684
        %1688 = vset.pattern.permute.xlu0 3
        %1689 = vperm.xlu0 %1688, %v1595
        %v1690 = vpop.permute.xlu0 %1689
        %v1692 = vadd.f32 %v1636, %v1655
        %v1693 = vadd.f32 %v1637, %v1655
        %v1694 = vadd.f32 %v1638, %v1660
        %v1695 = vadd.f32 %v1639, %v1660
        %v1696 = vadd.f32 %v1640, %v1665
        %v1697 = vadd.f32 %v1641, %v1665
        %v1698 = vadd.f32 %v1642, %v1670
        %v1699 = vadd.f32 %v1643, %v1670
        %v1700 = vadd.f32 %v1644, %v1675
        %v1701 = vadd.f32 %v1645, %v1675
        %v1702 = vadd.f32 %v1646, %v1680
        %v1703 = vadd.f32 %v1647, %v1680
        %v1704 = vadd.f32 %v1648, %v1685
        %v1705 = vadd.f32 %v1649, %v1685
        %v1706 = vadd.f32 %v1650, %v1690
        %v1707 = vadd.f32 %v1651, %v1690
        %vm1708 = vcmp.ge.f32.partialorder %v1692, 0.0
        %vm1709 = vcmp.ge.f32.partialorder %v1693, 0.0
        %vm1710 = vcmp.ge.f32.partialorder %v1694, 0.0
        %vm1711 = vcmp.ge.f32.partialorder %v1695, 0.0
        %vm1712 = vcmp.ge.f32.partialorder %v1696, 0.0
        %vm1713 = vcmp.ge.f32.partialorder %v1697, 0.0
        %vm1714 = vcmp.ge.f32.partialorder %v1698, 0.0
        %vm1715 = vcmp.ge.f32.partialorder %v1699, 0.0
        %vm1716 = vcmp.ge.f32.partialorder %v1700, 0.0
        %vm1717 = vcmp.ge.f32.partialorder %v1701, 0.0
        %vm1718 = vcmp.ge.f32.partialorder %v1702, 0.0
        %vm1719 = vcmp.ge.f32.partialorder %v1703, 0.0
        %vm1720 = vcmp.ge.f32.partialorder %v1704, 0.0
        %vm1721 = vcmp.ge.f32.partialorder %v1705, 0.0
        %vm1722 = vcmp.ge.f32.partialorder %v1706, 0.0
        %vm1723 = vcmp.ge.f32.partialorder %v1707, 0.0
        %v1724 = vmul.f32 %v1692, 0.01
        %v1725 = vmul.f32 %v1693, 0.01
        %v1726 = vmul.f32 %v1694, 0.01
        %v1727 = vmul.f32 %v1695, 0.01
        %v1728 = vmul.f32 %v1696, 0.01
        %v1729 = vmul.f32 %v1697, 0.01
        %v1730 = vmul.f32 %v1698, 0.01
        %v1731 = vmul.f32 %v1699, 0.01
        %v1732 = vmul.f32 %v1700, 0.01
        %v1733 = vmul.f32 %v1701, 0.01
        %v1734 = vmul.f32 %v1702, 0.01
        %v1735 = vmul.f32 %v1703, 0.01
        %v1736 = vmul.f32 %v1704, 0.01
        %v1737 = vmul.f32 %v1705, 0.01
        %v1738 = vmul.f32 %v1706, 0.01
        %v1739 = vmul.f32 %v1707, 0.01
        %v1740 = vsel %vm1708, %v1692, %v1724
        %v1741 = vsel %vm1709, %v1693, %v1725
        %v1742 = vsel %vm1710, %v1694, %v1726
        %v1743 = vsel %vm1711, %v1695, %v1727
        %v1744 = vsel %vm1712, %v1696, %v1728
        %v1745 = vsel %vm1713, %v1697, %v1729
        %v1746 = vsel %vm1714, %v1698, %v1730
        %v1747 = vsel %vm1715, %v1699, %v1731
        %v1748 = vsel %vm1716, %v1700, %v1732
        %v1749 = vsel %vm1717, %v1701, %v1733
        %v1750 = vsel %vm1718, %v1702, %v1734
        %v1751 = vsel %vm1719, %v1703, %v1735
        %v1752 = vsel %vm1720, %v1704, %v1736
        %v1753 = vsel %vm1721, %v1705, %v1737
        %v1754 = vsel %vm1722, %v1706, %v1738
        %v1755 = vsel %vm1723, %v1707, %v1739
        %1756 = vst [vmem:[#allocation2 + $0x8] sm:$0xff] %v1740
        %1757 = vst [vmem:[#allocation2 + $0x10] sm:$0xff] %v1741
        %1758 = vst [vmem:[#allocation2 + $0x28] sm:$0xff] %v1742
        %1759 = vst [vmem:[#allocation2 + $0x30] sm:$0xff] %v1743
        %1760 = vst [vmem:[#allocation2 + $0x48] sm:$0xff] %v1744
        %1761 = vst [vmem:[#allocation2 + $0x50] sm:$0xff] %v1745
        %1762 = vst [vmem:[#allocation2 + $0x68] sm:$0xff] %v1746
        %1763 = vst [vmem:[#allocation2 + $0x70] sm:$0xff] %v1747
        %1764 = vst [vmem:[#allocation2 + $0x88] sm:$0xff] %v1748
        %1765 = vst [vmem:[#allocation2 + $0x90] sm:$0xff] %v1749
        %1766 = vst [vmem:[#allocation2 + $0xa8] sm:$0xff] %v1750
        %1767 = vst [vmem:[#allocation2 + $0xb0] sm:$0xff] %v1751
        %1768 = vst [vmem:[#allocation2 + $0xc8] sm:$0xff] %v1752
        %1769 = vst [vmem:[#allocation2 + $0xd0] sm:$0xff] %v1753
        %1770 = vst [vmem:[#allocation2 + $0xe8] sm:$0xff] %v1754
        %1771 = vst [vmem:[#allocation2 + $0xf0] sm:$0xff] %v1755
        %s1772 = scalar_lea.vmem [#allocation6], 576
        %v1773 = vld [vmem:[%s1772] sm:$0xff]
        %v1774 = vld [vmem:[%s1772 + $0x8] sm:$0xff]
        %v1775 = vld [vmem:[%s1772 + $0x10] sm:$0xff]
        %v1776 = vld [vmem:[%s1772 + $0x18] sm:$0xff]
        %v1777 = vld [vmem:[%s1772 + $0x20] sm:$0xff]
        %v1778 = vld [vmem:[%s1772 + $0x28] sm:$0xff]
        %v1779 = vld [vmem:[%s1772 + $0x30] sm:$0xff]
        %v1780 = vld [vmem:[%s1772 + $0x38] sm:$0xff]
        %v1781 = vld [vmem:[#allocation2] sm:$0xff]
        %v1782 = vld [vmem:[#allocation2 + $0x8] sm:$0xff]
        %v1783 = vld [vmem:[#allocation2 + $0x10] sm:$0xff]
        %v1784 = vld [vmem:[#allocation2 + $0x20] sm:$0xff]
        %v1785 = vld [vmem:[#allocation2 + $0x28] sm:$0xff]
        %v1786 = vld [vmem:[#allocation2 + $0x30] sm:$0xff]
        %v1787 = vld [vmem:[#allocation2 + $0x40] sm:$0xff]
        %v1788 = vld [vmem:[#allocation2 + $0x48] sm:$0xff]
        %v1789 = vld [vmem:[#allocation2 + $0x50] sm:$0xff]
        %v1790 = vld [vmem:[#allocation2 + $0x60] sm:$0xff]
        %v1791 = vld [vmem:[#allocation2 + $0x68] sm:$0xff]
        %v1792 = vld [vmem:[#allocation2 + $0x70] sm:$0xff]
        %v1793 = vld [vmem:[#allocation2 + $0x80] sm:$0xff]
        %v1794 = vld [vmem:[#allocation2 + $0x88] sm:$0xff]
        %v1795 = vld [vmem:[#allocation2 + $0x90] sm:$0xff]
        %v1796 = vld [vmem:[#allocation2 + $0xa0] sm:$0xff]
        %v1797 = vld [vmem:[#allocation2 + $0xa8] sm:$0xff]
        %v1798 = vld [vmem:[#allocation2 + $0xb0] sm:$0xff]
        %v1799 = vld [vmem:[#allocation2 + $0xc0] sm:$0xff]
        %v1800 = vld [vmem:[#allocation2 + $0xc8] sm:$0xff]
        %v1801 = vld [vmem:[#allocation2 + $0xd0] sm:$0xff]
        %v1802 = vld [vmem:[#allocation2 + $0xe0] sm:$0xff]
        %v1803 = vld [vmem:[#allocation2 + $0xe8] sm:$0xff]
        %v1804 = vld [vmem:[#allocation2 + $0xf0] sm:$0xff]
        %s1805 = scalar_lea.vmem [#allocation6], 640
        %v1806 = vld [vmem:[%s1805] sm:$0xff]
        %v1807 = vld [vmem:[%s1805 + $0x8] sm:$0xff]
        %v1808 = vld [vmem:[%s1805 + $0x10] sm:$0xff]
        %v1809 = vld [vmem:[%s1805 + $0x18] sm:$0xff]
        %v1810 = vld [vmem:[%s1805 + $0x20] sm:$0xff]
        %v1811 = vld [vmem:[%s1805 + $0x28] sm:$0xff]
        %v1812 = vld [vmem:[%s1805 + $0x30] sm:$0xff]
        %v1813 = vld [vmem:[%s1805 + $0x38] sm:$0xff]
        %v1815 = vsel %vm685, %v1806, 0
        %v1818 = vsel %vm685, %v1807, 0
        %v1821 = vsel %vm685, %v1808, 0
        %v1824 = vsel %vm685, %v1809, 0
        %v1827 = vsel %vm685, %v1810, 0
        %v1830 = vsel %vm685, %v1811, 0
        %v1833 = vsel %vm685, %v1812, 0
        %v1836 = vsel %vm685, %v1813, 0
        %1838 = vmatprep.subr.mxu0 %v1783
        %1839 = vmatpush1.msra.mxu0 %v1782
        %1840 = vmatprep.subr.mxu0 %v1786
        %1841 = vmatpush1.msra.mxu0 %v1785
        %1842 = vmatprep.subr.mxu0 %v1789
        %1843 = vmatpush1.msra.mxu0 %v1788
        %1844 = vmatprep.subr.mxu0 %v1792
        %1845 = vmatpush1.msra.mxu0 %v1791
        %1846 = vmatprep.subr.mxu0 %v1795
        %1847 = vmatpush1.msra.mxu0 %v1794
        %1848 = vmatprep.subr.mxu0 %v1798
        %1849 = vmatpush1.msra.mxu0 %v1797
        %1850 = vmatprep.subr.mxu0 %v1801
        %1851 = vmatpush1.msra.mxu0 %v1800
        %1852 = vmatprep.subr.mxu0 %v1804
        %1853 = vmatpush1.msra.mxu0 %v1803
        %1854 = vmatprep.subr.mxu0 0.0
        %1855 = vmatpush1.msra.mxu0 0.0
        %1856 = vmatprep.subr.mxu0 0.0
        %1857 = vmatpush1.msra.mxu0 0.0
        %1858 = vmatprep.subr.mxu0 0.0
        %1859 = vmatpush1.msra.mxu0 0.0
        %1860 = vmatprep.subr.mxu0 0.0
        %1861 = vmatpush1.msra.mxu0 0.0
        %1862 = vmatprep.subr.mxu0 0.0
        %1863 = vmatpush1.msra.mxu0 0.0
        %1864 = vmatprep.subr.mxu0 0.0
        %1865 = vmatpush1.msra.mxu0 0.0
        %1866 = vmatprep.subr.mxu0 0.0
        %1867 = vmatpush1.msra.mxu0 0.0
        %1868 = vmatprep.subr.mxu0 0.0
        %1869 = vmatpush1.msra.mxu0 0.0
        %1870 = vmatprep.subr.mxu0 0.0
        %1871 = vmatpush1.msra.mxu0 0.0
        %1872 = vmatprep.subr.mxu0 0.0
        %1873 = vmatpush1.msra.mxu0 0.0
        %1874 = vmatprep.subr.mxu0 0.0
        %1875 = vmatpush1.msra.mxu0 0.0
        %1876 = vmatprep.subr.mxu0 0.0
        %1877 = vmatpush1.msra.mxu0 0.0
        %1878 = vmatprep.subr.mxu0 0.0
        %1879 = vmatpush1.msra.mxu0 0.0
        %1880 = vmatprep.subr.mxu0 0.0
        %1881 = vmatpush1.msra.mxu0 0.0
        %1882 = vmatprep.subr.mxu0 0.0
        %1883 = vmatpush1.msra.mxu0 0.0
        %1884 = vmatprep.subr.mxu0 0.0
        %1885 = vmatpush1.msra.mxu0 0.0
        %1886 = vmatprep.subr.mxu0 0.0
        %1887 = vmatpush1.msra.mxu0 0.0
        %1888 = vmatprep.subr.mxu0 0.0
        %1889 = vmatpush1.msra.mxu0 0.0
        %1890 = vmatprep.subr.mxu0 0.0
        %1891 = vmatpush1.msra.mxu0 0.0
        %1892 = vmatprep.subr.mxu0 0.0
        %1893 = vmatpush1.msra.mxu0 0.0
        %1894 = vmatprep.subr.mxu0 0.0
        %1895 = vmatpush1.msra.mxu0 0.0
        %1896 = vmatprep.subr.mxu0 0.0
        %1897 = vmatpush1.msra.mxu0 0.0
        %1898 = vmatprep.subr.mxu0 0.0
        %1899 = vmatpush1.msra.mxu0 0.0
        %1900 = vmatprep.subr.mxu0 0.0
        %1901 = vmatpush1.msra.mxu0 0.0
        %1902 = vmatprep.mubr.f32.mxu0 0.0
        %1903 = vmatmul.mubr.f32.gmra.mrb[0].mxu0 %v1815
        %v1904 = vpop.f32.mrb[0].mxu0
        %v1905 = vadd.f32 0.0, %v1904
        %v1906 = vpop.f32.mrb[0].mxu0
        %v1907 = vadd.f32 0.0, %v1906
        %1908 = vmatprep.mubr.f32.mxu0 0.0
        %1909 = vmatmul.mubr.f32.gmra.mrb[0].mxu0 %v1818
        %v1910 = vpop.f32.mrb[0].mxu0
        %v1911 = vadd.f32 0.0, %v1910
        %v1912 = vpop.f32.mrb[0].mxu0
        %v1913 = vadd.f32 0.0, %v1912
        %1914 = vmatprep.mubr.f32.mxu0 0.0
        %1915 = vmatmul.mubr.f32.gmra.mrb[0].mxu0 %v1821
        %v1916 = vpop.f32.mrb[0].mxu0
        %v1917 = vadd.f32 0.0, %v1916
        %v1918 = vpop.f32.mrb[0].mxu0
        %v1919 = vadd.f32 0.0, %v1918
        %1920 = vmatprep.mubr.f32.mxu0 0.0
        %1921 = vmatmul.mubr.f32.gmra.mrb[0].mxu0 %v1824
        %v1922 = vpop.f32.mrb[0].mxu0
        %v1923 = vadd.f32 0.0, %v1922
        %v1924 = vpop.f32.mrb[0].mxu0
        %v1925 = vadd.f32 0.0, %v1924
        %1926 = vmatprep.mubr.f32.mxu0 0.0
        %1927 = vmatmul.mubr.f32.gmra.mrb[0].mxu0 %v1827
        %v1928 = vpop.f32.mrb[0].mxu0
        %v1929 = vadd.f32 0.0, %v1928
        %v1930 = vpop.f32.mrb[0].mxu0
        %v1931 = vadd.f32 0.0, %v1930
        %1932 = vmatprep.mubr.f32.mxu0 0.0
        %1933 = vmatmul.mubr.f32.gmra.mrb[0].mxu0 %v1830
        %v1934 = vpop.f32.mrb[0].mxu0
        %v1935 = vadd.f32 0.0, %v1934
        %v1936 = vpop.f32.mrb[0].mxu0
        %v1937 = vadd.f32 0.0, %v1936
        %1938 = vmatprep.mubr.f32.mxu0 0.0
        %1939 = vmatmul.mubr.f32.gmra.mrb[0].mxu0 %v1833
        %v1940 = vpop.f32.mrb[0].mxu0
        %v1941 = vadd.f32 0.0, %v1940
        %v1942 = vpop.f32.mrb[0].mxu0
        %v1943 = vadd.f32 0.0, %v1942
        %1944 = vmatprep.mubr.f32.mxu0 0.0
        %1945 = vmatmul.mubr.f32.gmra.mrb[0].mxu0 %v1836
        %v1946 = vpop.f32.mrb[0].mxu0
        %v1947 = vadd.f32 0.0, %v1946
        %v1948 = vpop.f32.mrb[0].mxu0
        %v1949 = vadd.f32 0.0, %v1948
        %1950 = vdwg.mxu0
        %1975 = vrot.lane.b32.xlu0 %v1781, 1
        %v1976 = vpop.permute.xlu0 %1975
        %1977 = vrot.lane.b32.xlu0 %v1782, 1
        %v1978 = vpop.permute.xlu0 %1977
        %1979 = vrot.lane.b32.xlu0 %v1783, 1
        %v1980 = vpop.permute.xlu0 %1979
        %1981 = vrot.lane.b32.xlu0 %v1784, 1
        %v1982 = vpop.permute.xlu0 %1981
        %1983 = vrot.lane.b32.xlu0 %v1785, 1
        %v1984 = vpop.permute.xlu0 %1983
        %1985 = vrot.lane.b32.xlu0 %v1786, 1
        %v1986 = vpop.permute.xlu0 %1985
        %1987 = vrot.lane.b32.xlu0 %v1787, 1
        %v1988 = vpop.permute.xlu0 %1987
        %1989 = vrot.lane.b32.xlu0 %v1788, 1
        %v1990 = vpop.permute.xlu0 %1989
        %1991 = vrot.lane.b32.xlu0 %v1789, 1
        %v1992 = vpop.permute.xlu0 %1991
        %1993 = vrot.lane.b32.xlu0 %v1790, 1
        %v1994 = vpop.permute.xlu0 %1993
        %1995 = vrot.lane.b32.xlu0 %v1791, 1
        %v1996 = vpop.permute.xlu0 %1995
        %1997 = vrot.lane.b32.xlu0 %v1792, 1
        %v1998 = vpop.permute.xlu0 %1997
        %1999 = vrot.lane.b32.xlu0 %v1793, 1
        %v2000 = vpop.permute.xlu0 %1999
        %2001 = vrot.lane.b32.xlu0 %v1794, 1
        %v2002 = vpop.permute.xlu0 %2001
        %2003 = vrot.lane.b32.xlu0 %v1795, 1
        %v2004 = vpop.permute.xlu0 %2003
        %2005 = vrot.lane.b32.xlu0 %v1796, 1
        %v2006 = vpop.permute.xlu0 %2005
        %2007 = vrot.lane.b32.xlu0 %v1797, 1
        %v2008 = vpop.permute.xlu0 %2007
        %2009 = vrot.lane.b32.xlu0 %v1798, 1
        %v2010 = vpop.permute.xlu0 %2009
        %2011 = vrot.lane.b32.xlu0 %v1799, 1
        %v2012 = vpop.permute.xlu0 %2011
        %2013 = vrot.lane.b32.xlu0 %v1800, 1
        %v2014 = vpop.permute.xlu0 %2013
        %2015 = vrot.lane.b32.xlu0 %v1801, 1
        %v2016 = vpop.permute.xlu0 %2015
        %2017 = vrot.lane.b32.xlu0 %v1802, 1
        %v2018 = vpop.permute.xlu0 %2017
        %2019 = vrot.lane.b32.xlu0 %v1803, 1
        %v2020 = vpop.permute.xlu0 %2019
        %2021 = vrot.lane.b32.xlu0 %v1804, 1
        %v2022 = vpop.permute.xlu0 %2021
        %v2023 = vsel %vm895, %v1976, %v1978
        %v2024 = vsel %vm895, %v1978, %v1980
        %v2025 = vsel %vm895, %v1982, %v1984
        %v2026 = vsel %vm895, %v1984, %v1986
        %v2027 = vsel %vm895, %v1988, %v1990
        %v2028 = vsel %vm895, %v1990, %v1992
        %v2029 = vsel %vm895, %v1994, %v1996
        %v2030 = vsel %vm895, %v1996, %v1998
        %v2031 = vsel %vm895, %v2000, %v2002
        %v2032 = vsel %vm895, %v2002, %v2004
        %v2033 = vsel %vm895, %v2006, %v2008
        %v2034 = vsel %vm895, %v2008, %v2010
        %v2035 = vsel %vm895, %v2012, %v2014
        %v2036 = vsel %vm895, %v2014, %v2016
        %v2037 = vsel %vm895, %v2018, %v2020
        %v2038 = vsel %vm895, %v2020, %v2022
        %v2056 = vsel %vm685, %v1773, 0
        %v2059 = vsel %vm685, %v1774, 0
        %v2062 = vsel %vm685, %v1775, 0
        %v2065 = vsel %vm685, %v1776, 0
        %v2068 = vsel %vm685, %v1777, 0
        %v2071 = vsel %vm685, %v1778, 0
        %v2074 = vsel %vm685, %v1779, 0
        %v2077 = vsel %vm685, %v1780, 0
        %2079 = vmatprep.subr.mxu0 %v2024
        %2080 = vmatpush1.msra.mxu0 %v2023
        %2081 = vmatprep.subr.mxu0 %v2026
        %2082 = vmatpush1.msra.mxu0 %v2025
        %2083 = vmatprep.subr.mxu0 %v2028
        %2084 = vmatpush1.msra.mxu0 %v2027
        %2085 = vmatprep.subr.mxu0 %v2030
        %2086 = vmatpush1.msra.mxu0 %v2029
        %2087 = vmatprep.subr.mxu0 %v2032
        %2088 = vmatpush1.msra.mxu0 %v2031
        %2089 = vmatprep.subr.mxu0 %v2034
        %2090 = vmatpush1.msra.mxu0 %v2033
        %2091 = vmatprep.subr.mxu0 %v2036
        %2092 = vmatpush1.msra.mxu0 %v2035
        %2093 = vmatprep.subr.mxu0 %v2038
        %2094 = vmatpush1.msra.mxu0 %v2037
        %2095 = vmatprep.subr.mxu0 0.0
        %2096 = vmatpush1.msra.mxu0 0.0
        %2097 = vmatprep.subr.mxu0 0.0
        %2098 = vmatpush1.msra.mxu0 0.0
        %2099 = vmatprep.subr.mxu0 0.0
        %2100 = vmatpush1.msra.mxu0 0.0
        %2101 = vmatprep.subr.mxu0 0.0
        %2102 = vmatpush1.msra.mxu0 0.0
        %2103 = vmatprep.subr.mxu0 0.0
        %2104 = vmatpush1.msra.mxu0 0.0
        %2105 = vmatprep.subr.mxu0 0.0
        %2106 = vmatpush1.msra.mxu0 0.0
        %2107 = vmatprep.subr.mxu0 0.0
        %2108 = vmatpush1.msra.mxu0 0.0
        %2109 = vmatprep.subr.mxu0 0.0
        %2110 = vmatpush1.msra.mxu0 0.0
        %2111 = vmatprep.subr.mxu0 0.0
        %2112 = vmatpush1.msra.mxu0 0.0
        %2113 = vmatprep.subr.mxu0 0.0
        %2114 = vmatpush1.msra.mxu0 0.0
        %2115 = vmatprep.subr.mxu0 0.0
        %2116 = vmatpush1.msra.mxu0 0.0
        %2117 = vmatprep.subr.mxu0 0.0
        %2118 = vmatpush1.msra.mxu0 0.0
        %2119 = vmatprep.subr.mxu0 0.0
        %2120 = vmatpush1.msra.mxu0 0.0
        %2121 = vmatprep.subr.mxu0 0.0
        %2122 = vmatpush1.msra.mxu0 0.0
        %2123 = vmatprep.subr.mxu0 0.0
        %2124 = vmatpush1.msra.mxu0 0.0
        %2125 = vmatprep.subr.mxu0 0.0
        %2126 = vmatpush1.msra.mxu0 0.0
        %2127 = vmatprep.subr.mxu0 0.0
        %2128 = vmatpush1.msra.mxu0 0.0
        %2129 = vmatprep.subr.mxu0 0.0
        %2130 = vmatpush1.msra.mxu0 0.0
        %2131 = vmatprep.subr.mxu0 0.0
        %2132 = vmatpush1.msra.mxu0 0.0
        %2133 = vmatprep.subr.mxu0 0.0
        %2134 = vmatpush1.msra.mxu0 0.0
        %2135 = vmatprep.subr.mxu0 0.0
        %2136 = vmatpush1.msra.mxu0 0.0
        %2137 = vmatprep.subr.mxu0 0.0
        %2138 = vmatpush1.msra.mxu0 0.0
        %2139 = vmatprep.subr.mxu0 0.0
        %2140 = vmatpush1.msra.mxu0 0.0
        %2141 = vmatprep.subr.mxu0 0.0
        %2142 = vmatpush1.msra.mxu0 0.0
        %2143 = vmatprep.mubr.f32.mxu0 0.0
        %2144 = vmatmul.mubr.f32.gmra.mrb[0].mxu0 %v2056
        %v2145 = vpop.f32.mrb[0].mxu0
        %v2146 = vadd.f32 %v1905, %v2145
        %v2147 = vpop.f32.mrb[0].mxu0
        %v2148 = vadd.f32 %v1907, %v2147
        %2149 = vmatprep.mubr.f32.mxu0 0.0
        %2150 = vmatmul.mubr.f32.gmra.mrb[0].mxu0 %v2059
        %v2151 = vpop.f32.mrb[0].mxu0
        %v2152 = vadd.f32 %v1911, %v2151
        %v2153 = vpop.f32.mrb[0].mxu0
        %v2154 = vadd.f32 %v1913, %v2153
        %2155 = vmatprep.mubr.f32.mxu0 0.0
        %2156 = vmatmul.mubr.f32.gmra.mrb[0].mxu0 %v2062
        %v2157 = vpop.f32.mrb[0].mxu0
        %v2158 = vadd.f32 %v1917, %v2157
        %v2159 = vpop.f32.mrb[0].mxu0
        %v2160 = vadd.f32 %v1919, %v2159
        %2161 = vmatprep.mubr.f32.mxu0 0.0
        %2162 = vmatmul.mubr.f32.gmra.mrb[0].mxu0 %v2065
        %v2163 = vpop.f32.mrb[0].mxu0
        %v2164 = vadd.f32 %v1923, %v2163
        %v2165 = vpop.f32.mrb[0].mxu0
        %v2166 = vadd.f32 %v1925, %v2165
        %2167 = vmatprep.mubr.f32.mxu0 0.0
        %2168 = vmatmul.mubr.f32.gmra.mrb[0].mxu0 %v2068
        %v2169 = vpop.f32.mrb[0].mxu0
        %v2170 = vadd.f32 %v1929, %v2169
        %v2171 = vpop.f32.mrb[0].mxu0
        %v2172 = vadd.f32 %v1931, %v2171
        %2173 = vmatprep.mubr.f32.mxu0 0.0
        %2174 = vmatmul.mubr.f32.gmra.mrb[0].mxu0 %v2071
        %v2175 = vpop.f32.mrb[0].mxu0
        %v2176 = vadd.f32 %v1935, %v2175
        %v2177 = vpop.f32.mrb[0].mxu0
        %v2178 = vadd.f32 %v1937, %v2177
        %2179 = vmatprep.mubr.f32.mxu0 0.0
        %2180 = vmatmul.mubr.f32.gmra.mrb[0].mxu0 %v2074
        %v2181 = vpop.f32.mrb[0].mxu0
        %v2182 = vadd.f32 %v1941, %v2181
        %v2183 = vpop.f32.mrb[0].mxu0
        %v2184 = vadd.f32 %v1943, %v2183
        %2185 = vmatprep.mubr.f32.mxu0 0.0
        %2186 = vmatmul.mubr.f32.gmra.mrb[0].mxu0 %v2077
        %v2187 = vpop.f32.mrb[0].mxu0
        %v2188 = vadd.f32 %v1947, %v2187
        %v2189 = vpop.f32.mrb[0].mxu0
        %v2190 = vadd.f32 %v1949, %v2189
        %2191 = vdwg.mxu0
        %s2192 = scalar_lea.vmem [#allocation6], 704
        %v2193 = vld [vmem:[%s2192] sm:$0xff]
        %v2194 = vld [vmem:[%s2192 + $0x8] sm:$0xff]
        %v2195 = vld [vmem:[%s2192 + $0x10] sm:$0xff]
        %v2196 = vld [vmem:[%s2192 + $0x18] sm:$0xff]
        %v2197 = vld [vmem:[%s2192 + $0x20] sm:$0xff]
        %v2198 = vld [vmem:[%s2192 + $0x28] sm:$0xff]
        %v2199 = vld [vmem:[%s2192 + $0x30] sm:$0xff]
        %v2200 = vld [vmem:[%s2192 + $0x38] sm:$0xff]
        %v2201 = vld [vmem:[#allocation2 + $0x8] sm:$0xff]
        %v2202 = vld [vmem:[#allocation2 + $0x10] sm:$0xff]
        %v2203 = vld [vmem:[#allocation2 + $0x18] sm:$0xff]
        %v2204 = vld [vmem:[#allocation2 + $0x28] sm:$0xff]
        %v2205 = vld [vmem:[#allocation2 + $0x30] sm:$0xff]
        %v2206 = vld [vmem:[#allocation2 + $0x38] sm:$0xff]
        %v2207 = vld [vmem:[#allocation2 + $0x48] sm:$0xff]
        %v2208 = vld [vmem:[#allocation2 + $0x50] sm:$0xff]
        %v2209 = vld [vmem:[#allocation2 + $0x58] sm:$0xff]
        %v2210 = vld [vmem:[#allocation2 + $0x68] sm:$0xff]
        %v2211 = vld [vmem:[#allocation2 + $0x70] sm:$0xff]
        %v2212 = vld [vmem:[#allocation2 + $0x78] sm:$0xff]
        %v2213 = vld [vmem:[#allocation2 + $0x88] sm:$0xff]
        %v2214 = vld [vmem:[#allocation2 + $0x90] sm:$0xff]
        %v2215 = vld [vmem:[#allocation2 + $0x98] sm:$0xff]
        %v2216 = vld [vmem:[#allocation2 + $0xa8] sm:$0xff]
        %v2217 = vld [vmem:[#allocation2 + $0xb0] sm:$0xff]
        %v2218 = vld [vmem:[#allocation2 + $0xb8] sm:$0xff]
        %v2219 = vld [vmem:[#allocation2 + $0xc8] sm:$0xff]
        %v2220 = vld [vmem:[#allocation2 + $0xd0] sm:$0xff]
        %v2221 = vld [vmem:[#allocation2 + $0xd8] sm:$0xff]
        %v2222 = vld [vmem:[#allocation2 + $0xe8] sm:$0xff]
        %v2223 = vld [vmem:[#allocation2 + $0xf0] sm:$0xff]
        %v2224 = vld [vmem:[#allocation2 + $0xf8] sm:$0xff]
        %2249 = vrot.lane.b32.xlu0 %v2201, 127
        %v2250 = vpop.permute.xlu0 %2249
        %2251 = vrot.lane.b32.xlu0 %v2202, 127
        %v2252 = vpop.permute.xlu0 %2251
        %2253 = vrot.lane.b32.xlu0 %v2203, 127
        %v2254 = vpop.permute.xlu0 %2253
        %2255 = vrot.lane.b32.xlu0 %v2204, 127
        %v2256 = vpop.permute.xlu0 %2255
        %2257 = vrot.lane.b32.xlu0 %v2205, 127
        %v2258 = vpop.permute.xlu0 %2257
        %2259 = vrot.lane.b32.xlu0 %v2206, 127
        %v2260 = vpop.permute.xlu0 %2259
        %2261 = vrot.lane.b32.xlu0 %v2207, 127
        %v2262 = vpop.permute.xlu0 %2261
        %2263 = vrot.lane.b32.xlu0 %v2208, 127
        %v2264 = vpop.permute.xlu0 %2263
        %2265 = vrot.lane.b32.xlu0 %v2209, 127
        %v2266 = vpop.permute.xlu0 %2265
        %2267 = vrot.lane.b32.xlu0 %v2210, 127
        %v2268 = vpop.permute.xlu0 %2267
        %2269 = vrot.lane.b32.xlu0 %v2211, 127
        %v2270 = vpop.permute.xlu0 %2269
        %2271 = vrot.lane.b32.xlu0 %v2212, 127
        %v2272 = vpop.permute.xlu0 %2271
        %2273 = vrot.lane.b32.xlu0 %v2213, 127
        %v2274 = vpop.permute.xlu0 %2273
        %2275 = vrot.lane.b32.xlu0 %v2214, 127
        %v2276 = vpop.permute.xlu0 %2275
        %2277 = vrot.lane.b32.xlu0 %v2215, 127
        %v2278 = vpop.permute.xlu0 %2277
        %2279 = vrot.lane.b32.xlu0 %v2216, 127
        %v2280 = vpop.permute.xlu0 %2279
        %2281 = vrot.lane.b32.xlu0 %v2217, 127
        %v2282 = vpop.permute.xlu0 %2281
        %2283 = vrot.lane.b32.xlu0 %v2218, 127
        %v2284 = vpop.permute.xlu0 %2283
        %2285 = vrot.lane.b32.xlu0 %v2219, 127
        %v2286 = vpop.permute.xlu0 %2285
        %2287 = vrot.lane.b32.xlu0 %v2220, 127
        %v2288 = vpop.permute.xlu0 %2287
        %2289 = vrot.lane.b32.xlu0 %v2221, 127
        %v2290 = vpop.permute.xlu0 %2289
        %2291 = vrot.lane.b32.xlu0 %v2222, 127
        %v2292 = vpop.permute.xlu0 %2291
        %2293 = vrot.lane.b32.xlu0 %v2223, 127
        %v2294 = vpop.permute.xlu0 %2293
        %2295 = vrot.lane.b32.xlu0 %v2224, 127
        %v2296 = vpop.permute.xlu0 %2295
        %v2297 = vsel %vm1170, %v2250, %v2252
        %v2298 = vsel %vm1170, %v2252, %v2254
        %v2299 = vsel %vm1170, %v2256, %v2258
        %v2300 = vsel %vm1170, %v2258, %v2260
        %v2301 = vsel %vm1170, %v2262, %v2264
        %v2302 = vsel %vm1170, %v2264, %v2266
        %v2303 = vsel %vm1170, %v2268, %v2270
        %v2304 = vsel %vm1170, %v2270, %v2272
        %v2305 = vsel %vm1170, %v2274, %v2276
        %v2306 = vsel %vm1170, %v2276, %v2278
        %v2307 = vsel %vm1170, %v2280, %v2282
        %v2308 = vsel %vm1170, %v2282, %v2284
        %v2309 = vsel %vm1170, %v2286, %v2288
        %v2310 = vsel %vm1170, %v2288, %v2290
        %v2311 = vsel %vm1170, %v2292, %v2294
        %v2312 = vsel %vm1170, %v2294, %v2296
        %v2330 = vsel %vm685, %v2193, 0
        %v2333 = vsel %vm685, %v2194, 0
        %v2336 = vsel %vm685, %v2195, 0
        %v2339 = vsel %vm685, %v2196, 0
        %v2342 = vsel %vm685, %v2197, 0
        %v2345 = vsel %vm685, %v2198, 0
        %v2348 = vsel %vm685, %v2199, 0
        %v2351 = vsel %vm685, %v2200, 0
        %2353 = vmatprep.subr.mxu0 %v2298
        %2354 = vmatpush1.msra.mxu0 %v2297
        %2355 = vmatprep.subr.mxu0 %v2300
        %2356 = vmatpush1.msra.mxu0 %v2299
        %2357 = vmatprep.subr.mxu0 %v2302
        %2358 = vmatpush1.msra.mxu0 %v2301
        %2359 = vmatprep.subr.mxu0 %v2304
        %2360 = vmatpush1.msra.mxu0 %v2303
        %2361 = vmatprep.subr.mxu0 %v2306
        %2362 = vmatpush1.msra.mxu0 %v2305
        %2363 = vmatprep.subr.mxu0 %v2308
        %2364 = vmatpush1.msra.mxu0 %v2307
        %2365 = vmatprep.subr.mxu0 %v2310
        %2366 = vmatpush1.msra.mxu0 %v2309
        %2367 = vmatprep.subr.mxu0 %v2312
        %2368 = vmatpush1.msra.mxu0 %v2311
        %2369 = vmatprep.subr.mxu0 0.0
        %2370 = vmatpush1.msra.mxu0 0.0
        %2371 = vmatprep.subr.mxu0 0.0
        %2372 = vmatpush1.msra.mxu0 0.0
        %2373 = vmatprep.subr.mxu0 0.0
        %2374 = vmatpush1.msra.mxu0 0.0
        %2375 = vmatprep.subr.mxu0 0.0
        %2376 = vmatpush1.msra.mxu0 0.0
        %2377 = vmatprep.subr.mxu0 0.0
        %2378 = vmatpush1.msra.mxu0 0.0
        %2379 = vmatprep.subr.mxu0 0.0
        %2380 = vmatpush1.msra.mxu0 0.0
        %2381 = vmatprep.subr.mxu0 0.0
        %2382 = vmatpush1.msra.mxu0 0.0
        %2383 = vmatprep.subr.mxu0 0.0
        %2384 = vmatpush1.msra.mxu0 0.0
        %2385 = vmatprep.subr.mxu0 0.0
        %2386 = vmatpush1.msra.mxu0 0.0
        %2387 = vmatprep.subr.mxu0 0.0
        %2388 = vmatpush1.msra.mxu0 0.0
        %2389 = vmatprep.subr.mxu0 0.0
        %2390 = vmatpush1.msra.mxu0 0.0
        %2391 = vmatprep.subr.mxu0 0.0
        %2392 = vmatpush1.msra.mxu0 0.0
        %2393 = vmatprep.subr.mxu0 0.0
        %2394 = vmatpush1.msra.mxu0 0.0
        %2395 = vmatprep.subr.mxu0 0.0
        %2396 = vmatpush1.msra.mxu0 0.0
        %2397 = vmatprep.subr.mxu0 0.0
        %2398 = vmatpush1.msra.mxu0 0.0
        %2399 = vmatprep.subr.mxu0 0.0
        %2400 = vmatpush1.msra.mxu0 0.0
        %2401 = vmatprep.subr.mxu0 0.0
        %2402 = vmatpush1.msra.mxu0 0.0
        %2403 = vmatprep.subr.mxu0 0.0
        %2404 = vmatpush1.msra.mxu0 0.0
        %2405 = vmatprep.subr.mxu0 0.0
        %2406 = vmatpush1.msra.mxu0 0.0
        %2407 = vmatprep.subr.mxu0 0.0
        %2408 = vmatpush1.msra.mxu0 0.0
        %2409 = vmatprep.subr.mxu0 0.0
        %2410 = vmatpush1.msra.mxu0 0.0
        %2411 = vmatprep.subr.mxu0 0.0
        %2412 = vmatpush1.msra.mxu0 0.0
        %2413 = vmatprep.subr.mxu0 0.0
        %2414 = vmatpush1.msra.mxu0 0.0
        %2415 = vmatprep.subr.mxu0 0.0
        %2416 = vmatpush1.msra.mxu0 0.0
        %2417 = vmatprep.mubr.f32.mxu0 0.0
        %2418 = vmatmul.mubr.f32.gmra.mrb[0].mxu0 %v2330
        %v2419 = vpop.f32.mrb[0].mxu0
        %v2420 = vadd.f32 0.0, %v2419
        %v2421 = vpop.f32.mrb[0].mxu0
        %v2422 = vadd.f32 0.0, %v2421
        %2423 = vmatprep.mubr.f32.mxu0 0.0
        %2424 = vmatmul.mubr.f32.gmra.mrb[0].mxu0 %v2333
        %v2425 = vpop.f32.mrb[0].mxu0
        %v2426 = vadd.f32 0.0, %v2425
        %v2427 = vpop.f32.mrb[0].mxu0
        %v2428 = vadd.f32 0.0, %v2427
        %2429 = vmatprep.mubr.f32.mxu0 0.0
        %2430 = vmatmul.mubr.f32.gmra.mrb[0].mxu0 %v2336
        %v2431 = vpop.f32.mrb[0].mxu0
        %v2432 = vadd.f32 0.0, %v2431
        %v2433 = vpop.f32.mrb[0].mxu0
        %v2434 = vadd.f32 0.0, %v2433
        %2435 = vmatprep.mubr.f32.mxu0 0.0
        %2436 = vmatmul.mubr.f32.gmra.mrb[0].mxu0 %v2339
        %v2437 = vpop.f32.mrb[0].mxu0
        %v2438 = vadd.f32 0.0, %v2437
        %v2439 = vpop.f32.mrb[0].mxu0
        %v2440 = vadd.f32 0.0, %v2439
        %2441 = vmatprep.mubr.f32.mxu0 0.0
        %2442 = vmatmul.mubr.f32.gmra.mrb[0].mxu0 %v2342
        %v2443 = vpop.f32.mrb[0].mxu0
        %v2444 = vadd.f32 0.0, %v2443
        %v2445 = vpop.f32.mrb[0].mxu0
        %v2446 = vadd.f32 0.0, %v2445
        %2447 = vmatprep.mubr.f32.mxu0 0.0
        %2448 = vmatmul.mubr.f32.gmra.mrb[0].mxu0 %v2345
        %v2449 = vpop.f32.mrb[0].mxu0
        %v2450 = vadd.f32 0.0, %v2449
        %v2451 = vpop.f32.mrb[0].mxu0
        %v2452 = vadd.f32 0.0, %v2451
        %2453 = vmatprep.mubr.f32.mxu0 0.0
        %2454 = vmatmul.mubr.f32.gmra.mrb[0].mxu0 %v2348
        %v2455 = vpop.f32.mrb[0].mxu0
        %v2456 = vadd.f32 0.0, %v2455
        %v2457 = vpop.f32.mrb[0].mxu0
        %v2458 = vadd.f32 0.0, %v2457
        %2459 = vmatprep.mubr.f32.mxu0 0.0
        %2460 = vmatmul.mubr.f32.gmra.mrb[0].mxu0 %v2351
        %v2461 = vpop.f32.mrb[0].mxu0
        %v2462 = vadd.f32 0.0, %v2461
        %v2463 = vpop.f32.mrb[0].mxu0
        %v2464 = vadd.f32 0.0, %v2463
        %2465 = vdwg.mxu0
        %v2466 = vadd.f32 %v2146, %v2420
        %v2467 = vadd.f32 %v2148, %v2422
        %v2468 = vadd.f32 %v2152, %v2426
        %v2469 = vadd.f32 %v2154, %v2428
        %v2470 = vadd.f32 %v2158, %v2432
        %v2471 = vadd.f32 %v2160, %v2434
        %v2472 = vadd.f32 %v2164, %v2438
        %v2473 = vadd.f32 %v2166, %v2440
        %v2474 = vadd.f32 %v2170, %v2444
        %v2475 = vadd.f32 %v2172, %v2446
        %v2476 = vadd.f32 %v2176, %v2450
        %v2477 = vadd.f32 %v2178, %v2452
        %v2478 = vadd.f32 %v2182, %v2456
        %v2479 = vadd.f32 %v2184, %v2458
        %v2480 = vadd.f32 %v2188, %v2462
        %v2481 = vadd.f32 %v2190, %v2464
        %v2482 = vld [vmem:[%s2] sm:$0xff]
        %v2483 = vld [vmem:[%s2 + $0x8] sm:$0xff]
        %v2484 = vld [vmem:[%s2 + $0x10] sm:$0xff]
        %v2485 = vld [vmem:[%s2 + $0x18] sm:$0xff]
        %v2486 = vld [vmem:[%s2 + $0x20] sm:$0xff]
        %v2487 = vld [vmem:[%s2 + $0x28] sm:$0xff]
        %v2488 = vld [vmem:[%s2 + $0x30] sm:$0xff]
        %v2489 = vld [vmem:[%s2 + $0x38] sm:$0xff]
        %2491 = vset.pattern.permute.xlu0 3
        %2492 = vperm.xlu0 %2491, %v2482
        %v2493 = vpop.permute.xlu0 %2492
        %2496 = vset.pattern.permute.xlu0 3
        %2497 = vperm.xlu0 %2496, %v2483
        %v2498 = vpop.permute.xlu0 %2497
        %2501 = vset.pattern.permute.xlu0 3
        %2502 = vperm.xlu0 %2501, %v2484
        %v2503 = vpop.permute.xlu0 %2502
        %2506 = vset.pattern.permute.xlu0 3
        %2507 = vperm.xlu0 %2506, %v2485
        %v2508 = vpop.permute.xlu0 %2507
        %2511 = vset.pattern.permute.xlu0 3
        %2512 = vperm.xlu0 %2511, %v2486
        %v2513 = vpop.permute.xlu0 %2512
        %2516 = vset.pattern.permute.xlu0 3
        %2517 = vperm.xlu0 %2516, %v2487
        %v2518 = vpop.permute.xlu0 %2517
        %2521 = vset.pattern.permute.xlu0 3
        %2522 = vperm.xlu0 %2521, %v2488
        %v2523 = vpop.permute.xlu0 %2522
        %2526 = vset.pattern.permute.xlu0 3
        %2527 = vperm.xlu0 %2526, %v2489
        %v2528 = vpop.permute.xlu0 %2527
        %v2530 = vadd.f32 %v2466, %v2493
        %v2531 = vadd.f32 %v2467, %v2493
        %v2532 = vadd.f32 %v2468, %v2498
        %v2533 = vadd.f32 %v2469, %v2498
        %v2534 = vadd.f32 %v2470, %v2503
        %v2535 = vadd.f32 %v2471, %v2503
        %v2536 = vadd.f32 %v2472, %v2508
        %v2537 = vadd.f32 %v2473, %v2508
        %v2538 = vadd.f32 %v2474, %v2513
        %v2539 = vadd.f32 %v2475, %v2513
        %v2540 = vadd.f32 %v2476, %v2518
        %v2541 = vadd.f32 %v2477, %v2518
        %v2542 = vadd.f32 %v2478, %v2523
        %v2543 = vadd.f32 %v2479, %v2523
        %v2544 = vadd.f32 %v2480, %v2528
        %v2545 = vadd.f32 %v2481, %v2528
        %v2546 = vadd.f32 %v275, %v2530
        %v2547 = vadd.f32 %v276, %v2531
        %v2548 = vadd.f32 %v277, %v2532
        %v2549 = vadd.f32 %v278, %v2533
        %v2550 = vadd.f32 %v279, %v2534
        %v2551 = vadd.f32 %v280, %v2535
        %v2552 = vadd.f32 %v281, %v2536
        %v2553 = vadd.f32 %v282, %v2537
        %v2554 = vadd.f32 %v283, %v2538
        %v2555 = vadd.f32 %v284, %v2539
        %v2556 = vadd.f32 %v285, %v2540
        %v2557 = vadd.f32 %v286, %v2541
        %v2558 = vadd.f32 %v287, %v2542
        %v2559 = vadd.f32 %v288, %v2543
        %v2560 = vadd.f32 %v289, %v2544
        %v2561 = vadd.f32 %v290, %v2545
        %v2562 = vadd.f32 %v2546, %v2547
        %2563 = vadd.xlane.f32.xlu0 %v2562
        %v2564 = vpop.xlane.xlu0 %2563
        %v2565 = vadd.f32 %v2548, %v2549
        %2566 = vadd.xlane.f32.xlu0 %v2565
        %v2567 = vpop.xlane.xlu0 %2566
        %v2568 = vadd.f32 %v2550, %v2551
        %2569 = vadd.xlane.f32.xlu0 %v2568
        %v2570 = vpop.xlane.xlu0 %2569
        %v2571 = vadd.f32 %v2552, %v2553
        %2572 = vadd.xlane.f32.xlu0 %v2571
        %v2573 = vpop.xlane.xlu0 %2572
        %v2574 = vadd.f32 %v2554, %v2555
        %2575 = vadd.xlane.f32.xlu0 %v2574
        %v2576 = vpop.xlane.xlu0 %2575
        %v2577 = vadd.f32 %v2556, %v2557
        %2578 = vadd.xlane.f32.xlu0 %v2577
        %v2579 = vpop.xlane.xlu0 %2578
        %v2580 = vadd.f32 %v2558, %v2559
        %2581 = vadd.xlane.f32.xlu0 %v2580
        %v2582 = vpop.xlane.xlu0 %2581
        %v2583 = vadd.f32 %v2560, %v2561
        %2584 = vadd.xlane.f32.xlu0 %v2583
        %v2585 = vpop.xlane.xlu0 %2584
        %v2586 = vmul.f32 %v2564, %v315
        %v2587 = vmul.f32 %v2567, %v315
        %v2588 = vmul.f32 %v2570, %v315
        %v2589 = vmul.f32 %v2573, %v315
        %v2590 = vmul.f32 %v2576, %v315
        %v2591 = vmul.f32 %v2579, %v315
        %v2592 = vmul.f32 %v2582, %v315
        %v2593 = vmul.f32 %v2585, %v315
        %v2594 = vmul.f32 %v2546, %v2546
        %v2595 = vmul.f32 %v2547, %v2547
        %v2596 = vmul.f32 %v2548, %v2548
        %v2597 = vmul.f32 %v2549, %v2549
        %v2598 = vmul.f32 %v2550, %v2550
        %v2599 = vmul.f32 %v2551, %v2551
        %v2600 = vmul.f32 %v2552, %v2552
        %v2601 = vmul.f32 %v2553, %v2553
        %v2602 = vmul.f32 %v2554, %v2554
        %v2603 = vmul.f32 %v2555, %v2555
        %v2604 = vmul.f32 %v2556, %v2556
        %v2605 = vmul.f32 %v2557, %v2557
        %v2606 = vmul.f32 %v2558, %v2558
        %v2607 = vmul.f32 %v2559, %v2559
        %v2608 = vmul.f32 %v2560, %v2560
        %v2609 = vmul.f32 %v2561, %v2561
        %v2610 = vadd.f32 %v2594, %v2595
        %2611 = vadd.xlane.f32.xlu0 %v2610
        %v2612 = vpop.xlane.xlu0 %2611
        %v2613 = vadd.f32 %v2596, %v2597
        %2614 = vadd.xlane.f32.xlu0 %v2613
        %v2615 = vpop.xlane.xlu0 %2614
        %v2616 = vadd.f32 %v2598, %v2599
        %2617 = vadd.xlane.f32.xlu0 %v2616
        %v2618 = vpop.xlane.xlu0 %2617
        %v2619 = vadd.f32 %v2600, %v2601
        %2620 = vadd.xlane.f32.xlu0 %v2619
        %v2621 = vpop.xlane.xlu0 %2620
        %v2622 = vadd.f32 %v2602, %v2603
        %2623 = vadd.xlane.f32.xlu0 %v2622
        %v2624 = vpop.xlane.xlu0 %2623
        %v2625 = vadd.f32 %v2604, %v2605
        %2626 = vadd.xlane.f32.xlu0 %v2625
        %v2627 = vpop.xlane.xlu0 %2626
        %v2628 = vadd.f32 %v2606, %v2607
        %2629 = vadd.xlane.f32.xlu0 %v2628
        %v2630 = vpop.xlane.xlu0 %2629
        %v2631 = vadd.f32 %v2608, %v2609
        %2632 = vadd.xlane.f32.xlu0 %v2631
        %v2633 = vpop.xlane.xlu0 %2632
        %v2634 = vmul.f32 %v2612, %v315
        %v2635 = vmul.f32 %v2615, %v315
        %v2636 = vmul.f32 %v2618, %v315
        %v2637 = vmul.f32 %v2621, %v315
        %v2638 = vmul.f32 %v2624, %v315
        %v2639 = vmul.f32 %v2627, %v315
        %v2640 = vmul.f32 %v2630, %v315
        %v2641 = vmul.f32 %v2633, %v315
        %v2642 = vmul.f32 %v2586, %v2586
        %v2643 = vmul.f32 %v2587, %v2587
        %v2644 = vmul.f32 %v2588, %v2588
        %v2645 = vmul.f32 %v2589, %v2589
        %v2646 = vmul.f32 %v2590, %v2590
        %v2647 = vmul.f32 %v2591, %v2591
        %v2648 = vmul.f32 %v2592, %v2592
        %v2649 = vmul.f32 %v2593, %v2593
        %v2650 = vsub.f32 %v2634, %v2642
        %v2651 = vsub.f32 %v2635, %v2643
        %v2652 = vsub.f32 %v2636, %v2644
        %v2653 = vsub.f32 %v2637, %v2645
        %v2654 = vsub.f32 %v2638, %v2646
        %v2655 = vsub.f32 %v2639, %v2647
        %v2656 = vsub.f32 %v2640, %v2648
        %v2657 = vsub.f32 %v2641, %v2649
        %v2658 = vmax.f32 %v2650, 0.0
        %v2659 = vmax.f32 %v2651, 0.0
        %v2660 = vmax.f32 %v2652, 0.0
        %v2661 = vmax.f32 %v2653, 0.0
        %v2662 = vmax.f32 %v2654, 0.0
        %v2663 = vmax.f32 %v2655, 0.0
        %v2664 = vmax.f32 %v2656, 0.0
        %v2665 = vmax.f32 %v2657, 0.0
        %v2666 = vadd.f32 %v2658, 1e-05
        %v2667 = vadd.f32 %v2659, 1e-05
        %v2668 = vadd.f32 %v2660, 1e-05
        %v2669 = vadd.f32 %v2661, 1e-05
        %v2670 = vadd.f32 %v2662, 1e-05
        %v2671 = vadd.f32 %v2663, 1e-05
        %v2672 = vadd.f32 %v2664, 1e-05
        %v2673 = vadd.f32 %v2665, 1e-05
        %v2674 = vrsqrt.pop %v2666
        %v2675 = vrsqrt.pop %v2667
        %v2676 = vrsqrt.pop %v2668
        %v2677 = vrsqrt.pop %v2669
        %v2678 = vrsqrt.pop %v2670
        %v2679 = vrsqrt.pop %v2671
        %v2680 = vrsqrt.pop %v2672
        %v2681 = vrsqrt.pop %v2673
        %v2682 = vmul.f32 %v267, %v2674
        %v2683 = vmul.f32 %v268, %v2675
        %v2684 = vmul.f32 %v269, %v2676
        %v2685 = vmul.f32 %v270, %v2677
        %v2686 = vmul.f32 %v271, %v2678
        %v2687 = vmul.f32 %v272, %v2679
        %v2688 = vmul.f32 %v273, %v2680
        %v2689 = vmul.f32 %v274, %v2681
        %v2690 = vmul.f32 %v2586, %v2682
        %v2691 = vmul.f32 %v2587, %v2683
        %v2692 = vmul.f32 %v2588, %v2684
        %v2693 = vmul.f32 %v2589, %v2685
        %v2694 = vmul.f32 %v2590, %v2686
        %v2695 = vmul.f32 %v2591, %v2687
        %v2696 = vmul.f32 %v2592, %v2688
        %v2697 = vmul.f32 %v2593, %v2689
        %2706 = vrot.lane.b32.xlu0 %v2690, 1
        %v2707 = vpop.permute.xlu0 %2706
        %2708 = vrot.lane.b32.xlu0 %v2691, 1
        %v2709 = vpop.permute.xlu0 %2708
        %2710 = vrot.lane.b32.xlu0 %v2692, 1
        %v2711 = vpop.permute.xlu0 %2710
        %2712 = vrot.lane.b32.xlu0 %v2693, 1
        %v2713 = vpop.permute.xlu0 %2712
        %2714 = vrot.lane.b32.xlu0 %v2694, 1
        %v2715 = vpop.permute.xlu0 %2714
        %2716 = vrot.lane.b32.xlu0 %v2695, 1
        %v2717 = vpop.permute.xlu0 %2716
        %2718 = vrot.lane.b32.xlu0 %v2696, 1
        %v2719 = vpop.permute.xlu0 %2718
        %2720 = vrot.lane.b32.xlu0 %v2697, 1
        %v2721 = vpop.permute.xlu0 %2720
        %v2730 = vsub.f32 %v267, %v2707
        %v2731 = vsub.f32 %v268, %v2709
        %v2732 = vsub.f32 %v269, %v2711
        %v2733 = vsub.f32 %v270, %v2713
        %v2734 = vsub.f32 %v271, %v2715
        %v2735 = vsub.f32 %v272, %v2717
        %v2736 = vsub.f32 %v273, %v2719
        %v2737 = vsub.f32 %v274, %v2721
        %2739 = vset.pattern.permute.xlu0 4
        %2740 = vperm.xlu0 %2739, %v2682
        %v2741 = vpop.permute.xlu0 %2740
        %2744 = vset.pattern.permute.xlu0 4
        %2745 = vperm.xlu0 %2744, %v2683
        %v2746 = vpop.permute.xlu0 %2745
        %2749 = vset.pattern.permute.xlu0 4
        %2750 = vperm.xlu0 %2749, %v2684
        %v2751 = vpop.permute.xlu0 %2750
        %2754 = vset.pattern.permute.xlu0 4
        %2755 = vperm.xlu0 %2754, %v2685
        %v2756 = vpop.permute.xlu0 %2755
        %2759 = vset.pattern.permute.xlu0 4
        %2760 = vperm.xlu0 %2759, %v2686
        %v2761 = vpop.permute.xlu0 %2760
        %2764 = vset.pattern.permute.xlu0 4
        %2765 = vperm.xlu0 %2764, %v2687
        %v2766 = vpop.permute.xlu0 %2765
        %2769 = vset.pattern.permute.xlu0 4
        %2770 = vperm.xlu0 %2769, %v2688
        %v2771 = vpop.permute.xlu0 %2770
        %2774 = vset.pattern.permute.xlu0 4
        %2775 = vperm.xlu0 %2774, %v2689
        %v2776 = vpop.permute.xlu0 %2775
        %v2778 = vmul.f32 %v2546, %v2741
        %v2779 = vmul.f32 %v2547, %v2741
        %v2780 = vmul.f32 %v2548, %v2746
        %v2781 = vmul.f32 %v2549, %v2746
        %v2782 = vmul.f32 %v2550, %v2751
        %v2783 = vmul.f32 %v2551, %v2751
        %v2784 = vmul.f32 %v2552, %v2756
        %v2785 = vmul.f32 %v2553, %v2756
        %v2786 = vmul.f32 %v2554, %v2761
        %v2787 = vmul.f32 %v2555, %v2761
        %v2788 = vmul.f32 %v2556, %v2766
        %v2789 = vmul.f32 %v2557, %v2766
        %v2790 = vmul.f32 %v2558, %v2771
        %v2791 = vmul.f32 %v2559, %v2771
        %v2792 = vmul.f32 %v2560, %v2776
        %v2793 = vmul.f32 %v2561, %v2776
        %2795 = vset.pattern.permute.xlu0 5
        %2796 = vperm.xlu0 %2795, %v2730
        %v2797 = vpop.permute.xlu0 %2796
        %2800 = vset.pattern.permute.xlu0 5
        %2801 = vperm.xlu0 %2800, %v2731
        %v2802 = vpop.permute.xlu0 %2801
        %2805 = vset.pattern.permute.xlu0 5
        %2806 = vperm.xlu0 %2805, %v2732
        %v2807 = vpop.permute.xlu0 %2806
        %2810 = vset.pattern.permute.xlu0 5
        %2811 = vperm.xlu0 %2810, %v2733
        %v2812 = vpop.permute.xlu0 %2811
        %2815 = vset.pattern.permute.xlu0 5
        %2816 = vperm.xlu0 %2815, %v2734
        %v2817 = vpop.permute.xlu0 %2816
        %2820 = vset.pattern.permute.xlu0 5
        %2821 = vperm.xlu0 %2820, %v2735
        %v2822 = vpop.permute.xlu0 %2821
        %2825 = vset.pattern.permute.xlu0 5
        %2826 = vperm.xlu0 %2825, %v2736
        %v2827 = vpop.permute.xlu0 %2826
        %2830 = vset.pattern.permute.xlu0 5
        %2831 = vperm.xlu0 %2830, %v2737
        %v2832 = vpop.permute.xlu0 %2831
        %v2834 = vadd.f32 %v2778, %v2797
        %v2835 = vadd.f32 %v2779, %v2797
        %v2836 = vadd.f32 %v2780, %v2802
        %v2837 = vadd.f32 %v2781, %v2802
        %v2838 = vadd.f32 %v2782, %v2807
        %v2839 = vadd.f32 %v2783, %v2807
        %v2840 = vadd.f32 %v2784, %v2812
        %v2841 = vadd.f32 %v2785, %v2812
        %v2842 = vadd.f32 %v2786, %v2817
        %v2843 = vadd.f32 %v2787, %v2817
        %v2844 = vadd.f32 %v2788, %v2822
        %v2845 = vadd.f32 %v2789, %v2822
        %v2846 = vadd.f32 %v2790, %v2827
        %v2847 = vadd.f32 %v2791, %v2827
        %v2848 = vadd.f32 %v2792, %v2832
        %v2849 = vadd.f32 %v2793, %v2832
        %vm2850 = vcmp.ge.f32.partialorder %v2834, 0.0
        %vm2851 = vcmp.ge.f32.partialorder %v2835, 0.0
        %vm2852 = vcmp.ge.f32.partialorder %v2836, 0.0
        %vm2853 = vcmp.ge.f32.partialorder %v2837, 0.0
        %vm2854 = vcmp.ge.f32.partialorder %v2838, 0.0
        %vm2855 = vcmp.ge.f32.partialorder %v2839, 0.0
        %vm2856 = vcmp.ge.f32.partialorder %v2840, 0.0
        %vm2857 = vcmp.ge.f32.partialorder %v2841, 0.0
        %vm2858 = vcmp.ge.f32.partialorder %v2842, 0.0
        %vm2859 = vcmp.ge.f32.partialorder %v2843, 0.0
        %vm2860 = vcmp.ge.f32.partialorder %v2844, 0.0
        %vm2861 = vcmp.ge.f32.partialorder %v2845, 0.0
        %vm2862 = vcmp.ge.f32.partialorder %v2846, 0.0
        %vm2863 = vcmp.ge.f32.partialorder %v2847, 0.0
        %vm2864 = vcmp.ge.f32.partialorder %v2848, 0.0
        %vm2865 = vcmp.ge.f32.partialorder %v2849, 0.0
        %v2866 = vmul.f32 %v2834, 0.01
        %v2867 = vmul.f32 %v2835, 0.01
        %v2868 = vmul.f32 %v2836, 0.01
        %v2869 = vmul.f32 %v2837, 0.01
        %v2870 = vmul.f32 %v2838, 0.01
        %v2871 = vmul.f32 %v2839, 0.01
        %v2872 = vmul.f32 %v2840, 0.01
        %v2873 = vmul.f32 %v2841, 0.01
        %v2874 = vmul.f32 %v2842, 0.01
        %v2875 = vmul.f32 %v2843, 0.01
        %v2876 = vmul.f32 %v2844, 0.01
        %v2877 = vmul.f32 %v2845, 0.01
        %v2878 = vmul.f32 %v2846, 0.01
        %v2879 = vmul.f32 %v2847, 0.01
        %v2880 = vmul.f32 %v2848, 0.01
        %v2881 = vmul.f32 %v2849, 0.01
        %v2882 = vsel %vm2850, %v2834, %v2866
        %v2883 = vsel %vm2851, %v2835, %v2867
        %v2884 = vsel %vm2852, %v2836, %v2868
        %v2885 = vsel %vm2853, %v2837, %v2869
        %v2886 = vsel %vm2854, %v2838, %v2870
        %v2887 = vsel %vm2855, %v2839, %v2871
        %v2888 = vsel %vm2856, %v2840, %v2872
        %v2889 = vsel %vm2857, %v2841, %v2873
        %v2890 = vsel %vm2858, %v2842, %v2874
        %v2891 = vsel %vm2859, %v2843, %v2875
        %v2892 = vsel %vm2860, %v2844, %v2876
        %v2893 = vsel %vm2861, %v2845, %v2877
        %v2894 = vsel %vm2862, %v2846, %v2878
        %v2895 = vsel %vm2863, %v2847, %v2879
        %v2896 = vsel %vm2864, %v2848, %v2880
        %v2897 = vsel %vm2865, %v2849, %v2881
        %2898 = vst [vmem:[#allocation2 + $0x8] sm:$0xff] %v2882
        %2899 = vst [vmem:[#allocation2 + $0x10] sm:$0xff] %v2883
        %2900 = vst [vmem:[#allocation2 + $0x28] sm:$0xff] %v2884
        %2901 = vst [vmem:[#allocation2 + $0x30] sm:$0xff] %v2885
        %2902 = vst [vmem:[#allocation2 + $0x48] sm:$0xff] %v2886
        %2903 = vst [vmem:[#allocation2 + $0x50] sm:$0xff] %v2887
        %2904 = vst [vmem:[#allocation2 + $0x68] sm:$0xff] %v2888
        %2905 = vst [vmem:[#allocation2 + $0x70] sm:$0xff] %v2889
        %2906 = vst [vmem:[#allocation2 + $0x88] sm:$0xff] %v2890
        %2907 = vst [vmem:[#allocation2 + $0x90] sm:$0xff] %v2891
        %2908 = vst [vmem:[#allocation2 + $0xa8] sm:$0xff] %v2892
        %2909 = vst [vmem:[#allocation2 + $0xb0] sm:$0xff] %v2893
        %2910 = vst [vmem:[#allocation2 + $0xc8] sm:$0xff] %v2894
        %2911 = vst [vmem:[#allocation2 + $0xd0] sm:$0xff] %v2895
        %2912 = vst [vmem:[#allocation2 + $0xe8] sm:$0xff] %v2896
        %2913 = vst [vmem:[#allocation2 + $0xf0] sm:$0xff] %v2897
        %s2914 = scalar_lea.vmem [#allocation6], 192
        %v2915 = vld [vmem:[%s2914] sm:$0xff]
        %v2916 = vld [vmem:[%s2914 + $0x8] sm:$0xff]
        %v2917 = vld [vmem:[%s2914 + $0x10] sm:$0xff]
        %v2918 = vld [vmem:[%s2914 + $0x18] sm:$0xff]
        %v2919 = vld [vmem:[%s2914 + $0x20] sm:$0xff]
        %v2920 = vld [vmem:[%s2914 + $0x28] sm:$0xff]
        %v2921 = vld [vmem:[%s2914 + $0x30] sm:$0xff]
        %v2922 = vld [vmem:[%s2914 + $0x38] sm:$0xff]
        %v2923 = vld [vmem:[#allocation2] sm:$0xff]
        %v2924 = vld [vmem:[#allocation2 + $0x8] sm:$0xff]
        %v2925 = vld [vmem:[#allocation2 + $0x10] sm:$0xff]
        %v2926 = vld [vmem:[#allocation2 + $0x20] sm:$0xff]
        %v2927 = vld [vmem:[#allocation2 + $0x28] sm:$0xff]
        %v2928 = vld [vmem:[#allocation2 + $0x30] sm:$0xff]
        %v2929 = vld [vmem:[#allocation2 + $0x40] sm:$0xff]
        %v2930 = vld [vmem:[#allocation2 + $0x48] sm:$0xff]
        %v2931 = vld [vmem:[#allocation2 + $0x50] sm:$0xff]
        %v2932 = vld [vmem:[#allocation2 + $0x60] sm:$0xff]
        %v2933 = vld [vmem:[#allocation2 + $0x68] sm:$0xff]
        %v2934 = vld [vmem:[#allocation2 + $0x70] sm:$0xff]
        %v2935 = vld [vmem:[#allocation2 + $0x80] sm:$0xff]
        %v2936 = vld [vmem:[#allocation2 + $0x88] sm:$0xff]
        %v2937 = vld [vmem:[#allocation2 + $0x90] sm:$0xff]
        %v2938 = vld [vmem:[#allocation2 + $0xa0] sm:$0xff]
        %v2939 = vld [vmem:[#allocation2 + $0xa8] sm:$0xff]
        %v2940 = vld [vmem:[#allocation2 + $0xb0] sm:$0xff]
        %v2941 = vld [vmem:[#allocation2 + $0xc0] sm:$0xff]
        %v2942 = vld [vmem:[#allocation2 + $0xc8] sm:$0xff]
        %v2943 = vld [vmem:[#allocation2 + $0xd0] sm:$0xff]
        %v2944 = vld [vmem:[#allocation2 + $0xe0] sm:$0xff]
        %v2945 = vld [vmem:[#allocation2 + $0xe8] sm:$0xff]
        %v2946 = vld [vmem:[#allocation2 + $0xf0] sm:$0xff]
        %s2947 = scalar_lea.vmem [#allocation6], 256
        %v2948 = vld [vmem:[%s2947] sm:$0xff]
        %v2949 = vld [vmem:[%s2947 + $0x8] sm:$0xff]
        %v2950 = vld [vmem:[%s2947 + $0x10] sm:$0xff]
        %v2951 = vld [vmem:[%s2947 + $0x18] sm:$0xff]
        %v2952 = vld [vmem:[%s2947 + $0x20] sm:$0xff]
        %v2953 = vld [vmem:[%s2947 + $0x28] sm:$0xff]
        %v2954 = vld [vmem:[%s2947 + $0x30] sm:$0xff]
        %v2955 = vld [vmem:[%s2947 + $0x38] sm:$0xff]
        %v2957 = vsel %vm685, %v2948, 0
        %v2960 = vsel %vm685, %v2949, 0
        %v2963 = vsel %vm685, %v2950, 0
        %v2966 = vsel %vm685, %v2951, 0
        %v2969 = vsel %vm685, %v2952, 0
        %v2972 = vsel %vm685, %v2953, 0
        %v2975 = vsel %vm685, %v2954, 0
        %v2978 = vsel %vm685, %v2955, 0
        %2980 = vmatprep.subr.mxu0 %v2925
        %2981 = vmatpush1.msra.mxu0 %v2924
        %2982 = vmatprep.subr.mxu0 %v2928
        %2983 = vmatpush1.msra.mxu0 %v2927
        %2984 = vmatprep.subr.mxu0 %v2931
        %2985 = vmatpush1.msra.mxu0 %v2930
        %2986 = vmatprep.subr.mxu0 %v2934
        %2987 = vmatpush1.msra.mxu0 %v2933
        %2988 = vmatprep.subr.mxu0 %v2937
        %2989 = vmatpush1.msra.mxu0 %v2936
        %2990 = vmatprep.subr.mxu0 %v2940
        %2991 = vmatpush1.msra.mxu0 %v2939
        %2992 = vmatprep.subr.mxu0 %v2943
        %2993 = vmatpush1.msra.mxu0 %v2942
        %2994 = vmatprep.subr.mxu0 %v2946
        %2995 = vmatpush1.msra.mxu0 %v2945
        %2996 = vmatprep.subr.mxu0 0.0
        %2997 = vmatpush1.msra.mxu0 0.0
        %2998 = vmatprep.subr.mxu0 0.0
        %2999 = vmatpush1.msra.mxu0 0.0
        %3000 = vmatprep.subr.mxu0 0.0
        %3001 = vmatpush1.msra.mxu0 0.0
        %3002 = vmatprep.subr.mxu0 0.0
        %3003 = vmatpush1.msra.mxu0 0.0
        %3004 = vmatprep.subr.mxu0 0.0
        %3005 = vmatpush1.msra.mxu0 0.0
        %3006 = vmatprep.subr.mxu0 0.0
        %3007 = vmatpush1.msra.mxu0 0.0
        %3008 = vmatprep.subr.mxu0 0.0
        %3009 = vmatpush1.msra.mxu0 0.0
        %3010 = vmatprep.subr.mxu0 0.0
        %3011 = vmatpush1.msra.mxu0 0.0
        %3012 = vmatprep.subr.mxu0 0.0
        %3013 = vmatpush1.msra.mxu0 0.0
        %3014 = vmatprep.subr.mxu0 0.0
        %3015 = vmatpush1.msra.mxu0 0.0
        %3016 = vmatprep.subr.mxu0 0.0
        %3017 = vmatpush1.msra.mxu0 0.0
        %3018 = vmatprep.subr.mxu0 0.0
        %3019 = vmatpush1.msra.mxu0 0.0
        %3020 = vmatprep.subr.mxu0 0.0
        %3021 = vmatpush1.msra.mxu0 0.0
        %3022 = vmatprep.subr.mxu0 0.0
        %3023 = vmatpush1.msra.mxu0 0.0
        %3024 = vmatprep.subr.mxu0 0.0
        %3025 = vmatpush1.msra.mxu0 0.0
        %3026 = vmatprep.subr.mxu0 0.0
        %3027 = vmatpush1.msra.mxu0 0.0
        %3028 = vmatprep.subr.mxu0 0.0
        %3029 = vmatpush1.msra.mxu0 0.0
        %3030 = vmatprep.subr.mxu0 0.0
        %3031 = vmatpush1.msra.mxu0 0.0
        %3032 = vmatprep.subr.mxu0 0.0
        %3033 = vmatpush1.msra.mxu0 0.0
        %3034 = vmatprep.subr.mxu0 0.0
        %3035 = vmatpush1.msra.mxu0 0.0
        %3036 = vmatprep.subr.mxu0 0.0
        %3037 = vmatpush1.msra.mxu0 0.0
        %3038 = vmatprep.subr.mxu0 0.0
        %3039 = vmatpush1.msra.mxu0 0.0
        %3040 = vmatprep.subr.mxu0 0.0
        %3041 = vmatpush1.msra.mxu0 0.0
        %3042 = vmatprep.subr.mxu0 0.0
        %3043 = vmatpush1.msra.mxu0 0.0
        %3044 = vmatprep.mubr.f32.mxu0 0.0
        %3045 = vmatmul.mubr.f32.gmra.mrb[0].mxu0 %v2957
        %v3046 = vpop.f32.mrb[0].mxu0
        %v3047 = vadd.f32 0.0, %v3046
        %v3048 = vpop.f32.mrb[0].mxu0
        %v3049 = vadd.f32 0.0, %v3048
        %3050 = vmatprep.mubr.f32.mxu0 0.0
        %3051 = vmatmul.mubr.f32.gmra.mrb[0].mxu0 %v2960
        %v3052 = vpop.f32.mrb[0].mxu0
        %v3053 = vadd.f32 0.0, %v3052
        %v3054 = vpop.f32.mrb[0].mxu0
        %v3055 = vadd.f32 0.0, %v3054
        %3056 = vmatprep.mubr.f32.mxu0 0.0
        %3057 = vmatmul.mubr.f32.gmra.mrb[0].mxu0 %v2963
        %v3058 = vpop.f32.mrb[0].mxu0
        %v3059 = vadd.f32 0.0, %v3058
        %v3060 = vpop.f32.mrb[0].mxu0
        %v3061 = vadd.f32 0.0, %v3060
        %3062 = vmatprep.mubr.f32.mxu0 0.0
        %3063 = vmatmul.mubr.f32.gmra.mrb[0].mxu0 %v2966
        %v3064 = vpop.f32.mrb[0].mxu0
        %v3065 = vadd.f32 0.0, %v3064
        %v3066 = vpop.f32.mrb[0].mxu0
        %v3067 = vadd.f32 0.0, %v3066
        %3068 = vmatprep.mubr.f32.mxu0 0.0
        %3069 = vmatmul.mubr.f32.gmra.mrb[0].mxu0 %v2969
        %v3070 = vpop.f32.mrb[0].mxu0
        %v3071 = vadd.f32 0.0, %v3070
        %v3072 = vpop.f32.mrb[0].mxu0
        %v3073 = vadd.f32 0.0, %v3072
        %3074 = vmatprep.mubr.f32.mxu0 0.0
        %3075 = vmatmul.mubr.f32.gmra.mrb[0].mxu0 %v2972
        %v3076 = vpop.f32.mrb[0].mxu0
        %v3077 = vadd.f32 0.0, %v3076
        %v3078 = vpop.f32.mrb[0].mxu0
        %v3079 = vadd.f32 0.0, %v3078
        %3080 = vmatprep.mubr.f32.mxu0 0.0
        %3081 = vmatmul.mubr.f32.gmra.mrb[0].mxu0 %v2975
        %v3082 = vpop.f32.mrb[0].mxu0
        %v3083 = vadd.f32 0.0, %v3082
        %v3084 = vpop.f32.mrb[0].mxu0
        %v3085 = vadd.f32 0.0, %v3084
        %3086 = vmatprep.mubr.f32.mxu0 0.0
        %3087 = vmatmul.mubr.f32.gmra.mrb[0].mxu0 %v2978
        %v3088 = vpop.f32.mrb[0].mxu0
        %v3089 = vadd.f32 0.0, %v3088
        %v3090 = vpop.f32.mrb[0].mxu0
        %v3091 = vadd.f32 0.0, %v3090
        %3092 = vdwg.mxu0
        %3117 = vrot.lane.b32.xlu0 %v2923, 3
        %v3118 = vpop.permute.xlu0 %3117
        %3119 = vrot.lane.b32.xlu0 %v2924, 3
        %v3120 = vpop.permute.xlu0 %3119
        %3121 = vrot.lane.b32.xlu0 %v2925, 3
        %v3122 = vpop.permute.xlu0 %3121
        %3123 = vrot.lane.b32.xlu0 %v2926, 3
        %v3124 = vpop.permute.xlu0 %3123
        %3125 = vrot.lane.b32.xlu0 %v2927, 3
        %v3126 = vpop.permute.xlu0 %3125
        %3127 = vrot.lane.b32.xlu0 %v2928, 3
        %v3128 = vpop.permute.xlu0 %3127
        %3129 = vrot.lane.b32.xlu0 %v2929, 3
        %v3130 = vpop.permute.xlu0 %3129
        %3131 = vrot.lane.b32.xlu0 %v2930, 3
        %v3132 = vpop.permute.xlu0 %3131
        %3133 = vrot.lane.b32.xlu0 %v2931, 3
        %v3134 = vpop.permute.xlu0 %3133
        %3135 = vrot.lane.b32.xlu0 %v2932, 3
        %v3136 = vpop.permute.xlu0 %3135
        %3137 = vrot.lane.b32.xlu0 %v2933, 3
        %v3138 = vpop.permute.xlu0 %3137
        %3139 = vrot.lane.b32.xlu0 %v2934, 3
        %v3140 = vpop.permute.xlu0 %3139
        %3141 = vrot.lane.b32.xlu0 %v2935, 3
        %v3142 = vpop.permute.xlu0 %3141
        %3143 = vrot.lane.b32.xlu0 %v2936, 3
        %v3144 = vpop.permute.xlu0 %3143
        %3145 = vrot.lane.b32.xlu0 %v2937, 3
        %v3146 = vpop.permute.xlu0 %3145
        %3147 = vrot.lane.b32.xlu0 %v2938, 3
        %v3148 = vpop.permute.xlu0 %3147
        %3149 = vrot.lane.b32.xlu0 %v2939, 3
        %v3150 = vpop.permute.xlu0 %3149
        %3151 = vrot.lane.b32.xlu0 %v2940, 3
        %v3152 = vpop.permute.xlu0 %3151
        %3153 = vrot.lane.b32.xlu0 %v2941, 3
        %v3154 = vpop.permute.xlu0 %3153
        %3155 = vrot.lane.b32.xlu0 %v2942, 3
        %v3156 = vpop.permute.xlu0 %3155
        %3157 = vrot.lane.b32.xlu0 %v2943, 3
        %v3158 = vpop.permute.xlu0 %3157
        %3159 = vrot.lane.b32.xlu0 %v2944, 3
        %v3160 = vpop.permute.xlu0 %3159
        %3161 = vrot.lane.b32.xlu0 %v2945, 3
        %v3162 = vpop.permute.xlu0 %3161
        %3163 = vrot.lane.b32.xlu0 %v2946, 3
        %v3164 = vpop.permute.xlu0 %3163
        %vm3165 = vcmask 23552
        %v3166 = vsel %vm3165, %v3118, %v3120
        %v3167 = vsel %vm3165, %v3120, %v3122
        %v3168 = vsel %vm3165, %v3124, %v3126
        %v3169 = vsel %vm3165, %v3126, %v3128
        %v3170 = vsel %vm3165, %v3130, %v3132
        %v3171 = vsel %vm3165, %v3132, %v3134
        %v3172 = vsel %vm3165, %v3136, %v3138
        %v3173 = vsel %vm3165, %v3138, %v3140
        %v3174 = vsel %vm3165, %v3142, %v3144
        %v3175 = vsel %vm3165, %v3144, %v3146
        %v3176 = vsel %vm3165, %v3148, %v3150
        %v3177 = vsel %vm3165, %v3150, %v3152
        %v3178 = vsel %vm3165, %v3154, %v3156
        %v3179 = vsel %vm3165, %v3156, %v3158
        %v3180 = vsel %vm3165, %v3160, %v3162
        %v3181 = vsel %vm3165, %v3162, %v3164
        %v3199 = vsel %vm685, %v2915, 0
        %v3202 = vsel %vm685, %v2916, 0
        %v3205 = vsel %vm685, %v2917, 0
        %v3208 = vsel %vm685, %v2918, 0
        %v3211 = vsel %vm685, %v2919, 0
        %v3214 = vsel %vm685, %v2920, 0
        %v3217 = vsel %vm685, %v2921, 0
        %v3220 = vsel %vm685, %v2922, 0
        %3222 = vmatprep.subr.mxu0 %v3167
        %3223 = vmatpush1.msra.mxu0 %v3166
        %3224 = vmatprep.subr.mxu0 %v3169
        %3225 = vmatpush1.msra.mxu0 %v3168
        %3226 = vmatprep.subr.mxu0 %v3171
        %3227 = vmatpush1.msra.mxu0 %v3170
        %3228 = vmatprep.subr.mxu0 %v3173
        %3229 = vmatpush1.msra.mxu0 %v3172
        %3230 = vmatprep.subr.mxu0 %v3175
        %3231 = vmatpush1.msra.mxu0 %v3174
        %3232 = vmatprep.subr.mxu0 %v3177
        %3233 = vmatpush1.msra.mxu0 %v3176
        %3234 = vmatprep.subr.mxu0 %v3179
        %3235 = vmatpush1.msra.mxu0 %v3178
        %3236 = vmatprep.subr.mxu0 %v3181
        %3237 = vmatpush1.msra.mxu0 %v3180
        %3238 = vmatprep.subr.mxu0 0.0
        %3239 = vmatpush1.msra.mxu0 0.0
        %3240 = vmatprep.subr.mxu0 0.0
        %3241 = vmatpush1.msra.mxu0 0.0
        %3242 = vmatprep.subr.mxu0 0.0
        %3243 = vmatpush1.msra.mxu0 0.0
        %3244 = vmatprep.subr.mxu0 0.0
        %3245 = vmatpush1.msra.mxu0 0.0
        %3246 = vmatprep.subr.mxu0 0.0
        %3247 = vmatpush1.msra.mxu0 0.0
        %3248 = vmatprep.subr.mxu0 0.0
        %3249 = vmatpush1.msra.mxu0 0.0
        %3250 = vmatprep.subr.mxu0 0.0
        %3251 = vmatpush1.msra.mxu0 0.0
        %3252 = vmatprep.subr.mxu0 0.0
        %3253 = vmatpush1.msra.mxu0 0.0
        %3254 = vmatprep.subr.mxu0 0.0
        %3255 = vmatpush1.msra.mxu0 0.0
        %3256 = vmatprep.subr.mxu0 0.0
        %3257 = vmatpush1.msra.mxu0 0.0
        %3258 = vmatprep.subr.mxu0 0.0
        %3259 = vmatpush1.msra.mxu0 0.0
        %3260 = vmatprep.subr.mxu0 0.0
        %3261 = vmatpush1.msra.mxu0 0.0
        %3262 = vmatprep.subr.mxu0 0.0
        %3263 = vmatpush1.msra.mxu0 0.0
        %3264 = vmatprep.subr.mxu0 0.0
        %3265 = vmatpush1.msra.mxu0 0.0
        %3266 = vmatprep.subr.mxu0 0.0
        %3267 = vmatpush1.msra.mxu0 0.0
        %3268 = vmatprep.subr.mxu0 0.0
        %3269 = vmatpush1.msra.mxu0 0.0
        %3270 = vmatprep.subr.mxu0 0.0
        %3271 = vmatpush1.msra.mxu0 0.0
        %3272 = vmatprep.subr.mxu0 0.0
        %3273 = vmatpush1.msra.mxu0 0.0
        %3274 = vmatprep.subr.mxu0 0.0
        %3275 = vmatpush1.msra.mxu0 0.0
        %3276 = vmatprep.subr.mxu0 0.0
        %3277 = vmatpush1.msra.mxu0 0.0
        %3278 = vmatprep.subr.mxu0 0.0
        %3279 = vmatpush1.msra.mxu0 0.0
        %3280 = vmatprep.subr.mxu0 0.0
        %3281 = vmatpush1.msra.mxu0 0.0
        %3282 = vmatprep.subr.mxu0 0.0
        %3283 = vmatpush1.msra.mxu0 0.0
        %3284 = vmatprep.subr.mxu0 0.0
        %3285 = vmatpush1.msra.mxu0 0.0
        %3286 = vmatprep.mubr.f32.mxu0 0.0
        %3287 = vmatmul.mubr.f32.gmra.mrb[0].mxu0 %v3199
        %v3288 = vpop.f32.mrb[0].mxu0
        %v3289 = vadd.f32 %v3047, %v3288
        %v3290 = vpop.f32.mrb[0].mxu0
        %v3291 = vadd.f32 %v3049, %v3290
        %3292 = vmatprep.mubr.f32.mxu0 0.0
        %3293 = vmatmul.mubr.f32.gmra.mrb[0].mxu0 %v3202
        %v3294 = vpop.f32.mrb[0].mxu0
        %v3295 = vadd.f32 %v3053, %v3294
        %v3296 = vpop.f32.mrb[0].mxu0
        %v3297 = vadd.f32 %v3055, %v3296
        %3298 = vmatprep.mubr.f32.mxu0 0.0
        %3299 = vmatmul.mubr.f32.gmra.mrb[0].mxu0 %v3205
        %v3300 = vpop.f32.mrb[0].mxu0
        %v3301 = vadd.f32 %v3059, %v3300
        %v3302 = vpop.f32.mrb[0].mxu0
        %v3303 = vadd.f32 %v3061, %v3302
        %3304 = vmatprep.mubr.f32.mxu0 0.0
        %3305 = vmatmul.mubr.f32.gmra.mrb[0].mxu0 %v3208
        %v3306 = vpop.f32.mrb[0].mxu0
        %v3307 = vadd.f32 %v3065, %v3306
        %v3308 = vpop.f32.mrb[0].mxu0
        %v3309 = vadd.f32 %v3067, %v3308
        %3310 = vmatprep.mubr.f32.mxu0 0.0
        %3311 = vmatmul.mubr.f32.gmra.mrb[0].mxu0 %v3211
        %v3312 = vpop.f32.mrb[0].mxu0
        %v3313 = vadd.f32 %v3071, %v3312
        %v3314 = vpop.f32.mrb[0].mxu0
        %v3315 = vadd.f32 %v3073, %v3314
        %3316 = vmatprep.mubr.f32.mxu0 0.0
        %3317 = vmatmul.mubr.f32.gmra.mrb[0].mxu0 %v3214
        %v3318 = vpop.f32.mrb[0].mxu0
        %v3319 = vadd.f32 %v3077, %v3318
        %v3320 = vpop.f32.mrb[0].mxu0
        %v3321 = vadd.f32 %v3079, %v3320
        %3322 = vmatprep.mubr.f32.mxu0 0.0
        %3323 = vmatmul.mubr.f32.gmra.mrb[0].mxu0 %v3217
        %v3324 = vpop.f32.mrb[0].mxu0
        %v3325 = vadd.f32 %v3083, %v3324
        %v3326 = vpop.f32.mrb[0].mxu0
        %v3327 = vadd.f32 %v3085, %v3326
        %3328 = vmatprep.mubr.f32.mxu0 0.0
        %3329 = vmatmul.mubr.f32.gmra.mrb[0].mxu0 %v3220
        %v3330 = vpop.f32.mrb[0].mxu0
        %v3331 = vadd.f32 %v3089, %v3330
        %v3332 = vpop.f32.mrb[0].mxu0
        %v3333 = vadd.f32 %v3091, %v3332
        %3334 = vdwg.mxu0
        %s3335 = scalar_lea.vmem [#allocation6], 320
        %v3336 = vld [vmem:[%s3335] sm:$0xff]
        %v3337 = vld [vmem:[%s3335 + $0x8] sm:$0xff]
        %v3338 = vld [vmem:[%s3335 + $0x10] sm:$0xff]
        %v3339 = vld [vmem:[%s3335 + $0x18] sm:$0xff]
        %v3340 = vld [vmem:[%s3335 + $0x20] sm:$0xff]
        %v3341 = vld [vmem:[%s3335 + $0x28] sm:$0xff]
        %v3342 = vld [vmem:[%s3335 + $0x30] sm:$0xff]
        %v3343 = vld [vmem:[%s3335 + $0x38] sm:$0xff]
        %v3344 = vld [vmem:[#allocation2 + $0x8] sm:$0xff]
        %v3345 = vld [vmem:[#allocation2 + $0x10] sm:$0xff]
        %v3346 = vld [vmem:[#allocation2 + $0x18] sm:$0xff]
        %v3347 = vld [vmem:[#allocation2 + $0x28] sm:$0xff]
        %v3348 = vld [vmem:[#allocation2 + $0x30] sm:$0xff]
        %v3349 = vld [vmem:[#allocation2 + $0x38] sm:$0xff]
        %v3350 = vld [vmem:[#allocation2 + $0x48] sm:$0xff]
        %v3351 = vld [vmem:[#allocation2 + $0x50] sm:$0xff]
        %v3352 = vld [vmem:[#allocation2 + $0x58] sm:$0xff]
        %v3353 = vld [vmem:[#allocation2 + $0x68] sm:$0xff]
        %v3354 = vld [vmem:[#allocation2 + $0x70] sm:$0xff]
        %v3355 = vld [vmem:[#allocation2 + $0x78] sm:$0xff]
        %v3356 = vld [vmem:[#allocation2 + $0x88] sm:$0xff]
        %v3357 = vld [vmem:[#allocation2 + $0x90] sm:$0xff]
        %v3358 = vld [vmem:[#allocation2 + $0x98] sm:$0xff]
        %v3359 = vld [vmem:[#allocation2 + $0xa8] sm:$0xff]
        %v3360 = vld [vmem:[#allocation2 + $0xb0] sm:$0xff]
        %v3361 = vld [vmem:[#allocation2 + $0xb8] sm:$0xff]
        %v3362 = vld [vmem:[#allocation2 + $0xc8] sm:$0xff]
        %v3363 = vld [vmem:[#allocation2 + $0xd0] sm:$0xff]
        %v3364 = vld [vmem:[#allocation2 + $0xd8] sm:$0xff]
        %v3365 = vld [vmem:[#allocation2 + $0xe8] sm:$0xff]
        %v3366 = vld [vmem:[#allocation2 + $0xf0] sm:$0xff]
        %v3367 = vld [vmem:[#allocation2 + $0xf8] sm:$0xff]
        %3392 = vrot.lane.b32.xlu0 %v3344, 125
        %v3393 = vpop.permute.xlu0 %3392
        %3394 = vrot.lane.b32.xlu0 %v3345, 125
        %v3395 = vpop.permute.xlu0 %3394
        %3396 = vrot.lane.b32.xlu0 %v3346, 125
        %v3397 = vpop.permute.xlu0 %3396
        %3398 = vrot.lane.b32.xlu0 %v3347, 125
        %v3399 = vpop.permute.xlu0 %3398
        %3400 = vrot.lane.b32.xlu0 %v3348, 125
        %v3401 = vpop.permute.xlu0 %3400
        %3402 = vrot.lane.b32.xlu0 %v3349, 125
        %v3403 = vpop.permute.xlu0 %3402
        %3404 = vrot.lane.b32.xlu0 %v3350, 125
        %v3405 = vpop.permute.xlu0 %3404
        %3406 = vrot.lane.b32.xlu0 %v3351, 125
        %v3407 = vpop.permute.xlu0 %3406
        %3408 = vrot.lane.b32.xlu0 %v3352, 125
        %v3409 = vpop.permute.xlu0 %3408
        %3410 = vrot.lane.b32.xlu0 %v3353, 125
        %v3411 = vpop.permute.xlu0 %3410
        %3412 = vrot.lane.b32.xlu0 %v3354, 125
        %v3413 = vpop.permute.xlu0 %3412
        %3414 = vrot.lane.b32.xlu0 %v3355, 125
        %v3415 = vpop.permute.xlu0 %3414
        %3416 = vrot.lane.b32.xlu0 %v3356, 125
        %v3417 = vpop.permute.xlu0 %3416
        %3418 = vrot.lane.b32.xlu0 %v3357, 125
        %v3419 = vpop.permute.xlu0 %3418
        %3420 = vrot.lane.b32.xlu0 %v3358, 125
        %v3421 = vpop.permute.xlu0 %3420
        %3422 = vrot.lane.b32.xlu0 %v3359, 125
        %v3423 = vpop.permute.xlu0 %3422
        %3424 = vrot.lane.b32.xlu0 %v3360, 125
        %v3425 = vpop.permute.xlu0 %3424
        %3426 = vrot.lane.b32.xlu0 %v3361, 125
        %v3427 = vpop.permute.xlu0 %3426
        %3428 = vrot.lane.b32.xlu0 %v3362, 125
        %v3429 = vpop.permute.xlu0 %3428
        %3430 = vrot.lane.b32.xlu0 %v3363, 125
        %v3431 = vpop.permute.xlu0 %3430
        %3432 = vrot.lane.b32.xlu0 %v3364, 125
        %v3433 = vpop.permute.xlu0 %3432
        %3434 = vrot.lane.b32.xlu0 %v3365, 125
        %v3435 = vpop.permute.xlu0 %3434
        %3436 = vrot.lane.b32.xlu0 %v3366, 125
        %v3437 = vpop.permute.xlu0 %3436
        %3438 = vrot.lane.b32.xlu0 %v3367, 125
        %v3439 = vpop.permute.xlu0 %3438
        %vm3440 = vcmask 1022976
        %v3441 = vsel %vm3440, %v3393, %v3395
        %v3442 = vsel %vm3440, %v3395, %v3397
        %v3443 = vsel %vm3440, %v3399, %v3401
        %v3444 = vsel %vm3440, %v3401, %v3403
        %v3445 = vsel %vm3440, %v3405, %v3407
        %v3446 = vsel %vm3440, %v3407, %v3409
        %v3447 = vsel %vm3440, %v3411, %v3413
        %v3448 = vsel %vm3440, %v3413, %v3415
        %v3449 = vsel %vm3440, %v3417, %v3419
        %v3450 = vsel %vm3440, %v3419, %v3421
        %v3451 = vsel %vm3440, %v3423, %v3425
        %v3452 = vsel %vm3440, %v3425, %v3427
        %v3453 = vsel %vm3440, %v3429, %v3431
        %v3454 = vsel %vm3440, %v3431, %v3433
        %v3455 = vsel %vm3440, %v3435, %v3437
        %v3456 = vsel %vm3440, %v3437, %v3439
        %v3474 = vsel %vm685, %v3336, 0
        %v3477 = vsel %vm685, %v3337, 0
        %v3480 = vsel %vm685, %v3338, 0
        %v3483 = vsel %vm685, %v3339, 0
        %v3486 = vsel %vm685, %v3340, 0
        %v3489 = vsel %vm685, %v3341, 0
        %v3492 = vsel %vm685, %v3342, 0
        %v3495 = vsel %vm685, %v3343, 0
        %3497 = vmatprep.subr.mxu0 %v3442
        %3498 = vmatpush1.msra.mxu0 %v3441
        %3499 = vmatprep.subr.mxu0 %v3444
        %3500 = vmatpush1.msra.mxu0 %v3443
        %3501 = vmatprep.subr.mxu0 %v3446
        %3502 = vmatpush1.msra.mxu0 %v3445
        %3503 = vmatprep.subr.mxu0 %v3448
        %3504 = vmatpush1.msra.mxu0 %v3447
        %3505 = vmatprep.subr.mxu0 %v3450
        %3506 = vmatpush1.msra.mxu0 %v3449
        %3507 = vmatprep.subr.mxu0 %v3452
        %3508 = vmatpush1.msra.mxu0 %v3451
        %3509 = vmatprep.subr.mxu0 %v3454
        %3510 = vmatpush1.msra.mxu0 %v3453
        %3511 = vmatprep.subr.mxu0 %v3456
        %3512 = vmatpush1.msra.mxu0 %v3455
        %3513 = vmatprep.subr.mxu0 0.0
        %3514 = vmatpush1.msra.mxu0 0.0
        %3515 = vmatprep.subr.mxu0 0.0
        %3516 = vmatpush1.msra.mxu0 0.0
        %3517 = vmatprep.subr.mxu0 0.0
        %3518 = vmatpush1.msra.mxu0 0.0
        %3519 = vmatprep.subr.mxu0 0.0
        %3520 = vmatpush1.msra.mxu0 0.0
        %3521 = vmatprep.subr.mxu0 0.0
        %3522 = vmatpush1.msra.mxu0 0.0
        %3523 = vmatprep.subr.mxu0 0.0
        %3524 = vmatpush1.msra.mxu0 0.0
        %3525 = vmatprep.subr.mxu0 0.0
        %3526 = vmatpush1.msra.mxu0 0.0
        %3527 = vmatprep.subr.mxu0 0.0
        %3528 = vmatpush1.msra.mxu0 0.0
        %3529 = vmatprep.subr.mxu0 0.0
        %3530 = vmatpush1.msra.mxu0 0.0
        %3531 = vmatprep.subr.mxu0 0.0
        %3532 = vmatpush1.msra.mxu0 0.0
        %3533 = vmatprep.subr.mxu0 0.0
        %3534 = vmatpush1.msra.mxu0 0.0
        %3535 = vmatprep.subr.mxu0 0.0
        %3536 = vmatpush1.msra.mxu0 0.0
        %3537 = vmatprep.subr.mxu0 0.0
        %3538 = vmatpush1.msra.mxu0 0.0
        %3539 = vmatprep.subr.mxu0 0.0
        %3540 = vmatpush1.msra.mxu0 0.0
        %3541 = vmatprep.subr.mxu0 0.0
        %3542 = vmatpush1.msra.mxu0 0.0
        %3543 = vmatprep.subr.mxu0 0.0
        %3544 = vmatpush1.msra.mxu0 0.0
        %3545 = vmatprep.subr.mxu0 0.0
        %3546 = vmatpush1.msra.mxu0 0.0
        %3547 = vmatprep.subr.mxu0 0.0
        %3548 = vmatpush1.msra.mxu0 0.0
        %3549 = vmatprep.subr.mxu0 0.0
        %3550 = vmatpush1.msra.mxu0 0.0
        %3551 = vmatprep.subr.mxu0 0.0
        %3552 = vmatpush1.msra.mxu0 0.0
        %3553 = vmatprep.subr.mxu0 0.0
        %3554 = vmatpush1.msra.mxu0 0.0
        %3555 = vmatprep.subr.mxu0 0.0
        %3556 = vmatpush1.msra.mxu0 0.0
        %3557 = vmatprep.subr.mxu0 0.0
        %3558 = vmatpush1.msra.mxu0 0.0
        %3559 = vmatprep.subr.mxu0 0.0
        %3560 = vmatpush1.msra.mxu0 0.0
        %3561 = vmatprep.mubr.f32.mxu0 0.0
        %3562 = vmatmul.mubr.f32.gmra.mrb[0].mxu0 %v3474
        %v3563 = vpop.f32.mrb[0].mxu0
        %v3564 = vadd.f32 0.0, %v3563
        %v3565 = vpop.f32.mrb[0].mxu0
        %v3566 = vadd.f32 0.0, %v3565
        %3567 = vmatprep.mubr.f32.mxu0 0.0
        %3568 = vmatmul.mubr.f32.gmra.mrb[0].mxu0 %v3477
        %v3569 = vpop.f32.mrb[0].mxu0
        %v3570 = vadd.f32 0.0, %v3569
        %v3571 = vpop.f32.mrb[0].mxu0
        %v3572 = vadd.f32 0.0, %v3571
        %3573 = vmatprep.mubr.f32.mxu0 0.0
        %3574 = vmatmul.mubr.f32.gmra.mrb[0].mxu0 %v3480
        %v3575 = vpop.f32.mrb[0].mxu0
        %v3576 = vadd.f32 0.0, %v3575
        %v3577 = vpop.f32.mrb[0].mxu0
        %v3578 = vadd.f32 0.0, %v3577
        %3579 = vmatprep.mubr.f32.mxu0 0.0
        %3580 = vmatmul.mubr.f32.gmra.mrb[0].mxu0 %v3483
        %v3581 = vpop.f32.mrb[0].mxu0
        %v3582 = vadd.f32 0.0, %v3581
        %v3583 = vpop.f32.mrb[0].mxu0
        %v3584 = vadd.f32 0.0, %v3583
        %3585 = vmatprep.mubr.f32.mxu0 0.0
        %3586 = vmatmul.mubr.f32.gmra.mrb[0].mxu0 %v3486
        %v3587 = vpop.f32.mrb[0].mxu0
        %v3588 = vadd.f32 0.0, %v3587
        %v3589 = vpop.f32.mrb[0].mxu0
        %v3590 = vadd.f32 0.0, %v3589
        %3591 = vmatprep.mubr.f32.mxu0 0.0
        %3592 = vmatmul.mubr.f32.gmra.mrb[0].mxu0 %v3489
        %v3593 = vpop.f32.mrb[0].mxu0
        %v3594 = vadd.f32 0.0, %v3593
        %v3595 = vpop.f32.mrb[0].mxu0
        %v3596 = vadd.f32 0.0, %v3595
        %3597 = vmatprep.mubr.f32.mxu0 0.0
        %3598 = vmatmul.mubr.f32.gmra.mrb[0].mxu0 %v3492
        %v3599 = vpop.f32.mrb[0].mxu0
        %v3600 = vadd.f32 0.0, %v3599
        %v3601 = vpop.f32.mrb[0].mxu0
        %v3602 = vadd.f32 0.0, %v3601
        %3603 = vmatprep.mubr.f32.mxu0 0.0
        %3604 = vmatmul.mubr.f32.gmra.mrb[0].mxu0 %v3495
        %v3605 = vpop.f32.mrb[0].mxu0
        %v3606 = vadd.f32 0.0, %v3605
        %v3607 = vpop.f32.mrb[0].mxu0
        %v3608 = vadd.f32 0.0, %v3607
        %3609 = vdwg.mxu0
        %v3610 = vadd.f32 %v3289, %v3564
        %v3611 = vadd.f32 %v3291, %v3566
        %v3612 = vadd.f32 %v3295, %v3570
        %v3613 = vadd.f32 %v3297, %v3572
        %v3614 = vadd.f32 %v3301, %v3576
        %v3615 = vadd.f32 %v3303, %v3578
        %v3616 = vadd.f32 %v3307, %v3582
        %v3617 = vadd.f32 %v3309, %v3584
        %v3618 = vadd.f32 %v3313, %v3588
        %v3619 = vadd.f32 %v3315, %v3590
        %v3620 = vadd.f32 %v3319, %v3594
        %v3621 = vadd.f32 %v3321, %v3596
        %v3622 = vadd.f32 %v3325, %v3600
        %v3623 = vadd.f32 %v3327, %v3602
        %v3624 = vadd.f32 %v3331, %v3606
        %v3625 = vadd.f32 %v3333, %v3608
        %v3626 = vld [vmem:[%s2] sm:$0xff]
        %v3627 = vld [vmem:[%s2 + $0x8] sm:$0xff]
        %v3628 = vld [vmem:[%s2 + $0x10] sm:$0xff]
        %v3629 = vld [vmem:[%s2 + $0x18] sm:$0xff]
        %v3630 = vld [vmem:[%s2 + $0x20] sm:$0xff]
        %v3631 = vld [vmem:[%s2 + $0x28] sm:$0xff]
        %v3632 = vld [vmem:[%s2 + $0x30] sm:$0xff]
        %v3633 = vld [vmem:[%s2 + $0x38] sm:$0xff]
        %3635 = vset.pattern.permute.xlu0 1
        %3636 = vperm.xlu0 %3635, %v3626
        %v3637 = vpop.permute.xlu0 %3636
        %3640 = vset.pattern.permute.xlu0 1
        %3641 = vperm.xlu0 %3640, %v3627
        %v3642 = vpop.permute.xlu0 %3641
        %3645 = vset.pattern.permute.xlu0 1
        %3646 = vperm.xlu0 %3645, %v3628
        %v3647 = vpop.permute.xlu0 %3646
        %3650 = vset.pattern.permute.xlu0 1
        %3651 = vperm.xlu0 %3650, %v3629
        %v3652 = vpop.permute.xlu0 %3651
        %3655 = vset.pattern.permute.xlu0 1
        %3656 = vperm.xlu0 %3655, %v3630
        %v3657 = vpop.permute.xlu0 %3656
        %3660 = vset.pattern.permute.xlu0 1
        %3661 = vperm.xlu0 %3660, %v3631
        %v3662 = vpop.permute.xlu0 %3661
        %3665 = vset.pattern.permute.xlu0 1
        %3666 = vperm.xlu0 %3665, %v3632
        %v3667 = vpop.permute.xlu0 %3666
        %3670 = vset.pattern.permute.xlu0 1
        %3671 = vperm.xlu0 %3670, %v3633
        %v3672 = vpop.permute.xlu0 %3671
        %v3674 = vadd.f32 %v3610, %v3637
        %v3675 = vadd.f32 %v3611, %v3637
        %v3676 = vadd.f32 %v3612, %v3642
        %v3677 = vadd.f32 %v3613, %v3642
        %v3678 = vadd.f32 %v3614, %v3647
        %v3679 = vadd.f32 %v3615, %v3647
        %v3680 = vadd.f32 %v3616, %v3652
        %v3681 = vadd.f32 %v3617, %v3652
        %v3682 = vadd.f32 %v3618, %v3657
        %v3683 = vadd.f32 %v3619, %v3657
        %v3684 = vadd.f32 %v3620, %v3662
        %v3685 = vadd.f32 %v3621, %v3662
        %v3686 = vadd.f32 %v3622, %v3667
        %v3687 = vadd.f32 %v3623, %v3667
        %v3688 = vadd.f32 %v3624, %v3672
        %v3689 = vadd.f32 %v3625, %v3672
        %v3690 = vadd.f32 %v3674, %v3675
        %3691 = vadd.xlane.f32.xlu0 %v3690
        %v3692 = vpop.xlane.xlu0 %3691
        %v3693 = vadd.f32 %v3676, %v3677
        %3694 = vadd.xlane.f32.xlu0 %v3693
        %v3695 = vpop.xlane.xlu0 %3694
        %v3696 = vadd.f32 %v3678, %v3679
        %3697 = vadd.xlane.f32.xlu0 %v3696
        %v3698 = vpop.xlane.xlu0 %3697
        %v3699 = vadd.f32 %v3680, %v3681
        %3700 = vadd.xlane.f32.xlu0 %v3699
        %v3701 = vpop.xlane.xlu0 %3700
        %v3702 = vadd.f32 %v3682, %v3683
        %3703 = vadd.xlane.f32.xlu0 %v3702
        %v3704 = vpop.xlane.xlu0 %3703
        %v3705 = vadd.f32 %v3684, %v3685
        %3706 = vadd.xlane.f32.xlu0 %v3705
        %v3707 = vpop.xlane.xlu0 %3706
        %v3708 = vadd.f32 %v3686, %v3687
        %3709 = vadd.xlane.f32.xlu0 %v3708
        %v3710 = vpop.xlane.xlu0 %3709
        %v3711 = vadd.f32 %v3688, %v3689
        %3712 = vadd.xlane.f32.xlu0 %v3711
        %v3713 = vpop.xlane.xlu0 %3712
        %v3714 = vmul.f32 %v3692, %v315
        %v3715 = vmul.f32 %v3695, %v315
        %v3716 = vmul.f32 %v3698, %v315
        %v3717 = vmul.f32 %v3701, %v315
        %v3718 = vmul.f32 %v3704, %v315
        %v3719 = vmul.f32 %v3707, %v315
        %v3720 = vmul.f32 %v3710, %v315
        %v3721 = vmul.f32 %v3713, %v315
        %v3722 = vmul.f32 %v3674, %v3674
        %v3723 = vmul.f32 %v3675, %v3675
        %v3724 = vmul.f32 %v3676, %v3676
        %v3725 = vmul.f32 %v3677, %v3677
        %v3726 = vmul.f32 %v3678, %v3678
        %v3727 = vmul.f32 %v3679, %v3679
        %v3728 = vmul.f32 %v3680, %v3680
        %v3729 = vmul.f32 %v3681, %v3681
        %v3730 = vmul.f32 %v3682, %v3682
        %v3731 = vmul.f32 %v3683, %v3683
        %v3732 = vmul.f32 %v3684, %v3684
        %v3733 = vmul.f32 %v3685, %v3685
        %v3734 = vmul.f32 %v3686, %v3686
        %v3735 = vmul.f32 %v3687, %v3687
        %v3736 = vmul.f32 %v3688, %v3688
        %v3737 = vmul.f32 %v3689, %v3689
        %v3738 = vadd.f32 %v3722, %v3723
        %3739 = vadd.xlane.f32.xlu0 %v3738
        %v3740 = vpop.xlane.xlu0 %3739
        %v3741 = vadd.f32 %v3724, %v3725
        %3742 = vadd.xlane.f32.xlu0 %v3741
        %v3743 = vpop.xlane.xlu0 %3742
        %v3744 = vadd.f32 %v3726, %v3727
        %3745 = vadd.xlane.f32.xlu0 %v3744
        %v3746 = vpop.xlane.xlu0 %3745
        %v3747 = vadd.f32 %v3728, %v3729
        %3748 = vadd.xlane.f32.xlu0 %v3747
        %v3749 = vpop.xlane.xlu0 %3748
        %v3750 = vadd.f32 %v3730, %v3731
        %3751 = vadd.xlane.f32.xlu0 %v3750
        %v3752 = vpop.xlane.xlu0 %3751
        %v3753 = vadd.f32 %v3732, %v3733
        %3754 = vadd.xlane.f32.xlu0 %v3753
        %v3755 = vpop.xlane.xlu0 %3754
        %v3756 = vadd.f32 %v3734, %v3735
        %3757 = vadd.xlane.f32.xlu0 %v3756
        %v3758 = vpop.xlane.xlu0 %3757
        %v3759 = vadd.f32 %v3736, %v3737
        %3760 = vadd.xlane.f32.xlu0 %v3759
        %v3761 = vpop.xlane.xlu0 %3760
        %v3762 = vmul.f32 %v3740, %v315
        %v3763 = vmul.f32 %v3743, %v315
        %v3764 = vmul.f32 %v3746, %v315
        %v3765 = vmul.f32 %v3749, %v315
        %v3766 = vmul.f32 %v3752, %v315
        %v3767 = vmul.f32 %v3755, %v315
        %v3768 = vmul.f32 %v3758, %v315
        %v3769 = vmul.f32 %v3761, %v315
        %v3770 = vmul.f32 %v3714, %v3714
        %v3771 = vmul.f32 %v3715, %v3715
        %v3772 = vmul.f32 %v3716, %v3716
        %v3773 = vmul.f32 %v3717, %v3717
        %v3774 = vmul.f32 %v3718, %v3718
        %v3775 = vmul.f32 %v3719, %v3719
        %v3776 = vmul.f32 %v3720, %v3720
        %v3777 = vmul.f32 %v3721, %v3721
        %v3778 = vsub.f32 %v3762, %v3770
        %v3779 = vsub.f32 %v3763, %v3771
        %v3780 = vsub.f32 %v3764, %v3772
        %v3781 = vsub.f32 %v3765, %v3773
        %v3782 = vsub.f32 %v3766, %v3774
        %v3783 = vsub.f32 %v3767, %v3775
        %v3784 = vsub.f32 %v3768, %v3776
        %v3785 = vsub.f32 %v3769, %v3777
        %v3786 = vmax.f32 %v3778, 0.0
        %v3787 = vmax.f32 %v3779, 0.0
        %v3788 = vmax.f32 %v3780, 0.0
        %v3789 = vmax.f32 %v3781, 0.0
        %v3790 = vmax.f32 %v3782, 0.0
        %v3791 = vmax.f32 %v3783, 0.0
        %v3792 = vmax.f32 %v3784, 0.0
        %v3793 = vmax.f32 %v3785, 0.0
        %v3794 = vadd.f32 %v3786, 1e-05
        %v3795 = vadd.f32 %v3787, 1e-05
        %v3796 = vadd.f32 %v3788, 1e-05
        %v3797 = vadd.f32 %v3789, 1e-05
        %v3798 = vadd.f32 %v3790, 1e-05
        %v3799 = vadd.f32 %v3791, 1e-05
        %v3800 = vadd.f32 %v3792, 1e-05
        %v3801 = vadd.f32 %v3793, 1e-05
        %v3802 = vrsqrt.pop %v3794
        %v3803 = vrsqrt.pop %v3795
        %v3804 = vrsqrt.pop %v3796
        %v3805 = vrsqrt.pop %v3797
        %v3806 = vrsqrt.pop %v3798
        %v3807 = vrsqrt.pop %v3799
        %v3808 = vrsqrt.pop %v3800
        %v3809 = vrsqrt.pop %v3801
        %v3810 = vmul.f32 %v267, %v3802
        %v3811 = vmul.f32 %v268, %v3803
        %v3812 = vmul.f32 %v269, %v3804
        %v3813 = vmul.f32 %v270, %v3805
        %v3814 = vmul.f32 %v271, %v3806
        %v3815 = vmul.f32 %v272, %v3807
        %v3816 = vmul.f32 %v273, %v3808
        %v3817 = vmul.f32 %v274, %v3809
        %v3818 = vmul.f32 %v3714, %v3810
        %v3819 = vmul.f32 %v3715, %v3811
        %v3820 = vmul.f32 %v3716, %v3812
        %v3821 = vmul.f32 %v3717, %v3813
        %v3822 = vmul.f32 %v3718, %v3814
        %v3823 = vmul.f32 %v3719, %v3815
        %v3824 = vmul.f32 %v3720, %v3816
        %v3825 = vmul.f32 %v3721, %v3817
        %3834 = vrot.lane.b32.xlu0 %v3818, 1
        %v3835 = vpop.permute.xlu0 %3834
        %3836 = vrot.lane.b32.xlu0 %v3819, 1
        %v3837 = vpop.permute.xlu0 %3836
        %3838 = vrot.lane.b32.xlu0 %v3820, 1
        %v3839 = vpop.permute.xlu0 %3838
        %3840 = vrot.lane.b32.xlu0 %v3821, 1
        %v3841 = vpop.permute.xlu0 %3840
        %3842 = vrot.lane.b32.xlu0 %v3822, 1
        %v3843 = vpop.permute.xlu0 %3842
        %3844 = vrot.lane.b32.xlu0 %v3823, 1
        %v3845 = vpop.permute.xlu0 %3844
        %3846 = vrot.lane.b32.xlu0 %v3824, 1
        %v3847 = vpop.permute.xlu0 %3846
        %3848 = vrot.lane.b32.xlu0 %v3825, 1
        %v3849 = vpop.permute.xlu0 %3848
        %v3858 = vsub.f32 %v267, %v3835
        %v3859 = vsub.f32 %v268, %v3837
        %v3860 = vsub.f32 %v269, %v3839
        %v3861 = vsub.f32 %v270, %v3841
        %v3862 = vsub.f32 %v271, %v3843
        %v3863 = vsub.f32 %v272, %v3845
        %v3864 = vsub.f32 %v273, %v3847
        %v3865 = vsub.f32 %v274, %v3849
        %3867 = vset.pattern.permute.xlu0 6
        %3868 = vperm.xlu0 %3867, %v3810
        %v3869 = vpop.permute.xlu0 %3868
        %3872 = vset.pattern.permute.xlu0 6
        %3873 = vperm.xlu0 %3872, %v3811
        %v3874 = vpop.permute.xlu0 %3873
        %3877 = vset.pattern.permute.xlu0 6
        %3878 = vperm.xlu0 %3877, %v3812
        %v3879 = vpop.permute.xlu0 %3878
        %3882 = vset.pattern.permute.xlu0 6
        %3883 = vperm.xlu0 %3882, %v3813
        %v3884 = vpop.permute.xlu0 %3883
        %3887 = vset.pattern.permute.xlu0 6
        %3888 = vperm.xlu0 %3887, %v3814
        %v3889 = vpop.permute.xlu0 %3888
        %3892 = vset.pattern.permute.xlu0 6
        %3893 = vperm.xlu0 %3892, %v3815
        %v3894 = vpop.permute.xlu0 %3893
        %3897 = vset.pattern.permute.xlu0 6
        %3898 = vperm.xlu0 %3897, %v3816
        %v3899 = vpop.permute.xlu0 %3898
        %3902 = vset.pattern.permute.xlu0 6
        %3903 = vperm.xlu0 %3902, %v3817
        %v3904 = vpop.permute.xlu0 %3903
        %v3906 = vmul.f32 %v3674, %v3869
        %v3907 = vmul.f32 %v3675, %v3869
        %v3908 = vmul.f32 %v3676, %v3874
        %v3909 = vmul.f32 %v3677, %v3874
        %v3910 = vmul.f32 %v3678, %v3879
        %v3911 = vmul.f32 %v3679, %v3879
        %v3912 = vmul.f32 %v3680, %v3884
        %v3913 = vmul.f32 %v3681, %v3884
        %v3914 = vmul.f32 %v3682, %v3889
        %v3915 = vmul.f32 %v3683, %v3889
        %v3916 = vmul.f32 %v3684, %v3894
        %v3917 = vmul.f32 %v3685, %v3894
        %v3918 = vmul.f32 %v3686, %v3899
        %v3919 = vmul.f32 %v3687, %v3899
        %v3920 = vmul.f32 %v3688, %v3904
        %v3921 = vmul.f32 %v3689, %v3904
        %3923 = vset.pattern.permute.xlu0 7
        %3924 = vperm.xlu0 %3923, %v3858
        %v3925 = vpop.permute.xlu0 %3924
        %3928 = vset.pattern.permute.xlu0 7
        %3929 = vperm.xlu0 %3928, %v3859
        %v3930 = vpop.permute.xlu0 %3929
        %3933 = vset.pattern.permute.xlu0 7
        %3934 = vperm.xlu0 %3933, %v3860
        %v3935 = vpop.permute.xlu0 %3934
        %3938 = vset.pattern.permute.xlu0 7
        %3939 = vperm.xlu0 %3938, %v3861
        %v3940 = vpop.permute.xlu0 %3939
        %3943 = vset.pattern.permute.xlu0 7
        %3944 = vperm.xlu0 %3943, %v3862
        %v3945 = vpop.permute.xlu0 %3944
        %3948 = vset.pattern.permute.xlu0 7
        %3949 = vperm.xlu0 %3948, %v3863
        %v3950 = vpop.permute.xlu0 %3949
        %3953 = vset.pattern.permute.xlu0 7
        %3954 = vperm.xlu0 %3953, %v3864
        %v3955 = vpop.permute.xlu0 %3954
        %3958 = vset.pattern.permute.xlu0 7
        %3959 = vperm.xlu0 %3958, %v3865
        %v3960 = vpop.permute.xlu0 %3959
        %v3962 = vadd.f32 %v3906, %v3925
        %v3963 = vadd.f32 %v3907, %v3925
        %v3964 = vadd.f32 %v3908, %v3930
        %v3965 = vadd.f32 %v3909, %v3930
        %v3966 = vadd.f32 %v3910, %v3935
        %v3967 = vadd.f32 %v3911, %v3935
        %v3968 = vadd.f32 %v3912, %v3940
        %v3969 = vadd.f32 %v3913, %v3940
        %v3970 = vadd.f32 %v3914, %v3945
        %v3971 = vadd.f32 %v3915, %v3945
        %v3972 = vadd.f32 %v3916, %v3950
        %v3973 = vadd.f32 %v3917, %v3950
        %v3974 = vadd.f32 %v3918, %v3955
        %v3975 = vadd.f32 %v3919, %v3955
        %v3976 = vadd.f32 %v3920, %v3960
        %v3977 = vadd.f32 %v3921, %v3960
        %vm3978 = vcmp.ge.f32.partialorder %v3962, 0.0
        %vm3979 = vcmp.ge.f32.partialorder %v3963, 0.0
        %vm3980 = vcmp.ge.f32.partialorder %v3964, 0.0
        %vm3981 = vcmp.ge.f32.partialorder %v3965, 0.0
        %vm3982 = vcmp.ge.f32.partialorder %v3966, 0.0
        %vm3983 = vcmp.ge.f32.partialorder %v3967, 0.0
        %vm3984 = vcmp.ge.f32.partialorder %v3968, 0.0
        %vm3985 = vcmp.ge.f32.partialorder %v3969, 0.0
        %vm3986 = vcmp.ge.f32.partialorder %v3970, 0.0
        %vm3987 = vcmp.ge.f32.partialorder %v3971, 0.0
        %vm3988 = vcmp.ge.f32.partialorder %v3972, 0.0
        %vm3989 = vcmp.ge.f32.partialorder %v3973, 0.0
        %vm3990 = vcmp.ge.f32.partialorder %v3974, 0.0
        %vm3991 = vcmp.ge.f32.partialorder %v3975, 0.0
        %vm3992 = vcmp.ge.f32.partialorder %v3976, 0.0
        %vm3993 = vcmp.ge.f32.partialorder %v3977, 0.0
        %v3994 = vmul.f32 %v3962, 0.01
        %v3995 = vmul.f32 %v3963, 0.01
        %v3996 = vmul.f32 %v3964, 0.01
        %v3997 = vmul.f32 %v3965, 0.01
        %v3998 = vmul.f32 %v3966, 0.01
        %v3999 = vmul.f32 %v3967, 0.01
        %v4000 = vmul.f32 %v3968, 0.01
        %v4001 = vmul.f32 %v3969, 0.01
        %v4002 = vmul.f32 %v3970, 0.01
        %v4003 = vmul.f32 %v3971, 0.01
        %v4004 = vmul.f32 %v3972, 0.01
        %v4005 = vmul.f32 %v3973, 0.01
        %v4006 = vmul.f32 %v3974, 0.01
        %v4007 = vmul.f32 %v3975, 0.01
        %v4008 = vmul.f32 %v3976, 0.01
        %v4009 = vmul.f32 %v3977, 0.01
        %v4010 = vsel %vm3978, %v3962, %v3994
        %v4011 = vsel %vm3979, %v3963, %v3995
        %v4012 = vsel %vm3980, %v3964, %v3996
        %v4013 = vsel %vm3981, %v3965, %v3997
        %v4014 = vsel %vm3982, %v3966, %v3998
        %v4015 = vsel %vm3983, %v3967, %v3999
        %v4016 = vsel %vm3984, %v3968, %v4000
        %v4017 = vsel %vm3985, %v3969, %v4001
        %v4018 = vsel %vm3986, %v3970, %v4002
        %v4019 = vsel %vm3987, %v3971, %v4003
        %v4020 = vsel %vm3988, %v3972, %v4004
        %v4021 = vsel %vm3989, %v3973, %v4005
        %v4022 = vsel %vm3990, %v3974, %v4006
        %v4023 = vsel %vm3991, %v3975, %v4007
        %v4024 = vsel %vm3992, %v3976, %v4008
        %v4025 = vsel %vm3993, %v3977, %v4009
        %4026 = vst [vmem:[#allocation2 + $0x8] sm:$0xff] %v4010
        %4027 = vst [vmem:[#allocation2 + $0x10] sm:$0xff] %v4011
        %4028 = vst [vmem:[#allocation2 + $0x28] sm:$0xff] %v4012
        %4029 = vst [vmem:[#allocation2 + $0x30] sm:$0xff] %v4013
        %4030 = vst [vmem:[#allocation2 + $0x48] sm:$0xff] %v4014
        %4031 = vst [vmem:[#allocation2 + $0x50] sm:$0xff] %v4015
        %4032 = vst [vmem:[#allocation2 + $0x68] sm:$0xff] %v4016
        %4033 = vst [vmem:[#allocation2 + $0x70] sm:$0xff] %v4017
        %4034 = vst [vmem:[#allocation2 + $0x88] sm:$0xff] %v4018
        %4035 = vst [vmem:[#allocation2 + $0x90] sm:$0xff] %v4019
        %4036 = vst [vmem:[#allocation2 + $0xa8] sm:$0xff] %v4020
        %4037 = vst [vmem:[#allocation2 + $0xb0] sm:$0xff] %v4021
        %4038 = vst [vmem:[#allocation2 + $0xc8] sm:$0xff] %v4022
        %4039 = vst [vmem:[#allocation2 + $0xd0] sm:$0xff] %v4023
        %4040 = vst [vmem:[#allocation2 + $0xe8] sm:$0xff] %v4024
        %4041 = vst [vmem:[#allocation2 + $0xf0] sm:$0xff] %v4025
        %s4042 = scalar_lea.vmem [#allocation6], 768
        %v4043 = vld [vmem:[%s4042] sm:$0xff]
        %v4044 = vld [vmem:[%s4042 + $0x8] sm:$0xff]
        %v4045 = vld [vmem:[%s4042 + $0x10] sm:$0xff]
        %v4046 = vld [vmem:[%s4042 + $0x18] sm:$0xff]
        %v4047 = vld [vmem:[%s4042 + $0x20] sm:$0xff]
        %v4048 = vld [vmem:[%s4042 + $0x28] sm:$0xff]
        %v4049 = vld [vmem:[%s4042 + $0x30] sm:$0xff]
        %v4050 = vld [vmem:[%s4042 + $0x38] sm:$0xff]
        %v4051 = vld [vmem:[#allocation2] sm:$0xff]
        %v4052 = vld [vmem:[#allocation2 + $0x8] sm:$0xff]
        %v4053 = vld [vmem:[#allocation2 + $0x10] sm:$0xff]
        %v4054 = vld [vmem:[#allocation2 + $0x20] sm:$0xff]
        %v4055 = vld [vmem:[#allocation2 + $0x28] sm:$0xff]
        %v4056 = vld [vmem:[#allocation2 + $0x30] sm:$0xff]
        %v4057 = vld [vmem:[#allocation2 + $0x40] sm:$0xff]
        %v4058 = vld [vmem:[#allocation2 + $0x48] sm:$0xff]
        %v4059 = vld [vmem:[#allocation2 + $0x50] sm:$0xff]
        %v4060 = vld [vmem:[#allocation2 + $0x60] sm:$0xff]
        %v4061 = vld [vmem:[#allocation2 + $0x68] sm:$0xff]
        %v4062 = vld [vmem:[#allocation2 + $0x70] sm:$0xff]
        %v4063 = vld [vmem:[#allocation2 + $0x80] sm:$0xff]
        %v4064 = vld [vmem:[#allocation2 + $0x88] sm:$0xff]
        %v4065 = vld [vmem:[#allocation2 + $0x90] sm:$0xff]
        %v4066 = vld [vmem:[#allocation2 + $0xa0] sm:$0xff]
        %v4067 = vld [vmem:[#allocation2 + $0xa8] sm:$0xff]
        %v4068 = vld [vmem:[#allocation2 + $0xb0] sm:$0xff]
        %v4069 = vld [vmem:[#allocation2 + $0xc0] sm:$0xff]
        %v4070 = vld [vmem:[#allocation2 + $0xc8] sm:$0xff]
        %v4071 = vld [vmem:[#allocation2 + $0xd0] sm:$0xff]
        %v4072 = vld [vmem:[#allocation2 + $0xe0] sm:$0xff]
        %v4073 = vld [vmem:[#allocation2 + $0xe8] sm:$0xff]
        %v4074 = vld [vmem:[#allocation2 + $0xf0] sm:$0xff]
        %s4075 = scalar_lea.vmem [#allocation6], 832
        %v4076 = vld [vmem:[%s4075] sm:$0xff]
        %v4077 = vld [vmem:[%s4075 + $0x8] sm:$0xff]
        %v4078 = vld [vmem:[%s4075 + $0x10] sm:$0xff]
        %v4079 = vld [vmem:[%s4075 + $0x18] sm:$0xff]
        %v4080 = vld [vmem:[%s4075 + $0x20] sm:$0xff]
        %v4081 = vld [vmem:[%s4075 + $0x28] sm:$0xff]
        %v4082 = vld [vmem:[%s4075 + $0x30] sm:$0xff]
        %v4083 = vld [vmem:[%s4075 + $0x38] sm:$0xff]
        %v4085 = vsel %vm685, %v4076, 0
        %v4088 = vsel %vm685, %v4077, 0
        %v4091 = vsel %vm685, %v4078, 0
        %v4094 = vsel %vm685, %v4079, 0
        %v4097 = vsel %vm685, %v4080, 0
        %v4100 = vsel %vm685, %v4081, 0
        %v4103 = vsel %vm685, %v4082, 0
        %v4106 = vsel %vm685, %v4083, 0
        %4108 = vmatprep.subr.mxu0 %v4053
        %4109 = vmatpush1.msra.mxu0 %v4052
        %4110 = vmatprep.subr.mxu0 %v4056
        %4111 = vmatpush1.msra.mxu0 %v4055
        %4112 = vmatprep.subr.mxu0 %v4059
        %4113 = vmatpush1.msra.mxu0 %v4058
        %4114 = vmatprep.subr.mxu0 %v4062
        %4115 = vmatpush1.msra.mxu0 %v4061
        %4116 = vmatprep.subr.mxu0 %v4065
        %4117 = vmatpush1.msra.mxu0 %v4064
        %4118 = vmatprep.subr.mxu0 %v4068
        %4119 = vmatpush1.msra.mxu0 %v4067
        %4120 = vmatprep.subr.mxu0 %v4071
        %4121 = vmatpush1.msra.mxu0 %v4070
        %4122 = vmatprep.subr.mxu0 %v4074
        %4123 = vmatpush1.msra.mxu0 %v4073
        %4124 = vmatprep.subr.mxu0 0.0
        %4125 = vmatpush1.msra.mxu0 0.0
        %4126 = vmatprep.subr.mxu0 0.0
        %4127 = vmatpush1.msra.mxu0 0.0
        %4128 = vmatprep.subr.mxu0 0.0
        %4129 = vmatpush1.msra.mxu0 0.0
        %4130 = vmatprep.subr.mxu0 0.0
        %4131 = vmatpush1.msra.mxu0 0.0
        %4132 = vmatprep.subr.mxu0 0.0
        %4133 = vmatpush1.msra.mxu0 0.0
        %4134 = vmatprep.subr.mxu0 0.0
        %4135 = vmatpush1.msra.mxu0 0.0
        %4136 = vmatprep.subr.mxu0 0.0
        %4137 = vmatpush1.msra.mxu0 0.0
        %4138 = vmatprep.subr.mxu0 0.0
        %4139 = vmatpush1.msra.mxu0 0.0
        %4140 = vmatprep.subr.mxu0 0.0
        %4141 = vmatpush1.msra.mxu0 0.0
        %4142 = vmatprep.subr.mxu0 0.0
        %4143 = vmatpush1.msra.mxu0 0.0
        %4144 = vmatprep.subr.mxu0 0.0
        %4145 = vmatpush1.msra.mxu0 0.0
        %4146 = vmatprep.subr.mxu0 0.0
        %4147 = vmatpush1.msra.mxu0 0.0
        %4148 = vmatprep.subr.mxu0 0.0
        %4149 = vmatpush1.msra.mxu0 0.0
        %4150 = vmatprep.subr.mxu0 0.0
        %4151 = vmatpush1.msra.mxu0 0.0
        %4152 = vmatprep.subr.mxu0 0.0
        %4153 = vmatpush1.msra.mxu0 0.0
        %4154 = vmatprep.subr.mxu0 0.0
        %4155 = vmatpush1.msra.mxu0 0.0
        %4156 = vmatprep.subr.mxu0 0.0
        %4157 = vmatpush1.msra.mxu0 0.0
        %4158 = vmatprep.subr.mxu0 0.0
        %4159 = vmatpush1.msra.mxu0 0.0
        %4160 = vmatprep.subr.mxu0 0.0
        %4161 = vmatpush1.msra.mxu0 0.0
        %4162 = vmatprep.subr.mxu0 0.0
        %4163 = vmatpush1.msra.mxu0 0.0
        %4164 = vmatprep.subr.mxu0 0.0
        %4165 = vmatpush1.msra.mxu0 0.0
        %4166 = vmatprep.subr.mxu0 0.0
        %4167 = vmatpush1.msra.mxu0 0.0
        %4168 = vmatprep.subr.mxu0 0.0
        %4169 = vmatpush1.msra.mxu0 0.0
        %4170 = vmatprep.subr.mxu0 0.0
        %4171 = vmatpush1.msra.mxu0 0.0
        %4172 = vmatprep.mubr.f32.mxu0 0.0
        %4173 = vmatmul.mubr.f32.gmra.mrb[0].mxu0 %v4085
        %v4174 = vpop.f32.mrb[0].mxu0
        %v4175 = vadd.f32 0.0, %v4174
        %v4176 = vpop.f32.mrb[0].mxu0
        %v4177 = vadd.f32 0.0, %v4176
        %4178 = vmatprep.mubr.f32.mxu0 0.0
        %4179 = vmatmul.mubr.f32.gmra.mrb[0].mxu0 %v4088
        %v4180 = vpop.f32.mrb[0].mxu0
        %v4181 = vadd.f32 0.0, %v4180
        %v4182 = vpop.f32.mrb[0].mxu0
        %v4183 = vadd.f32 0.0, %v4182
        %4184 = vmatprep.mubr.f32.mxu0 0.0
        %4185 = vmatmul.mubr.f32.gmra.mrb[0].mxu0 %v4091
        %v4186 = vpop.f32.mrb[0].mxu0
        %v4187 = vadd.f32 0.0, %v4186
        %v4188 = vpop.f32.mrb[0].mxu0
        %v4189 = vadd.f32 0.0, %v4188
        %4190 = vmatprep.mubr.f32.mxu0 0.0
        %4191 = vmatmul.mubr.f32.gmra.mrb[0].mxu0 %v4094
        %v4192 = vpop.f32.mrb[0].mxu0
        %v4193 = vadd.f32 0.0, %v4192
        %v4194 = vpop.f32.mrb[0].mxu0
        %v4195 = vadd.f32 0.0, %v4194
        %4196 = vmatprep.mubr.f32.mxu0 0.0
        %4197 = vmatmul.mubr.f32.gmra.mrb[0].mxu0 %v4097
        %v4198 = vpop.f32.mrb[0].mxu0
        %v4199 = vadd.f32 0.0, %v4198
        %v4200 = vpop.f32.mrb[0].mxu0
        %v4201 = vadd.f32 0.0, %v4200
        %4202 = vmatprep.mubr.f32.mxu0 0.0
        %4203 = vmatmul.mubr.f32.gmra.mrb[0].mxu0 %v4100
        %v4204 = vpop.f32.mrb[0].mxu0
        %v4205 = vadd.f32 0.0, %v4204
        %v4206 = vpop.f32.mrb[0].mxu0
        %v4207 = vadd.f32 0.0, %v4206
        %4208 = vmatprep.mubr.f32.mxu0 0.0
        %4209 = vmatmul.mubr.f32.gmra.mrb[0].mxu0 %v4103
        %v4210 = vpop.f32.mrb[0].mxu0
        %v4211 = vadd.f32 0.0, %v4210
        %v4212 = vpop.f32.mrb[0].mxu0
        %v4213 = vadd.f32 0.0, %v4212
        %4214 = vmatprep.mubr.f32.mxu0 0.0
        %4215 = vmatmul.mubr.f32.gmra.mrb[0].mxu0 %v4106
        %v4216 = vpop.f32.mrb[0].mxu0
        %v4217 = vadd.f32 0.0, %v4216
        %v4218 = vpop.f32.mrb[0].mxu0
        %v4219 = vadd.f32 0.0, %v4218
        %4220 = vdwg.mxu0
        %4245 = vrot.lane.b32.xlu0 %v4051, 1
        %v4246 = vpop.permute.xlu0 %4245
        %4247 = vrot.lane.b32.xlu0 %v4052, 1
        %v4248 = vpop.permute.xlu0 %4247
        %4249 = vrot.lane.b32.xlu0 %v4053, 1
        %v4250 = vpop.permute.xlu0 %4249
        %4251 = vrot.lane.b32.xlu0 %v4054, 1
        %v4252 = vpop.permute.xlu0 %4251
        %4253 = vrot.lane.b32.xlu0 %v4055, 1
        %v4254 = vpop.permute.xlu0 %4253
        %4255 = vrot.lane.b32.xlu0 %v4056, 1
        %v4256 = vpop.permute.xlu0 %4255
        %4257 = vrot.lane.b32.xlu0 %v4057, 1
        %v4258 = vpop.permute.xlu0 %4257
        %4259 = vrot.lane.b32.xlu0 %v4058, 1
        %v4260 = vpop.permute.xlu0 %4259
        %4261 = vrot.lane.b32.xlu0 %v4059, 1
        %v4262 = vpop.permute.xlu0 %4261
        %4263 = vrot.lane.b32.xlu0 %v4060, 1
        %v4264 = vpop.permute.xlu0 %4263
        %4265 = vrot.lane.b32.xlu0 %v4061, 1
        %v4266 = vpop.permute.xlu0 %4265
        %4267 = vrot.lane.b32.xlu0 %v4062, 1
        %v4268 = vpop.permute.xlu0 %4267
        %4269 = vrot.lane.b32.xlu0 %v4063, 1
        %v4270 = vpop.permute.xlu0 %4269
        %4271 = vrot.lane.b32.xlu0 %v4064, 1
        %v4272 = vpop.permute.xlu0 %4271
        %4273 = vrot.lane.b32.xlu0 %v4065, 1
        %v4274 = vpop.permute.xlu0 %4273
        %4275 = vrot.lane.b32.xlu0 %v4066, 1
        %v4276 = vpop.permute.xlu0 %4275
        %4277 = vrot.lane.b32.xlu0 %v4067, 1
        %v4278 = vpop.permute.xlu0 %4277
        %4279 = vrot.lane.b32.xlu0 %v4068, 1
        %v4280 = vpop.permute.xlu0 %4279
        %4281 = vrot.lane.b32.xlu0 %v4069, 1
        %v4282 = vpop.permute.xlu0 %4281
        %4283 = vrot.lane.b32.xlu0 %v4070, 1
        %v4284 = vpop.permute.xlu0 %4283
        %4285 = vrot.lane.b32.xlu0 %v4071, 1
        %v4286 = vpop.permute.xlu0 %4285
        %4287 = vrot.lane.b32.xlu0 %v4072, 1
        %v4288 = vpop.permute.xlu0 %4287
        %4289 = vrot.lane.b32.xlu0 %v4073, 1
        %v4290 = vpop.permute.xlu0 %4289
        %4291 = vrot.lane.b32.xlu0 %v4074, 1
        %v4292 = vpop.permute.xlu0 %4291
        %v4293 = vsel %vm895, %v4246, %v4248
        %v4294 = vsel %vm895, %v4248, %v4250
        %v4295 = vsel %vm895, %v4252, %v4254
        %v4296 = vsel %vm895, %v4254, %v4256
        %v4297 = vsel %vm895, %v4258, %v4260
        %v4298 = vsel %vm895, %v4260, %v4262
        %v4299 = vsel %vm895, %v4264, %v4266
        %v4300 = vsel %vm895, %v4266, %v4268
        %v4301 = vsel %vm895, %v4270, %v4272
        %v4302 = vsel %vm895, %v4272, %v4274
        %v4303 = vsel %vm895, %v4276, %v4278
        %v4304 = vsel %vm895, %v4278, %v4280
        %v4305 = vsel %vm895, %v4282, %v4284
        %v4306 = vsel %vm895, %v4284, %v4286
        %v4307 = vsel %vm895, %v4288, %v4290
        %v4308 = vsel %vm895, %v4290, %v4292
        %v4326 = vsel %vm685, %v4043, 0
        %v4329 = vsel %vm685, %v4044, 0
        %v4332 = vsel %vm685, %v4045, 0
        %v4335 = vsel %vm685, %v4046, 0
        %v4338 = vsel %vm685, %v4047, 0
        %v4341 = vsel %vm685, %v4048, 0
        %v4344 = vsel %vm685, %v4049, 0
        %v4347 = vsel %vm685, %v4050, 0
        %4349 = vmatprep.subr.mxu0 %v4294
        %4350 = vmatpush1.msra.mxu0 %v4293
        %4351 = vmatprep.subr.mxu0 %v4296
        %4352 = vmatpush1.msra.mxu0 %v4295
        %4353 = vmatprep.subr.mxu0 %v4298
        %4354 = vmatpush1.msra.mxu0 %v4297
        %4355 = vmatprep.subr.mxu0 %v4300
        %4356 = vmatpush1.msra.mxu0 %v4299
        %4357 = vmatprep.subr.mxu0 %v4302
        %4358 = vmatpush1.msra.mxu0 %v4301
        %4359 = vmatprep.subr.mxu0 %v4304
        %4360 = vmatpush1.msra.mxu0 %v4303
        %4361 = vmatprep.subr.mxu0 %v4306
        %4362 = vmatpush1.msra.mxu0 %v4305
        %4363 = vmatprep.subr.mxu0 %v4308
        %4364 = vmatpush1.msra.mxu0 %v4307
        %4365 = vmatprep.subr.mxu0 0.0
        %4366 = vmatpush1.msra.mxu0 0.0
        %4367 = vmatprep.subr.mxu0 0.0
        %4368 = vmatpush1.msra.mxu0 0.0
        %4369 = vmatprep.subr.mxu0 0.0
        %4370 = vmatpush1.msra.mxu0 0.0
        %4371 = vmatprep.subr.mxu0 0.0
        %4372 = vmatpush1.msra.mxu0 0.0
        %4373 = vmatprep.subr.mxu0 0.0
        %4374 = vmatpush1.msra.mxu0 0.0
        %4375 = vmatprep.subr.mxu0 0.0
        %4376 = vmatpush1.msra.mxu0 0.0
        %4377 = vmatprep.subr.mxu0 0.0
        %4378 = vmatpush1.msra.mxu0 0.0
        %4379 = vmatprep.subr.mxu0 0.0
        %4380 = vmatpush1.msra.mxu0 0.0
        %4381 = vmatprep.subr.mxu0 0.0
        %4382 = vmatpush1.msra.mxu0 0.0
        %4383 = vmatprep.subr.mxu0 0.0
        %4384 = vmatpush1.msra.mxu0 0.0
        %4385 = vmatprep.subr.mxu0 0.0
        %4386 = vmatpush1.msra.mxu0 0.0
        %4387 = vmatprep.subr.mxu0 0.0
        %4388 = vmatpush1.msra.mxu0 0.0
        %4389 = vmatprep.subr.mxu0 0.0
        %4390 = vmatpush1.msra.mxu0 0.0
        %4391 = vmatprep.subr.mxu0 0.0
        %4392 = vmatpush1.msra.mxu0 0.0
        %4393 = vmatprep.subr.mxu0 0.0
        %4394 = vmatpush1.msra.mxu0 0.0
        %4395 = vmatprep.subr.mxu0 0.0
        %4396 = vmatpush1.msra.mxu0 0.0
        %4397 = vmatprep.subr.mxu0 0.0
        %4398 = vmatpush1.msra.mxu0 0.0
        %4399 = vmatprep.subr.mxu0 0.0
        %4400 = vmatpush1.msra.mxu0 0.0
        %4401 = vmatprep.subr.mxu0 0.0
        %4402 = vmatpush1.msra.mxu0 0.0
        %4403 = vmatprep.subr.mxu0 0.0
        %4404 = vmatpush1.msra.mxu0 0.0
        %4405 = vmatprep.subr.mxu0 0.0
        %4406 = vmatpush1.msra.mxu0 0.0
        %4407 = vmatprep.subr.mxu0 0.0
        %4408 = vmatpush1.msra.mxu0 0.0
        %4409 = vmatprep.subr.mxu0 0.0
        %4410 = vmatpush1.msra.mxu0 0.0
        %4411 = vmatprep.subr.mxu0 0.0
        %4412 = vmatpush1.msra.mxu0 0.0
        %4413 = vmatprep.mubr.f32.mxu0 0.0
        %4414 = vmatmul.mubr.f32.gmra.mrb[0].mxu0 %v4326
        %v4415 = vpop.f32.mrb[0].mxu0
        %v4416 = vadd.f32 %v4175, %v4415
        %v4417 = vpop.f32.mrb[0].mxu0
        %v4418 = vadd.f32 %v4177, %v4417
        %4419 = vmatprep.mubr.f32.mxu0 0.0
        %4420 = vmatmul.mubr.f32.gmra.mrb[0].mxu0 %v4329
        %v4421 = vpop.f32.mrb[0].mxu0
        %v4422 = vadd.f32 %v4181, %v4421
        %v4423 = vpop.f32.mrb[0].mxu0
        %v4424 = vadd.f32 %v4183, %v4423
        %4425 = vmatprep.mubr.f32.mxu0 0.0
        %4426 = vmatmul.mubr.f32.gmra.mrb[0].mxu0 %v4332
        %v4427 = vpop.f32.mrb[0].mxu0
        %v4428 = vadd.f32 %v4187, %v4427
        %v4429 = vpop.f32.mrb[0].mxu0
        %v4430 = vadd.f32 %v4189, %v4429
        %4431 = vmatprep.mubr.f32.mxu0 0.0
        %4432 = vmatmul.mubr.f32.gmra.mrb[0].mxu0 %v4335
        %v4433 = vpop.f32.mrb[0].mxu0
        %v4434 = vadd.f32 %v4193, %v4433
        %v4435 = vpop.f32.mrb[0].mxu0
        %v4436 = vadd.f32 %v4195, %v4435
        %4437 = vmatprep.mubr.f32.mxu0 0.0
        %4438 = vmatmul.mubr.f32.gmra.mrb[0].mxu0 %v4338
        %v4439 = vpop.f32.mrb[0].mxu0
        %v4440 = vadd.f32 %v4199, %v4439
        %v4441 = vpop.f32.mrb[0].mxu0
        %v4442 = vadd.f32 %v4201, %v4441
        %4443 = vmatprep.mubr.f32.mxu0 0.0
        %4444 = vmatmul.mubr.f32.gmra.mrb[0].mxu0 %v4341
        %v4445 = vpop.f32.mrb[0].mxu0
        %v4446 = vadd.f32 %v4205, %v4445
        %v4447 = vpop.f32.mrb[0].mxu0
        %v4448 = vadd.f32 %v4207, %v4447
        %4449 = vmatprep.mubr.f32.mxu0 0.0
        %4450 = vmatmul.mubr.f32.gmra.mrb[0].mxu0 %v4344
        %v4451 = vpop.f32.mrb[0].mxu0
        %v4452 = vadd.f32 %v4211, %v4451
        %v4453 = vpop.f32.mrb[0].mxu0
        %v4454 = vadd.f32 %v4213, %v4453
        %4455 = vmatprep.mubr.f32.mxu0 0.0
        %4456 = vmatmul.mubr.f32.gmra.mrb[0].mxu0 %v4347
        %v4457 = vpop.f32.mrb[0].mxu0
        %v4458 = vadd.f32 %v4217, %v4457
        %v4459 = vpop.f32.mrb[0].mxu0
        %v4460 = vadd.f32 %v4219, %v4459
        %4461 = vdwg.mxu0
        %s4462 = scalar_lea.vmem [#allocation6], 896
        %v4463 = vld [vmem:[%s4462] sm:$0xff]
        %v4464 = vld [vmem:[%s4462 + $0x8] sm:$0xff]
        %v4465 = vld [vmem:[%s4462 + $0x10] sm:$0xff]
        %v4466 = vld [vmem:[%s4462 + $0x18] sm:$0xff]
        %v4467 = vld [vmem:[%s4462 + $0x20] sm:$0xff]
        %v4468 = vld [vmem:[%s4462 + $0x28] sm:$0xff]
        %v4469 = vld [vmem:[%s4462 + $0x30] sm:$0xff]
        %v4470 = vld [vmem:[%s4462 + $0x38] sm:$0xff]
        %v4471 = vld [vmem:[#allocation2 + $0x8] sm:$0xff]
        %v4472 = vld [vmem:[#allocation2 + $0x10] sm:$0xff]
        %v4473 = vld [vmem:[#allocation2 + $0x18] sm:$0xff]
        %v4474 = vld [vmem:[#allocation2 + $0x28] sm:$0xff]
        %v4475 = vld [vmem:[#allocation2 + $0x30] sm:$0xff]
        %v4476 = vld [vmem:[#allocation2 + $0x38] sm:$0xff]
        %v4477 = vld [vmem:[#allocation2 + $0x48] sm:$0xff]
        %v4478 = vld [vmem:[#allocation2 + $0x50] sm:$0xff]
        %v4479 = vld [vmem:[#allocation2 + $0x58] sm:$0xff]
        %v4480 = vld [vmem:[#allocation2 + $0x68] sm:$0xff]
        %v4481 = vld [vmem:[#allocation2 + $0x70] sm:$0xff]
        %v4482 = vld [vmem:[#allocation2 + $0x78] sm:$0xff]
        %v4483 = vld [vmem:[#allocation2 + $0x88] sm:$0xff]
        %v4484 = vld [vmem:[#allocation2 + $0x90] sm:$0xff]
        %v4485 = vld [vmem:[#allocation2 + $0x98] sm:$0xff]
        %v4486 = vld [vmem:[#allocation2 + $0xa8] sm:$0xff]
        %v4487 = vld [vmem:[#allocation2 + $0xb0] sm:$0xff]
        %v4488 = vld [vmem:[#allocation2 + $0xb8] sm:$0xff]
        %v4489 = vld [vmem:[#allocation2 + $0xc8] sm:$0xff]
        %v4490 = vld [vmem:[#allocation2 + $0xd0] sm:$0xff]
        %v4491 = vld [vmem:[#allocation2 + $0xd8] sm:$0xff]
        %v4492 = vld [vmem:[#allocation2 + $0xe8] sm:$0xff]
        %v4493 = vld [vmem:[#allocation2 + $0xf0] sm:$0xff]
        %v4494 = vld [vmem:[#allocation2 + $0xf8] sm:$0xff]
        %4519 = vrot.lane.b32.xlu0 %v4471, 127
        %v4520 = vpop.permute.xlu0 %4519
        %4521 = vrot.lane.b32.xlu0 %v4472, 127
        %v4522 = vpop.permute.xlu0 %4521
        %4523 = vrot.lane.b32.xlu0 %v4473, 127
        %v4524 = vpop.permute.xlu0 %4523
        %4525 = vrot.lane.b32.xlu0 %v4474, 127
        %v4526 = vpop.permute.xlu0 %4525
        %4527 = vrot.lane.b32.xlu0 %v4475, 127
        %v4528 = vpop.permute.xlu0 %4527
        %4529 = vrot.lane.b32.xlu0 %v4476, 127
        %v4530 = vpop.permute.xlu0 %4529
        %4531 = vrot.lane.b32.xlu0 %v4477, 127
        %v4532 = vpop.permute.xlu0 %4531
        %4533 = vrot.lane.b32.xlu0 %v4478, 127
        %v4534 = vpop.permute.xlu0 %4533
        %4535 = vrot.lane.b32.xlu0 %v4479, 127
        %v4536 = vpop.permute.xlu0 %4535
        %4537 = vrot.lane.b32.xlu0 %v4480, 127
        %v4538 = vpop.permute.xlu0 %4537
        %4539 = vrot.lane.b32.xlu0 %v4481, 127
        %v4540 = vpop.permute.xlu0 %4539
        %4541 = vrot.lane.b32.xlu0 %v4482, 127
        %v4542 = vpop.permute.xlu0 %4541
        %4543 = vrot.lane.b32.xlu0 %v4483, 127
        %v4544 = vpop.permute.xlu0 %4543
        %4545 = vrot.lane.b32.xlu0 %v4484, 127
        %v4546 = vpop.permute.xlu0 %4545
        %4547 = vrot.lane.b32.xlu0 %v4485, 127
        %v4548 = vpop.permute.xlu0 %4547
        %4549 = vrot.lane.b32.xlu0 %v4486, 127
        %v4550 = vpop.permute.xlu0 %4549
        %4551 = vrot.lane.b32.xlu0 %v4487, 127
        %v4552 = vpop.permute.xlu0 %4551
        %4553 = vrot.lane.b32.xlu0 %v4488, 127
        %v4554 = vpop.permute.xlu0 %4553
        %4555 = vrot.lane.b32.xlu0 %v4489, 127
        %v4556 = vpop.permute.xlu0 %4555
        %4557 = vrot.lane.b32.xlu0 %v4490, 127
        %v4558 = vpop.permute.xlu0 %4557
        %4559 = vrot.lane.b32.xlu0 %v4491, 127
        %v4560 = vpop.permute.xlu0 %4559
        %4561 = vrot.lane.b32.xlu0 %v4492, 127
        %v4562 = vpop.permute.xlu0 %4561
        %4563 = vrot.lane.b32.xlu0 %v4493, 127
        %v4564 = vpop.permute.xlu0 %4563
        %4565 = vrot.lane.b32.xlu0 %v4494, 127
        %v4566 = vpop.permute.xlu0 %4565
        %v4567 = vsel %vm1170, %v4520, %v4522
        %v4568 = vsel %vm1170, %v4522, %v4524
        %v4569 = vsel %vm1170, %v4526, %v4528
        %v4570 = vsel %vm1170, %v4528, %v4530
        %v4571 = vsel %vm1170, %v4532, %v4534
        %v4572 = vsel %vm1170, %v4534, %v4536
        %v4573 = vsel %vm1170, %v4538, %v4540
        %v4574 = vsel %vm1170, %v4540, %v4542
        %v4575 = vsel %vm1170, %v4544, %v4546
        %v4576 = vsel %vm1170, %v4546, %v4548
        %v4577 = vsel %vm1170, %v4550, %v4552
        %v4578 = vsel %vm1170, %v4552, %v4554
        %v4579 = vsel %vm1170, %v4556, %v4558
        %v4580 = vsel %vm1170, %v4558, %v4560
        %v4581 = vsel %vm1170, %v4562, %v4564
        %v4582 = vsel %vm1170, %v4564, %v4566
        %v4600 = vsel %vm685, %v4463, 0
        %v4603 = vsel %vm685, %v4464, 0
        %v4606 = vsel %vm685, %v4465, 0
        %v4609 = vsel %vm685, %v4466, 0
        %v4612 = vsel %vm685, %v4467, 0
        %v4615 = vsel %vm685, %v4468, 0
        %v4618 = vsel %vm685, %v4469, 0
        %v4621 = vsel %vm685, %v4470, 0
        %4623 = vmatprep.subr.mxu0 %v4568
        %4624 = vmatpush1.msra.mxu0 %v4567
        %4625 = vmatprep.subr.mxu0 %v4570
        %4626 = vmatpush1.msra.mxu0 %v4569
        %4627 = vmatprep.subr.mxu0 %v4572
        %4628 = vmatpush1.msra.mxu0 %v4571
        %4629 = vmatprep.subr.mxu0 %v4574
        %4630 = vmatpush1.msra.mxu0 %v4573
        %4631 = vmatprep.subr.mxu0 %v4576
        %4632 = vmatpush1.msra.mxu0 %v4575
        %4633 = vmatprep.subr.mxu0 %v4578
        %4634 = vmatpush1.msra.mxu0 %v4577
        %4635 = vmatprep.subr.mxu0 %v4580
        %4636 = vmatpush1.msra.mxu0 %v4579
        %4637 = vmatprep.subr.mxu0 %v4582
        %4638 = vmatpush1.msra.mxu0 %v4581
        %4639 = vmatprep.subr.mxu0 0.0
        %4640 = vmatpush1.msra.mxu0 0.0
        %4641 = vmatprep.subr.mxu0 0.0
        %4642 = vmatpush1.msra.mxu0 0.0
        %4643 = vmatprep.subr.mxu0 0.0
        %4644 = vmatpush1.msra.mxu0 0.0
        %4645 = vmatprep.subr.mxu0 0.0
        %4646 = vmatpush1.msra.mxu0 0.0
        %4647 = vmatprep.subr.mxu0 0.0
        %4648 = vmatpush1.msra.mxu0 0.0
        %4649 = vmatprep.subr.mxu0 0.0
        %4650 = vmatpush1.msra.mxu0 0.0
        %4651 = vmatprep.subr.mxu0 0.0
        %4652 = vmatpush1.msra.mxu0 0.0
        %4653 = vmatprep.subr.mxu0 0.0
        %4654 = vmatpush1.msra.mxu0 0.0
        %4655 = vmatprep.subr.mxu0 0.0
        %4656 = vmatpush1.msra.mxu0 0.0
        %4657 = vmatprep.subr.mxu0 0.0
        %4658 = vmatpush1.msra.mxu0 0.0
        %4659 = vmatprep.subr.mxu0 0.0
        %4660 = vmatpush1.msra.mxu0 0.0
        %4661 = vmatprep.subr.mxu0 0.0
        %4662 = vmatpush1.msra.mxu0 0.0
        %4663 = vmatprep.subr.mxu0 0.0
        %4664 = vmatpush1.msra.mxu0 0.0
        %4665 = vmatprep.subr.mxu0 0.0
        %4666 = vmatpush1.msra.mxu0 0.0
        %4667 = vmatprep.subr.mxu0 0.0
        %4668 = vmatpush1.msra.mxu0 0.0
        %4669 = vmatprep.subr.mxu0 0.0
        %4670 = vmatpush1.msra.mxu0 0.0
        %4671 = vmatprep.subr.mxu0 0.0
        %4672 = vmatpush1.msra.mxu0 0.0
        %4673 = vmatprep.subr.mxu0 0.0
        %4674 = vmatpush1.msra.mxu0 0.0
        %4675 = vmatprep.subr.mxu0 0.0
        %4676 = vmatpush1.msra.mxu0 0.0
        %4677 = vmatprep.subr.mxu0 0.0
        %4678 = vmatpush1.msra.mxu0 0.0
        %4679 = vmatprep.subr.mxu0 0.0
        %4680 = vmatpush1.msra.mxu0 0.0
        %4681 = vmatprep.subr.mxu0 0.0
        %4682 = vmatpush1.msra.mxu0 0.0
        %4683 = vmatprep.subr.mxu0 0.0
        %4684 = vmatpush1.msra.mxu0 0.0
        %4685 = vmatprep.subr.mxu0 0.0
        %4686 = vmatpush1.msra.mxu0 0.0
        %4687 = vmatprep.mubr.f32.mxu0 0.0
        %4688 = vmatmul.mubr.f32.gmra.mrb[0].mxu0 %v4600
        %v4689 = vpop.f32.mrb[0].mxu0
        %v4690 = vadd.f32 0.0, %v4689
        %v4691 = vpop.f32.mrb[0].mxu0
        %v4692 = vadd.f32 0.0, %v4691
        %4693 = vmatprep.mubr.f32.mxu0 0.0
        %4694 = vmatmul.mubr.f32.gmra.mrb[0].mxu0 %v4603
        %v4695 = vpop.f32.mrb[0].mxu0
        %v4696 = vadd.f32 0.0, %v4695
        %v4697 = vpop.f32.mrb[0].mxu0
        %v4698 = vadd.f32 0.0, %v4697
        %4699 = vmatprep.mubr.f32.mxu0 0.0
        %4700 = vmatmul.mubr.f32.gmra.mrb[0].mxu0 %v4606
        %v4701 = vpop.f32.mrb[0].mxu0
        %v4702 = vadd.f32 0.0, %v4701
        %v4703 = vpop.f32.mrb[0].mxu0
        %v4704 = vadd.f32 0.0, %v4703
        %4705 = vmatprep.mubr.f32.mxu0 0.0
        %4706 = vmatmul.mubr.f32.gmra.mrb[0].mxu0 %v4609
        %v4707 = vpop.f32.mrb[0].mxu0
        %v4708 = vadd.f32 0.0, %v4707
        %v4709 = vpop.f32.mrb[0].mxu0
        %v4710 = vadd.f32 0.0, %v4709
        %4711 = vmatprep.mubr.f32.mxu0 0.0
        %4712 = vmatmul.mubr.f32.gmra.mrb[0].mxu0 %v4612
        %v4713 = vpop.f32.mrb[0].mxu0
        %v4714 = vadd.f32 0.0, %v4713
        %v4715 = vpop.f32.mrb[0].mxu0
        %v4716 = vadd.f32 0.0, %v4715
        %4717 = vmatprep.mubr.f32.mxu0 0.0
        %4718 = vmatmul.mubr.f32.gmra.mrb[0].mxu0 %v4615
        %v4719 = vpop.f32.mrb[0].mxu0
        %v4720 = vadd.f32 0.0, %v4719
        %v4721 = vpop.f32.mrb[0].mxu0
        %v4722 = vadd.f32 0.0, %v4721
        %4723 = vmatprep.mubr.f32.mxu0 0.0
        %4724 = vmatmul.mubr.f32.gmra.mrb[0].mxu0 %v4618
        %v4725 = vpop.f32.mrb[0].mxu0
        %v4726 = vadd.f32 0.0, %v4725
        %v4727 = vpop.f32.mrb[0].mxu0
        %v4728 = vadd.f32 0.0, %v4727
        %4729 = vmatprep.mubr.f32.mxu0 0.0
        %4730 = vmatmul.mubr.f32.gmra.mrb[0].mxu0 %v4621
        %v4731 = vpop.f32.mrb[0].mxu0
        %v4732 = vadd.f32 0.0, %v4731
        %v4733 = vpop.f32.mrb[0].mxu0
        %v4734 = vadd.f32 0.0, %v4733
        %4735 = vdwg.mxu0
        %v4736 = vadd.f32 %v4416, %v4690
        %v4737 = vadd.f32 %v4418, %v4692
        %v4738 = vadd.f32 %v4422, %v4696
        %v4739 = vadd.f32 %v4424, %v4698
        %v4740 = vadd.f32 %v4428, %v4702
        %v4741 = vadd.f32 %v4430, %v4704
        %v4742 = vadd.f32 %v4434, %v4708
        %v4743 = vadd.f32 %v4436, %v4710
        %v4744 = vadd.f32 %v4440, %v4714
        %v4745 = vadd.f32 %v4442, %v4716
        %v4746 = vadd.f32 %v4446, %v4720
        %v4747 = vadd.f32 %v4448, %v4722
        %v4748 = vadd.f32 %v4452, %v4726
        %v4749 = vadd.f32 %v4454, %v4728
        %v4750 = vadd.f32 %v4458, %v4732
        %v4751 = vadd.f32 %v4460, %v4734
        %v4752 = vld [vmem:[%s2] sm:$0xff]
        %v4753 = vld [vmem:[%s2 + $0x8] sm:$0xff]
        %v4754 = vld [vmem:[%s2 + $0x10] sm:$0xff]
        %v4755 = vld [vmem:[%s2 + $0x18] sm:$0xff]
        %v4756 = vld [vmem:[%s2 + $0x20] sm:$0xff]
        %v4757 = vld [vmem:[%s2 + $0x28] sm:$0xff]
        %v4758 = vld [vmem:[%s2 + $0x30] sm:$0xff]
        %v4759 = vld [vmem:[%s2 + $0x38] sm:$0xff]
        %4761 = vset.pattern.permute.xlu0 4
        %4762 = vperm.xlu0 %4761, %v4752
        %v4763 = vpop.permute.xlu0 %4762
        %4766 = vset.pattern.permute.xlu0 4
        %4767 = vperm.xlu0 %4766, %v4753
        %v4768 = vpop.permute.xlu0 %4767
        %4771 = vset.pattern.permute.xlu0 4
        %4772 = vperm.xlu0 %4771, %v4754
        %v4773 = vpop.permute.xlu0 %4772
        %4776 = vset.pattern.permute.xlu0 4
        %4777 = vperm.xlu0 %4776, %v4755
        %v4778 = vpop.permute.xlu0 %4777
        %4781 = vset.pattern.permute.xlu0 4
        %4782 = vperm.xlu0 %4781, %v4756
        %v4783 = vpop.permute.xlu0 %4782
        %4786 = vset.pattern.permute.xlu0 4
        %4787 = vperm.xlu0 %4786, %v4757
        %v4788 = vpop.permute.xlu0 %4787
        %4791 = vset.pattern.permute.xlu0 4
        %4792 = vperm.xlu0 %4791, %v4758
        %v4793 = vpop.permute.xlu0 %4792
        %4796 = vset.pattern.permute.xlu0 4
        %4797 = vperm.xlu0 %4796, %v4759
        %v4798 = vpop.permute.xlu0 %4797
        %v4800 = vadd.f32 %v4736, %v4763
        %v4801 = vadd.f32 %v4737, %v4763
        %v4802 = vadd.f32 %v4738, %v4768
        %v4803 = vadd.f32 %v4739, %v4768
        %v4804 = vadd.f32 %v4740, %v4773
        %v4805 = vadd.f32 %v4741, %v4773
        %v4806 = vadd.f32 %v4742, %v4778
        %v4807 = vadd.f32 %v4743, %v4778
        %v4808 = vadd.f32 %v4744, %v4783
        %v4809 = vadd.f32 %v4745, %v4783
        %v4810 = vadd.f32 %v4746, %v4788
        %v4811 = vadd.f32 %v4747, %v4788
        %v4812 = vadd.f32 %v4748, %v4793
        %v4813 = vadd.f32 %v4749, %v4793
        %v4814 = vadd.f32 %v4750, %v4798
        %v4815 = vadd.f32 %v4751, %v4798
        %v4816 = vadd.f32 %v2546, %v4800
        %v4817 = vadd.f32 %v2547, %v4801
        %v4818 = vadd.f32 %v2548, %v4802
        %v4819 = vadd.f32 %v2549, %v4803
        %v4820 = vadd.f32 %v2550, %v4804
        %v4821 = vadd.f32 %v2551, %v4805
        %v4822 = vadd.f32 %v2552, %v4806
        %v4823 = vadd.f32 %v2553, %v4807
        %v4824 = vadd.f32 %v2554, %v4808
        %v4825 = vadd.f32 %v2555, %v4809
        %v4826 = vadd.f32 %v2556, %v4810
        %v4827 = vadd.f32 %v2557, %v4811
        %v4828 = vadd.f32 %v2558, %v4812
        %v4829 = vadd.f32 %v2559, %v4813
        %v4830 = vadd.f32 %v2560, %v4814
        %v4831 = vadd.f32 %v2561, %v4815
        %v4832 = vadd.f32 %v4816, %v4817
        %4833 = vadd.xlane.f32.xlu0 %v4832
        %v4834 = vpop.xlane.xlu0 %4833
        %v4835 = vadd.f32 %v4818, %v4819
        %4836 = vadd.xlane.f32.xlu0 %v4835
        %v4837 = vpop.xlane.xlu0 %4836
        %v4838 = vadd.f32 %v4820, %v4821
        %4839 = vadd.xlane.f32.xlu0 %v4838
        %v4840 = vpop.xlane.xlu0 %4839
        %v4841 = vadd.f32 %v4822, %v4823
        %4842 = vadd.xlane.f32.xlu0 %v4841
        %v4843 = vpop.xlane.xlu0 %4842
        %v4844 = vadd.f32 %v4824, %v4825
        %4845 = vadd.xlane.f32.xlu0 %v4844
        %v4846 = vpop.xlane.xlu0 %4845
        %v4847 = vadd.f32 %v4826, %v4827
        %4848 = vadd.xlane.f32.xlu0 %v4847
        %v4849 = vpop.xlane.xlu0 %4848
        %v4850 = vadd.f32 %v4828, %v4829
        %4851 = vadd.xlane.f32.xlu0 %v4850
        %v4852 = vpop.xlane.xlu0 %4851
        %v4853 = vadd.f32 %v4830, %v4831
        %4854 = vadd.xlane.f32.xlu0 %v4853
        %v4855 = vpop.xlane.xlu0 %4854
        %v4856 = vmul.f32 %v4834, %v315
        %v4857 = vmul.f32 %v4837, %v315
        %v4858 = vmul.f32 %v4840, %v315
        %v4859 = vmul.f32 %v4843, %v315
        %v4860 = vmul.f32 %v4846, %v315
        %v4861 = vmul.f32 %v4849, %v315
        %v4862 = vmul.f32 %v4852, %v315
        %v4863 = vmul.f32 %v4855, %v315
        %v4864 = vmul.f32 %v4816, %v4816
        %v4865 = vmul.f32 %v4817, %v4817
        %v4866 = vmul.f32 %v4818, %v4818
        %v4867 = vmul.f32 %v4819, %v4819
        %v4868 = vmul.f32 %v4820, %v4820
        %v4869 = vmul.f32 %v4821, %v4821
        %v4870 = vmul.f32 %v4822, %v4822
        %v4871 = vmul.f32 %v4823, %v4823
        %v4872 = vmul.f32 %v4824, %v4824
        %v4873 = vmul.f32 %v4825, %v4825
        %v4874 = vmul.f32 %v4826, %v4826
        %v4875 = vmul.f32 %v4827, %v4827
        %v4876 = vmul.f32 %v4828, %v4828
        %v4877 = vmul.f32 %v4829, %v4829
        %v4878 = vmul.f32 %v4830, %v4830
        %v4879 = vmul.f32 %v4831, %v4831
        %v4880 = vadd.f32 %v4864, %v4865
        %4881 = vadd.xlane.f32.xlu0 %v4880
        %v4882 = vpop.xlane.xlu0 %4881
        %v4883 = vadd.f32 %v4866, %v4867
        %4884 = vadd.xlane.f32.xlu0 %v4883
        %v4885 = vpop.xlane.xlu0 %4884
        %v4886 = vadd.f32 %v4868, %v4869
        %4887 = vadd.xlane.f32.xlu0 %v4886
        %v4888 = vpop.xlane.xlu0 %4887
        %v4889 = vadd.f32 %v4870, %v4871
        %4890 = vadd.xlane.f32.xlu0 %v4889
        %v4891 = vpop.xlane.xlu0 %4890
        %v4892 = vadd.f32 %v4872, %v4873
        %4893 = vadd.xlane.f32.xlu0 %v4892
        %v4894 = vpop.xlane.xlu0 %4893
        %v4895 = vadd.f32 %v4874, %v4875
        %4896 = vadd.xlane.f32.xlu0 %v4895
        %v4897 = vpop.xlane.xlu0 %4896
        %v4898 = vadd.f32 %v4876, %v4877
        %4899 = vadd.xlane.f32.xlu0 %v4898
        %v4900 = vpop.xlane.xlu0 %4899
        %v4901 = vadd.f32 %v4878, %v4879
        %4902 = vadd.xlane.f32.xlu0 %v4901
        %v4903 = vpop.xlane.xlu0 %4902
        %v4904 = vmul.f32 %v4882, %v315
        %v4905 = vmul.f32 %v4885, %v315
        %v4906 = vmul.f32 %v4888, %v315
        %v4907 = vmul.f32 %v4891, %v315
        %v4908 = vmul.f32 %v4894, %v315
        %v4909 = vmul.f32 %v4897, %v315
        %v4910 = vmul.f32 %v4900, %v315
        %v4911 = vmul.f32 %v4903, %v315
        %v4912 = vmul.f32 %v4856, %v4856
        %v4913 = vmul.f32 %v4857, %v4857
        %v4914 = vmul.f32 %v4858, %v4858
        %v4915 = vmul.f32 %v4859, %v4859
        %v4916 = vmul.f32 %v4860, %v4860
        %v4917 = vmul.f32 %v4861, %v4861
        %v4918 = vmul.f32 %v4862, %v4862
        %v4919 = vmul.f32 %v4863, %v4863
        %v4920 = vsub.f32 %v4904, %v4912
        %v4921 = vsub.f32 %v4905, %v4913
        %v4922 = vsub.f32 %v4906, %v4914
        %v4923 = vsub.f32 %v4907, %v4915
        %v4924 = vsub.f32 %v4908, %v4916
        %v4925 = vsub.f32 %v4909, %v4917
        %v4926 = vsub.f32 %v4910, %v4918
        %v4927 = vsub.f32 %v4911, %v4919
        %v4928 = vmax.f32 %v4920, 0.0
        %v4929 = vmax.f32 %v4921, 0.0
        %v4930 = vmax.f32 %v4922, 0.0
        %v4931 = vmax.f32 %v4923, 0.0
        %v4932 = vmax.f32 %v4924, 0.0
        %v4933 = vmax.f32 %v4925, 0.0
        %v4934 = vmax.f32 %v4926, 0.0
        %v4935 = vmax.f32 %v4927, 0.0
        %v4936 = vadd.f32 %v4928, 1e-05
        %v4937 = vadd.f32 %v4929, 1e-05
        %v4938 = vadd.f32 %v4930, 1e-05
        %v4939 = vadd.f32 %v4931, 1e-05
        %v4940 = vadd.f32 %v4932, 1e-05
        %v4941 = vadd.f32 %v4933, 1e-05
        %v4942 = vadd.f32 %v4934, 1e-05
        %v4943 = vadd.f32 %v4935, 1e-05
        %v4944 = vrsqrt.pop %v4936
        %v4945 = vrsqrt.pop %v4937
        %v4946 = vrsqrt.pop %v4938
        %v4947 = vrsqrt.pop %v4939
        %v4948 = vrsqrt.pop %v4940
        %v4949 = vrsqrt.pop %v4941
        %v4950 = vrsqrt.pop %v4942
        %v4951 = vrsqrt.pop %v4943
        %v4952 = vmul.f32 %v267, %v4944
        %v4953 = vmul.f32 %v268, %v4945
        %v4954 = vmul.f32 %v269, %v4946
        %v4955 = vmul.f32 %v270, %v4947
        %v4956 = vmul.f32 %v271, %v4948
        %v4957 = vmul.f32 %v272, %v4949
        %v4958 = vmul.f32 %v273, %v4950
        %v4959 = vmul.f32 %v274, %v4951
        %v4960 = vmul.f32 %v4856, %v4952
        %v4961 = vmul.f32 %v4857, %v4953
        %v4962 = vmul.f32 %v4858, %v4954
        %v4963 = vmul.f32 %v4859, %v4955
        %v4964 = vmul.f32 %v4860, %v4956
        %v4965 = vmul.f32 %v4861, %v4957
        %v4966 = vmul.f32 %v4862, %v4958
        %v4967 = vmul.f32 %v4863, %v4959
        %4976 = vrot.lane.b32.xlu0 %v4960, 1
        %v4977 = vpop.permute.xlu0 %4976
        %4978 = vrot.lane.b32.xlu0 %v4961, 1
        %v4979 = vpop.permute.xlu0 %4978
        %4980 = vrot.lane.b32.xlu0 %v4962, 1
        %v4981 = vpop.permute.xlu0 %4980
        %4982 = vrot.lane.b32.xlu0 %v4963, 1
        %v4983 = vpop.permute.xlu0 %4982
        %4984 = vrot.lane.b32.xlu0 %v4964, 1
        %v4985 = vpop.permute.xlu0 %4984
        %4986 = vrot.lane.b32.xlu0 %v4965, 1
        %v4987 = vpop.permute.xlu0 %4986
        %4988 = vrot.lane.b32.xlu0 %v4966, 1
        %v4989 = vpop.permute.xlu0 %4988
        %4990 = vrot.lane.b32.xlu0 %v4967, 1
        %v4991 = vpop.permute.xlu0 %4990
        %v5000 = vsub.f32 %v267, %v4977
        %v5001 = vsub.f32 %v268, %v4979
        %v5002 = vsub.f32 %v269, %v4981
        %v5003 = vsub.f32 %v270, %v4983
        %v5004 = vsub.f32 %v271, %v4985
        %v5005 = vsub.f32 %v272, %v4987
        %v5006 = vsub.f32 %v273, %v4989
        %v5007 = vsub.f32 %v274, %v4991
        %5009 = vset.pattern.permute.xlu0 8
        %5010 = vperm.xlu0 %5009, %v4952
        %v5011 = vpop.permute.xlu0 %5010
        %5014 = vset.pattern.permute.xlu0 8
        %5015 = vperm.xlu0 %5014, %v4953
        %v5016 = vpop.permute.xlu0 %5015
        %5019 = vset.pattern.permute.xlu0 8
        %5020 = vperm.xlu0 %5019, %v4954
        %v5021 = vpop.permute.xlu0 %5020
        %5024 = vset.pattern.permute.xlu0 8
        %5025 = vperm.xlu0 %5024, %v4955
        %v5026 = vpop.permute.xlu0 %5025
        %5029 = vset.pattern.permute.xlu0 8
        %5030 = vperm.xlu0 %5029, %v4956
        %v5031 = vpop.permute.xlu0 %5030
        %5034 = vset.pattern.permute.xlu0 8
        %5035 = vperm.xlu0 %5034, %v4957
        %v5036 = vpop.permute.xlu0 %5035
        %5039 = vset.pattern.permute.xlu0 8
        %5040 = vperm.xlu0 %5039, %v4958
        %v5041 = vpop.permute.xlu0 %5040
        %5044 = vset.pattern.permute.xlu0 8
        %5045 = vperm.xlu0 %5044, %v4959
        %v5046 = vpop.permute.xlu0 %5045
        %v5048 = vmul.f32 %v4816, %v5011
        %v5049 = vmul.f32 %v4817, %v5011
        %v5050 = vmul.f32 %v4818, %v5016
        %v5051 = vmul.f32 %v4819, %v5016
        %v5052 = vmul.f32 %v4820, %v5021
        %v5053 = vmul.f32 %v4821, %v5021
        %v5054 = vmul.f32 %v4822, %v5026
        %v5055 = vmul.f32 %v4823, %v5026
        %v5056 = vmul.f32 %v4824, %v5031
        %v5057 = vmul.f32 %v4825, %v5031
        %v5058 = vmul.f32 %v4826, %v5036
        %v5059 = vmul.f32 %v4827, %v5036
        %v5060 = vmul.f32 %v4828, %v5041
        %v5061 = vmul.f32 %v4829, %v5041
        %v5062 = vmul.f32 %v4830, %v5046
        %v5063 = vmul.f32 %v4831, %v5046
        %5065 = vset.pattern.permute.xlu0 9
        %5066 = vperm.xlu0 %5065, %v5000
        %v5067 = vpop.permute.xlu0 %5066
        %5070 = vset.pattern.permute.xlu0 9
        %5071 = vperm.xlu0 %5070, %v5001
        %v5072 = vpop.permute.xlu0 %5071
        %5075 = vset.pattern.permute.xlu0 9
        %5076 = vperm.xlu0 %5075, %v5002
        %v5077 = vpop.permute.xlu0 %5076
        %5080 = vset.pattern.permute.xlu0 9
        %5081 = vperm.xlu0 %5080, %v5003
        %v5082 = vpop.permute.xlu0 %5081
        %5085 = vset.pattern.permute.xlu0 9
        %5086 = vperm.xlu0 %5085, %v5004
        %v5087 = vpop.permute.xlu0 %5086
        %5090 = vset.pattern.permute.xlu0 9
        %5091 = vperm.xlu0 %5090, %v5005
        %v5092 = vpop.permute.xlu0 %5091
        %5095 = vset.pattern.permute.xlu0 9
        %5096 = vperm.xlu0 %5095, %v5006
        %v5097 = vpop.permute.xlu0 %5096
        %5100 = vset.pattern.permute.xlu0 9
        %5101 = vperm.xlu0 %5100, %v5007
        %v5102 = vpop.permute.xlu0 %5101
        %v5104 = vadd.f32 %v5048, %v5067
        %v5105 = vadd.f32 %v5049, %v5067
        %v5106 = vadd.f32 %v5050, %v5072
        %v5107 = vadd.f32 %v5051, %v5072
        %v5108 = vadd.f32 %v5052, %v5077
        %v5109 = vadd.f32 %v5053, %v5077
        %v5110 = vadd.f32 %v5054, %v5082
        %v5111 = vadd.f32 %v5055, %v5082
        %v5112 = vadd.f32 %v5056, %v5087
        %v5113 = vadd.f32 %v5057, %v5087
        %v5114 = vadd.f32 %v5058, %v5092
        %v5115 = vadd.f32 %v5059, %v5092
        %v5116 = vadd.f32 %v5060, %v5097
        %v5117 = vadd.f32 %v5061, %v5097
        %v5118 = vadd.f32 %v5062, %v5102
        %v5119 = vadd.f32 %v5063, %v5102
        %vm5120 = vcmp.ge.f32.partialorder %v5104, 0.0
        %vm5121 = vcmp.ge.f32.partialorder %v5105, 0.0
        %vm5122 = vcmp.ge.f32.partialorder %v5106, 0.0
        %vm5123 = vcmp.ge.f32.partialorder %v5107, 0.0
        %vm5124 = vcmp.ge.f32.partialorder %v5108, 0.0
        %vm5125 = vcmp.ge.f32.partialorder %v5109, 0.0
        %vm5126 = vcmp.ge.f32.partialorder %v5110, 0.0
        %vm5127 = vcmp.ge.f32.partialorder %v5111, 0.0
        %vm5128 = vcmp.ge.f32.partialorder %v5112, 0.0
        %vm5129 = vcmp.ge.f32.partialorder %v5113, 0.0
        %vm5130 = vcmp.ge.f32.partialorder %v5114, 0.0
        %vm5131 = vcmp.ge.f32.partialorder %v5115, 0.0
        %vm5132 = vcmp.ge.f32.partialorder %v5116, 0.0
        %vm5133 = vcmp.ge.f32.partialorder %v5117, 0.0
        %vm5134 = vcmp.ge.f32.partialorder %v5118, 0.0
        %vm5135 = vcmp.ge.f32.partialorder %v5119, 0.0
        %v5136 = vmul.f32 %v5104, 0.01
        %v5137 = vmul.f32 %v5105, 0.01
        %v5138 = vmul.f32 %v5106, 0.01
        %v5139 = vmul.f32 %v5107, 0.01
        %v5140 = vmul.f32 %v5108, 0.01
        %v5141 = vmul.f32 %v5109, 0.01
        %v5142 = vmul.f32 %v5110, 0.01
        %v5143 = vmul.f32 %v5111, 0.01
        %v5144 = vmul.f32 %v5112, 0.01
        %v5145 = vmul.f32 %v5113, 0.01
        %v5146 = vmul.f32 %v5114, 0.01
        %v5147 = vmul.f32 %v5115, 0.01
        %v5148 = vmul.f32 %v5116, 0.01
        %v5149 = vmul.f32 %v5117, 0.01
        %v5150 = vmul.f32 %v5118, 0.01
        %v5151 = vmul.f32 %v5119, 0.01
        %v5152 = vsel %vm5120, %v5104, %v5136
        %v5153 = vsel %vm5121, %v5105, %v5137
        %v5154 = vsel %vm5122, %v5106, %v5138
        %v5155 = vsel %vm5123, %v5107, %v5139
        %v5156 = vsel %vm5124, %v5108, %v5140
        %v5157 = vsel %vm5125, %v5109, %v5141
        %v5158 = vsel %vm5126, %v5110, %v5142
        %v5159 = vsel %vm5127, %v5111, %v5143
        %v5160 = vsel %vm5128, %v5112, %v5144
        %v5161 = vsel %vm5129, %v5113, %v5145
        %v5162 = vsel %vm5130, %v5114, %v5146
        %v5163 = vsel %vm5131, %v5115, %v5147
        %v5164 = vsel %vm5132, %v5116, %v5148
        %v5165 = vsel %vm5133, %v5117, %v5149
        %v5166 = vsel %vm5134, %v5118, %v5150
        %v5167 = vsel %vm5135, %v5119, %v5151
        %5168 = vst [vmem:[#allocation2 + $0x8] sm:$0xff] %v5152
        %5169 = vst [vmem:[#allocation2 + $0x10] sm:$0xff] %v5153
        %5170 = vst [vmem:[#allocation2 + $0x28] sm:$0xff] %v5154
        %5171 = vst [vmem:[#allocation2 + $0x30] sm:$0xff] %v5155
        %5172 = vst [vmem:[#allocation2 + $0x48] sm:$0xff] %v5156
        %5173 = vst [vmem:[#allocation2 + $0x50] sm:$0xff] %v5157
        %5174 = vst [vmem:[#allocation2 + $0x68] sm:$0xff] %v5158
        %5175 = vst [vmem:[#allocation2 + $0x70] sm:$0xff] %v5159
        %5176 = vst [vmem:[#allocation2 + $0x88] sm:$0xff] %v5160
        %5177 = vst [vmem:[#allocation2 + $0x90] sm:$0xff] %v5161
        %5178 = vst [vmem:[#allocation2 + $0xa8] sm:$0xff] %v5162
        %5179 = vst [vmem:[#allocation2 + $0xb0] sm:$0xff] %v5163
        %5180 = vst [vmem:[#allocation2 + $0xc8] sm:$0xff] %v5164
        %5181 = vst [vmem:[#allocation2 + $0xd0] sm:$0xff] %v5165
        %5182 = vst [vmem:[#allocation2 + $0xe8] sm:$0xff] %v5166
        %5183 = vst [vmem:[#allocation2 + $0xf0] sm:$0xff] %v5167
        %s5184 = scalar_lea.vmem [#allocation6], 384
        %v5185 = vld [vmem:[%s5184] sm:$0xff]
        %v5186 = vld [vmem:[%s5184 + $0x8] sm:$0xff]
        %v5187 = vld [vmem:[%s5184 + $0x10] sm:$0xff]
        %v5188 = vld [vmem:[%s5184 + $0x18] sm:$0xff]
        %v5189 = vld [vmem:[%s5184 + $0x20] sm:$0xff]
        %v5190 = vld [vmem:[%s5184 + $0x28] sm:$0xff]
        %v5191 = vld [vmem:[%s5184 + $0x30] sm:$0xff]
        %v5192 = vld [vmem:[%s5184 + $0x38] sm:$0xff]
        %v5193 = vld [vmem:[#allocation2] sm:$0xff]
        %v5194 = vld [vmem:[#allocation2 + $0x8] sm:$0xff]
        %v5195 = vld [vmem:[#allocation2 + $0x10] sm:$0xff]
        %v5196 = vld [vmem:[#allocation2 + $0x20] sm:$0xff]
        %v5197 = vld [vmem:[#allocation2 + $0x28] sm:$0xff]
        %v5198 = vld [vmem:[#allocation2 + $0x30] sm:$0xff]
        %v5199 = vld [vmem:[#allocation2 + $0x40] sm:$0xff]
        %v5200 = vld [vmem:[#allocation2 + $0x48] sm:$0xff]
        %v5201 = vld [vmem:[#allocation2 + $0x50] sm:$0xff]
        %v5202 = vld [vmem:[#allocation2 + $0x60] sm:$0xff]
        %v5203 = vld [vmem:[#allocation2 + $0x68] sm:$0xff]
        %v5204 = vld [vmem:[#allocation2 + $0x70] sm:$0xff]
        %v5205 = vld [vmem:[#allocation2 + $0x80] sm:$0xff]
        %v5206 = vld [vmem:[#allocation2 + $0x88] sm:$0xff]
        %v5207 = vld [vmem:[#allocation2 + $0x90] sm:$0xff]
        %v5208 = vld [vmem:[#allocation2 + $0xa0] sm:$0xff]
        %v5209 = vld [vmem:[#allocation2 + $0xa8] sm:$0xff]
        %v5210 = vld [vmem:[#allocation2 + $0xb0] sm:$0xff]
        %v5211 = vld [vmem:[#allocation2 + $0xc0] sm:$0xff]
        %v5212 = vld [vmem:[#allocation2 + $0xc8] sm:$0xff]
        %v5213 = vld [vmem:[#allocation2 + $0xd0] sm:$0xff]
        %v5214 = vld [vmem:[#allocation2 + $0xe0] sm:$0xff]
        %v5215 = vld [vmem:[#allocation2 + $0xe8] sm:$0xff]
        %v5216 = vld [vmem:[#allocation2 + $0xf0] sm:$0xff]
        %s5217 = scalar_lea.vmem [#allocation6], 448
        %v5218 = vld [vmem:[%s5217] sm:$0xff]
        %v5219 = vld [vmem:[%s5217 + $0x8] sm:$0xff]
        %v5220 = vld [vmem:[%s5217 + $0x10] sm:$0xff]
        %v5221 = vld [vmem:[%s5217 + $0x18] sm:$0xff]
        %v5222 = vld [vmem:[%s5217 + $0x20] sm:$0xff]
        %v5223 = vld [vmem:[%s5217 + $0x28] sm:$0xff]
        %v5224 = vld [vmem:[%s5217 + $0x30] sm:$0xff]
        %v5225 = vld [vmem:[%s5217 + $0x38] sm:$0xff]
        %v5227 = vsel %vm685, %v5218, 0
        %v5230 = vsel %vm685, %v5219, 0
        %v5233 = vsel %vm685, %v5220, 0
        %v5236 = vsel %vm685, %v5221, 0
        %v5239 = vsel %vm685, %v5222, 0
        %v5242 = vsel %vm685, %v5223, 0
        %v5245 = vsel %vm685, %v5224, 0
        %v5248 = vsel %vm685, %v5225, 0
        %5250 = vmatprep.subr.mxu0 %v5195
        %5251 = vmatpush1.msra.mxu0 %v5194
        %5252 = vmatprep.subr.mxu0 %v5198
        %5253 = vmatpush1.msra.mxu0 %v5197
        %5254 = vmatprep.subr.mxu0 %v5201
        %5255 = vmatpush1.msra.mxu0 %v5200
        %5256 = vmatprep.subr.mxu0 %v5204
        %5257 = vmatpush1.msra.mxu0 %v5203
        %5258 = vmatprep.subr.mxu0 %v5207
        %5259 = vmatpush1.msra.mxu0 %v5206
        %5260 = vmatprep.subr.mxu0 %v5210
        %5261 = vmatpush1.msra.mxu0 %v5209
        %5262 = vmatprep.subr.mxu0 %v5213
        %5263 = vmatpush1.msra.mxu0 %v5212
        %5264 = vmatprep.subr.mxu0 %v5216
        %5265 = vmatpush1.msra.mxu0 %v5215
        %5266 = vmatprep.subr.mxu0 0.0
        %5267 = vmatpush1.msra.mxu0 0.0
        %5268 = vmatprep.subr.mxu0 0.0
        %5269 = vmatpush1.msra.mxu0 0.0
        %5270 = vmatprep.subr.mxu0 0.0
        %5271 = vmatpush1.msra.mxu0 0.0
        %5272 = vmatprep.subr.mxu0 0.0
        %5273 = vmatpush1.msra.mxu0 0.0
        %5274 = vmatprep.subr.mxu0 0.0
        %5275 = vmatpush1.msra.mxu0 0.0
        %5276 = vmatprep.subr.mxu0 0.0
        %5277 = vmatpush1.msra.mxu0 0.0
        %5278 = vmatprep.subr.mxu0 0.0
        %5279 = vmatpush1.msra.mxu0 0.0
        %5280 = vmatprep.subr.mxu0 0.0
        %5281 = vmatpush1.msra.mxu0 0.0
        %5282 = vmatprep.subr.mxu0 0.0
        %5283 = vmatpush1.msra.mxu0 0.0
        %5284 = vmatprep.subr.mxu0 0.0
        %5285 = vmatpush1.msra.mxu0 0.0
        %5286 = vmatprep.subr.mxu0 0.0
        %5287 = vmatpush1.msra.mxu0 0.0
        %5288 = vmatprep.subr.mxu0 0.0
        %5289 = vmatpush1.msra.mxu0 0.0
        %5290 = vmatprep.subr.mxu0 0.0
        %5291 = vmatpush1.msra.mxu0 0.0
        %5292 = vmatprep.subr.mxu0 0.0
        %5293 = vmatpush1.msra.mxu0 0.0
        %5294 = vmatprep.subr.mxu0 0.0
        %5295 = vmatpush1.msra.mxu0 0.0
        %5296 = vmatprep.subr.mxu0 0.0
        %5297 = vmatpush1.msra.mxu0 0.0
        %5298 = vmatprep.subr.mxu0 0.0
        %5299 = vmatpush1.msra.mxu0 0.0
        %5300 = vmatprep.subr.mxu0 0.0
        %5301 = vmatpush1.msra.mxu0 0.0
        %5302 = vmatprep.subr.mxu0 0.0
        %5303 = vmatpush1.msra.mxu0 0.0
        %5304 = vmatprep.subr.mxu0 0.0
        %5305 = vmatpush1.msra.mxu0 0.0
        %5306 = vmatprep.subr.mxu0 0.0
        %5307 = vmatpush1.msra.mxu0 0.0
        %5308 = vmatprep.subr.mxu0 0.0
        %5309 = vmatpush1.msra.mxu0 0.0
        %5310 = vmatprep.subr.mxu0 0.0
        %5311 = vmatpush1.msra.mxu0 0.0
        %5312 = vmatprep.subr.mxu0 0.0
        %5313 = vmatpush1.msra.mxu0 0.0
        %5314 = vmatprep.mubr.f32.mxu0 0.0
        %5315 = vmatmul.mubr.f32.gmra.mrb[0].mxu0 %v5227
        %v5316 = vpop.f32.mrb[0].mxu0
        %v5317 = vadd.f32 0.0, %v5316
        %v5318 = vpop.f32.mrb[0].mxu0
        %v5319 = vadd.f32 0.0, %v5318
        %5320 = vmatprep.mubr.f32.mxu0 0.0
        %5321 = vmatmul.mubr.f32.gmra.mrb[0].mxu0 %v5230
        %v5322 = vpop.f32.mrb[0].mxu0
        %v5323 = vadd.f32 0.0, %v5322
        %v5324 = vpop.f32.mrb[0].mxu0
        %v5325 = vadd.f32 0.0, %v5324
        %5326 = vmatprep.mubr.f32.mxu0 0.0
        %5327 = vmatmul.mubr.f32.gmra.mrb[0].mxu0 %v5233
        %v5328 = vpop.f32.mrb[0].mxu0
        %v5329 = vadd.f32 0.0, %v5328
        %v5330 = vpop.f32.mrb[0].mxu0
        %v5331 = vadd.f32 0.0, %v5330
        %5332 = vmatprep.mubr.f32.mxu0 0.0
        %5333 = vmatmul.mubr.f32.gmra.mrb[0].mxu0 %v5236
        %v5334 = vpop.f32.mrb[0].mxu0
        %v5335 = vadd.f32 0.0, %v5334
        %v5336 = vpop.f32.mrb[0].mxu0
        %v5337 = vadd.f32 0.0, %v5336
        %5338 = vmatprep.mubr.f32.mxu0 0.0
        %5339 = vmatmul.mubr.f32.gmra.mrb[0].mxu0 %v5239
        %v5340 = vpop.f32.mrb[0].mxu0
        %v5341 = vadd.f32 0.0, %v5340
        %v5342 = vpop.f32.mrb[0].mxu0
        %v5343 = vadd.f32 0.0, %v5342
        %5344 = vmatprep.mubr.f32.mxu0 0.0
        %5345 = vmatmul.mubr.f32.gmra.mrb[0].mxu0 %v5242
        %v5346 = vpop.f32.mrb[0].mxu0
        %v5347 = vadd.f32 0.0, %v5346
        %v5348 = vpop.f32.mrb[0].mxu0
        %v5349 = vadd.f32 0.0, %v5348
        %5350 = vmatprep.mubr.f32.mxu0 0.0
        %5351 = vmatmul.mubr.f32.gmra.mrb[0].mxu0 %v5245
        %v5352 = vpop.f32.mrb[0].mxu0
        %v5353 = vadd.f32 0.0, %v5352
        %v5354 = vpop.f32.mrb[0].mxu0
        %v5355 = vadd.f32 0.0, %v5354
        %5356 = vmatprep.mubr.f32.mxu0 0.0
        %5357 = vmatmul.mubr.f32.gmra.mrb[0].mxu0 %v5248
        %v5358 = vpop.f32.mrb[0].mxu0
        %v5359 = vadd.f32 0.0, %v5358
        %v5360 = vpop.f32.mrb[0].mxu0
        %v5361 = vadd.f32 0.0, %v5360
        %5362 = vdwg.mxu0
        %5387 = vrot.lane.b32.xlu0 %v5193, 5
        %v5388 = vpop.permute.xlu0 %5387
        %5389 = vrot.lane.b32.xlu0 %v5194, 5
        %v5390 = vpop.permute.xlu0 %5389
        %5391 = vrot.lane.b32.xlu0 %v5195, 5
        %v5392 = vpop.permute.xlu0 %5391
        %5393 = vrot.lane.b32.xlu0 %v5196, 5
        %v5394 = vpop.permute.xlu0 %5393
        %5395 = vrot.lane.b32.xlu0 %v5197, 5
        %v5396 = vpop.permute.xlu0 %5395
        %5397 = vrot.lane.b32.xlu0 %v5198, 5
        %v5398 = vpop.permute.xlu0 %5397
        %5399 = vrot.lane.b32.xlu0 %v5199, 5
        %v5400 = vpop.permute.xlu0 %5399
        %5401 = vrot.lane.b32.xlu0 %v5200, 5
        %v5402 = vpop.permute.xlu0 %5401
        %5403 = vrot.lane.b32.xlu0 %v5201, 5
        %v5404 = vpop.permute.xlu0 %5403
        %5405 = vrot.lane.b32.xlu0 %v5202, 5
        %v5406 = vpop.permute.xlu0 %5405
        %5407 = vrot.lane.b32.xlu0 %v5203, 5
        %v5408 = vpop.permute.xlu0 %5407
        %5409 = vrot.lane.b32.xlu0 %v5204, 5
        %v5410 = vpop.permute.xlu0 %5409
        %5411 = vrot.lane.b32.xlu0 %v5205, 5
        %v5412 = vpop.permute.xlu0 %5411
        %5413 = vrot.lane.b32.xlu0 %v5206, 5
        %v5414 = vpop.permute.xlu0 %5413
        %5415 = vrot.lane.b32.xlu0 %v5207, 5
        %v5416 = vpop.permute.xlu0 %5415
        %5417 = vrot.lane.b32.xlu0 %v5208, 5
        %v5418 = vpop.permute.xlu0 %5417
        %5419 = vrot.lane.b32.xlu0 %v5209, 5
        %v5420 = vpop.permute.xlu0 %5419
        %5421 = vrot.lane.b32.xlu0 %v5210, 5
        %v5422 = vpop.permute.xlu0 %5421
        %5423 = vrot.lane.b32.xlu0 %v5211, 5
        %v5424 = vpop.permute.xlu0 %5423
        %5425 = vrot.lane.b32.xlu0 %v5212, 5
        %v5426 = vpop.permute.xlu0 %5425
        %5427 = vrot.lane.b32.xlu0 %v5213, 5
        %v5428 = vpop.permute.xlu0 %5427
        %5429 = vrot.lane.b32.xlu0 %v5214, 5
        %v5430 = vpop.permute.xlu0 %5429
        %5431 = vrot.lane.b32.xlu0 %v5215, 5
        %v5432 = vpop.permute.xlu0 %5431
        %5433 = vrot.lane.b32.xlu0 %v5216, 5
        %v5434 = vpop.permute.xlu0 %5433
        %vm5435 = vcmask 39936
        %v5436 = vsel %vm5435, %v5388, %v5390
        %v5437 = vsel %vm5435, %v5390, %v5392
        %v5438 = vsel %vm5435, %v5394, %v5396
        %v5439 = vsel %vm5435, %v5396, %v5398
        %v5440 = vsel %vm5435, %v5400, %v5402
        %v5441 = vsel %vm5435, %v5402, %v5404
        %v5442 = vsel %vm5435, %v5406, %v5408
        %v5443 = vsel %vm5435, %v5408, %v5410
        %v5444 = vsel %vm5435, %v5412, %v5414
        %v5445 = vsel %vm5435, %v5414, %v5416
        %v5446 = vsel %vm5435, %v5418, %v5420
        %v5447 = vsel %vm5435, %v5420, %v5422
        %v5448 = vsel %vm5435, %v5424, %v5426
        %v5449 = vsel %vm5435, %v5426, %v5428
        %v5450 = vsel %vm5435, %v5430, %v5432
        %v5451 = vsel %vm5435, %v5432, %v5434
        %v5469 = vsel %vm685, %v5185, 0
        %v5472 = vsel %vm685, %v5186, 0
        %v5475 = vsel %vm685, %v5187, 0
        %v5478 = vsel %vm685, %v5188, 0
        %v5481 = vsel %vm685, %v5189, 0
        %v5484 = vsel %vm685, %v5190, 0
        %v5487 = vsel %vm685, %v5191, 0
        %v5490 = vsel %vm685, %v5192, 0
        %5492 = vmatprep.subr.mxu0 %v5437
        %5493 = vmatpush1.msra.mxu0 %v5436
        %5494 = vmatprep.subr.mxu0 %v5439
        %5495 = vmatpush1.msra.mxu0 %v5438
        %5496 = vmatprep.subr.mxu0 %v5441
        %5497 = vmatpush1.msra.mxu0 %v5440
        %5498 = vmatprep.subr.mxu0 %v5443
        %5499 = vmatpush1.msra.mxu0 %v5442
        %5500 = vmatprep.subr.mxu0 %v5445
        %5501 = vmatpush1.msra.mxu0 %v5444
        %5502 = vmatprep.subr.mxu0 %v5447
        %5503 = vmatpush1.msra.mxu0 %v5446
        %5504 = vmatprep.subr.mxu0 %v5449
        %5505 = vmatpush1.msra.mxu0 %v5448
        %5506 = vmatprep.subr.mxu0 %v5451
        %5507 = vmatpush1.msra.mxu0 %v5450
        %5508 = vmatprep.subr.mxu0 0.0
        %5509 = vmatpush1.msra.mxu0 0.0
        %5510 = vmatprep.subr.mxu0 0.0
        %5511 = vmatpush1.msra.mxu0 0.0
        %5512 = vmatprep.subr.mxu0 0.0
        %5513 = vmatpush1.msra.mxu0 0.0
        %5514 = vmatprep.subr.mxu0 0.0
        %5515 = vmatpush1.msra.mxu0 0.0
        %5516 = vmatprep.subr.mxu0 0.0
        %5517 = vmatpush1.msra.mxu0 0.0
        %5518 = vmatprep.subr.mxu0 0.0
        %5519 = vmatpush1.msra.mxu0 0.0
        %5520 = vmatprep.subr.mxu0 0.0
        %5521 = vmatpush1.msra.mxu0 0.0
        %5522 = vmatprep.subr.mxu0 0.0
        %5523 = vmatpush1.msra.mxu0 0.0
        %5524 = vmatprep.subr.mxu0 0.0
        %5525 = vmatpush1.msra.mxu0 0.0
        %5526 = vmatprep.subr.mxu0 0.0
        %5527 = vmatpush1.msra.mxu0 0.0
        %5528 = vmatprep.subr.mxu0 0.0
        %5529 = vmatpush1.msra.mxu0 0.0
        %5530 = vmatprep.subr.mxu0 0.0
        %5531 = vmatpush1.msra.mxu0 0.0
        %5532 = vmatprep.subr.mxu0 0.0
        %5533 = vmatpush1.msra.mxu0 0.0
        %5534 = vmatprep.subr.mxu0 0.0
        %5535 = vmatpush1.msra.mxu0 0.0
        %5536 = vmatprep.subr.mxu0 0.0
        %5537 = vmatpush1.msra.mxu0 0.0
        %5538 = vmatprep.subr.mxu0 0.0
        %5539 = vmatpush1.msra.mxu0 0.0
        %5540 = vmatprep.subr.mxu0 0.0
        %5541 = vmatpush1.msra.mxu0 0.0
        %5542 = vmatprep.subr.mxu0 0.0
        %5543 = vmatpush1.msra.mxu0 0.0
        %5544 = vmatprep.subr.mxu0 0.0
        %5545 = vmatpush1.msra.mxu0 0.0
        %5546 = vmatprep.subr.mxu0 0.0
        %5547 = vmatpush1.msra.mxu0 0.0
        %5548 = vmatprep.subr.mxu0 0.0
        %5549 = vmatpush1.msra.mxu0 0.0
        %5550 = vmatprep.subr.mxu0 0.0
        %5551 = vmatpush1.msra.mxu0 0.0
        %5552 = vmatprep.subr.mxu0 0.0
        %5553 = vmatpush1.msra.mxu0 0.0
        %5554 = vmatprep.subr.mxu0 0.0
        %5555 = vmatpush1.msra.mxu0 0.0
        %5556 = vmatprep.mubr.f32.mxu0 0.0
        %5557 = vmatmul.mubr.f32.gmra.mrb[0].mxu0 %v5469
        %v5558 = vpop.f32.mrb[0].mxu0
        %v5559 = vadd.f32 %v5317, %v5558
        %v5560 = vpop.f32.mrb[0].mxu0
        %v5561 = vadd.f32 %v5319, %v5560
        %5562 = vmatprep.mubr.f32.mxu0 0.0
        %5563 = vmatmul.mubr.f32.gmra.mrb[0].mxu0 %v5472
        %v5564 = vpop.f32.mrb[0].mxu0
        %v5565 = vadd.f32 %v5323, %v5564
        %v5566 = vpop.f32.mrb[0].mxu0
        %v5567 = vadd.f32 %v5325, %v5566
        %5568 = vmatprep.mubr.f32.mxu0 0.0
        %5569 = vmatmul.mubr.f32.gmra.mrb[0].mxu0 %v5475
        %v5570 = vpop.f32.mrb[0].mxu0
        %v5571 = vadd.f32 %v5329, %v5570
        %v5572 = vpop.f32.mrb[0].mxu0
        %v5573 = vadd.f32 %v5331, %v5572
        %5574 = vmatprep.mubr.f32.mxu0 0.0
        %5575 = vmatmul.mubr.f32.gmra.mrb[0].mxu0 %v5478
        %v5576 = vpop.f32.mrb[0].mxu0
        %v5577 = vadd.f32 %v5335, %v5576
        %v5578 = vpop.f32.mrb[0].mxu0
        %v5579 = vadd.f32 %v5337, %v5578
        %5580 = vmatprep.mubr.f32.mxu0 0.0
        %5581 = vmatmul.mubr.f32.gmra.mrb[0].mxu0 %v5481
        %v5582 = vpop.f32.mrb[0].mxu0
        %v5583 = vadd.f32 %v5341, %v5582
        %v5584 = vpop.f32.mrb[0].mxu0
        %v5585 = vadd.f32 %v5343, %v5584
        %5586 = vmatprep.mubr.f32.mxu0 0.0
        %5587 = vmatmul.mubr.f32.gmra.mrb[0].mxu0 %v5484
        %v5588 = vpop.f32.mrb[0].mxu0
        %v5589 = vadd.f32 %v5347, %v5588
        %v5590 = vpop.f32.mrb[0].mxu0
        %v5591 = vadd.f32 %v5349, %v5590
        %5592 = vmatprep.mubr.f32.mxu0 0.0
        %5593 = vmatmul.mubr.f32.gmra.mrb[0].mxu0 %v5487
        %v5594 = vpop.f32.mrb[0].mxu0
        %v5595 = vadd.f32 %v5353, %v5594
        %v5596 = vpop.f32.mrb[0].mxu0
        %v5597 = vadd.f32 %v5355, %v5596
        %5598 = vmatprep.mubr.f32.mxu0 0.0
        %5599 = vmatmul.mubr.f32.gmra.mrb[0].mxu0 %v5490
        %v5600 = vpop.f32.mrb[0].mxu0
        %v5601 = vadd.f32 %v5359, %v5600
        %v5602 = vpop.f32.mrb[0].mxu0
        %v5603 = vadd.f32 %v5361, %v5602
        %5604 = vdwg.mxu0
        %s5605 = scalar_lea.vmem [#allocation6], 512
        %v5606 = vld [vmem:[%s5605] sm:$0xff]
        %v5607 = vld [vmem:[%s5605 + $0x8] sm:$0xff]
        %v5608 = vld [vmem:[%s5605 + $0x10] sm:$0xff]
        %v5609 = vld [vmem:[%s5605 + $0x18] sm:$0xff]
        %v5610 = vld [vmem:[%s5605 + $0x20] sm:$0xff]
        %v5611 = vld [vmem:[%s5605 + $0x28] sm:$0xff]
        %v5612 = vld [vmem:[%s5605 + $0x30] sm:$0xff]
        %v5613 = vld [vmem:[%s5605 + $0x38] sm:$0xff]
        %v5614 = vld [vmem:[#allocation2 + $0x8] sm:$0xff]
        %v5615 = vld [vmem:[#allocation2 + $0x10] sm:$0xff]
        %v5616 = vld [vmem:[#allocation2 + $0x18] sm:$0xff]
        %v5617 = vld [vmem:[#allocation2 + $0x28] sm:$0xff]
        %v5618 = vld [vmem:[#allocation2 + $0x30] sm:$0xff]
        %v5619 = vld [vmem:[#allocation2 + $0x38] sm:$0xff]
        %v5620 = vld [vmem:[#allocation2 + $0x48] sm:$0xff]
        %v5621 = vld [vmem:[#allocation2 + $0x50] sm:$0xff]
        %v5622 = vld [vmem:[#allocation2 + $0x58] sm:$0xff]
        %v5623 = vld [vmem:[#allocation2 + $0x68] sm:$0xff]
        %v5624 = vld [vmem:[#allocation2 + $0x70] sm:$0xff]
        %v5625 = vld [vmem:[#allocation2 + $0x78] sm:$0xff]
        %v5626 = vld [vmem:[#allocation2 + $0x88] sm:$0xff]
        %v5627 = vld [vmem:[#allocation2 + $0x90] sm:$0xff]
        %v5628 = vld [vmem:[#allocation2 + $0x98] sm:$0xff]
        %v5629 = vld [vmem:[#allocation2 + $0xa8] sm:$0xff]
        %v5630 = vld [vmem:[#allocation2 + $0xb0] sm:$0xff]
        %v5631 = vld [vmem:[#allocation2 + $0xb8] sm:$0xff]
        %v5632 = vld [vmem:[#allocation2 + $0xc8] sm:$0xff]
        %v5633 = vld [vmem:[#allocation2 + $0xd0] sm:$0xff]
        %v5634 = vld [vmem:[#allocation2 + $0xd8] sm:$0xff]
        %v5635 = vld [vmem:[#allocation2 + $0xe8] sm:$0xff]
        %v5636 = vld [vmem:[#allocation2 + $0xf0] sm:$0xff]
        %v5637 = vld [vmem:[#allocation2 + $0xf8] sm:$0xff]
        %5662 = vrot.lane.b32.xlu0 %v5614, 123
        %v5663 = vpop.permute.xlu0 %5662
        %5664 = vrot.lane.b32.xlu0 %v5615, 123
        %v5665 = vpop.permute.xlu0 %5664
        %5666 = vrot.lane.b32.xlu0 %v5616, 123
        %v5667 = vpop.permute.xlu0 %5666
        %5668 = vrot.lane.b32.xlu0 %v5617, 123
        %v5669 = vpop.permute.xlu0 %5668
        %5670 = vrot.lane.b32.xlu0 %v5618, 123
        %v5671 = vpop.permute.xlu0 %5670
        %5672 = vrot.lane.b32.xlu0 %v5619, 123
        %v5673 = vpop.permute.xlu0 %5672
        %5674 = vrot.lane.b32.xlu0 %v5620, 123
        %v5675 = vpop.permute.xlu0 %5674
        %5676 = vrot.lane.b32.xlu0 %v5621, 123
        %v5677 = vpop.permute.xlu0 %5676
        %5678 = vrot.lane.b32.xlu0 %v5622, 123
        %v5679 = vpop.permute.xlu0 %5678
        %5680 = vrot.lane.b32.xlu0 %v5623, 123
        %v5681 = vpop.permute.xlu0 %5680
        %5682 = vrot.lane.b32.xlu0 %v5624, 123
        %v5683 = vpop.permute.xlu0 %5682
        %5684 = vrot.lane.b32.xlu0 %v5625, 123
        %v5685 = vpop.permute.xlu0 %5684
        %5686 = vrot.lane.b32.xlu0 %v5626, 123
        %v5687 = vpop.permute.xlu0 %5686
        %5688 = vrot.lane.b32.xlu0 %v5627, 123
        %v5689 = vpop.permute.xlu0 %5688
        %5690 = vrot.lane.b32.xlu0 %v5628, 123
        %v5691 = vpop.permute.xlu0 %5690
        %5692 = vrot.lane.b32.xlu0 %v5629, 123
        %v5693 = vpop.permute.xlu0 %5692
        %5694 = vrot.lane.b32.xlu0 %v5630, 123
        %v5695 = vpop.permute.xlu0 %5694
        %5696 = vrot.lane.b32.xlu0 %v5631, 123
        %v5697 = vpop.permute.xlu0 %5696
        %5698 = vrot.lane.b32.xlu0 %v5632, 123
        %v5699 = vpop.permute.xlu0 %5698
        %5700 = vrot.lane.b32.xlu0 %v5633, 123
        %v5701 = vpop.permute.xlu0 %5700
        %5702 = vrot.lane.b32.xlu0 %v5634, 123
        %v5703 = vpop.permute.xlu0 %5702
        %5704 = vrot.lane.b32.xlu0 %v5635, 123
        %v5705 = vpop.permute.xlu0 %5704
        %5706 = vrot.lane.b32.xlu0 %v5636, 123
        %v5707 = vpop.permute.xlu0 %5706
        %5708 = vrot.lane.b32.xlu0 %v5637, 123
        %v5709 = vpop.permute.xlu0 %5708
        %vm5710 = vcmask 1006592
        %v5711 = vsel %vm5710, %v5663, %v5665
        %v5712 = vsel %vm5710, %v5665, %v5667
        %v5713 = vsel %vm5710, %v5669, %v5671
        %v5714 = vsel %vm5710, %v5671, %v5673
        %v5715 = vsel %vm5710, %v5675, %v5677
        %v5716 = vsel %vm5710, %v5677, %v5679
        %v5717 = vsel %vm5710, %v5681, %v5683
        %v5718 = vsel %vm5710, %v5683, %v5685
        %v5719 = vsel %vm5710, %v5687, %v5689
        %v5720 = vsel %vm5710, %v5689, %v5691
        %v5721 = vsel %vm5710, %v5693, %v5695
        %v5722 = vsel %vm5710, %v5695, %v5697
        %v5723 = vsel %vm5710, %v5699, %v5701
        %v5724 = vsel %vm5710, %v5701, %v5703
        %v5725 = vsel %vm5710, %v5705, %v5707
        %v5726 = vsel %vm5710, %v5707, %v5709
        %v5744 = vsel %vm685, %v5606, 0
        %v5747 = vsel %vm685, %v5607, 0
        %v5750 = vsel %vm685, %v5608, 0
        %v5753 = vsel %vm685, %v5609, 0
        %v5756 = vsel %vm685, %v5610, 0
        %v5759 = vsel %vm685, %v5611, 0
        %v5762 = vsel %vm685, %v5612, 0
        %v5765 = vsel %vm685, %v5613, 0
        %5767 = vmatprep.subr.mxu0 %v5712
        %5768 = vmatpush1.msra.mxu0 %v5711
        %5769 = vmatprep.subr.mxu0 %v5714
        %5770 = vmatpush1.msra.mxu0 %v5713
        %5771 = vmatprep.subr.mxu0 %v5716
        %5772 = vmatpush1.msra.mxu0 %v5715
        %5773 = vmatprep.subr.mxu0 %v5718
        %5774 = vmatpush1.msra.mxu0 %v5717
        %5775 = vmatprep.subr.mxu0 %v5720
        %5776 = vmatpush1.msra.mxu0 %v5719
        %5777 = vmatprep.subr.mxu0 %v5722
        %5778 = vmatpush1.msra.mxu0 %v5721
        %5779 = vmatprep.subr.mxu0 %v5724
        %5780 = vmatpush1.msra.mxu0 %v5723
        %5781 = vmatprep.subr.mxu0 %v5726
        %5782 = vmatpush1.msra.mxu0 %v5725
        %5783 = vmatprep.subr.mxu0 0.0
        %5784 = vmatpush1.msra.mxu0 0.0
        %5785 = vmatprep.subr.mxu0 0.0
        %5786 = vmatpush1.msra.mxu0 0.0
        %5787 = vmatprep.subr.mxu0 0.0
        %5788 = vmatpush1.msra.mxu0 0.0
        %5789 = vmatprep.subr.mxu0 0.0
        %5790 = vmatpush1.msra.mxu0 0.0
        %5791 = vmatprep.subr.mxu0 0.0
        %5792 = vmatpush1.msra.mxu0 0.0
        %5793 = vmatprep.subr.mxu0 0.0
        %5794 = vmatpush1.msra.mxu0 0.0
        %5795 = vmatprep.subr.mxu0 0.0
        %5796 = vmatpush1.msra.mxu0 0.0
        %5797 = vmatprep.subr.mxu0 0.0
        %5798 = vmatpush1.msra.mxu0 0.0
        %5799 = vmatprep.subr.mxu0 0.0
        %5800 = vmatpush1.msra.mxu0 0.0
        %5801 = vmatprep.subr.mxu0 0.0
        %5802 = vmatpush1.msra.mxu0 0.0
        %5803 = vmatprep.subr.mxu0 0.0
        %5804 = vmatpush1.msra.mxu0 0.0
        %5805 = vmatprep.subr.mxu0 0.0
        %5806 = vmatpush1.msra.mxu0 0.0
        %5807 = vmatprep.subr.mxu0 0.0
        %5808 = vmatpush1.msra.mxu0 0.0
        %5809 = vmatprep.subr.mxu0 0.0
        %5810 = vmatpush1.msra.mxu0 0.0
        %5811 = vmatprep.subr.mxu0 0.0
        %5812 = vmatpush1.msra.mxu0 0.0
        %5813 = vmatprep.subr.mxu0 0.0
        %5814 = vmatpush1.msra.mxu0 0.0
        %5815 = vmatprep.subr.mxu0 0.0
        %5816 = vmatpush1.msra.mxu0 0.0
        %5817 = vmatprep.subr.mxu0 0.0
        %5818 = vmatpush1.msra.mxu0 0.0
        %5819 = vmatprep.subr.mxu0 0.0
        %5820 = vmatpush1.msra.mxu0 0.0
        %5821 = vmatprep.subr.mxu0 0.0
        %5822 = vmatpush1.msra.mxu0 0.0
        %5823 = vmatprep.subr.mxu0 0.0
        %5824 = vmatpush1.msra.mxu0 0.0
        %5825 = vmatprep.subr.mxu0 0.0
        %5826 = vmatpush1.msra.mxu0 0.0
        %5827 = vmatprep.subr.mxu0 0.0
        %5828 = vmatpush1.msra.mxu0 0.0
        %5829 = vmatprep.subr.mxu0 0.0
        %5830 = vmatpush1.msra.mxu0 0.0
        %5831 = vmatprep.mubr.f32.mxu0 0.0
        %5832 = vmatmul.mubr.f32.gmra.mrb[0].mxu0 %v5744
        %v5833 = vpop.f32.mrb[0].mxu0
        %v5834 = vadd.f32 0.0, %v5833
        %v5835 = vpop.f32.mrb[0].mxu0
        %v5836 = vadd.f32 0.0, %v5835
        %5837 = vmatprep.mubr.f32.mxu0 0.0
        %5838 = vmatmul.mubr.f32.gmra.mrb[0].mxu0 %v5747
        %v5839 = vpop.f32.mrb[0].mxu0
        %v5840 = vadd.f32 0.0, %v5839
        %v5841 = vpop.f32.mrb[0].mxu0
        %v5842 = vadd.f32 0.0, %v5841
        %5843 = vmatprep.mubr.f32.mxu0 0.0
        %5844 = vmatmul.mubr.f32.gmra.mrb[0].mxu0 %v5750
        %v5845 = vpop.f32.mrb[0].mxu0
        %v5846 = vadd.f32 0.0, %v5845
        %v5847 = vpop.f32.mrb[0].mxu0
        %v5848 = vadd.f32 0.0, %v5847
        %5849 = vmatprep.mubr.f32.mxu0 0.0
        %5850 = vmatmul.mubr.f32.gmra.mrb[0].mxu0 %v5753
        %v5851 = vpop.f32.mrb[0].mxu0
        %v5852 = vadd.f32 0.0, %v5851
        %v5853 = vpop.f32.mrb[0].mxu0
        %v5854 = vadd.f32 0.0, %v5853
        %5855 = vmatprep.mubr.f32.mxu0 0.0
        %5856 = vmatmul.mubr.f32.gmra.mrb[0].mxu0 %v5756
        %v5857 = vpop.f32.mrb[0].mxu0
        %v5858 = vadd.f32 0.0, %v5857
        %v5859 = vpop.f32.mrb[0].mxu0
        %v5860 = vadd.f32 0.0, %v5859
        %5861 = vmatprep.mubr.f32.mxu0 0.0
        %5862 = vmatmul.mubr.f32.gmra.mrb[0].mxu0 %v5759
        %v5863 = vpop.f32.mrb[0].mxu0
        %v5864 = vadd.f32 0.0, %v5863
        %v5865 = vpop.f32.mrb[0].mxu0
        %v5866 = vadd.f32 0.0, %v5865
        %5867 = vmatprep.mubr.f32.mxu0 0.0
        %5868 = vmatmul.mubr.f32.gmra.mrb[0].mxu0 %v5762
        %v5869 = vpop.f32.mrb[0].mxu0
        %v5870 = vadd.f32 0.0, %v5869
        %v5871 = vpop.f32.mrb[0].mxu0
        %v5872 = vadd.f32 0.0, %v5871
        %5873 = vmatprep.mubr.f32.mxu0 0.0
        %5874 = vmatmul.mubr.f32.gmra.mrb[0].mxu0 %v5765
        %v5875 = vpop.f32.mrb[0].mxu0
        %v5876 = vadd.f32 0.0, %v5875
        %v5877 = vpop.f32.mrb[0].mxu0
        %v5878 = vadd.f32 0.0, %v5877
        %5879 = vdwg.mxu0
        %v5880 = vadd.f32 %v5559, %v5834
        %v5881 = vadd.f32 %v5561, %v5836
        %v5882 = vadd.f32 %v5565, %v5840
        %v5883 = vadd.f32 %v5567, %v5842
        %v5884 = vadd.f32 %v5571, %v5846
        %v5885 = vadd.f32 %v5573, %v5848
        %v5886 = vadd.f32 %v5577, %v5852
        %v5887 = vadd.f32 %v5579, %v5854
        %v5888 = vadd.f32 %v5583, %v5858
        %v5889 = vadd.f32 %v5585, %v5860
        %v5890 = vadd.f32 %v5589, %v5864
        %v5891 = vadd.f32 %v5591, %v5866
        %v5892 = vadd.f32 %v5595, %v5870
        %v5893 = vadd.f32 %v5597, %v5872
        %v5894 = vadd.f32 %v5601, %v5876
        %v5895 = vadd.f32 %v5603, %v5878
        %v5896 = vld [vmem:[%s2] sm:$0xff]
        %v5897 = vld [vmem:[%s2 + $0x8] sm:$0xff]
        %v5898 = vld [vmem:[%s2 + $0x10] sm:$0xff]
        %v5899 = vld [vmem:[%s2 + $0x18] sm:$0xff]
        %v5900 = vld [vmem:[%s2 + $0x20] sm:$0xff]
        %v5901 = vld [vmem:[%s2 + $0x28] sm:$0xff]
        %v5902 = vld [vmem:[%s2 + $0x30] sm:$0xff]
        %v5903 = vld [vmem:[%s2 + $0x38] sm:$0xff]
        %5905 = vset.pattern.permute.xlu0 2
        %5906 = vperm.xlu0 %5905, %v5896
        %v5907 = vpop.permute.xlu0 %5906
        %5910 = vset.pattern.permute.xlu0 2
        %5911 = vperm.xlu0 %5910, %v5897
        %v5912 = vpop.permute.xlu0 %5911
        %5915 = vset.pattern.permute.xlu0 2
        %5916 = vperm.xlu0 %5915, %v5898
        %v5917 = vpop.permute.xlu0 %5916
        %5920 = vset.pattern.permute.xlu0 2
        %5921 = vperm.xlu0 %5920, %v5899
        %v5922 = vpop.permute.xlu0 %5921
        %5925 = vset.pattern.permute.xlu0 2
        %5926 = vperm.xlu0 %5925, %v5900
        %v5927 = vpop.permute.xlu0 %5926
        %5930 = vset.pattern.permute.xlu0 2
        %5931 = vperm.xlu0 %5930, %v5901
        %v5932 = vpop.permute.xlu0 %5931
        %5935 = vset.pattern.permute.xlu0 2
        %5936 = vperm.xlu0 %5935, %v5902
        %v5937 = vpop.permute.xlu0 %5936
        %5940 = vset.pattern.permute.xlu0 2
        %5941 = vperm.xlu0 %5940, %v5903
        %v5942 = vpop.permute.xlu0 %5941
        %v5944 = vadd.f32 %v5880, %v5907
        %v5945 = vadd.f32 %v5881, %v5907
        %v5946 = vadd.f32 %v5882, %v5912
        %v5947 = vadd.f32 %v5883, %v5912
        %v5948 = vadd.f32 %v5884, %v5917
        %v5949 = vadd.f32 %v5885, %v5917
        %v5950 = vadd.f32 %v5886, %v5922
        %v5951 = vadd.f32 %v5887, %v5922
        %v5952 = vadd.f32 %v5888, %v5927
        %v5953 = vadd.f32 %v5889, %v5927
        %v5954 = vadd.f32 %v5890, %v5932
        %v5955 = vadd.f32 %v5891, %v5932
        %v5956 = vadd.f32 %v5892, %v5937
        %v5957 = vadd.f32 %v5893, %v5937
        %v5958 = vadd.f32 %v5894, %v5942
        %v5959 = vadd.f32 %v5895, %v5942
        %v5960 = vadd.f32 %v5944, %v5945
        %5961 = vadd.xlane.f32.xlu0 %v5960
        %v5962 = vpop.xlane.xlu0 %5961
        %v5963 = vadd.f32 %v5946, %v5947
        %5964 = vadd.xlane.f32.xlu0 %v5963
        %v5965 = vpop.xlane.xlu0 %5964
        %v5966 = vadd.f32 %v5948, %v5949
        %5967 = vadd.xlane.f32.xlu0 %v5966
        %v5968 = vpop.xlane.xlu0 %5967
        %v5969 = vadd.f32 %v5950, %v5951
        %5970 = vadd.xlane.f32.xlu0 %v5969
        %v5971 = vpop.xlane.xlu0 %5970
        %v5972 = vadd.f32 %v5952, %v5953
        %5973 = vadd.xlane.f32.xlu0 %v5972
        %v5974 = vpop.xlane.xlu0 %5973
        %v5975 = vadd.f32 %v5954, %v5955
        %5976 = vadd.xlane.f32.xlu0 %v5975
        %v5977 = vpop.xlane.xlu0 %5976
        %v5978 = vadd.f32 %v5956, %v5957
        %5979 = vadd.xlane.f32.xlu0 %v5978
        %v5980 = vpop.xlane.xlu0 %5979
        %v5981 = vadd.f32 %v5958, %v5959
        %5982 = vadd.xlane.f32.xlu0 %v5981
        %v5983 = vpop.xlane.xlu0 %5982
        %v5984 = vmul.f32 %v5962, %v315
        %v5985 = vmul.f32 %v5965, %v315
        %v5986 = vmul.f32 %v5968, %v315
        %v5987 = vmul.f32 %v5971, %v315
        %v5988 = vmul.f32 %v5974, %v315
        %v5989 = vmul.f32 %v5977, %v315
        %v5990 = vmul.f32 %v5980, %v315
        %v5991 = vmul.f32 %v5983, %v315
        %v5992 = vmul.f32 %v5944, %v5944
        %v5993 = vmul.f32 %v5945, %v5945
        %v5994 = vmul.f32 %v5946, %v5946
        %v5995 = vmul.f32 %v5947, %v5947
        %v5996 = vmul.f32 %v5948, %v5948
        %v5997 = vmul.f32 %v5949, %v5949
        %v5998 = vmul.f32 %v5950, %v5950
        %v5999 = vmul.f32 %v5951, %v5951
        %v6000 = vmul.f32 %v5952, %v5952
        %v6001 = vmul.f32 %v5953, %v5953
        %v6002 = vmul.f32 %v5954, %v5954
        %v6003 = vmul.f32 %v5955, %v5955
        %v6004 = vmul.f32 %v5956, %v5956
        %v6005 = vmul.f32 %v5957, %v5957
        %v6006 = vmul.f32 %v5958, %v5958
        %v6007 = vmul.f32 %v5959, %v5959
        %v6008 = vadd.f32 %v5992, %v5993
        %6009 = vadd.xlane.f32.xlu0 %v6008
        %v6010 = vpop.xlane.xlu0 %6009
        %v6011 = vadd.f32 %v5994, %v5995
        %6012 = vadd.xlane.f32.xlu0 %v6011
        %v6013 = vpop.xlane.xlu0 %6012
        %v6014 = vadd.f32 %v5996, %v5997
        %6015 = vadd.xlane.f32.xlu0 %v6014
        %v6016 = vpop.xlane.xlu0 %6015
        %v6017 = vadd.f32 %v5998, %v5999
        %6018 = vadd.xlane.f32.xlu0 %v6017
        %v6019 = vpop.xlane.xlu0 %6018
        %v6020 = vadd.f32 %v6000, %v6001
        %6021 = vadd.xlane.f32.xlu0 %v6020
        %v6022 = vpop.xlane.xlu0 %6021
        %v6023 = vadd.f32 %v6002, %v6003
        %6024 = vadd.xlane.f32.xlu0 %v6023
        %v6025 = vpop.xlane.xlu0 %6024
        %v6026 = vadd.f32 %v6004, %v6005
        %6027 = vadd.xlane.f32.xlu0 %v6026
        %v6028 = vpop.xlane.xlu0 %6027
        %v6029 = vadd.f32 %v6006, %v6007
        %6030 = vadd.xlane.f32.xlu0 %v6029
        %v6031 = vpop.xlane.xlu0 %6030
        %v6032 = vmul.f32 %v6010, %v315
        %v6033 = vmul.f32 %v6013, %v315
        %v6034 = vmul.f32 %v6016, %v315
        %v6035 = vmul.f32 %v6019, %v315
        %v6036 = vmul.f32 %v6022, %v315
        %v6037 = vmul.f32 %v6025, %v315
        %v6038 = vmul.f32 %v6028, %v315
        %v6039 = vmul.f32 %v6031, %v315
        %v6040 = vmul.f32 %v5984, %v5984
        %v6041 = vmul.f32 %v5985, %v5985
        %v6042 = vmul.f32 %v5986, %v5986
        %v6043 = vmul.f32 %v5987, %v5987
        %v6044 = vmul.f32 %v5988, %v5988
        %v6045 = vmul.f32 %v5989, %v5989
        %v6046 = vmul.f32 %v5990, %v5990
        %v6047 = vmul.f32 %v5991, %v5991
        %v6048 = vsub.f32 %v6032, %v6040
        %v6049 = vsub.f32 %v6033, %v6041
        %v6050 = vsub.f32 %v6034, %v6042
        %v6051 = vsub.f32 %v6035, %v6043
        %v6052 = vsub.f32 %v6036, %v6044
        %v6053 = vsub.f32 %v6037, %v6045
        %v6054 = vsub.f32 %v6038, %v6046
        %v6055 = vsub.f32 %v6039, %v6047
        %v6056 = vmax.f32 %v6048, 0.0
        %v6057 = vmax.f32 %v6049, 0.0
        %v6058 = vmax.f32 %v6050, 0.0
        %v6059 = vmax.f32 %v6051, 0.0
        %v6060 = vmax.f32 %v6052, 0.0
        %v6061 = vmax.f32 %v6053, 0.0
        %v6062 = vmax.f32 %v6054, 0.0
        %v6063 = vmax.f32 %v6055, 0.0
        %v6064 = vadd.f32 %v6056, 1e-05
        %v6065 = vadd.f32 %v6057, 1e-05
        %v6066 = vadd.f32 %v6058, 1e-05
        %v6067 = vadd.f32 %v6059, 1e-05
        %v6068 = vadd.f32 %v6060, 1e-05
        %v6069 = vadd.f32 %v6061, 1e-05
        %v6070 = vadd.f32 %v6062, 1e-05
        %v6071 = vadd.f32 %v6063, 1e-05
        %v6072 = vrsqrt.pop %v6064
        %v6073 = vrsqrt.pop %v6065
        %v6074 = vrsqrt.pop %v6066
        %v6075 = vrsqrt.pop %v6067
        %v6076 = vrsqrt.pop %v6068
        %v6077 = vrsqrt.pop %v6069
        %v6078 = vrsqrt.pop %v6070
        %v6079 = vrsqrt.pop %v6071
        %v6080 = vmul.f32 %v267, %v6072
        %v6081 = vmul.f32 %v268, %v6073
        %v6082 = vmul.f32 %v269, %v6074
        %v6083 = vmul.f32 %v270, %v6075
        %v6084 = vmul.f32 %v271, %v6076
        %v6085 = vmul.f32 %v272, %v6077
        %v6086 = vmul.f32 %v273, %v6078
        %v6087 = vmul.f32 %v274, %v6079
        %v6088 = vmul.f32 %v5984, %v6080
        %v6089 = vmul.f32 %v5985, %v6081
        %v6090 = vmul.f32 %v5986, %v6082
        %v6091 = vmul.f32 %v5987, %v6083
        %v6092 = vmul.f32 %v5988, %v6084
        %v6093 = vmul.f32 %v5989, %v6085
        %v6094 = vmul.f32 %v5990, %v6086
        %v6095 = vmul.f32 %v5991, %v6087
        %6104 = vrot.lane.b32.xlu0 %v6088, 1
        %v6105 = vpop.permute.xlu0 %6104
        %6106 = vrot.lane.b32.xlu0 %v6089, 1
        %v6107 = vpop.permute.xlu0 %6106
        %6108 = vrot.lane.b32.xlu0 %v6090, 1
        %v6109 = vpop.permute.xlu0 %6108
        %6110 = vrot.lane.b32.xlu0 %v6091, 1
        %v6111 = vpop.permute.xlu0 %6110
        %6112 = vrot.lane.b32.xlu0 %v6092, 1
        %v6113 = vpop.permute.xlu0 %6112
        %6114 = vrot.lane.b32.xlu0 %v6093, 1
        %v6115 = vpop.permute.xlu0 %6114
        %6116 = vrot.lane.b32.xlu0 %v6094, 1
        %v6117 = vpop.permute.xlu0 %6116
        %6118 = vrot.lane.b32.xlu0 %v6095, 1
        %v6119 = vpop.permute.xlu0 %6118
        %v6128 = vsub.f32 %v267, %v6105
        %v6129 = vsub.f32 %v268, %v6107
        %v6130 = vsub.f32 %v269, %v6109
        %v6131 = vsub.f32 %v270, %v6111
        %v6132 = vsub.f32 %v271, %v6113
        %v6133 = vsub.f32 %v272, %v6115
        %v6134 = vsub.f32 %v273, %v6117
        %v6135 = vsub.f32 %v274, %v6119
        %6137 = vset.pattern.permute.xlu0 10
        %6138 = vperm.xlu0 %6137, %v6080
        %v6139 = vpop.permute.xlu0 %6138
        %6142 = vset.pattern.permute.xlu0 10
        %6143 = vperm.xlu0 %6142, %v6081
        %v6144 = vpop.permute.xlu0 %6143
        %6147 = vset.pattern.permute.xlu0 10
        %6148 = vperm.xlu0 %6147, %v6082
        %v6149 = vpop.permute.xlu0 %6148
        %6152 = vset.pattern.permute.xlu0 10
        %6153 = vperm.xlu0 %6152, %v6083
        %v6154 = vpop.permute.xlu0 %6153
        %6157 = vset.pattern.permute.xlu0 10
        %6158 = vperm.xlu0 %6157, %v6084
        %v6159 = vpop.permute.xlu0 %6158
        %6162 = vset.pattern.permute.xlu0 10
        %6163 = vperm.xlu0 %6162, %v6085
        %v6164 = vpop.permute.xlu0 %6163
        %6167 = vset.pattern.permute.xlu0 10
        %6168 = vperm.xlu0 %6167, %v6086
        %v6169 = vpop.permute.xlu0 %6168
        %6172 = vset.pattern.permute.xlu0 10
        %6173 = vperm.xlu0 %6172, %v6087
        %v6174 = vpop.permute.xlu0 %6173
        %v6176 = vmul.f32 %v5944, %v6139
        %v6177 = vmul.f32 %v5945, %v6139
        %v6178 = vmul.f32 %v5946, %v6144
        %v6179 = vmul.f32 %v5947, %v6144
        %v6180 = vmul.f32 %v5948, %v6149
        %v6181 = vmul.f32 %v5949, %v6149
        %v6182 = vmul.f32 %v5950, %v6154
        %v6183 = vmul.f32 %v5951, %v6154
        %v6184 = vmul.f32 %v5952, %v6159
        %v6185 = vmul.f32 %v5953, %v6159
        %v6186 = vmul.f32 %v5954, %v6164
        %v6187 = vmul.f32 %v5955, %v6164
        %v6188 = vmul.f32 %v5956, %v6169
        %v6189 = vmul.f32 %v5957, %v6169
        %v6190 = vmul.f32 %v5958, %v6174
        %v6191 = vmul.f32 %v5959, %v6174
        %6193 = vset.pattern.permute.xlu0 11
        %6194 = vperm.xlu0 %6193, %v6128
        %v6195 = vpop.permute.xlu0 %6194
        %6198 = vset.pattern.permute.xlu0 11
        %6199 = vperm.xlu0 %6198, %v6129
        %v6200 = vpop.permute.xlu0 %6199
        %6203 = vset.pattern.permute.xlu0 11
        %6204 = vperm.xlu0 %6203, %v6130
        %v6205 = vpop.permute.xlu0 %6204
        %6208 = vset.pattern.permute.xlu0 11
        %6209 = vperm.xlu0 %6208, %v6131
        %v6210 = vpop.permute.xlu0 %6209
        %6213 = vset.pattern.permute.xlu0 11
        %6214 = vperm.xlu0 %6213, %v6132
        %v6215 = vpop.permute.xlu0 %6214
        %6218 = vset.pattern.permute.xlu0 11
        %6219 = vperm.xlu0 %6218, %v6133
        %v6220 = vpop.permute.xlu0 %6219
        %6223 = vset.pattern.permute.xlu0 11
        %6224 = vperm.xlu0 %6223, %v6134
        %v6225 = vpop.permute.xlu0 %6224
        %6228 = vset.pattern.permute.xlu0 11
        %6229 = vperm.xlu0 %6228, %v6135
        %v6230 = vpop.permute.xlu0 %6229
        %v6232 = vadd.f32 %v6176, %v6195
        %v6233 = vadd.f32 %v6177, %v6195
        %v6234 = vadd.f32 %v6178, %v6200
        %v6235 = vadd.f32 %v6179, %v6200
        %v6236 = vadd.f32 %v6180, %v6205
        %v6237 = vadd.f32 %v6181, %v6205
        %v6238 = vadd.f32 %v6182, %v6210
        %v6239 = vadd.f32 %v6183, %v6210
        %v6240 = vadd.f32 %v6184, %v6215
        %v6241 = vadd.f32 %v6185, %v6215
        %v6242 = vadd.f32 %v6186, %v6220
        %v6243 = vadd.f32 %v6187, %v6220
        %v6244 = vadd.f32 %v6188, %v6225
        %v6245 = vadd.f32 %v6189, %v6225
        %v6246 = vadd.f32 %v6190, %v6230
        %v6247 = vadd.f32 %v6191, %v6230
        %vm6248 = vcmp.ge.f32.partialorder %v6232, 0.0
        %vm6249 = vcmp.ge.f32.partialorder %v6233, 0.0
        %vm6250 = vcmp.ge.f32.partialorder %v6234, 0.0
        %vm6251 = vcmp.ge.f32.partialorder %v6235, 0.0
        %vm6252 = vcmp.ge.f32.partialorder %v6236, 0.0
        %vm6253 = vcmp.ge.f32.partialorder %v6237, 0.0
        %vm6254 = vcmp.ge.f32.partialorder %v6238, 0.0
        %vm6255 = vcmp.ge.f32.partialorder %v6239, 0.0
        %vm6256 = vcmp.ge.f32.partialorder %v6240, 0.0
        %vm6257 = vcmp.ge.f32.partialorder %v6241, 0.0
        %vm6258 = vcmp.ge.f32.partialorder %v6242, 0.0
        %vm6259 = vcmp.ge.f32.partialorder %v6243, 0.0
        %vm6260 = vcmp.ge.f32.partialorder %v6244, 0.0
        %vm6261 = vcmp.ge.f32.partialorder %v6245, 0.0
        %vm6262 = vcmp.ge.f32.partialorder %v6246, 0.0
        %vm6263 = vcmp.ge.f32.partialorder %v6247, 0.0
        %v6264 = vmul.f32 %v6232, 0.01
        %v6265 = vmul.f32 %v6233, 0.01
        %v6266 = vmul.f32 %v6234, 0.01
        %v6267 = vmul.f32 %v6235, 0.01
        %v6268 = vmul.f32 %v6236, 0.01
        %v6269 = vmul.f32 %v6237, 0.01
        %v6270 = vmul.f32 %v6238, 0.01
        %v6271 = vmul.f32 %v6239, 0.01
        %v6272 = vmul.f32 %v6240, 0.01
        %v6273 = vmul.f32 %v6241, 0.01
        %v6274 = vmul.f32 %v6242, 0.01
        %v6275 = vmul.f32 %v6243, 0.01
        %v6276 = vmul.f32 %v6244, 0.01
        %v6277 = vmul.f32 %v6245, 0.01
        %v6278 = vmul.f32 %v6246, 0.01
        %v6279 = vmul.f32 %v6247, 0.01
        %v6280 = vsel %vm6248, %v6232, %v6264
        %v6281 = vsel %vm6249, %v6233, %v6265
        %v6282 = vsel %vm6250, %v6234, %v6266
        %v6283 = vsel %vm6251, %v6235, %v6267
        %v6284 = vsel %vm6252, %v6236, %v6268
        %v6285 = vsel %vm6253, %v6237, %v6269
        %v6286 = vsel %vm6254, %v6238, %v6270
        %v6287 = vsel %vm6255, %v6239, %v6271
        %v6288 = vsel %vm6256, %v6240, %v6272
        %v6289 = vsel %vm6257, %v6241, %v6273
        %v6290 = vsel %vm6258, %v6242, %v6274
        %v6291 = vsel %vm6259, %v6243, %v6275
        %v6292 = vsel %vm6260, %v6244, %v6276
        %v6293 = vsel %vm6261, %v6245, %v6277
        %v6294 = vsel %vm6262, %v6246, %v6278
        %v6295 = vsel %vm6263, %v6247, %v6279
        %6296 = vst [vmem:[#allocation2 + $0x8] sm:$0xff] %v6280
        %6297 = vst [vmem:[#allocation2 + $0x10] sm:$0xff] %v6281
        %6298 = vst [vmem:[#allocation2 + $0x28] sm:$0xff] %v6282
        %6299 = vst [vmem:[#allocation2 + $0x30] sm:$0xff] %v6283
        %6300 = vst [vmem:[#allocation2 + $0x48] sm:$0xff] %v6284
        %6301 = vst [vmem:[#allocation2 + $0x50] sm:$0xff] %v6285
        %6302 = vst [vmem:[#allocation2 + $0x68] sm:$0xff] %v6286
        %6303 = vst [vmem:[#allocation2 + $0x70] sm:$0xff] %v6287
        %6304 = vst [vmem:[#allocation2 + $0x88] sm:$0xff] %v6288
        %6305 = vst [vmem:[#allocation2 + $0x90] sm:$0xff] %v6289
        %6306 = vst [vmem:[#allocation2 + $0xa8] sm:$0xff] %v6290
        %6307 = vst [vmem:[#allocation2 + $0xb0] sm:$0xff] %v6291
        %6308 = vst [vmem:[#allocation2 + $0xc8] sm:$0xff] %v6292
        %6309 = vst [vmem:[#allocation2 + $0xd0] sm:$0xff] %v6293
        %6310 = vst [vmem:[#allocation2 + $0xe8] sm:$0xff] %v6294
        %6311 = vst [vmem:[#allocation2 + $0xf0] sm:$0xff] %v6295
        %s6312 = scalar_lea.vmem [#allocation6], 960
        %v6313 = vld [vmem:[%s6312] sm:$0xff]
        %v6314 = vld [vmem:[%s6312 + $0x8] sm:$0xff]
        %v6315 = vld [vmem:[%s6312 + $0x10] sm:$0xff]
        %v6316 = vld [vmem:[%s6312 + $0x18] sm:$0xff]
        %v6317 = vld [vmem:[%s6312 + $0x20] sm:$0xff]
        %v6318 = vld [vmem:[%s6312 + $0x28] sm:$0xff]
        %v6319 = vld [vmem:[%s6312 + $0x30] sm:$0xff]
        %v6320 = vld [vmem:[%s6312 + $0x38] sm:$0xff]
        %v6321 = vld [vmem:[#allocation2] sm:$0xff]
        %v6322 = vld [vmem:[#allocation2 + $0x8] sm:$0xff]
        %v6323 = vld [vmem:[#allocation2 + $0x10] sm:$0xff]
        %v6324 = vld [vmem:[#allocation2 + $0x20] sm:$0xff]
        %v6325 = vld [vmem:[#allocation2 + $0x28] sm:$0xff]
        %v6326 = vld [vmem:[#allocation2 + $0x30] sm:$0xff]
        %v6327 = vld [vmem:[#allocation2 + $0x40] sm:$0xff]
        %v6328 = vld [vmem:[#allocation2 + $0x48] sm:$0xff]
        %v6329 = vld [vmem:[#allocation2 + $0x50] sm:$0xff]
        %v6330 = vld [vmem:[#allocation2 + $0x60] sm:$0xff]
        %v6331 = vld [vmem:[#allocation2 + $0x68] sm:$0xff]
        %v6332 = vld [vmem:[#allocation2 + $0x70] sm:$0xff]
        %v6333 = vld [vmem:[#allocation2 + $0x80] sm:$0xff]
        %v6334 = vld [vmem:[#allocation2 + $0x88] sm:$0xff]
        %v6335 = vld [vmem:[#allocation2 + $0x90] sm:$0xff]
        %v6336 = vld [vmem:[#allocation2 + $0xa0] sm:$0xff]
        %v6337 = vld [vmem:[#allocation2 + $0xa8] sm:$0xff]
        %v6338 = vld [vmem:[#allocation2 + $0xb0] sm:$0xff]
        %v6339 = vld [vmem:[#allocation2 + $0xc0] sm:$0xff]
        %v6340 = vld [vmem:[#allocation2 + $0xc8] sm:$0xff]
        %v6341 = vld [vmem:[#allocation2 + $0xd0] sm:$0xff]
        %v6342 = vld [vmem:[#allocation2 + $0xe0] sm:$0xff]
        %v6343 = vld [vmem:[#allocation2 + $0xe8] sm:$0xff]
        %v6344 = vld [vmem:[#allocation2 + $0xf0] sm:$0xff]
        %s6345 = scalar_lea.vmem [#allocation6], 1024
        %v6346 = vld [vmem:[%s6345] sm:$0xff]
        %v6347 = vld [vmem:[%s6345 + $0x8] sm:$0xff]
        %v6348 = vld [vmem:[%s6345 + $0x10] sm:$0xff]
        %v6349 = vld [vmem:[%s6345 + $0x18] sm:$0xff]
        %v6350 = vld [vmem:[%s6345 + $0x20] sm:$0xff]
        %v6351 = vld [vmem:[%s6345 + $0x28] sm:$0xff]
        %v6352 = vld [vmem:[%s6345 + $0x30] sm:$0xff]
        %v6353 = vld [vmem:[%s6345 + $0x38] sm:$0xff]
        %v6355 = vsel %vm685, %v6346, 0
        %v6358 = vsel %vm685, %v6347, 0
        %v6361 = vsel %vm685, %v6348, 0
        %v6364 = vsel %vm685, %v6349, 0
        %v6367 = vsel %vm685, %v6350, 0
        %v6370 = vsel %vm685, %v6351, 0
        %v6373 = vsel %vm685, %v6352, 0
        %v6376 = vsel %vm685, %v6353, 0
        %6378 = vmatprep.subr.mxu0 %v6323
        %6379 = vmatpush1.msra.mxu0 %v6322
        %6380 = vmatprep.subr.mxu0 %v6326
        %6381 = vmatpush1.msra.mxu0 %v6325
        %6382 = vmatprep.subr.mxu0 %v6329
        %6383 = vmatpush1.msra.mxu0 %v6328
        %6384 = vmatprep.subr.mxu0 %v6332
        %6385 = vmatpush1.msra.mxu0 %v6331
        %6386 = vmatprep.subr.mxu0 %v6335
        %6387 = vmatpush1.msra.mxu0 %v6334
        %6388 = vmatprep.subr.mxu0 %v6338
        %6389 = vmatpush1.msra.mxu0 %v6337
        %6390 = vmatprep.subr.mxu0 %v6341
        %6391 = vmatpush1.msra.mxu0 %v6340
        %6392 = vmatprep.subr.mxu0 %v6344
        %6393 = vmatpush1.msra.mxu0 %v6343
        %6394 = vmatprep.subr.mxu0 0.0
        %6395 = vmatpush1.msra.mxu0 0.0
        %6396 = vmatprep.subr.mxu0 0.0
        %6397 = vmatpush1.msra.mxu0 0.0
        %6398 = vmatprep.subr.mxu0 0.0
        %6399 = vmatpush1.msra.mxu0 0.0
        %6400 = vmatprep.subr.mxu0 0.0
        %6401 = vmatpush1.msra.mxu0 0.0
        %6402 = vmatprep.subr.mxu0 0.0
        %6403 = vmatpush1.msra.mxu0 0.0
        %6404 = vmatprep.subr.mxu0 0.0
        %6405 = vmatpush1.msra.mxu0 0.0
        %6406 = vmatprep.subr.mxu0 0.0
        %6407 = vmatpush1.msra.mxu0 0.0
        %6408 = vmatprep.subr.mxu0 0.0
        %6409 = vmatpush1.msra.mxu0 0.0
        %6410 = vmatprep.subr.mxu0 0.0
        %6411 = vmatpush1.msra.mxu0 0.0
        %6412 = vmatprep.subr.mxu0 0.0
        %6413 = vmatpush1.msra.mxu0 0.0
        %6414 = vmatprep.subr.mxu0 0.0
        %6415 = vmatpush1.msra.mxu0 0.0
        %6416 = vmatprep.subr.mxu0 0.0
        %6417 = vmatpush1.msra.mxu0 0.0
        %6418 = vmatprep.subr.mxu0 0.0
        %6419 = vmatpush1.msra.mxu0 0.0
        %6420 = vmatprep.subr.mxu0 0.0
        %6421 = vmatpush1.msra.mxu0 0.0
        %6422 = vmatprep.subr.mxu0 0.0
        %6423 = vmatpush1.msra.mxu0 0.0
        %6424 = vmatprep.subr.mxu0 0.0
        %6425 = vmatpush1.msra.mxu0 0.0
        %6426 = vmatprep.subr.mxu0 0.0
        %6427 = vmatpush1.msra.mxu0 0.0
        %6428 = vmatprep.subr.mxu0 0.0
        %6429 = vmatpush1.msra.mxu0 0.0
        %6430 = vmatprep.subr.mxu0 0.0
        %6431 = vmatpush1.msra.mxu0 0.0
        %6432 = vmatprep.subr.mxu0 0.0
        %6433 = vmatpush1.msra.mxu0 0.0
        %6434 = vmatprep.subr.mxu0 0.0
        %6435 = vmatpush1.msra.mxu0 0.0
        %6436 = vmatprep.subr.mxu0 0.0
        %6437 = vmatpush1.msra.mxu0 0.0
        %6438 = vmatprep.subr.mxu0 0.0
        %6439 = vmatpush1.msra.mxu0 0.0
        %6440 = vmatprep.subr.mxu0 0.0
        %6441 = vmatpush1.msra.mxu0 0.0
        %6442 = vmatprep.mubr.f32.mxu0 0.0
        %6443 = vmatmul.mubr.f32.gmra.mrb[0].mxu0 %v6355
        %v6444 = vpop.f32.mrb[0].mxu0
        %v6445 = vadd.f32 0.0, %v6444
        %v6446 = vpop.f32.mrb[0].mxu0
        %v6447 = vadd.f32 0.0, %v6446
        %6448 = vmatprep.mubr.f32.mxu0 0.0
        %6449 = vmatmul.mubr.f32.gmra.mrb[0].mxu0 %v6358
        %v6450 = vpop.f32.mrb[0].mxu0
        %v6451 = vadd.f32 0.0, %v6450
        %v6452 = vpop.f32.mrb[0].mxu0
        %v6453 = vadd.f32 0.0, %v6452
        %6454 = vmatprep.mubr.f32.mxu0 0.0
        %6455 = vmatmul.mubr.f32.gmra.mrb[0].mxu0 %v6361
        %v6456 = vpop.f32.mrb[0].mxu0
        %v6457 = vadd.f32 0.0, %v6456
        %v6458 = vpop.f32.mrb[0].mxu0
        %v6459 = vadd.f32 0.0, %v6458
        %6460 = vmatprep.mubr.f32.mxu0 0.0
        %6461 = vmatmul.mubr.f32.gmra.mrb[0].mxu0 %v6364
        %v6462 = vpop.f32.mrb[0].mxu0
        %v6463 = vadd.f32 0.0, %v6462
        %v6464 = vpop.f32.mrb[0].mxu0
        %v6465 = vadd.f32 0.0, %v6464
        %6466 = vmatprep.mubr.f32.mxu0 0.0
        %6467 = vmatmul.mubr.f32.gmra.mrb[0].mxu0 %v6367
        %v6468 = vpop.f32.mrb[0].mxu0
        %v6469 = vadd.f32 0.0, %v6468
        %v6470 = vpop.f32.mrb[0].mxu0
        %v6471 = vadd.f32 0.0, %v6470
        %6472 = vmatprep.mubr.f32.mxu0 0.0
        %6473 = vmatmul.mubr.f32.gmra.mrb[0].mxu0 %v6370
        %v6474 = vpop.f32.mrb[0].mxu0
        %v6475 = vadd.f32 0.0, %v6474
        %v6476 = vpop.f32.mrb[0].mxu0
        %v6477 = vadd.f32 0.0, %v6476
        %6478 = vmatprep.mubr.f32.mxu0 0.0
        %6479 = vmatmul.mubr.f32.gmra.mrb[0].mxu0 %v6373
        %v6480 = vpop.f32.mrb[0].mxu0
        %v6481 = vadd.f32 0.0, %v6480
        %v6482 = vpop.f32.mrb[0].mxu0
        %v6483 = vadd.f32 0.0, %v6482
        %6484 = vmatprep.mubr.f32.mxu0 0.0
        %6485 = vmatmul.mubr.f32.gmra.mrb[0].mxu0 %v6376
        %v6486 = vpop.f32.mrb[0].mxu0
        %v6487 = vadd.f32 0.0, %v6486
        %v6488 = vpop.f32.mrb[0].mxu0
        %v6489 = vadd.f32 0.0, %v6488
        %6490 = vdwg.mxu0
        %6515 = vrot.lane.b32.xlu0 %v6321, 1
        %v6516 = vpop.permute.xlu0 %6515
        %6517 = vrot.lane.b32.xlu0 %v6322, 1
        %v6518 = vpop.permute.xlu0 %6517
        %6519 = vrot.lane.b32.xlu0 %v6323, 1
        %v6520 = vpop.permute.xlu0 %6519
        %6521 = vrot.lane.b32.xlu0 %v6324, 1
        %v6522 = vpop.permute.xlu0 %6521
        %6523 = vrot.lane.b32.xlu0 %v6325, 1
        %v6524 = vpop.permute.xlu0 %6523
        %6525 = vrot.lane.b32.xlu0 %v6326, 1
        %v6526 = vpop.permute.xlu0 %6525
        %6527 = vrot.lane.b32.xlu0 %v6327, 1
        %v6528 = vpop.permute.xlu0 %6527
        %6529 = vrot.lane.b32.xlu0 %v6328, 1
        %v6530 = vpop.permute.xlu0 %6529
        %6531 = vrot.lane.b32.xlu0 %v6329, 1
        %v6532 = vpop.permute.xlu0 %6531
        %6533 = vrot.lane.b32.xlu0 %v6330, 1
        %v6534 = vpop.permute.xlu0 %6533
        %6535 = vrot.lane.b32.xlu0 %v6331, 1
        %v6536 = vpop.permute.xlu0 %6535
        %6537 = vrot.lane.b32.xlu0 %v6332, 1
        %v6538 = vpop.permute.xlu0 %6537
        %6539 = vrot.lane.b32.xlu0 %v6333, 1
        %v6540 = vpop.permute.xlu0 %6539
        %6541 = vrot.lane.b32.xlu0 %v6334, 1
        %v6542 = vpop.permute.xlu0 %6541
        %6543 = vrot.lane.b32.xlu0 %v6335, 1
        %v6544 = vpop.permute.xlu0 %6543
        %6545 = vrot.lane.b32.xlu0 %v6336, 1
        %v6546 = vpop.permute.xlu0 %6545
        %6547 = vrot.lane.b32.xlu0 %v6337, 1
        %v6548 = vpop.permute.xlu0 %6547
        %6549 = vrot.lane.b32.xlu0 %v6338, 1
        %v6550 = vpop.permute.xlu0 %6549
        %6551 = vrot.lane.b32.xlu0 %v6339, 1
        %v6552 = vpop.permute.xlu0 %6551
        %6553 = vrot.lane.b32.xlu0 %v6340, 1
        %v6554 = vpop.permute.xlu0 %6553
        %6555 = vrot.lane.b32.xlu0 %v6341, 1
        %v6556 = vpop.permute.xlu0 %6555
        %6557 = vrot.lane.b32.xlu0 %v6342, 1
        %v6558 = vpop.permute.xlu0 %6557
        %6559 = vrot.lane.b32.xlu0 %v6343, 1
        %v6560 = vpop.permute.xlu0 %6559
        %6561 = vrot.lane.b32.xlu0 %v6344, 1
        %v6562 = vpop.permute.xlu0 %6561
        %v6563 = vsel %vm895, %v6516, %v6518
        %v6564 = vsel %vm895, %v6518, %v6520
        %v6565 = vsel %vm895, %v6522, %v6524
        %v6566 = vsel %vm895, %v6524, %v6526
        %v6567 = vsel %vm895, %v6528, %v6530
        %v6568 = vsel %vm895, %v6530, %v6532
        %v6569 = vsel %vm895, %v6534, %v6536
        %v6570 = vsel %vm895, %v6536, %v6538
        %v6571 = vsel %vm895, %v6540, %v6542
        %v6572 = vsel %vm895, %v6542, %v6544
        %v6573 = vsel %vm895, %v6546, %v6548
        %v6574 = vsel %vm895, %v6548, %v6550
        %v6575 = vsel %vm895, %v6552, %v6554
        %v6576 = vsel %vm895, %v6554, %v6556
        %v6577 = vsel %vm895, %v6558, %v6560
        %v6578 = vsel %vm895, %v6560, %v6562
        %v6596 = vsel %vm685, %v6313, 0
        %v6599 = vsel %vm685, %v6314, 0
        %v6602 = vsel %vm685, %v6315, 0
        %v6605 = vsel %vm685, %v6316, 0
        %v6608 = vsel %vm685, %v6317, 0
        %v6611 = vsel %vm685, %v6318, 0
        %v6614 = vsel %vm685, %v6319, 0
        %v6617 = vsel %vm685, %v6320, 0
        %6619 = vmatprep.subr.mxu0 %v6564
        %6620 = vmatpush1.msra.mxu0 %v6563
        %6621 = vmatprep.subr.mxu0 %v6566
        %6622 = vmatpush1.msra.mxu0 %v6565
        %6623 = vmatprep.subr.mxu0 %v6568
        %6624 = vmatpush1.msra.mxu0 %v6567
        %6625 = vmatprep.subr.mxu0 %v6570
        %6626 = vmatpush1.msra.mxu0 %v6569
        %6627 = vmatprep.subr.mxu0 %v6572
        %6628 = vmatpush1.msra.mxu0 %v6571
        %6629 = vmatprep.subr.mxu0 %v6574
        %6630 = vmatpush1.msra.mxu0 %v6573
        %6631 = vmatprep.subr.mxu0 %v6576
        %6632 = vmatpush1.msra.mxu0 %v6575
        %6633 = vmatprep.subr.mxu0 %v6578
        %6634 = vmatpush1.msra.mxu0 %v6577
        %6635 = vmatprep.subr.mxu0 0.0
        %6636 = vmatpush1.msra.mxu0 0.0
        %6637 = vmatprep.subr.mxu0 0.0
        %6638 = vmatpush1.msra.mxu0 0.0
        %6639 = vmatprep.subr.mxu0 0.0
        %6640 = vmatpush1.msra.mxu0 0.0
        %6641 = vmatprep.subr.mxu0 0.0
        %6642 = vmatpush1.msra.mxu0 0.0
        %6643 = vmatprep.subr.mxu0 0.0
        %6644 = vmatpush1.msra.mxu0 0.0
        %6645 = vmatprep.subr.mxu0 0.0
        %6646 = vmatpush1.msra.mxu0 0.0
        %6647 = vmatprep.subr.mxu0 0.0
        %6648 = vmatpush1.msra.mxu0 0.0
        %6649 = vmatprep.subr.mxu0 0.0
        %6650 = vmatpush1.msra.mxu0 0.0
        %6651 = vmatprep.subr.mxu0 0.0
        %6652 = vmatpush1.msra.mxu0 0.0
        %6653 = vmatprep.subr.mxu0 0.0
        %6654 = vmatpush1.msra.mxu0 0.0
        %6655 = vmatprep.subr.mxu0 0.0
        %6656 = vmatpush1.msra.mxu0 0.0
        %6657 = vmatprep.subr.mxu0 0.0
        %6658 = vmatpush1.msra.mxu0 0.0
        %6659 = vmatprep.subr.mxu0 0.0
        %6660 = vmatpush1.msra.mxu0 0.0
        %6661 = vmatprep.subr.mxu0 0.0
        %6662 = vmatpush1.msra.mxu0 0.0
        %6663 = vmatprep.subr.mxu0 0.0
        %6664 = vmatpush1.msra.mxu0 0.0
        %6665 = vmatprep.subr.mxu0 0.0
        %6666 = vmatpush1.msra.mxu0 0.0
        %6667 = vmatprep.subr.mxu0 0.0
        %6668 = vmatpush1.msra.mxu0 0.0
        %6669 = vmatprep.subr.mxu0 0.0
        %6670 = vmatpush1.msra.mxu0 0.0
        %6671 = vmatprep.subr.mxu0 0.0
        %6672 = vmatpush1.msra.mxu0 0.0
        %6673 = vmatprep.subr.mxu0 0.0
        %6674 = vmatpush1.msra.mxu0 0.0
        %6675 = vmatprep.subr.mxu0 0.0
        %6676 = vmatpush1.msra.mxu0 0.0
        %6677 = vmatprep.subr.mxu0 0.0
        %6678 = vmatpush1.msra.mxu0 0.0
        %6679 = vmatprep.subr.mxu0 0.0
        %6680 = vmatpush1.msra.mxu0 0.0
        %6681 = vmatprep.subr.mxu0 0.0
        %6682 = vmatpush1.msra.mxu0 0.0
        %6683 = vmatprep.mubr.f32.mxu0 0.0
        %6684 = vmatmul.mubr.f32.gmra.mrb[0].mxu0 %v6596
        %v6685 = vpop.f32.mrb[0].mxu0
        %v6686 = vadd.f32 %v6445, %v6685
        %v6687 = vpop.f32.mrb[0].mxu0
        %v6688 = vadd.f32 %v6447, %v6687
        %6689 = vmatprep.mubr.f32.mxu0 0.0
        %6690 = vmatmul.mubr.f32.gmra.mrb[0].mxu0 %v6599
        %v6691 = vpop.f32.mrb[0].mxu0
        %v6692 = vadd.f32 %v6451, %v6691
        %v6693 = vpop.f32.mrb[0].mxu0
        %v6694 = vadd.f32 %v6453, %v6693
        %6695 = vmatprep.mubr.f32.mxu0 0.0
        %6696 = vmatmul.mubr.f32.gmra.mrb[0].mxu0 %v6602
        %v6697 = vpop.f32.mrb[0].mxu0
        %v6698 = vadd.f32 %v6457, %v6697
        %v6699 = vpop.f32.mrb[0].mxu0
        %v6700 = vadd.f32 %v6459, %v6699
        %6701 = vmatprep.mubr.f32.mxu0 0.0
        %6702 = vmatmul.mubr.f32.gmra.mrb[0].mxu0 %v6605
        %v6703 = vpop.f32.mrb[0].mxu0
        %v6704 = vadd.f32 %v6463, %v6703
        %v6705 = vpop.f32.mrb[0].mxu0
        %v6706 = vadd.f32 %v6465, %v6705
        %6707 = vmatprep.mubr.f32.mxu0 0.0
        %6708 = vmatmul.mubr.f32.gmra.mrb[0].mxu0 %v6608
        %v6709 = vpop.f32.mrb[0].mxu0
        %v6710 = vadd.f32 %v6469, %v6709
        %v6711 = vpop.f32.mrb[0].mxu0
        %v6712 = vadd.f32 %v6471, %v6711
        %6713 = vmatprep.mubr.f32.mxu0 0.0
        %6714 = vmatmul.mubr.f32.gmra.mrb[0].mxu0 %v6611
        %v6715 = vpop.f32.mrb[0].mxu0
        %v6716 = vadd.f32 %v6475, %v6715
        %v6717 = vpop.f32.mrb[0].mxu0
        %v6718 = vadd.f32 %v6477, %v6717
        %6719 = vmatprep.mubr.f32.mxu0 0.0
        %6720 = vmatmul.mubr.f32.gmra.mrb[0].mxu0 %v6614
        %v6721 = vpop.f32.mrb[0].mxu0
        %v6722 = vadd.f32 %v6481, %v6721
        %v6723 = vpop.f32.mrb[0].mxu0
        %v6724 = vadd.f32 %v6483, %v6723
        %6725 = vmatprep.mubr.f32.mxu0 0.0
        %6726 = vmatmul.mubr.f32.gmra.mrb[0].mxu0 %v6617
        %v6727 = vpop.f32.mrb[0].mxu0
        %v6728 = vadd.f32 %v6487, %v6727
        %v6729 = vpop.f32.mrb[0].mxu0
        %v6730 = vadd.f32 %v6489, %v6729
        %6731 = vdwg.mxu0
        %s6732 = scalar_lea.vmem [#allocation6], 1088
        %v6733 = vld [vmem:[%s6732] sm:$0xff]
        %v6734 = vld [vmem:[%s6732 + $0x8] sm:$0xff]
        %v6735 = vld [vmem:[%s6732 + $0x10] sm:$0xff]
        %v6736 = vld [vmem:[%s6732 + $0x18] sm:$0xff]
        %v6737 = vld [vmem:[%s6732 + $0x20] sm:$0xff]
        %v6738 = vld [vmem:[%s6732 + $0x28] sm:$0xff]
        %v6739 = vld [vmem:[%s6732 + $0x30] sm:$0xff]
        %v6740 = vld [vmem:[%s6732 + $0x38] sm:$0xff]
        %v6741 = vld [vmem:[#allocation2 + $0x8] sm:$0xff]
        %v6742 = vld [vmem:[#allocation2 + $0x10] sm:$0xff]
        %v6743 = vld [vmem:[#allocation2 + $0x18] sm:$0xff]
        %v6744 = vld [vmem:[#allocation2 + $0x28] sm:$0xff]
        %v6745 = vld [vmem:[#allocation2 + $0x30] sm:$0xff]
        %v6746 = vld [vmem:[#allocation2 + $0x38] sm:$0xff]
        %v6747 = vld [vmem:[#allocation2 + $0x48] sm:$0xff]
        %v6748 = vld [vmem:[#allocation2 + $0x50] sm:$0xff]
        %v6749 = vld [vmem:[#allocation2 + $0x58] sm:$0xff]
        %v6750 = vld [vmem:[#allocation2 + $0x68] sm:$0xff]
        %v6751 = vld [vmem:[#allocation2 + $0x70] sm:$0xff]
        %v6752 = vld [vmem:[#allocation2 + $0x78] sm:$0xff]
        %v6753 = vld [vmem:[#allocation2 + $0x88] sm:$0xff]
        %v6754 = vld [vmem:[#allocation2 + $0x90] sm:$0xff]
        %v6755 = vld [vmem:[#allocation2 + $0x98] sm:$0xff]
        %v6756 = vld [vmem:[#allocation2 + $0xa8] sm:$0xff]
        %v6757 = vld [vmem:[#allocation2 + $0xb0] sm:$0xff]
        %v6758 = vld [vmem:[#allocation2 + $0xb8] sm:$0xff]
        %v6759 = vld [vmem:[#allocation2 + $0xc8] sm:$0xff]
        %v6760 = vld [vmem:[#allocation2 + $0xd0] sm:$0xff]
        %v6761 = vld [vmem:[#allocation2 + $0xd8] sm:$0xff]
        %v6762 = vld [vmem:[#allocation2 + $0xe8] sm:$0xff]
        %v6763 = vld [vmem:[#allocation2 + $0xf0] sm:$0xff]
        %v6764 = vld [vmem:[#allocation2 + $0xf8] sm:$0xff]
        %6789 = vrot.lane.b32.xlu0 %v6741, 127
        %v6790 = vpop.permute.xlu0 %6789
        %6791 = vrot.lane.b32.xlu0 %v6742, 127
        %v6792 = vpop.permute.xlu0 %6791
        %6793 = vrot.lane.b32.xlu0 %v6743, 127
        %v6794 = vpop.permute.xlu0 %6793
        %6795 = vrot.lane.b32.xlu0 %v6744, 127
        %v6796 = vpop.permute.xlu0 %6795
        %6797 = vrot.lane.b32.xlu0 %v6745, 127
        %v6798 = vpop.permute.xlu0 %6797
        %6799 = vrot.lane.b32.xlu0 %v6746, 127
        %v6800 = vpop.permute.xlu0 %6799
        %6801 = vrot.lane.b32.xlu0 %v6747, 127
        %v6802 = vpop.permute.xlu0 %6801
        %6803 = vrot.lane.b32.xlu0 %v6748, 127
        %v6804 = vpop.permute.xlu0 %6803
        %6805 = vrot.lane.b32.xlu0 %v6749, 127
        %v6806 = vpop.permute.xlu0 %6805
        %6807 = vrot.lane.b32.xlu0 %v6750, 127
        %v6808 = vpop.permute.xlu0 %6807
        %6809 = vrot.lane.b32.xlu0 %v6751, 127
        %v6810 = vpop.permute.xlu0 %6809
        %6811 = vrot.lane.b32.xlu0 %v6752, 127
        %v6812 = vpop.permute.xlu0 %6811
        %6813 = vrot.lane.b32.xlu0 %v6753, 127
        %v6814 = vpop.permute.xlu0 %6813
        %6815 = vrot.lane.b32.xlu0 %v6754, 127
        %v6816 = vpop.permute.xlu0 %6815
        %6817 = vrot.lane.b32.xlu0 %v6755, 127
        %v6818 = vpop.permute.xlu0 %6817
        %6819 = vrot.lane.b32.xlu0 %v6756, 127
        %v6820 = vpop.permute.xlu0 %6819
        %6821 = vrot.lane.b32.xlu0 %v6757, 127
        %v6822 = vpop.permute.xlu0 %6821
        %6823 = vrot.lane.b32.xlu0 %v6758, 127
        %v6824 = vpop.permute.xlu0 %6823
        %6825 = vrot.lane.b32.xlu0 %v6759, 127
        %v6826 = vpop.permute.xlu0 %6825
        %6827 = vrot.lane.b32.xlu0 %v6760, 127
        %v6828 = vpop.permute.xlu0 %6827
        %6829 = vrot.lane.b32.xlu0 %v6761, 127
        %v6830 = vpop.permute.xlu0 %6829
        %6831 = vrot.lane.b32.xlu0 %v6762, 127
        %v6832 = vpop.permute.xlu0 %6831
        %6833 = vrot.lane.b32.xlu0 %v6763, 127
        %v6834 = vpop.permute.xlu0 %6833
        %6835 = vrot.lane.b32.xlu0 %v6764, 127
        %v6836 = vpop.permute.xlu0 %6835
        %v6837 = vsel %vm1170, %v6790, %v6792
        %v6838 = vsel %vm1170, %v6792, %v6794
        %v6839 = vsel %vm1170, %v6796, %v6798
        %v6840 = vsel %vm1170, %v6798, %v6800
        %v6841 = vsel %vm1170, %v6802, %v6804
        %v6842 = vsel %vm1170, %v6804, %v6806
        %v6843 = vsel %vm1170, %v6808, %v6810
        %v6844 = vsel %vm1170, %v6810, %v6812
        %v6845 = vsel %vm1170, %v6814, %v6816
        %v6846 = vsel %vm1170, %v6816, %v6818
        %v6847 = vsel %vm1170, %v6820, %v6822
        %v6848 = vsel %vm1170, %v6822, %v6824
        %v6849 = vsel %vm1170, %v6826, %v6828
        %v6850 = vsel %vm1170, %v6828, %v6830
        %v6851 = vsel %vm1170, %v6832, %v6834
        %v6852 = vsel %vm1170, %v6834, %v6836
        %v6870 = vsel %vm685, %v6733, 0
        %v6873 = vsel %vm685, %v6734, 0
        %v6876 = vsel %vm685, %v6735, 0
        %v6879 = vsel %vm685, %v6736, 0
        %v6882 = vsel %vm685, %v6737, 0
        %v6885 = vsel %vm685, %v6738, 0
        %v6888 = vsel %vm685, %v6739, 0
        %v6891 = vsel %vm685, %v6740, 0
        %6893 = vmatprep.subr.mxu0 %v6838
        %6894 = vmatpush1.msra.mxu0 %v6837
        %6895 = vmatprep.subr.mxu0 %v6840
        %6896 = vmatpush1.msra.mxu0 %v6839
        %6897 = vmatprep.subr.mxu0 %v6842
        %6898 = vmatpush1.msra.mxu0 %v6841
        %6899 = vmatprep.subr.mxu0 %v6844
        %6900 = vmatpush1.msra.mxu0 %v6843
        %6901 = vmatprep.subr.mxu0 %v6846
        %6902 = vmatpush1.msra.mxu0 %v6845
        %6903 = vmatprep.subr.mxu0 %v6848
        %6904 = vmatpush1.msra.mxu0 %v6847
        %6905 = vmatprep.subr.mxu0 %v6850
        %6906 = vmatpush1.msra.mxu0 %v6849
        %6907 = vmatprep.subr.mxu0 %v6852
        %6908 = vmatpush1.msra.mxu0 %v6851
        %6909 = vmatprep.subr.mxu0 0.0
        %6910 = vmatpush1.msra.mxu0 0.0
        %6911 = vmatprep.subr.mxu0 0.0
        %6912 = vmatpush1.msra.mxu0 0.0
        %6913 = vmatprep.subr.mxu0 0.0
        %6914 = vmatpush1.msra.mxu0 0.0
        %6915 = vmatprep.subr.mxu0 0.0
        %6916 = vmatpush1.msra.mxu0 0.0
        %6917 = vmatprep.subr.mxu0 0.0
        %6918 = vmatpush1.msra.mxu0 0.0
        %6919 = vmatprep.subr.mxu0 0.0
        %6920 = vmatpush1.msra.mxu0 0.0
        %6921 = vmatprep.subr.mxu0 0.0
        %6922 = vmatpush1.msra.mxu0 0.0
        %6923 = vmatprep.subr.mxu0 0.0
        %6924 = vmatpush1.msra.mxu0 0.0
        %6925 = vmatprep.subr.mxu0 0.0
        %6926 = vmatpush1.msra.mxu0 0.0
        %6927 = vmatprep.subr.mxu0 0.0
        %6928 = vmatpush1.msra.mxu0 0.0
        %6929 = vmatprep.subr.mxu0 0.0
        %6930 = vmatpush1.msra.mxu0 0.0
        %6931 = vmatprep.subr.mxu0 0.0
        %6932 = vmatpush1.msra.mxu0 0.0
        %6933 = vmatprep.subr.mxu0 0.0
        %6934 = vmatpush1.msra.mxu0 0.0
        %6935 = vmatprep.subr.mxu0 0.0
        %6936 = vmatpush1.msra.mxu0 0.0
        %6937 = vmatprep.subr.mxu0 0.0
        %6938 = vmatpush1.msra.mxu0 0.0
        %6939 = vmatprep.subr.mxu0 0.0
        %6940 = vmatpush1.msra.mxu0 0.0
        %6941 = vmatprep.subr.mxu0 0.0
        %6942 = vmatpush1.msra.mxu0 0.0
        %6943 = vmatprep.subr.mxu0 0.0
        %6944 = vmatpush1.msra.mxu0 0.0
        %6945 = vmatprep.subr.mxu0 0.0
        %6946 = vmatpush1.msra.mxu0 0.0
        %6947 = vmatprep.subr.mxu0 0.0
        %6948 = vmatpush1.msra.mxu0 0.0
        %6949 = vmatprep.subr.mxu0 0.0
        %6950 = vmatpush1.msra.mxu0 0.0
        %6951 = vmatprep.subr.mxu0 0.0
        %6952 = vmatpush1.msra.mxu0 0.0
        %6953 = vmatprep.subr.mxu0 0.0
        %6954 = vmatpush1.msra.mxu0 0.0
        %6955 = vmatprep.subr.mxu0 0.0
        %6956 = vmatpush1.msra.mxu0 0.0
        %6957 = vmatprep.mubr.f32.mxu0 0.0
        %6958 = vmatmul.mubr.f32.gmra.mrb[0].mxu0 %v6870
        %v6959 = vpop.f32.mrb[0].mxu0
        %v6960 = vadd.f32 0.0, %v6959
        %v6961 = vpop.f32.mrb[0].mxu0
        %v6962 = vadd.f32 0.0, %v6961
        %6963 = vmatprep.mubr.f32.mxu0 0.0
        %6964 = vmatmul.mubr.f32.gmra.mrb[0].mxu0 %v6873
        %v6965 = vpop.f32.mrb[0].mxu0
        %v6966 = vadd.f32 0.0, %v6965
        %v6967 = vpop.f32.mrb[0].mxu0
        %v6968 = vadd.f32 0.0, %v6967
        %6969 = vmatprep.mubr.f32.mxu0 0.0
        %6970 = vmatmul.mubr.f32.gmra.mrb[0].mxu0 %v6876
        %v6971 = vpop.f32.mrb[0].mxu0
        %v6972 = vadd.f32 0.0, %v6971
        %v6973 = vpop.f32.mrb[0].mxu0
        %v6974 = vadd.f32 0.0, %v6973
        %6975 = vmatprep.mubr.f32.mxu0 0.0
        %6976 = vmatmul.mubr.f32.gmra.mrb[0].mxu0 %v6879
        %v6977 = vpop.f32.mrb[0].mxu0
        %v6978 = vadd.f32 0.0, %v6977
        %v6979 = vpop.f32.mrb[0].mxu0
        %v6980 = vadd.f32 0.0, %v6979
        %6981 = vmatprep.mubr.f32.mxu0 0.0
        %6982 = vmatmul.mubr.f32.gmra.mrb[0].mxu0 %v6882
        %v6983 = vpop.f32.mrb[0].mxu0
        %v6984 = vadd.f32 0.0, %v6983
        %v6985 = vpop.f32.mrb[0].mxu0
        %v6986 = vadd.f32 0.0, %v6985
        %6987 = vmatprep.mubr.f32.mxu0 0.0
        %6988 = vmatmul.mubr.f32.gmra.mrb[0].mxu0 %v6885
        %v6989 = vpop.f32.mrb[0].mxu0
        %v6990 = vadd.f32 0.0, %v6989
        %v6991 = vpop.f32.mrb[0].mxu0
        %v6992 = vadd.f32 0.0, %v6991
        %6993 = vmatprep.mubr.f32.mxu0 0.0
        %6994 = vmatmul.mubr.f32.gmra.mrb[0].mxu0 %v6888
        %v6995 = vpop.f32.mrb[0].mxu0
        %v6996 = vadd.f32 0.0, %v6995
        %v6997 = vpop.f32.mrb[0].mxu0
        %v6998 = vadd.f32 0.0, %v6997
        %6999 = vmatprep.mubr.f32.mxu0 0.0
        %7000 = vmatmul.mubr.f32.gmra.mrb[0].mxu0 %v6891
        %v7001 = vpop.f32.mrb[0].mxu0
        %v7002 = vadd.f32 0.0, %v7001
        %v7003 = vpop.f32.mrb[0].mxu0
        %v7004 = vadd.f32 0.0, %v7003
        %7005 = vdwg.mxu0
        %v7006 = vadd.f32 %v6686, %v6960
        %v7007 = vadd.f32 %v6688, %v6962
        %v7008 = vadd.f32 %v6692, %v6966
        %v7009 = vadd.f32 %v6694, %v6968
        %v7010 = vadd.f32 %v6698, %v6972
        %v7011 = vadd.f32 %v6700, %v6974
        %v7012 = vadd.f32 %v6704, %v6978
        %v7013 = vadd.f32 %v6706, %v6980
        %v7014 = vadd.f32 %v6710, %v6984
        %v7015 = vadd.f32 %v6712, %v6986
        %v7016 = vadd.f32 %v6716, %v6990
        %v7017 = vadd.f32 %v6718, %v6992
        %v7018 = vadd.f32 %v6722, %v6996
        %v7019 = vadd.f32 %v6724, %v6998
        %v7020 = vadd.f32 %v6728, %v7002
        %v7021 = vadd.f32 %v6730, %v7004
        %v7022 = vld [vmem:[%s2] sm:$0xff]
        %v7023 = vld [vmem:[%s2 + $0x8] sm:$0xff]
        %v7024 = vld [vmem:[%s2 + $0x10] sm:$0xff]
        %v7025 = vld [vmem:[%s2 + $0x18] sm:$0xff]
        %v7026 = vld [vmem:[%s2 + $0x20] sm:$0xff]
        %v7027 = vld [vmem:[%s2 + $0x28] sm:$0xff]
        %v7028 = vld [vmem:[%s2 + $0x30] sm:$0xff]
        %v7029 = vld [vmem:[%s2 + $0x38] sm:$0xff]
        %7031 = vset.pattern.permute.xlu0 5
        %7032 = vperm.xlu0 %7031, %v7022
        %v7033 = vpop.permute.xlu0 %7032
        %7036 = vset.pattern.permute.xlu0 5
        %7037 = vperm.xlu0 %7036, %v7023
        %v7038 = vpop.permute.xlu0 %7037
        %7041 = vset.pattern.permute.xlu0 5
        %7042 = vperm.xlu0 %7041, %v7024
        %v7043 = vpop.permute.xlu0 %7042
        %7046 = vset.pattern.permute.xlu0 5
        %7047 = vperm.xlu0 %7046, %v7025
        %v7048 = vpop.permute.xlu0 %7047
        %7051 = vset.pattern.permute.xlu0 5
        %7052 = vperm.xlu0 %7051, %v7026
        %v7053 = vpop.permute.xlu0 %7052
        %7056 = vset.pattern.permute.xlu0 5
        %7057 = vperm.xlu0 %7056, %v7027
        %v7058 = vpop.permute.xlu0 %7057
        %7061 = vset.pattern.permute.xlu0 5
        %7062 = vperm.xlu0 %7061, %v7028
        %v7063 = vpop.permute.xlu0 %7062
        %7066 = vset.pattern.permute.xlu0 5
        %7067 = vperm.xlu0 %7066, %v7029
        %v7068 = vpop.permute.xlu0 %7067
        %v7070 = vadd.f32 %v7006, %v7033
        %v7071 = vadd.f32 %v7007, %v7033
        %v7072 = vadd.f32 %v7008, %v7038
        %v7073 = vadd.f32 %v7009, %v7038
        %v7074 = vadd.f32 %v7010, %v7043
        %v7075 = vadd.f32 %v7011, %v7043
        %v7076 = vadd.f32 %v7012, %v7048
        %v7077 = vadd.f32 %v7013, %v7048
        %v7078 = vadd.f32 %v7014, %v7053
        %v7079 = vadd.f32 %v7015, %v7053
        %v7080 = vadd.f32 %v7016, %v7058
        %v7081 = vadd.f32 %v7017, %v7058
        %v7082 = vadd.f32 %v7018, %v7063
        %v7083 = vadd.f32 %v7019, %v7063
        %v7084 = vadd.f32 %v7020, %v7068
        %v7085 = vadd.f32 %v7021, %v7068
        %v7086 = vadd.f32 %v4816, %v7070
        %v7087 = vadd.f32 %v4817, %v7071
        %v7088 = vadd.f32 %v4818, %v7072
        %v7089 = vadd.f32 %v4819, %v7073
        %v7090 = vadd.f32 %v4820, %v7074
        %v7091 = vadd.f32 %v4821, %v7075
        %v7092 = vadd.f32 %v4822, %v7076
        %v7093 = vadd.f32 %v4823, %v7077
        %v7094 = vadd.f32 %v4824, %v7078
        %v7095 = vadd.f32 %v4825, %v7079
        %v7096 = vadd.f32 %v4826, %v7080
        %v7097 = vadd.f32 %v4827, %v7081
        %v7098 = vadd.f32 %v4828, %v7082
        %v7099 = vadd.f32 %v4829, %v7083
        %v7100 = vadd.f32 %v4830, %v7084
        %v7101 = vadd.f32 %v4831, %v7085
        %7102 = vst [vmem:[%s245] sm:$0xff] %v7086
        %7103 = vst [vmem:[%s245 + $0x8] sm:$0xff] %v7087
        %7104 = vst [vmem:[%s245 + $0x10] sm:$0xff] %v7088
        %7105 = vst [vmem:[%s245 + $0x18] sm:$0xff] %v7089
        %7106 = vst [vmem:[%s245 + $0x20] sm:$0xff] %v7090
        %7107 = vst [vmem:[%s245 + $0x28] sm:$0xff] %v7091
        %7108 = vst [vmem:[%s245 + $0x30] sm:$0xff] %v7092
        %7109 = vst [vmem:[%s245 + $0x38] sm:$0xff] %v7093
        %7110 = vst [vmem:[%s245 + $0x40] sm:$0xff] %v7094
        %7111 = vst [vmem:[%s245 + $0x48] sm:$0xff] %v7095
        %7112 = vst [vmem:[%s245 + $0x50] sm:$0xff] %v7096
        %7113 = vst [vmem:[%s245 + $0x58] sm:$0xff] %v7097
        %7114 = vst [vmem:[%s245 + $0x60] sm:$0xff] %v7098
        %7115 = vst [vmem:[%s245 + $0x68] sm:$0xff] %v7099
        %7116 = vst [vmem:[%s245 + $0x70] sm:$0xff] %v7100
        %7117 = vst [vmem:[%s245 + $0x78] sm:$0xff] %v7101
        %s7118 = sand.u32 %s124, 1
        %s7119 = scalar_lea.sflag [#allocation5], %s7118
        %s7120 = sand.u32 %s124, 1
        %s7121 = smul.addr %s7120, 128
        %s7122 = scalar_lea.vmem [#allocation8], %s7121
        // Predicated region
        $region45: #{tpu_custom_call.1} parent=35 // pred_check
          %p7123 = pneg %p134
        $region46: #{tpu_custom_call.1} parent=35 // pred_check_branch
          %7125 = sbr.rel (%p7123) target = $region48
        $region47: #{tpu_custom_call.1} parent=35 // pred_region
          %s7127 = ssub.s32 2048, 2048
          %7128 = vsyncadd %s7119, %s7127
          %s7129 = smul.addr %s22, 16
          %s7130 = smul.addr %s7129, 128
          %s7131 = scalar_lea.hbm %s4, %s7130
          %s7132 = sshll.u32 %s7122, 4
          %s7133 = int_to_ptr.vmem [resolvable:$true] %s7132
          %7138 = dma.vmem_to_hbm [thread:$0]  %s7133, 2048, %s7131, %s7119, 256, 256, 16
        $region48: #{tpu_custom_call.1} parent=35 // pred_fallthru
          _
      $region36: #{tpu_custom_call.1} parent=5 // pred_fallthru
        _
      %p7139 = scmp.le.s32.totalorder 2, %s17
      // Predicated region
      $region49: #{tpu_custom_call.1} parent=5 // pred_check
        %p7140 = pneg %p7139
      $region50: #{tpu_custom_call.1} parent=5 // pred_check_branch
        %7142 = sbr.rel (%p7140) target = $region52
      $region51: #{tpu_custom_call.1} parent=5 // pred_region
        %s7143 = ssub.s32 %s17, 2
        // Predicated region
        $region53: #{tpu_custom_call.1} parent=51 // pred_check
          %p7144 = pneg %p140
        $region54: #{tpu_custom_call.1} parent=51 // pred_check_branch
          %7146 = sbr.rel (%p7144) target = $region56
        $region55: #{tpu_custom_call.1} parent=51 // pred_region
          %s7147 = sand.u32 %s125, 1
          %s7148 = scalar_lea.sflag [#allocation5], %s7147
          %s7149 = sand.u32 %s125, 1
          %s7150 = smul.addr %s7149, 128
          %s7151 = scalar_lea.vmem [#allocation8], %s7150
          %7152 = dma.done %s7148, 2048
        $region56: #{tpu_custom_call.1} parent=51 // pred_fallthru
          _
      $region52: #{tpu_custom_call.1} parent=5 // pred_fallthru
        _
    $region6: #{tpu_custom_call.1} parent=1 // loop_footer
      %s21 = sadd.s32 1, %s17
    $region7: #{tpu_custom_call.1} parent=1 // loop_footer_branch
      %16 = sbr.rel target = $region3
    $region8: #{tpu_custom_call.1} parent=1 // loop_exit
      _
    %7153 = vsyncpa [#allocation4], 1
    %s7154 = scalar_lea.sflag [#allocation4], 1
    %7155 = vsyncpa %s7154, 1
    %7156 = vsyncpa [#allocation7], 1
    %7157 = vsyncpa [#allocation5], 1
    %s7158 = scalar_lea.sflag [#allocation5], 1
    %7159 = vsyncpa %s7158, 1

</llo_original>
